<compile_context>
chip_gen: v7x
topology: tpu7x:2x2x1
jax: 0.10.0
libtpu: 0.0.40
codegen_flags: <defaults>
</compile_context>

<pallas_src>
import math
import functools

import numpy as np
import jax
import jax.numpy as jnp
from jax.experimental import pallas as pl
from jax.experimental.pallas import tpu as pltpu

# ---------------- small config (consistent with the module's constructor) ----
IMAGE_SIZE = 16
CHANNELS = 3
PATCH_SIZE = 4
LATENT_DIM = 4
BASE_DIM = 16
DIM_MULTS = (1, 2)
DEPTHS = (1, 1)
HEAD_DIM = 8
KERNEL_SIZE = 3
LN_EPS = 1e-5


# ------------------------------ kernel helpers --------------------------------
def _mm(a, w):
    """MXU matmul with bf16 operands and f32 accumulation."""
    return jnp.dot(a.astype(jnp.bfloat16), w.astype(jnp.bfloat16),
                   preferred_element_type=jnp.float32)


def _ln(x, g, b):
    """LayerNorm over the last dim, f32 elementwise (v5e-safe)."""
    mu = jnp.mean(x, axis=-1, keepdims=True)
    var = jnp.mean(jnp.square(x - mu), axis=-1, keepdims=True)
    return (x - mu) * jax.lax.rsqrt(var + LN_EPS) * g + b


# ------------------------------ fused stage kernel ----------------------------
def _stage_kernel(*refs, t, heads, head_dim, n_blocks,
                  has_pre, has_pre_ln, has_mask, has_post, post_act):
    """One grid step = one batch element through a whole hourglass level.

    Ref order: x, [pre_w, pre_b], [pre_ln_g, pre_ln_b],
               12 refs per attention block, [mask], [post_w, post_b], out.
    """
    it = iter(refs)
    x_ref = next(it)
    x = x_ref[0].astype(jnp.float32)                       # (t, d_in)

    if has_pre:
        w_ref, b_ref = next(it), next(it)
        x = _mm(x, w_ref[...]) + b_ref[...]
    if has_pre_ln:
        g_ref, b_ref = next(it), next(it)
        x = _ln(x, g_ref[...], b_ref[...])

    blocks = [tuple(next(it) for _ in range(12)) for _ in range(n_blocks)]
    mask = next(it)[...] if has_mask else None
    post = (next(it), next(it)) if has_post else None
    o_ref = next(it)

    scale = 1.0 / math.sqrt(head_dim)

    for (l1g, l1b, wqkv, bqkv, wpr, bpr, l2g, l2b, w1, b1, w2, b2) in blocks:
        # ---- attention sub-block (pre-LN, residual), heads unrolled ----
        y = _ln(x, l1g[...], l1b[...])
        attn = None
        for h in range(heads):
            qh = _mm(y, wqkv[h]) + bqkv[h]                  # (t, hd)
            kh = _mm(y, wqkv[heads + h]) + bqkv[heads + h]
            vh = _mm(y, wqkv[2 * heads + h]) + bqkv[2 * heads + h]
            # scores: contract last dims directly (no explicit transpose)
            s = jax.lax.dot_general(
                qh.astype(jnp.bfloat16), kh.astype(jnp.bfloat16),
                dimension_numbers=(((1,), (1,)), ((), ())),
                preferred_element_type=jnp.float32) * scale  # (t, t)
            if mask is not None:
                s = s + mask
            s = s - jnp.max(s, axis=-1, keepdims=True)
            p = jnp.exp(s)
            p = p * pl.reciprocal(jnp.sum(p, axis=-1, keepdims=True), approx=True)
            oh = _mm(p, vh)                                  # (t, hd)
            contrib = _mm(oh, wpr[h])                        # (t, d) = o_h @ Wproj_h
            attn = contrib if attn is None else attn + contrib
        x = x + attn + bpr[...]

        # ---- MLP sub-block (pre-LN, residual) ----
        y = _ln(x, l2g[...], l2b[...])
        hdn = jax.nn.gelu(_mm(y, w1[...]) + b1[...], approximate=True)
        x = x + _mm(hdn, w2[...]) + b2[...]

    if has_post:
        pw, pb = post
        x = _mm(x, pw[...]) + pb[...]
        if post_act == "tanh":
            x = jnp.tanh(x)

    o_ref[0] = x.astype(o_ref.dtype)


def fused_stage(x_tokens, *, pre=None, pre_ln=None, blocks=(), mask=None,
                post=None, post_act=None, heads, head_dim, d_out):
    """x_tokens: (b, t, d_in) -> (b, t, d_out); one pallas_call per level."""
    b, t, d_in = x_tokens.shape
    args = [x_tokens]
    in_specs = [pl.BlockSpec((1, t, d_in), lambda i: (i, 0, 0))]

    def add_param(a):
        args.append(a)
        nd = a.ndim
        in_specs.append(pl.BlockSpec(a.shape, lambda i, _nd=nd: (0,) * _nd))

    if pre is not None:
        add_param(pre["w"]); add_param(pre["b"])
    if pre_ln is not None:
        add_param(pre_ln["g"]); add_param(pre_ln["b"])
    for blk in blocks:
        for a in (blk["ln1"]["g"], blk["ln1"]["b"],
                  blk["wqkv"], blk["bqkv"], blk["wproj"], blk["bproj"],
                  blk["ln2"]["g"], blk["ln2"]["b"],
                  blk["fc1"]["w"], blk["fc1"]["b"],
                  blk["fc2"]["w"], blk["fc2"]["b"]):
            add_param(a)
    if mask is not None:
        add_param(mask)
    if post is not None:
        add_param(post["w"]); add_param(post["b"])

    kernel = functools.partial(
        _stage_kernel, t=t, heads=heads, head_dim=head_dim, n_blocks=len(blocks),
        has_pre=pre is not None, has_pre_ln=pre_ln is not None,
        has_mask=mask is not None, has_post=post is not None, post_act=post_act)

    return pl.pallas_call(
        kernel,
        out_shape=jax.ShapeDtypeStruct((b, t, d_out), jnp.float32),
        grid=(b,),
        in_specs=in_specs,
        out_specs=pl.BlockSpec((1, t, d_out), lambda i: (i, 0, 0)),
        compiler_params=pltpu.CompilerParams(
            dimension_semantics=("parallel",)),   # shards batch across v7x TCs
    )(*args)


# -------------------------- masks / spatial glue ------------------------------
def natten_mask(h, w, kernel):
    """NATTEN-style clamped-window neighborhood additive mask, (h*w, h*w)."""
    idx = np.arange(h * w)
    qi, qj = idx // w, idx % w
    si = np.clip(qi - kernel // 2, 0, max(h - kernel, 0))
    sj = np.clip(qj - kernel // 2, 0, max(w - kernel, 0))
    ki, kj = idx // w, idx % w
    in_i = (ki[None, :] >= si[:, None]) & (ki[None, :] < si[:, None] + min(kernel, h))
    in_j = (kj[None, :] >= sj[:, None]) & (kj[None, :] < sj[:, None] + min(kernel, w))
    allowed = in_i & in_j
    return jnp.asarray(np.where(allowed, 0.0, -1e9), dtype=jnp.float32)


def space_to_depth(x, f):
    """pixel-unshuffle on NHWC (XLA glue between fused stage kernels)."""
    b, h, w, c = x.shape
    x = x.reshape(b, h // f, f, w // f, f, c).transpose(0, 1, 3, 2, 4, 5)
    return x.reshape(b, h // f, w // f, f * f * c)


def depth_to_space(x, f):
    """pixel-shuffle on NHWC (XLA glue between fused stage kernels)."""
    b, h, w, c = x.shape
    cout = c // (f * f)
    x = x.reshape(b, h, w, f, f, cout).transpose(0, 1, 3, 2, 4, 5)
    return x.reshape(b, h * f, w * f, cout)


# --------------------------- parameter init -----------------------------------
def _init_linear(key, din, dout):
    w = jax.random.normal(key, (din, dout), jnp.float32) * (1.0 / math.sqrt(din))
    b = jnp.zeros((1, dout), jnp.float32)
    return {"w": w, "b": b}


def _init_ln(dim):
    return {"g": jnp.ones((1, dim), jnp.float32), "b": jnp.zeros((1, dim), jnp.float32)}


def _init_attn_block(key, dim, head_dim):
    heads = dim // head_dim
    ks = jax.random.split(key, 4)
    qkv = _init_linear(ks[0], dim, 3 * dim)
    proj = _init_linear(ks[1], dim, dim)
    # Reorganize fused qkv weight into per-(q/k/v, head) slabs so the kernel can
    # index the leading axis statically: (3*heads, dim, head_dim).
    wqkv = (qkv["w"].reshape(dim, 3, heads, head_dim)
            .transpose(1, 2, 0, 3).reshape(3 * heads, dim, head_dim))
    bqkv = qkv["b"].reshape(3, heads, 1, head_dim).reshape(3 * heads, 1, head_dim)
    # Output proj rows are ordered [head][head_dim]: (heads, head_dim, dim).
    wproj = proj["w"].reshape(heads, head_dim, dim)
    return {
        "ln1": _init_ln(dim),
        "wqkv": wqkv, "bqkv": bqkv,
        "wproj": wproj, "bproj": proj["b"],
        "ln2": _init_ln(dim),
        "fc1": _init_linear(ks[2], dim, 4 * dim),
        "fc2": _init_linear(ks[3], 4 * dim, dim),
    }


def init_params(key):
    enc_dims = [BASE_DIM * m for m in DIM_MULTS]
    dec_dims = [BASE_DIM * m for m in DIM_MULTS[::-1]]
    dec_depths = DEPTHS[::-1]
    keys = iter(jax.random.split(key, 64))
    p = {}

    # encoder
    p["patch_embed"] = _init_linear(next(keys), PATCH_SIZE * PATCH_SIZE * CHANNELS, enc_dims[0])
    p["enc_norm"] = _init_ln(enc_dims[0])
    p["enc_blocks"] = []
    p["enc_down"] = []
    for i in range(len(DIM_MULTS)):
        p["enc_blocks"].append(
            [_init_attn_block(next(keys), enc_dims[i], HEAD_DIM) for _ in range(DEPTHS[i])])
        if i < len(DIM_MULTS) - 1:
            p["enc_down"].append(_init_linear(next(keys), 4 * enc_dims[i], enc_dims[i + 1]))
    p["latent_mean"] = _init_linear(next(keys), enc_dims[-1], LATENT_DIM)

    # decoder
    p["latent_proj"] = _init_linear(next(keys), LATENT_DIM, dec_dims[0])
    p["dec_blocks"] = []
    p["dec_up"] = []
    for i in range(len(dec_dims)):
        if i > 0:
            p["dec_up"].append(_init_linear(next(keys), dec_dims[i - 1], 4 * dec_dims[i]))
        p["dec_blocks"].append(
            [_init_attn_block(next(keys), dec_dims[i], HEAD_DIM) for _ in range(dec_depths[i])])
    p["out_embed"] = _init_linear(next(keys), dec_dims[-1], CHANNELS * PATCH_SIZE * PATCH_SIZE)
    return p


# ------------------------------- forward --------------------------------------
def encoder_forward(p, x_nchw):
    enc_dims = [BASE_DIM * m for m in DIM_MULTS]
    n_levels = len(DIM_MULTS)
    x = jnp.transpose(x_nchw, (0, 2, 3, 1))                 # NCHW -> NHWC
    x = space_to_depth(x, PATCH_SIZE)                       # patchify
    for i in range(n_levels):
        b, hh, ww, cc = x.shape
        t = hh * ww
        is_global = (i == n_levels - 1)
        dim = enc_dims[i]
        heads = dim // HEAD_DIM
        pre = p["patch_embed"] if i == 0 else p["enc_down"][i - 1]
        pre_ln = p["enc_norm"] if i == 0 else None
        post = p["latent_mean"] if is_global else None
        d_out = LATENT_DIM if post is not None else dim
        mask = None if is_global else natten_mask(hh, ww, KERNEL_SIZE)
        y = fused_stage(x.reshape(b, t, cc), pre=pre, pre_ln=pre_ln,
                        blocks=p["enc_blocks"][i], mask=mask, post=post,
                        heads=heads, head_dim=HEAD_DIM, d_out=d_out)
        x = y.reshape(b, hh, ww, d_out)
        if not is_global:
            x = space_to_depth(x, 2)
    return x                                                # (b, ls, ls, LATENT_DIM)


def decoder_forward(p, z):
    dec_dims = [BASE_DIM * m for m in DIM_MULTS[::-1]]
    n_levels = len(dec_dims)
    x = z
    for i in range(n_levels):
        b, hh, ww, cc = x.shape
        t = hh * ww
        is_global = (i == 0)
        dim = dec_dims[i]
        heads = dim // HEAD_DIM
        pre = p["latent_proj"] if i == 0 else None
        if i < n_levels - 1:
            post, d_out, post_act = p["dec_up"][i], 4 * dec_dims[i + 1], None
        else:
            post, d_out, post_act = p["out_embed"], CHANNELS * PATCH_SIZE * PATCH_SIZE, "tanh"
        mask = None if is_global else natten_mask(hh, ww, KERNEL_SIZE)
        y = fused_stage(x.reshape(b, t, cc), pre=pre, pre_ln=None,
                        blocks=p["dec_blocks"][i], mask=mask, post=post,
                        post_act=post_act, heads=heads, head_dim=HEAD_DIM, d_out=d_out)
        x = y.reshape(b, hh, ww, d_out)
        if i < n_levels - 1:
            x = depth_to_space(x, 2)
    x = depth_to_space(x, PATCH_SIZE)                       # un-patchify (tanh already applied)
    return jnp.transpose(x, (0, 3, 1, 2))                   # NHWC -> NCHW


def hvit_vae_forward(p, x_nchw):
    z = encoder_forward(p, x_nchw)
    recon = decoder_forward(p, z)
    return recon


# --------------------------------- main ----------------------------------------
if __name__ == "__main__":
    key = jax.random.PRNGKey(0)
    key_x, key_p = jax.random.split(key)
    x = jax.random.normal(key_x, (2, CHANNELS, IMAGE_SIZE, IMAGE_SIZE), dtype=jnp.float32)
    params = init_params(key_p)

    fwd = jax.jit(hvit_vae_forward)
    recon = jax.block_until_ready(fwd(params, x))

    assert recon.shape == (2, CHANNELS, IMAGE_SIZE, IMAGE_SIZE), recon.shape
    assert bool(jnp.all(jnp.isfinite(recon)))
    assert bool(jnp.all(jnp.abs(recon) <= 1.0 + 1e-6))  # tanh output range
    print("KERNEL_OK")
</pallas_src>

<mosaic_0001>
module attributes {stable_mosaic.version = 11 : i64} {
  func.func @_stage_kernel(%arg0: i32, %arg1: memref<1x16x48xf32, #tpu.memory_space<vmem>>, %arg2: memref<48x16xf32, #tpu.memory_space<vmem>>, %arg3: memref<1x16xf32, #tpu.memory_space<vmem>>, %arg4: memref<1x16xf32, #tpu.memory_space<vmem>>, %arg5: memref<1x16xf32, #tpu.memory_space<vmem>>, %arg6: memref<1x16xf32, #tpu.memory_space<vmem>>, %arg7: memref<1x16xf32, #tpu.memory_space<vmem>>, %arg8: memref<6x16x8xf32, #tpu.memory_space<vmem>>, %arg9: memref<6x1x8xf32, #tpu.memory_space<vmem>>, %arg10: memref<2x8x16xf32, #tpu.memory_space<vmem>>, %arg11: memref<1x16xf32, #tpu.memory_space<vmem>>, %arg12: memref<1x16xf32, #tpu.memory_space<vmem>>, %arg13: memref<1x16xf32, #tpu.memory_space<vmem>>, %arg14: memref<16x64xf32, #tpu.memory_space<vmem>>, %arg15: memref<1x64xf32, #tpu.memory_space<vmem>>, %arg16: memref<64x16xf32, #tpu.memory_space<vmem>>, %arg17: memref<1x16xf32, #tpu.memory_space<vmem>>, %arg18: memref<16x16xf32, #tpu.memory_space<vmem>>, %arg19: memref<1x16x16xf32, #tpu.memory_space<vmem>>) attributes {dimension_semantics = [#tpu.dimension_semantics<parallel>], iteration_bounds = array<i64: 2>, scalar_prefetch = 0 : i64, scratch_operands = 0 : i64, tpu.core_type = #tpu.core_type<tc>, window_params = [{transform_indices = @transform_0, window_bounds = array<i64: 1, 16, 48>}, {pipeline_mode = #tpu.pipeline_mode<synchronous>, transform_indices = @transform_1, window_bounds = array<i64: 48, 16>}, {pipeline_mode = #tpu.pipeline_mode<synchronous>, transform_indices = @transform_2, window_bounds = array<i64: 1, 16>}, {pipeline_mode = #tpu.pipeline_mode<synchronous>, transform_indices = @transform_3, window_bounds = array<i64: 1, 16>}, {pipeline_mode = #tpu.pipeline_mode<synchronous>, transform_indices = @transform_4, window_bounds = array<i64: 1, 16>}, {pipeline_mode = #tpu.pipeline_mode<synchronous>, transform_indices = @transform_5, window_bounds = array<i64: 1, 16>}, {pipeline_mode = #tpu.pipeline_mode<synchronous>, transform_indices = @transform_6, window_bounds = array<i64: 1, 16>}, {pipeline_mode = #tpu.pipeline_mode<synchronous>, transform_indices = @transform_7, window_bounds = array<i64: 6, 16, 8>}, {pipeline_mode = #tpu.pipeline_mode<synchronous>, transform_indices = @transform_8, window_bounds = array<i64: 6, 1, 8>}, {pipeline_mode = #tpu.pipeline_mode<synchronous>, transform_indices = @transform_9, window_bounds = array<i64: 2, 8, 16>}, {pipeline_mode = #tpu.pipeline_mode<synchronous>, transform_indices = @transform_10, window_bounds = array<i64: 1, 16>}, {pipeline_mode = #tpu.pipeline_mode<synchronous>, transform_indices = @transform_11, window_bounds = array<i64: 1, 16>}, {pipeline_mode = #tpu.pipeline_mode<synchronous>, transform_indices = @transform_12, window_bounds = array<i64: 1, 16>}, {pipeline_mode = #tpu.pipeline_mode<synchronous>, transform_indices = @transform_13, window_bounds = array<i64: 16, 64>}, {pipeline_mode = #tpu.pipeline_mode<synchronous>, transform_indices = @transform_14, window_bounds = array<i64: 1, 64>}, {pipeline_mode = #tpu.pipeline_mode<synchronous>, transform_indices = @transform_15, window_bounds = array<i64: 64, 16>}, {pipeline_mode = #tpu.pipeline_mode<synchronous>, transform_indices = @transform_16, window_bounds = array<i64: 1, 16>}, {pipeline_mode = #tpu.pipeline_mode<synchronous>, transform_indices = @transform_17, window_bounds = array<i64: 16, 16>}, {transform_indices = @transform_18, window_bounds = array<i64: 1, 16, 16>}]} {
    %c0 = arith.constant 0 : index
    %c0_0 = arith.constant 0 : index
    %c0_1 = arith.constant 0 : index
    %0 = vector.load %arg1[%c0, %c0_0, %c0_1] : memref<1x16x48xf32, #tpu.memory_space<vmem>>, vector<1x16x48xf32>
    %1 = vector.shape_cast %0 : vector<1x16x48xf32> to vector<16x48xf32>
    %c0_2 = arith.constant 0 : index
    %c0_3 = arith.constant 0 : index
    %2 = vector.load %arg2[%c0_2, %c0_3] : memref<48x16xf32, #tpu.memory_space<vmem>>, vector<48x16xf32>
    %3 = arith.truncf %1 : vector<16x48xf32> to vector<16x48xbf16>
    %4 = arith.truncf %2 : vector<48x16xf32> to vector<48x16xbf16>
    %cst = arith.constant dense<0.000000e+00> : vector<16x16xf32>
    %5 = tpu.matmul %3, %4, %cst {dimension_numbers = #tpu.dot_dimension_numbers<[1], [0], [0], [1], [0, 0, 1, 1], [], []>} : vector<16x48xbf16>, vector<48x16xbf16>, vector<16x16xf32> -> vector<16x16xf32>
    %c0_4 = arith.constant 0 : index
    %c0_5 = arith.constant 0 : index
    %6 = vector.load %arg3[%c0_4, %c0_5] : memref<1x16xf32, #tpu.memory_space<vmem>>, vector<1x16xf32>
    %7 = vector.broadcast %6 : vector<1x16xf32> to vector<16x16xf32>
    %8 = arith.addf %5, %7 : vector<16x16xf32>
    %c0_6 = arith.constant 0 : index
    %c0_7 = arith.constant 0 : index
    %9 = vector.load %arg4[%c0_6, %c0_7] : memref<1x16xf32, #tpu.memory_space<vmem>>, vector<1x16xf32>
    %c0_8 = arith.constant 0 : index
    %c0_9 = arith.constant 0 : index
    %10 = vector.load %arg5[%c0_8, %c0_9] : memref<1x16xf32, #tpu.memory_space<vmem>>, vector<1x16xf32>
    %cst_10 = arith.constant dense<0.000000e+00> : vector<16xf32>
    %11 = vector.multi_reduction <add>, %8, %cst_10 [1] : vector<16x16xf32> to vector<16xf32>
    %12 = vector.shape_cast %11 : vector<16xf32> to vector<16x1xf32>
    %cst_11 = arith.constant 1.600000e+01 : f32
    %13 = vector.broadcast %cst_11 : f32 to vector<16x1xf32>
    %14 = arith.divf %12, %13 : vector<16x1xf32>
    %15 = vector.broadcast %14 : vector<16x1xf32> to vector<16x16xf32>
    %16 = arith.subf %8, %15 : vector<16x16xf32>
    %17 = arith.mulf %16, %16 : vector<16x16xf32>
    %cst_12 = arith.constant dense<0.000000e+00> : vector<16xf32>
    %18 = vector.multi_reduction <add>, %17, %cst_12 [1] : vector<16x16xf32> to vector<16xf32>
    %19 = vector.shape_cast %18 : vector<16xf32> to vector<16x1xf32>
    %cst_13 = arith.constant 1.600000e+01 : f32
    %20 = vector.broadcast %cst_13 : f32 to vector<16x1xf32>
    %21 = arith.divf %19, %20 : vector<16x1xf32>
    %22 = vector.broadcast %14 : vector<16x1xf32> to vector<16x16xf32>
    %23 = arith.subf %8, %22 : vector<16x16xf32>
    %cst_14 = arith.constant 9.99999974E-6 : f32
    %24 = vector.broadcast %cst_14 : f32 to vector<16x1xf32>
    %25 = arith.addf %21, %24 : vector<16x1xf32>
    %26 = math.rsqrt %25 : vector<16x1xf32>
    %27 = vector.broadcast %26 : vector<16x1xf32> to vector<16x16xf32>
    %28 = arith.mulf %23, %27 : vector<16x16xf32>
    %29 = vector.broadcast %9 : vector<1x16xf32> to vector<16x16xf32>
    %30 = arith.mulf %28, %29 : vector<16x16xf32>
    %31 = vector.broadcast %10 : vector<1x16xf32> to vector<16x16xf32>
    %32 = arith.addf %30, %31 : vector<16x16xf32>
    %c0_15 = arith.constant 0 : index
    %c0_16 = arith.constant 0 : index
    %33 = vector.load %arg18[%c0_15, %c0_16] : memref<16x16xf32, #tpu.memory_space<vmem>>, vector<16x16xf32>
    %c0_17 = arith.constant 0 : index
    %c0_18 = arith.constant 0 : index
    %34 = vector.load %arg6[%c0_17, %c0_18] : memref<1x16xf32, #tpu.memory_space<vmem>>, vector<1x16xf32>
    %c0_19 = arith.constant 0 : index
    %c0_20 = arith.constant 0 : index
    %35 = vector.load %arg7[%c0_19, %c0_20] : memref<1x16xf32, #tpu.memory_space<vmem>>, vector<1x16xf32>
    %cst_21 = arith.constant dense<0.000000e+00> : vector<16xf32>
    %36 = vector.multi_reduction <add>, %32, %cst_21 [1] : vector<16x16xf32> to vector<16xf32>
    %37 = vector.shape_cast %36 : vector<16xf32> to vector<16x1xf32>
    %cst_22 = arith.constant 1.600000e+01 : f32
    %38 = vector.broadcast %cst_22 : f32 to vector<16x1xf32>
    %39 = arith.divf %37, %38 : vector<16x1xf32>
    %40 = vector.broadcast %39 : vector<16x1xf32> to vector<16x16xf32>
    %41 = arith.subf %32, %40 : vector<16x16xf32>
    %42 = arith.mulf %41, %41 : vector<16x16xf32>
    %cst_23 = arith.constant dense<0.000000e+00> : vector<16xf32>
    %43 = vector.multi_reduction <add>, %42, %cst_23 [1] : vector<16x16xf32> to vector<16xf32>
    %44 = vector.shape_cast %43 : vector<16xf32> to vector<16x1xf32>
    %cst_24 = arith.constant 1.600000e+01 : f32
    %45 = vector.broadcast %cst_24 : f32 to vector<16x1xf32>
    %46 = arith.divf %44, %45 : vector<16x1xf32>
    %47 = vector.broadcast %39 : vector<16x1xf32> to vector<16x16xf32>
    %48 = arith.subf %32, %47 : vector<16x16xf32>
    %cst_25 = arith.constant 9.99999974E-6 : f32
    %49 = vector.broadcast %cst_25 : f32 to vector<16x1xf32>
    %50 = arith.addf %46, %49 : vector<16x1xf32>
    %51 = math.rsqrt %50 : vector<16x1xf32>
    %52 = vector.broadcast %51 : vector<16x1xf32> to vector<16x16xf32>
    %53 = arith.mulf %48, %52 : vector<16x16xf32>
    %54 = vector.broadcast %34 : vector<1x16xf32> to vector<16x16xf32>
    %55 = arith.mulf %53, %54 : vector<16x16xf32>
    %56 = vector.broadcast %35 : vector<1x16xf32> to vector<16x16xf32>
    %57 = arith.addf %55, %56 : vector<16x16xf32>
    %c0_26 = arith.constant 0 : index
    %c0_27 = arith.constant 0 : index
    %c0_28 = arith.constant 0 : index
    %58 = vector.load %arg8[%c0_26, %c0_27, %c0_28] : memref<6x16x8xf32, #tpu.memory_space<vmem>>, vector<1x16x8xf32>
    %59 = vector.shape_cast %58 : vector<1x16x8xf32> to vector<16x8xf32>
    %60 = arith.truncf %57 : vector<16x16xf32> to vector<16x16xbf16>
    %61 = arith.truncf %59 : vector<16x8xf32> to vector<16x8xbf16>
    %cst_29 = arith.constant dense<0.000000e+00> : vector<16x8xf32>
    %62 = tpu.matmul %60, %61, %cst_29 {dimension_numbers = #tpu.dot_dimension_numbers<[1], [0], [0], [1], [0, 0, 1, 1], [], []>} : vector<16x16xbf16>, vector<16x8xbf16>, vector<16x8xf32> -> vector<16x8xf32>
    %c0_30 = arith.constant 0 : index
    %c0_31 = arith.constant 0 : index
    %c0_32 = arith.constant 0 : index
    %63 = vector.load %arg9[%c0_30, %c0_31, %c0_32] : memref<6x1x8xf32, #tpu.memory_space<vmem>>, vector<1x1x8xf32>
    %64 = vector.shape_cast %63 : vector<1x1x8xf32> to vector<1x8xf32>
    %65 = vector.broadcast %64 : vector<1x8xf32> to vector<16x8xf32>
    %66 = arith.addf %62, %65 : vector<16x8xf32>
    %c2 = arith.constant 2 : index
    %c0_33 = arith.constant 0 : index
    %c0_34 = arith.constant 0 : index
    %67 = vector.load %arg8[%c2, %c0_33, %c0_34] : memref<6x16x8xf32, #tpu.memory_space<vmem>>, vector<1x16x8xf32>
    %68 = vector.shape_cast %67 : vector<1x16x8xf32> to vector<16x8xf32>
    %69 = arith.truncf %57 : vector<16x16xf32> to vector<16x16xbf16>
    %70 = arith.truncf %68 : vector<16x8xf32> to vector<16x8xbf16>
    %cst_35 = arith.constant dense<0.000000e+00> : vector<16x8xf32>
    %71 = tpu.matmul %69, %70, %cst_35 {dimension_numbers = #tpu.dot_dimension_numbers<[1], [0], [0], [1], [0, 0, 1, 1], [], []>} : vector<16x16xbf16>, vector<16x8xbf16>, vector<16x8xf32> -> vector<16x8xf32>
    %c2_36 = arith.constant 2 : index
    %c0_37 = arith.constant 0 : index
    %c0_38 = arith.constant 0 : index
    %72 = vector.load %arg9[%c2_36, %c0_37, %c0_38] : memref<6x1x8xf32, #tpu.memory_space<vmem>>, vector<1x1x8xf32>
    %73 = vector.shape_cast %72 : vector<1x1x8xf32> to vector<1x8xf32>
    %74 = vector.broadcast %73 : vector<1x8xf32> to vector<16x8xf32>
    %75 = arith.addf %71, %74 : vector<16x8xf32>
    %c4 = arith.constant 4 : index
    %c0_39 = arith.constant 0 : index
    %c0_40 = arith.constant 0 : index
    %76 = vector.load %arg8[%c4, %c0_39, %c0_40] : memref<6x16x8xf32, #tpu.memory_space<vmem>>, vector<1x16x8xf32>
    %77 = vector.shape_cast %76 : vector<1x16x8xf32> to vector<16x8xf32>
    %78 = arith.truncf %57 : vector<16x16xf32> to vector<16x16xbf16>
    %79 = arith.truncf %77 : vector<16x8xf32> to vector<16x8xbf16>
    %cst_41 = arith.constant dense<0.000000e+00> : vector<16x8xf32>
    %80 = tpu.matmul %78, %79, %cst_41 {dimension_numbers = #tpu.dot_dimension_numbers<[1], [0], [0], [1], [0, 0, 1, 1], [], []>} : vector<16x16xbf16>, vector<16x8xbf16>, vector<16x8xf32> -> vector<16x8xf32>
    %c4_42 = arith.constant 4 : index
    %c0_43 = arith.constant 0 : index
    %c0_44 = arith.constant 0 : index
    %81 = vector.load %arg9[%c4_42, %c0_43, %c0_44] : memref<6x1x8xf32, #tpu.memory_space<vmem>>, vector<1x1x8xf32>
    %82 = vector.shape_cast %81 : vector<1x1x8xf32> to vector<1x8xf32>
    %83 = vector.broadcast %82 : vector<1x8xf32> to vector<16x8xf32>
    %84 = arith.addf %80, %83 : vector<16x8xf32>
    %85 = arith.truncf %66 : vector<16x8xf32> to vector<16x8xbf16>
    %86 = arith.truncf %75 : vector<16x8xf32> to vector<16x8xbf16>
    %cst_45 = arith.constant dense<0.000000e+00> : vector<16x16xf32>
    %87 = tpu.matmul %85, %86, %cst_45 {dimension_numbers = #tpu.dot_dimension_numbers<[1], [1], [0], [0], [0, 0, 1, 0], [], []>} : vector<16x8xbf16>, vector<16x8xbf16>, vector<16x16xf32> -> vector<16x16xf32>
    %cst_46 = arith.constant 0.353553385 : f32
    %88 = vector.broadcast %cst_46 : f32 to vector<16x16xf32>
    %89 = arith.mulf %87, %88 : vector<16x16xf32>
    %90 = arith.addf %89, %33 : vector<16x16xf32>
    %cst_47 = arith.constant dense<0xFF800000> : vector<16xf32>
    %91 = vector.multi_reduction <maximumf>, %90, %cst_47 [1] : vector<16x16xf32> to vector<16xf32>
    %92 = vector.shape_cast %91 : vector<16xf32> to vector<16x1xf32>
    %93 = vector.broadcast %92 : vector<16x1xf32> to vector<16x16xf32>
    %94 = arith.subf %90, %93 : vector<16x16xf32>
    %95 = math.exp %94 : vector<16x16xf32>
    %cst_48 = arith.constant dense<0.000000e+00> : vector<16xf32>
    %96 = vector.multi_reduction <add>, %95, %cst_48 [1] : vector<16x16xf32> to vector<16xf32>
    %97 = vector.shape_cast %96 : vector<16xf32> to vector<16x1xf32>
    %98 = tpu.reciprocal %97 {approx = true} : vector<16x1xf32> -> vector<16x1xf32>
    %99 = vector.broadcast %98 : vector<16x1xf32> to vector<16x16xf32>
    %100 = arith.mulf %95, %99 : vector<16x16xf32>
    %101 = arith.truncf %100 : vector<16x16xf32> to vector<16x16xbf16>
    %102 = arith.truncf %84 : vector<16x8xf32> to vector<16x8xbf16>
    %cst_49 = arith.constant dense<0.000000e+00> : vector<16x8xf32>
    %103 = tpu.matmul %101, %102, %cst_49 {dimension_numbers = #tpu.dot_dimension_numbers<[1], [0], [0], [1], [0, 0, 1, 1], [], []>} : vector<16x16xbf16>, vector<16x8xbf16>, vector<16x8xf32> -> vector<16x8xf32>
    %c0_50 = arith.constant 0 : index
    %c0_51 = arith.constant 0 : index
    %c0_52 = arith.constant 0 : index
    %104 = vector.load %arg10[%c0_50, %c0_51, %c0_52] : memref<2x8x16xf32, #tpu.memory_space<vmem>>, vector<1x8x16xf32>
    %105 = vector.shape_cast %104 : vector<1x8x16xf32> to vector<8x16xf32>
    %106 = arith.truncf %103 : vector<16x8xf32> to vector<16x8xbf16>
    %107 = arith.truncf %105 : vector<8x16xf32> to vector<8x16xbf16>
    %cst_53 = arith.constant dense<0.000000e+00> : vector<16x16xf32>
    %108 = tpu.matmul %106, %107, %cst_53 {dimension_numbers = #tpu.dot_dimension_numbers<[1], [0], [0], [1], [0, 0, 1, 1], [], []>} : vector<16x8xbf16>, vector<8x16xbf16>, vector<16x16xf32> -> vector<16x16xf32>
    %c1 = arith.constant 1 : index
    %c0_54 = arith.constant 0 : index
    %c0_55 = arith.constant 0 : index
    %109 = vector.load %arg8[%c1, %c0_54, %c0_55] : memref<6x16x8xf32, #tpu.memory_space<vmem>>, vector<1x16x8xf32>
    %110 = vector.shape_cast %109 : vector<1x16x8xf32> to vector<16x8xf32>
    %111 = arith.truncf %57 : vector<16x16xf32> to vector<16x16xbf16>
    %112 = arith.truncf %110 : vector<16x8xf32> to vector<16x8xbf16>
    %cst_56 = arith.constant dense<0.000000e+00> : vector<16x8xf32>
    %113 = tpu.matmul %111, %112, %cst_56 {dimension_numbers = #tpu.dot_dimension_numbers<[1], [0], [0], [1], [0, 0, 1, 1], [], []>} : vector<16x16xbf16>, vector<16x8xbf16>, vector<16x8xf32> -> vector<16x8xf32>
    %c1_57 = arith.constant 1 : index
    %c0_58 = arith.constant 0 : index
    %c0_59 = arith.constant 0 : index
    %114 = vector.load %arg9[%c1_57, %c0_58, %c0_59] : memref<6x1x8xf32, #tpu.memory_space<vmem>>, vector<1x1x8xf32>
    %115 = vector.shape_cast %114 : vector<1x1x8xf32> to vector<1x8xf32>
    %116 = vector.broadcast %115 : vector<1x8xf32> to vector<16x8xf32>
    %117 = arith.addf %113, %116 : vector<16x8xf32>
    %c3 = arith.constant 3 : index
    %c0_60 = arith.constant 0 : index
    %c0_61 = arith.constant 0 : index
    %118 = vector.load %arg8[%c3, %c0_60, %c0_61] : memref<6x16x8xf32, #tpu.memory_space<vmem>>, vector<1x16x8xf32>
    %119 = vector.shape_cast %118 : vector<1x16x8xf32> to vector<16x8xf32>
    %120 = arith.truncf %57 : vector<16x16xf32> to vector<16x16xbf16>
    %121 = arith.truncf %119 : vector<16x8xf32> to vector<16x8xbf16>
    %cst_62 = arith.constant dense<0.000000e+00> : vector<16x8xf32>
    %122 = tpu.matmul %120, %121, %cst_62 {dimension_numbers = #tpu.dot_dimension_numbers<[1], [0], [0], [1], [0, 0, 1, 1], [], []>} : vector<16x16xbf16>, vector<16x8xbf16>, vector<16x8xf32> -> vector<16x8xf32>
    %c3_63 = arith.constant 3 : index
    %c0_64 = arith.constant 0 : index
    %c0_65 = arith.constant 0 : index
    %123 = vector.load %arg9[%c3_63, %c0_64, %c0_65] : memref<6x1x8xf32, #tpu.memory_space<vmem>>, vector<1x1x8xf32>
    %124 = vector.shape_cast %123 : vector<1x1x8xf32> to vector<1x8xf32>
    %125 = vector.broadcast %124 : vector<1x8xf32> to vector<16x8xf32>
    %126 = arith.addf %122, %125 : vector<16x8xf32>
    %c5 = arith.constant 5 : index
    %c0_66 = arith.constant 0 : index
    %c0_67 = arith.constant 0 : index
    %127 = vector.load %arg8[%c5, %c0_66, %c0_67] : memref<6x16x8xf32, #tpu.memory_space<vmem>>, vector<1x16x8xf32>
    %128 = vector.shape_cast %127 : vector<1x16x8xf32> to vector<16x8xf32>
    %129 = arith.truncf %57 : vector<16x16xf32> to vector<16x16xbf16>
    %130 = arith.truncf %128 : vector<16x8xf32> to vector<16x8xbf16>
    %cst_68 = arith.constant dense<0.000000e+00> : vector<16x8xf32>
    %131 = tpu.matmul %129, %130, %cst_68 {dimension_numbers = #tpu.dot_dimension_numbers<[1], [0], [0], [1], [0, 0, 1, 1], [], []>} : vector<16x16xbf16>, vector<16x8xbf16>, vector<16x8xf32> -> vector<16x8xf32>
    %c5_69 = arith.constant 5 : index
    %c0_70 = arith.constant 0 : index
    %c0_71 = arith.constant 0 : index
    %132 = vector.load %arg9[%c5_69, %c0_70, %c0_71] : memref<6x1x8xf32, #tpu.memory_space<vmem>>, vector<1x1x8xf32>
    %133 = vector.shape_cast %132 : vector<1x1x8xf32> to vector<1x8xf32>
    %134 = vector.broadcast %133 : vector<1x8xf32> to vector<16x8xf32>
    %135 = arith.addf %131, %134 : vector<16x8xf32>
    %136 = arith.truncf %117 : vector<16x8xf32> to vector<16x8xbf16>
    %137 = arith.truncf %126 : vector<16x8xf32> to vector<16x8xbf16>
    %cst_72 = arith.constant dense<0.000000e+00> : vector<16x16xf32>
    %138 = tpu.matmul %136, %137, %cst_72 {dimension_numbers = #tpu.dot_dimension_numbers<[1], [1], [0], [0], [0, 0, 1, 0], [], []>} : vector<16x8xbf16>, vector<16x8xbf16>, vector<16x16xf32> -> vector<16x16xf32>
    %cst_73 = arith.constant 0.353553385 : f32
    %139 = vector.broadcast %cst_73 : f32 to vector<16x16xf32>
    %140 = arith.mulf %138, %139 : vector<16x16xf32>
    %141 = arith.addf %140, %33 : vector<16x16xf32>
    %cst_74 = arith.constant dense<0xFF800000> : vector<16xf32>
    %142 = vector.multi_reduction <maximumf>, %141, %cst_74 [1] : vector<16x16xf32> to vector<16xf32>
    %143 = vector.shape_cast %142 : vector<16xf32> to vector<16x1xf32>
    %144 = vector.broadcast %143 : vector<16x1xf32> to vector<16x16xf32>
    %145 = arith.subf %141, %144 : vector<16x16xf32>
    %146 = math.exp %145 : vector<16x16xf32>
    %cst_75 = arith.constant dense<0.000000e+00> : vector<16xf32>
    %147 = vector.multi_reduction <add>, %146, %cst_75 [1] : vector<16x16xf32> to vector<16xf32>
    %148 = vector.shape_cast %147 : vector<16xf32> to vector<16x1xf32>
    %149 = tpu.reciprocal %148 {approx = true} : vector<16x1xf32> -> vector<16x1xf32>
    %150 = vector.broadcast %149 : vector<16x1xf32> to vector<16x16xf32>
    %151 = arith.mulf %146, %150 : vector<16x16xf32>
    %152 = arith.truncf %151 : vector<16x16xf32> to vector<16x16xbf16>
    %153 = arith.truncf %135 : vector<16x8xf32> to vector<16x8xbf16>
    %cst_76 = arith.constant dense<0.000000e+00> : vector<16x8xf32>
    %154 = tpu.matmul %152, %153, %cst_76 {dimension_numbers = #tpu.dot_dimension_numbers<[1], [0], [0], [1], [0, 0, 1, 1], [], []>} : vector<16x16xbf16>, vector<16x8xbf16>, vector<16x8xf32> -> vector<16x8xf32>
    %c1_77 = arith.constant 1 : index
    %c0_78 = arith.constant 0 : index
    %c0_79 = arith.constant 0 : index
    %155 = vector.load %arg10[%c1_77, %c0_78, %c0_79] : memref<2x8x16xf32, #tpu.memory_space<vmem>>, vector<1x8x16xf32>
    %156 = vector.shape_cast %155 : vector<1x8x16xf32> to vector<8x16xf32>
    %157 = arith.truncf %154 : vector<16x8xf32> to vector<16x8xbf16>
    %158 = arith.truncf %156 : vector<8x16xf32> to vector<8x16xbf16>
    %cst_80 = arith.constant dense<0.000000e+00> : vector<16x16xf32>
    %159 = tpu.matmul %157, %158, %cst_80 {dimension_numbers = #tpu.dot_dimension_numbers<[1], [0], [0], [1], [0, 0, 1, 1], [], []>} : vector<16x8xbf16>, vector<8x16xbf16>, vector<16x16xf32> -> vector<16x16xf32>
    %160 = arith.addf %108, %159 : vector<16x16xf32>
    %161 = arith.addf %32, %160 : vector<16x16xf32>
    %c0_81 = arith.constant 0 : index
    %c0_82 = arith.constant 0 : index
    %162 = vector.load %arg11[%c0_81, %c0_82] : memref<1x16xf32, #tpu.memory_space<vmem>>, vector<1x16xf32>
    %163 = vector.broadcast %162 : vector<1x16xf32> to vector<16x16xf32>
    %164 = arith.addf %161, %163 : vector<16x16xf32>
    %c0_83 = arith.constant 0 : index
    %c0_84 = arith.constant 0 : index
    %165 = vector.load %arg12[%c0_83, %c0_84] : memref<1x16xf32, #tpu.memory_space<vmem>>, vector<1x16xf32>
    %c0_85 = arith.constant 0 : index
    %c0_86 = arith.constant 0 : index
    %166 = vector.load %arg13[%c0_85, %c0_86] : memref<1x16xf32, #tpu.memory_space<vmem>>, vector<1x16xf32>
    %cst_87 = arith.constant dense<0.000000e+00> : vector<16xf32>
    %167 = vector.multi_reduction <add>, %164, %cst_87 [1] : vector<16x16xf32> to vector<16xf32>
    %168 = vector.shape_cast %167 : vector<16xf32> to vector<16x1xf32>
    %cst_88 = arith.constant 1.600000e+01 : f32
    %169 = vector.broadcast %cst_88 : f32 to vector<16x1xf32>
    %170 = arith.divf %168, %169 : vector<16x1xf32>
    %171 = vector.broadcast %170 : vector<16x1xf32> to vector<16x16xf32>
    %172 = arith.subf %164, %171 : vector<16x16xf32>
    %173 = arith.mulf %172, %172 : vector<16x16xf32>
    %cst_89 = arith.constant dense<0.000000e+00> : vector<16xf32>
    %174 = vector.multi_reduction <add>, %173, %cst_89 [1] : vector<16x16xf32> to vector<16xf32>
    %175 = vector.shape_cast %174 : vector<16xf32> to vector<16x1xf32>
    %cst_90 = arith.constant 1.600000e+01 : f32
    %176 = vector.broadcast %cst_90 : f32 to vector<16x1xf32>
    %177 = arith.divf %175, %176 : vector<16x1xf32>
    %178 = vector.broadcast %170 : vector<16x1xf32> to vector<16x16xf32>
    %179 = arith.subf %164, %178 : vector<16x16xf32>
    %cst_91 = arith.constant 9.99999974E-6 : f32
    %180 = vector.broadcast %cst_91 : f32 to vector<16x1xf32>
    %181 = arith.addf %177, %180 : vector<16x1xf32>
    %182 = math.rsqrt %181 : vector<16x1xf32>
    %183 = vector.broadcast %182 : vector<16x1xf32> to vector<16x16xf32>
    %184 = arith.mulf %179, %183 : vector<16x16xf32>
    %185 = vector.broadcast %165 : vector<1x16xf32> to vector<16x16xf32>
    %186 = arith.mulf %184, %185 : vector<16x16xf32>
    %187 = vector.broadcast %166 : vector<1x16xf32> to vector<16x16xf32>
    %188 = arith.addf %186, %187 : vector<16x16xf32>
    %c0_92 = arith.constant 0 : index
    %c0_93 = arith.constant 0 : index
    %189 = vector.load %arg14[%c0_92, %c0_93] : memref<16x64xf32, #tpu.memory_space<vmem>>, vector<16x64xf32>
    %190 = arith.truncf %188 : vector<16x16xf32> to vector<16x16xbf16>
    %191 = arith.truncf %189 : vector<16x64xf32> to vector<16x64xbf16>
    %cst_94 = arith.constant dense<0.000000e+00> : vector<16x64xf32>
    %192 = tpu.matmul %190, %191, %cst_94 {dimension_numbers = #tpu.dot_dimension_numbers<[1], [0], [0], [1], [0, 0, 1, 1], [], []>} : vector<16x16xbf16>, vector<16x64xbf16>, vector<16x64xf32> -> vector<16x64xf32>
    %c0_95 = arith.constant 0 : index
    %c0_96 = arith.constant 0 : index
    %193 = vector.load %arg15[%c0_95, %c0_96] : memref<1x64xf32, #tpu.memory_space<vmem>>, vector<1x64xf32>
    %194 = vector.broadcast %193 : vector<1x64xf32> to vector<16x64xf32>
    %195 = arith.addf %192, %194 : vector<16x64xf32>
    %196 = arith.mulf %195, %195 : vector<16x64xf32>
    %197 = arith.mulf %195, %196 : vector<16x64xf32>
    %cst_97 = arith.constant 4.471500e-02 : f32
    %198 = vector.broadcast %cst_97 : f32 to vector<16x64xf32>
    %199 = arith.mulf %198, %197 : vector<16x64xf32>
    %200 = arith.addf %195, %199 : vector<16x64xf32>
    %cst_98 = arith.constant 0.797884583 : f32
    %201 = vector.broadcast %cst_98 : f32 to vector<16x64xf32>
    %202 = arith.mulf %201, %200 : vector<16x64xf32>
    %203 = math.tanh %202 : vector<16x64xf32>
    %cst_99 = arith.constant 1.000000e+00 : f32
    %204 = vector.broadcast %cst_99 : f32 to vector<16x64xf32>
    %205 = arith.addf %204, %203 : vector<16x64xf32>
    %cst_100 = arith.constant 5.000000e-01 : f32
    %206 = vector.broadcast %cst_100 : f32 to vector<16x64xf32>
    %207 = arith.mulf %206, %205 : vector<16x64xf32>
    %208 = arith.mulf %195, %207 : vector<16x64xf32>
    %c0_101 = arith.constant 0 : index
    %c0_102 = arith.constant 0 : index
    %209 = vector.load %arg16[%c0_101, %c0_102] : memref<64x16xf32, #tpu.memory_space<vmem>>, vector<64x16xf32>
    %210 = arith.truncf %208 : vector<16x64xf32> to vector<16x64xbf16>
    %211 = arith.truncf %209 : vector<64x16xf32> to vector<64x16xbf16>
    %cst_103 = arith.constant dense<0.000000e+00> : vector<16x16xf32>
    %212 = tpu.matmul %210, %211, %cst_103 {dimension_numbers = #tpu.dot_dimension_numbers<[1], [0], [0], [1], [0, 0, 1, 1], [], []>} : vector<16x64xbf16>, vector<64x16xbf16>, vector<16x16xf32> -> vector<16x16xf32>
    %213 = arith.addf %164, %212 : vector<16x16xf32>
    %c0_104 = arith.constant 0 : index
    %c0_105 = arith.constant 0 : index
    %214 = vector.load %arg17[%c0_104, %c0_105] : memref<1x16xf32, #tpu.memory_space<vmem>>, vector<1x16xf32>
    %215 = vector.broadcast %214 : vector<1x16xf32> to vector<16x16xf32>
    %216 = arith.addf %213, %215 : vector<16x16xf32>
    %c0_106 = arith.constant 0 : index
    %c0_107 = arith.constant 0 : index
    %c0_108 = arith.constant 0 : index
    %217 = vector.load %arg19[%c0_106, %c0_107, %c0_108] : memref<1x16x16xf32, #tpu.memory_space<vmem>>, vector<1x16x16xf32>
    %218 = vector.shape_cast %217 : vector<1x16x16xf32> to vector<16x16xf32>
    %219 = vector.shape_cast %216 : vector<16x16xf32> to vector<1x16x16xf32>
    tpu.vector_store %arg19[%c0_106, %c0_107, %c0_108], %219 {strides = array<i32>} : memref<1x16x16xf32, #tpu.memory_space<vmem>>, vector<1x16x16xf32>,
    return
  }
  func.func @transform_0(%arg0: i32) -> (i32, i32, i32) {
    %c0_i32 = arith.constant 0 : i32
    %c0_i32_0 = arith.constant 0 : i32
    %c0_i32_1 = arith.constant 0 : i32
    return %arg0, %c0_i32, %c0_i32_0 : i32, i32, i32
  }
  func.func @transform_1(%arg0: i32) -> (i32, i32) {
    %c0_i32 = arith.constant 0 : i32
    %c0_i32_0 = arith.constant 0 : i32
    %c0_i32_1 = arith.constant 0 : i32
    return %c0_i32, %c0_i32_0 : i32, i32
  }
  func.func @transform_2(%arg0: i32) -> (i32, i32) {
    %c0_i32 = arith.constant 0 : i32
    %c0_i32_0 = arith.constant 0 : i32
    %c0_i32_1 = arith.constant 0 : i32
    return %c0_i32, %c0_i32_0 : i32, i32
  }
  func.func @transform_3(%arg0: i32) -> (i32, i32) {
    %c0_i32 = arith.constant 0 : i32
    %c0_i32_0 = arith.constant 0 : i32
    %c0_i32_1 = arith.constant 0 : i32
    return %c0_i32, %c0_i32_0 : i32, i32
  }
  func.func @transform_4(%arg0: i32) -> (i32, i32) {
    %c0_i32 = arith.constant 0 : i32
    %c0_i32_0 = arith.constant 0 : i32
    %c0_i32_1 = arith.constant 0 : i32
    return %c0_i32, %c0_i32_0 : i32, i32
  }
  func.func @transform_5(%arg0: i32) -> (i32, i32) {
    %c0_i32 = arith.constant 0 : i32
    %c0_i32_0 = arith.constant 0 : i32
    %c0_i32_1 = arith.constant 0 : i32
    return %c0_i32, %c0_i32_0 : i32, i32
  }
  func.func @transform_6(%arg0: i32) -> (i32, i32) {
    %c0_i32 = arith.constant 0 : i32
    %c0_i32_0 = arith.constant 0 : i32
    %c0_i32_1 = arith.constant 0 : i32
    return %c0_i32, %c0_i32_0 : i32, i32
  }
  func.func @transform_7(%arg0: i32) -> (i32, i32, i32) {
    %c0_i32 = arith.constant 0 : i32
    %c0_i32_0 = arith.constant 0 : i32
    %c0_i32_1 = arith.constant 0 : i32
    %c0_i32_2 = arith.constant 0 : i32
    return %c0_i32, %c0_i32_0, %c0_i32_1 : i32, i32, i32
  }
  func.func @transform_8(%arg0: i32) -> (i32, i32, i32) {
    %c0_i32 = arith.constant 0 : i32
    %c0_i32_0 = arith.constant 0 : i32
    %c0_i32_1 = arith.constant 0 : i32
    %c0_i32_2 = arith.constant 0 : i32
    return %c0_i32, %c0_i32_0, %c0_i32_1 : i32, i32, i32
  }
  func.func @transform_9(%arg0: i32) -> (i32, i32, i32) {
    %c0_i32 = arith.constant 0 : i32
    %c0_i32_0 = arith.constant 0 : i32
    %c0_i32_1 = arith.constant 0 : i32
    %c0_i32_2 = arith.constant 0 : i32
    return %c0_i32, %c0_i32_0, %c0_i32_1 : i32, i32, i32
  }
  func.func @transform_10(%arg0: i32) -> (i32, i32) {
    %c0_i32 = arith.constant 0 : i32
    %c0_i32_0 = arith.constant 0 : i32
    %c0_i32_1 = arith.constant 0 : i32
    return %c0_i32, %c0_i32_0 : i32, i32
  }
  func.func @transform_11(%arg0: i32) -> (i32, i32) {
    %c0_i32 = arith.constant 0 : i32
    %c0_i32_0 = arith.constant 0 : i32
    %c0_i32_1 = arith.constant 0 : i32
    return %c0_i32, %c0_i32_0 : i32, i32
  }
  func.func @transform_12(%arg0: i32) -> (i32, i32) {
    %c0_i32 = arith.constant 0 : i32
    %c0_i32_0 = arith.constant 0 : i32
    %c0_i32_1 = arith.constant 0 : i32
    return %c0_i32, %c0_i32_0 : i32, i32
  }
  func.func @transform_13(%arg0: i32) -> (i32, i32) {
    %c0_i32 = arith.constant 0 : i32
    %c0_i32_0 = arith.constant 0 : i32
    %c0_i32_1 = arith.constant 0 : i32
    return %c0_i32, %c0_i32_0 : i32, i32
  }
  func.func @transform_14(%arg0: i32) -> (i32, i32) {
    %c0_i32 = arith.constant 0 : i32
    %c0_i32_0 = arith.constant 0 : i32
    %c0_i32_1 = arith.constant 0 : i32
    return %c0_i32, %c0_i32_0 : i32, i32
  }
  func.func @transform_15(%arg0: i32) -> (i32, i32) {
    %c0_i32 = arith.constant 0 : i32
    %c0_i32_0 = arith.constant 0 : i32
    %c0_i32_1 = arith.constant 0 : i32
    return %c0_i32, %c0_i32_0 : i32, i32
  }
  func.func @transform_16(%arg0: i32) -> (i32, i32) {
    %c0_i32 = arith.constant 0 : i32
    %c0_i32_0 = arith.constant 0 : i32
    %c0_i32_1 = arith.constant 0 : i32
    return %c0_i32, %c0_i32_0 : i32, i32
  }
  func.func @transform_17(%arg0: i32) -> (i32, i32) {
    %c0_i32 = arith.constant 0 : i32
    %c0_i32_0 = arith.constant 0 : i32
    %c0_i32_1 = arith.constant 0 : i32
    return %c0_i32, %c0_i32_0 : i32, i32
  }
  func.func @transform_18(%arg0: i32) -> (i32, i32, i32) {
    %c0_i32 = arith.constant 0 : i32
    %c0_i32_0 = arith.constant 0 : i32
    %c0_i32_1 = arith.constant 0 : i32
    return %arg0, %c0_i32, %c0_i32_0 : i32, i32, i32
  }
}

module attributes {stable_mosaic.version = 11 : i64} {
  func.func @_stage_kernel(%arg0: i32, %arg1: memref<1x4x64xf32, #tpu.memory_space<vmem>>, %arg2: memref<64x32xf32, #tpu.memory_space<vmem>>, %arg3: memref<1x32xf32, #tpu.memory_space<vmem>>, %arg4: memref<1x32xf32, #tpu.memory_space<vmem>>, %arg5: memref<1x32xf32, #tpu.memory_space<vmem>>, %arg6: memref<12x32x8xf32, #tpu.memory_space<vmem>>, %arg7: memref<12x1x8xf32, #tpu.memory_space<vmem>>, %arg8: memref<4x8x32xf32, #tpu.memory_space<vmem>>, %arg9: memref<1x32xf32, #tpu.memory_space<vmem>>, %arg10: memref<1x32xf32, #tpu.memory_space<vmem>>, %arg11: memref<1x32xf32, #tpu.memory_space<vmem>>, %arg12: memref<32x128xf32, #tpu.memory_space<vmem>>, %arg13: memref<1x128xf32, #tpu.memory_space<vmem>>, %arg14: memref<128x32xf32, #tpu.memory_space<vmem>>, %arg15: memref<1x32xf32, #tpu.memory_space<vmem>>, %arg16: memref<32x4xf32, #tpu.memory_space<vmem>>, %arg17: memref<1x4xf32, #tpu.memory_space<vmem>>, %arg18: memref<1x4x4xf32, #tpu.memory_space<vmem>>) attributes {dimension_semantics = [#tpu.dimension_semantics<parallel>], iteration_bounds = array<i64: 2>, scalar_prefetch = 0 : i64, scratch_operands = 0 : i64, tpu.core_type = #tpu.core_type<tc>, window_params = [{transform_indices = @transform_0, window_bounds = array<i64: 1, 4, 64>}, {pipeline_mode = #tpu.pipeline_mode<synchronous>, transform_indices = @transform_1, window_bounds = array<i64: 64, 32>}, {pipeline_mode = #tpu.pipeline_mode<synchronous>, transform_indices = @transform_2, window_bounds = array<i64: 1, 32>}, {pipeline_mode = #tpu.pipeline_mode<synchronous>, transform_indices = @transform_3, window_bounds = array<i64: 1, 32>}, {pipeline_mode = #tpu.pipeline_mode<synchronous>, transform_indices = @transform_4, window_bounds = array<i64: 1, 32>}, {pipeline_mode = #tpu.pipeline_mode<synchronous>, transform_indices = @transform_5, window_bounds = array<i64: 12, 32, 8>}, {pipeline_mode = #tpu.pipeline_mode<synchronous>, transform_indices = @transform_6, window_bounds = array<i64: 12, 1, 8>}, {pipeline_mode = #tpu.pipeline_mode<synchronous>, transform_indices = @transform_7, window_bounds = array<i64: 4, 8, 32>}, {pipeline_mode = #tpu.pipeline_mode<synchronous>, transform_indices = @transform_8, window_bounds = array<i64: 1, 32>}, {pipeline_mode = #tpu.pipeline_mode<synchronous>, transform_indices = @transform_9, window_bounds = array<i64: 1, 32>}, {pipeline_mode = #tpu.pipeline_mode<synchronous>, transform_indices = @transform_10, window_bounds = array<i64: 1, 32>}, {pipeline_mode = #tpu.pipeline_mode<synchronous>, transform_indices = @transform_11, window_bounds = array<i64: 32, 128>}, {pipeline_mode = #tpu.pipeline_mode<synchronous>, transform_indices = @transform_12, window_bounds = array<i64: 1, 128>}, {pipeline_mode = #tpu.pipeline_mode<synchronous>, transform_indices = @transform_13, window_bounds = array<i64: 128, 32>}, {pipeline_mode = #tpu.pipeline_mode<synchronous>, transform_indices = @transform_14, window_bounds = array<i64: 1, 32>}, {pipeline_mode = #tpu.pipeline_mode<synchronous>, transform_indices = @transform_15, window_bounds = array<i64: 32, 4>}, {pipeline_mode = #tpu.pipeline_mode<synchronous>, transform_indices = @transform_16, window_bounds = array<i64: 1, 4>}, {transform_indices = @transform_17, window_bounds = array<i64: 1, 4, 4>}]} {
    %c0 = arith.constant 0 : index
    %c0_0 = arith.constant 0 : index
    %c0_1 = arith.constant 0 : index
    %0 = vector.load %arg1[%c0, %c0_0, %c0_1] : memref<1x4x64xf32, #tpu.memory_space<vmem>>, vector<1x4x64xf32>
    %1 = vector.shape_cast %0 : vector<1x4x64xf32> to vector<4x64xf32>
    %c0_2 = arith.constant 0 : index
    %c0_3 = arith.constant 0 : index
    %2 = vector.load %arg2[%c0_2, %c0_3] : memref<64x32xf32, #tpu.memory_space<vmem>>, vector<64x32xf32>
    %3 = arith.truncf %1 : vector<4x64xf32> to vector<4x64xbf16>
    %4 = arith.truncf %2 : vector<64x32xf32> to vector<64x32xbf16>
    %cst = arith.constant dense<0.000000e+00> : vector<4x32xf32>
    %5 = tpu.matmul %3, %4, %cst {dimension_numbers = #tpu.dot_dimension_numbers<[1], [0], [0], [1], [0, 0, 1, 1], [], []>} : vector<4x64xbf16>, vector<64x32xbf16>, vector<4x32xf32> -> vector<4x32xf32>
    %c0_4 = arith.constant 0 : index
    %c0_5 = arith.constant 0 : index
    %6 = vector.load %arg3[%c0_4, %c0_5] : memref<1x32xf32, #tpu.memory_space<vmem>>, vector<1x32xf32>
    %7 = vector.broadcast %6 : vector<1x32xf32> to vector<4x32xf32>
    %8 = arith.addf %5, %7 : vector<4x32xf32>
    %c0_6 = arith.constant 0 : index
    %c0_7 = arith.constant 0 : index
    %9 = vector.load %arg4[%c0_6, %c0_7] : memref<1x32xf32, #tpu.memory_space<vmem>>, vector<1x32xf32>
    %c0_8 = arith.constant 0 : index
    %c0_9 = arith.constant 0 : index
    %10 = vector.load %arg5[%c0_8, %c0_9] : memref<1x32xf32, #tpu.memory_space<vmem>>, vector<1x32xf32>
    %cst_10 = arith.constant dense<0.000000e+00> : vector<4xf32>
    %11 = vector.multi_reduction <add>, %8, %cst_10 [1] : vector<4x32xf32> to vector<4xf32>
    %12 = vector.shape_cast %11 : vector<4xf32> to vector<4x1xf32>
    %cst_11 = arith.constant 3.200000e+01 : f32
    %13 = vector.broadcast %cst_11 : f32 to vector<4x1xf32>
    %14 = arith.divf %12, %13 : vector<4x1xf32>
    %15 = vector.broadcast %14 : vector<4x1xf32> to vector<4x32xf32>
    %16 = arith.subf %8, %15 : vector<4x32xf32>
    %17 = arith.mulf %16, %16 : vector<4x32xf32>
    %cst_12 = arith.constant dense<0.000000e+00> : vector<4xf32>
    %18 = vector.multi_reduction <add>, %17, %cst_12 [1] : vector<4x32xf32> to vector<4xf32>
    %19 = vector.shape_cast %18 : vector<4xf32> to vector<4x1xf32>
    %cst_13 = arith.constant 3.200000e+01 : f32
    %20 = vector.broadcast %cst_13 : f32 to vector<4x1xf32>
    %21 = arith.divf %19, %20 : vector<4x1xf32>
    %22 = vector.broadcast %14 : vector<4x1xf32> to vector<4x32xf32>
    %23 = arith.subf %8, %22 : vector<4x32xf32>
    %cst_14 = arith.constant 9.99999974E-6 : f32
    %24 = vector.broadcast %cst_14 : f32 to vector<4x1xf32>
    %25 = arith.addf %21, %24 : vector<4x1xf32>
    %26 = math.rsqrt %25 : vector<4x1xf32>
    %27 = vector.broadcast %26 : vector<4x1xf32> to vector<4x32xf32>
    %28 = arith.mulf %23, %27 : vector<4x32xf32>
    %29 = vector.broadcast %9 : vector<1x32xf32> to vector<4x32xf32>
    %30 = arith.mulf %28, %29 : vector<4x32xf32>
    %31 = vector.broadcast %10 : vector<1x32xf32> to vector<4x32xf32>
    %32 = arith.addf %30, %31 : vector<4x32xf32>
    %c0_15 = arith.constant 0 : index
    %c0_16 = arith.constant 0 : index
    %c0_17 = arith.constant 0 : index
    %33 = vector.load %arg6[%c0_15, %c0_16, %c0_17] : memref<12x32x8xf32, #tpu.memory_space<vmem>>, vector<1x32x8xf32>
    %34 = vector.shape_cast %33 : vector<1x32x8xf32> to vector<32x8xf32>
    %35 = arith.truncf %32 : vector<4x32xf32> to vector<4x32xbf16>
    %36 = arith.truncf %34 : vector<32x8xf32> to vector<32x8xbf16>
    %cst_18 = arith.constant dense<0.000000e+00> : vector<4x8xf32>
    %37 = tpu.matmul %35, %36, %cst_18 {dimension_numbers = #tpu.dot_dimension_numbers<[1], [0], [0], [1], [0, 0, 1, 1], [], []>} : vector<4x32xbf16>, vector<32x8xbf16>, vector<4x8xf32> -> vector<4x8xf32>
    %c0_19 = arith.constant 0 : index
    %c0_20 = arith.constant 0 : index
    %c0_21 = arith.constant 0 : index
    %38 = vector.load %arg7[%c0_19, %c0_20, %c0_21] : memref<12x1x8xf32, #tpu.memory_space<vmem>>, vector<1x1x8xf32>
    %39 = vector.shape_cast %38 : vector<1x1x8xf32> to vector<1x8xf32>
    %40 = vector.broadcast %39 : vector<1x8xf32> to vector<4x8xf32>
    %41 = arith.addf %37, %40 : vector<4x8xf32>
    %c4 = arith.constant 4 : index
    %c0_22 = arith.constant 0 : index
    %c0_23 = arith.constant 0 : index
    %42 = vector.load %arg6[%c4, %c0_22, %c0_23] : memref<12x32x8xf32, #tpu.memory_space<vmem>>, vector<1x32x8xf32>
    %43 = vector.shape_cast %42 : vector<1x32x8xf32> to vector<32x8xf32>
    %44 = arith.truncf %32 : vector<4x32xf32> to vector<4x32xbf16>
    %45 = arith.truncf %43 : vector<32x8xf32> to vector<32x8xbf16>
    %cst_24 = arith.constant dense<0.000000e+00> : vector<4x8xf32>
    %46 = tpu.matmul %44, %45, %cst_24 {dimension_numbers = #tpu.dot_dimension_numbers<[1], [0], [0], [1], [0, 0, 1, 1], [], []>} : vector<4x32xbf16>, vector<32x8xbf16>, vector<4x8xf32> -> vector<4x8xf32>
    %c4_25 = arith.constant 4 : index
    %c0_26 = arith.constant 0 : index
    %c0_27 = arith.constant 0 : index
    %47 = vector.load %arg7[%c4_25, %c0_26, %c0_27] : memref<12x1x8xf32, #tpu.memory_space<vmem>>, vector<1x1x8xf32>
    %48 = vector.shape_cast %47 : vector<1x1x8xf32> to vector<1x8xf32>
    %49 = vector.broadcast %48 : vector<1x8xf32> to vector<4x8xf32>
    %50 = arith.addf %46, %49 : vector<4x8xf32>
    %c8 = arith.constant 8 : index
    %c0_28 = arith.constant 0 : index
    %c0_29 = arith.constant 0 : index
    %51 = vector.load %arg6[%c8, %c0_28, %c0_29] : memref<12x32x8xf32, #tpu.memory_space<vmem>>, vector<1x32x8xf32>
    %52 = vector.shape_cast %51 : vector<1x32x8xf32> to vector<32x8xf32>
    %53 = arith.truncf %32 : vector<4x32xf32> to vector<4x32xbf16>
    %54 = arith.truncf %52 : vector<32x8xf32> to vector<32x8xbf16>
    %cst_30 = arith.constant dense<0.000000e+00> : vector<4x8xf32>
    %55 = tpu.matmul %53, %54, %cst_30 {dimension_numbers = #tpu.dot_dimension_numbers<[1], [0], [0], [1], [0, 0, 1, 1], [], []>} : vector<4x32xbf16>, vector<32x8xbf16>, vector<4x8xf32> -> vector<4x8xf32>
    %c8_31 = arith.constant 8 : index
    %c0_32 = arith.constant 0 : index
    %c0_33 = arith.constant 0 : index
    %56 = vector.load %arg7[%c8_31, %c0_32, %c0_33] : memref<12x1x8xf32, #tpu.memory_space<vmem>>, vector<1x1x8xf32>
    %57 = vector.shape_cast %56 : vector<1x1x8xf32> to vector<1x8xf32>
    %58 = vector.broadcast %57 : vector<1x8xf32> to vector<4x8xf32>
    %59 = arith.addf %55, %58 : vector<4x8xf32>
    %60 = arith.truncf %41 : vector<4x8xf32> to vector<4x8xbf16>
    %61 = arith.truncf %50 : vector<4x8xf32> to vector<4x8xbf16>
    %cst_34 = arith.constant dense<0.000000e+00> : vector<4x4xf32>
    %62 = tpu.matmul %60, %61, %cst_34 {dimension_numbers = #tpu.dot_dimension_numbers<[1], [1], [0], [0], [0, 0, 1, 0], [], []>} : vector<4x8xbf16>, vector<4x8xbf16>, vector<4x4xf32> -> vector<4x4xf32>
    %cst_35 = arith.constant 0.353553385 : f32
    %63 = vector.broadcast %cst_35 : f32 to vector<4x4xf32>
    %64 = arith.mulf %62, %63 : vector<4x4xf32>
    %cst_36 = arith.constant dense<0xFF800000> : vector<4xf32>
    %65 = vector.multi_reduction <maximumf>, %64, %cst_36 [1] : vector<4x4xf32> to vector<4xf32>
    %66 = vector.shape_cast %65 : vector<4xf32> to vector<4x1xf32>
    %67 = vector.broadcast %66 : vector<4x1xf32> to vector<4x4xf32>
    %68 = arith.subf %64, %67 : vector<4x4xf32>
    %69 = math.exp %68 : vector<4x4xf32>
    %cst_37 = arith.constant dense<0.000000e+00> : vector<4xf32>
    %70 = vector.multi_reduction <add>, %69, %cst_37 [1] : vector<4x4xf32> to vector<4xf32>
    %71 = vector.shape_cast %70 : vector<4xf32> to vector<4x1xf32>
    %72 = tpu.reciprocal %71 {approx = true} : vector<4x1xf32> -> vector<4x1xf32>
    %73 = vector.broadcast %72 : vector<4x1xf32> to vector<4x4xf32>
    %74 = arith.mulf %69, %73 : vector<4x4xf32>
    %75 = arith.truncf %74 : vector<4x4xf32> to vector<4x4xbf16>
    %76 = arith.truncf %59 : vector<4x8xf32> to vector<4x8xbf16>
    %cst_38 = arith.constant dense<0.000000e+00> : vector<4x8xf32>
    %77 = tpu.matmul %75, %76, %cst_38 {dimension_numbers = #tpu.dot_dimension_numbers<[1], [0], [0], [1], [0, 0, 1, 1], [], []>} : vector<4x4xbf16>, vector<4x8xbf16>, vector<4x8xf32> -> vector<4x8xf32>
    %c0_39 = arith.constant 0 : index
    %c0_40 = arith.constant 0 : index
    %c0_41 = arith.constant 0 : index
    %78 = vector.load %arg8[%c0_39, %c0_40, %c0_41] : memref<4x8x32xf32, #tpu.memory_space<vmem>>, vector<1x8x32xf32>
    %79 = vector.shape_cast %78 : vector<1x8x32xf32> to vector<8x32xf32>
    %80 = arith.truncf %77 : vector<4x8xf32> to vector<4x8xbf16>
    %81 = arith.truncf %79 : vector<8x32xf32> to vector<8x32xbf16>
    %cst_42 = arith.constant dense<0.000000e+00> : vector<4x32xf32>
    %82 = tpu.matmul %80, %81, %cst_42 {dimension_numbers = #tpu.dot_dimension_numbers<[1], [0], [0], [1], [0, 0, 1, 1], [], []>} : vector<4x8xbf16>, vector<8x32xbf16>, vector<4x32xf32> -> vector<4x32xf32>
    %c1 = arith.constant 1 : index
    %c0_43 = arith.constant 0 : index
    %c0_44 = arith.constant 0 : index
    %83 = vector.load %arg6[%c1, %c0_43, %c0_44] : memref<12x32x8xf32, #tpu.memory_space<vmem>>, vector<1x32x8xf32>
    %84 = vector.shape_cast %83 : vector<1x32x8xf32> to vector<32x8xf32>
    %85 = arith.truncf %32 : vector<4x32xf32> to vector<4x32xbf16>
    %86 = arith.truncf %84 : vector<32x8xf32> to vector<32x8xbf16>
    %cst_45 = arith.constant dense<0.000000e+00> : vector<4x8xf32>
    %87 = tpu.matmul %85, %86, %cst_45 {dimension_numbers = #tpu.dot_dimension_numbers<[1], [0], [0], [1], [0, 0, 1, 1], [], []>} : vector<4x32xbf16>, vector<32x8xbf16>, vector<4x8xf32> -> vector<4x8xf32>
    %c1_46 = arith.constant 1 : index
    %c0_47 = arith.constant 0 : index
    %c0_48 = arith.constant 0 : index
    %88 = vector.load %arg7[%c1_46, %c0_47, %c0_48] : memref<12x1x8xf32, #tpu.memory_space<vmem>>, vector<1x1x8xf32>
    %89 = vector.shape_cast %88 : vector<1x1x8xf32> to vector<1x8xf32>
    %90 = vector.broadcast %89 : vector<1x8xf32> to vector<4x8xf32>
    %91 = arith.addf %87, %90 : vector<4x8xf32>
    %c5 = arith.constant 5 : index
    %c0_49 = arith.constant 0 : index
    %c0_50 = arith.constant 0 : index
    %92 = vector.load %arg6[%c5, %c0_49, %c0_50] : memref<12x32x8xf32, #tpu.memory_space<vmem>>, vector<1x32x8xf32>
    %93 = vector.shape_cast %92 : vector<1x32x8xf32> to vector<32x8xf32>
    %94 = arith.truncf %32 : vector<4x32xf32> to vector<4x32xbf16>
    %95 = arith.truncf %93 : vector<32x8xf32> to vector<32x8xbf16>
    %cst_51 = arith.constant dense<0.000000e+00> : vector<4x8xf32>
    %96 = tpu.matmul %94, %95, %cst_51 {dimension_numbers = #tpu.dot_dimension_numbers<[1], [0], [0], [1], [0, 0, 1, 1], [], []>} : vector<4x32xbf16>, vector<32x8xbf16>, vector<4x8xf32> -> vector<4x8xf32>
    %c5_52 = arith.constant 5 : index
    %c0_53 = arith.constant 0 : index
    %c0_54 = arith.constant 0 : index
    %97 = vector.load %arg7[%c5_52, %c0_53, %c0_54] : memref<12x1x8xf32, #tpu.memory_space<vmem>>, vector<1x1x8xf32>
    %98 = vector.shape_cast %97 : vector<1x1x8xf32> to vector<1x8xf32>
    %99 = vector.broadcast %98 : vector<1x8xf32> to vector<4x8xf32>
    %100 = arith.addf %96, %99 : vector<4x8xf32>
    %c9 = arith.constant 9 : index
    %c0_55 = arith.constant 0 : index
    %c0_56 = arith.constant 0 : index
    %101 = vector.load %arg6[%c9, %c0_55, %c0_56] : memref<12x32x8xf32, #tpu.memory_space<vmem>>, vector<1x32x8xf32>
    %102 = vector.shape_cast %101 : vector<1x32x8xf32> to vector<32x8xf32>
    %103 = arith.truncf %32 : vector<4x32xf32> to vector<4x32xbf16>
    %104 = arith.truncf %102 : vector<32x8xf32> to vector<32x8xbf16>
    %cst_57 = arith.constant dense<0.000000e+00> : vector<4x8xf32>
    %105 = tpu.matmul %103, %104, %cst_57 {dimension_numbers = #tpu.dot_dimension_numbers<[1], [0], [0], [1], [0, 0, 1, 1], [], []>} : vector<4x32xbf16>, vector<32x8xbf16>, vector<4x8xf32> -> vector<4x8xf32>
    %c9_58 = arith.constant 9 : index
    %c0_59 = arith.constant 0 : index
    %c0_60 = arith.constant 0 : index
    %106 = vector.load %arg7[%c9_58, %c0_59, %c0_60] : memref<12x1x8xf32, #tpu.memory_space<vmem>>, vector<1x1x8xf32>
    %107 = vector.shape_cast %106 : vector<1x1x8xf32> to vector<1x8xf32>
    %108 = vector.broadcast %107 : vector<1x8xf32> to vector<4x8xf32>
    %109 = arith.addf %105, %108 : vector<4x8xf32>
    %110 = arith.truncf %91 : vector<4x8xf32> to vector<4x8xbf16>
    %111 = arith.truncf %100 : vector<4x8xf32> to vector<4x8xbf16>
    %cst_61 = arith.constant dense<0.000000e+00> : vector<4x4xf32>
    %112 = tpu.matmul %110, %111, %cst_61 {dimension_numbers = #tpu.dot_dimension_numbers<[1], [1], [0], [0], [0, 0, 1, 0], [], []>} : vector<4x8xbf16>, vector<4x8xbf16>, vector<4x4xf32> -> vector<4x4xf32>
    %cst_62 = arith.constant 0.353553385 : f32
    %113 = vector.broadcast %cst_62 : f32 to vector<4x4xf32>
    %114 = arith.mulf %112, %113 : vector<4x4xf32>
    %cst_63 = arith.constant dense<0xFF800000> : vector<4xf32>
    %115 = vector.multi_reduction <maximumf>, %114, %cst_63 [1] : vector<4x4xf32> to vector<4xf32>
    %116 = vector.shape_cast %115 : vector<4xf32> to vector<4x1xf32>
    %117 = vector.broadcast %116 : vector<4x1xf32> to vector<4x4xf32>
    %118 = arith.subf %114, %117 : vector<4x4xf32>
    %119 = math.exp %118 : vector<4x4xf32>
    %cst_64 = arith.constant dense<0.000000e+00> : vector<4xf32>
    %120 = vector.multi_reduction <add>, %119, %cst_64 [1] : vector<4x4xf32> to vector<4xf32>
    %121 = vector.shape_cast %120 : vector<4xf32> to vector<4x1xf32>
    %122 = tpu.reciprocal %121 {approx = true} : vector<4x1xf32> -> vector<4x1xf32>
    %123 = vector.broadcast %122 : vector<4x1xf32> to vector<4x4xf32>
    %124 = arith.mulf %119, %123 : vector<4x4xf32>
    %125 = arith.truncf %124 : vector<4x4xf32> to vector<4x4xbf16>
    %126 = arith.truncf %109 : vector<4x8xf32> to vector<4x8xbf16>
    %cst_65 = arith.constant dense<0.000000e+00> : vector<4x8xf32>
    %127 = tpu.matmul %125, %126, %cst_65 {dimension_numbers = #tpu.dot_dimension_numbers<[1], [0], [0], [1], [0, 0, 1, 1], [], []>} : vector<4x4xbf16>, vector<4x8xbf16>, vector<4x8xf32> -> vector<4x8xf32>
    %c1_66 = arith.constant 1 : index
    %c0_67 = arith.constant 0 : index
    %c0_68 = arith.constant 0 : index
    %128 = vector.load %arg8[%c1_66, %c0_67, %c0_68] : memref<4x8x32xf32, #tpu.memory_space<vmem>>, vector<1x8x32xf32>
    %129 = vector.shape_cast %128 : vector<1x8x32xf32> to vector<8x32xf32>
    %130 = arith.truncf %127 : vector<4x8xf32> to vector<4x8xbf16>
    %131 = arith.truncf %129 : vector<8x32xf32> to vector<8x32xbf16>
    %cst_69 = arith.constant dense<0.000000e+00> : vector<4x32xf32>
    %132 = tpu.matmul %130, %131, %cst_69 {dimension_numbers = #tpu.dot_dimension_numbers<[1], [0], [0], [1], [0, 0, 1, 1], [], []>} : vector<4x8xbf16>, vector<8x32xbf16>, vector<4x32xf32> -> vector<4x32xf32>
    %133 = arith.addf %82, %132 : vector<4x32xf32>
    %c2 = arith.constant 2 : index
    %c0_70 = arith.constant 0 : index
    %c0_71 = arith.constant 0 : index
    %134 = vector.load %arg6[%c2, %c0_70, %c0_71] : memref<12x32x8xf32, #tpu.memory_space<vmem>>, vector<1x32x8xf32>
    %135 = vector.shape_cast %134 : vector<1x32x8xf32> to vector<32x8xf32>
    %136 = arith.truncf %32 : vector<4x32xf32> to vector<4x32xbf16>
    %137 = arith.truncf %135 : vector<32x8xf32> to vector<32x8xbf16>
    %cst_72 = arith.constant dense<0.000000e+00> : vector<4x8xf32>
    %138 = tpu.matmul %136, %137, %cst_72 {dimension_numbers = #tpu.dot_dimension_numbers<[1], [0], [0], [1], [0, 0, 1, 1], [], []>} : vector<4x32xbf16>, vector<32x8xbf16>, vector<4x8xf32> -> vector<4x8xf32>
    %c2_73 = arith.constant 2 : index
    %c0_74 = arith.constant 0 : index
    %c0_75 = arith.constant 0 : index
    %139 = vector.load %arg7[%c2_73, %c0_74, %c0_75] : memref<12x1x8xf32, #tpu.memory_space<vmem>>, vector<1x1x8xf32>
    %140 = vector.shape_cast %139 : vector<1x1x8xf32> to vector<1x8xf32>
    %141 = vector.broadcast %140 : vector<1x8xf32> to vector<4x8xf32>
    %142 = arith.addf %138, %141 : vector<4x8xf32>
    %c6 = arith.constant 6 : index
    %c0_76 = arith.constant 0 : index
    %c0_77 = arith.constant 0 : index
    %143 = vector.load %arg6[%c6, %c0_76, %c0_77] : memref<12x32x8xf32, #tpu.memory_space<vmem>>, vector<1x32x8xf32>
    %144 = vector.shape_cast %143 : vector<1x32x8xf32> to vector<32x8xf32>
    %145 = arith.truncf %32 : vector<4x32xf32> to vector<4x32xbf16>
    %146 = arith.truncf %144 : vector<32x8xf32> to vector<32x8xbf16>
    %cst_78 = arith.constant dense<0.000000e+00> : vector<4x8xf32>
    %147 = tpu.matmul %145, %146, %cst_78 {dimension_numbers = #tpu.dot_dimension_numbers<[1], [0], [0], [1], [0, 0, 1, 1], [], []>} : vector<4x32xbf16>, vector<32x8xbf16>, vector<4x8xf32> -> vector<4x8xf32>
    %c6_79 = arith.constant 6 : index
    %c0_80 = arith.constant 0 : index
    %c0_81 = arith.constant 0 : index
    %148 = vector.load %arg7[%c6_79, %c0_80, %c0_81] : memref<12x1x8xf32, #tpu.memory_space<vmem>>, vector<1x1x8xf32>
    %149 = vector.shape_cast %148 : vector<1x1x8xf32> to vector<1x8xf32>
    %150 = vector.broadcast %149 : vector<1x8xf32> to vector<4x8xf32>
    %151 = arith.addf %147, %150 : vector<4x8xf32>
    %c10 = arith.constant 10 : index
    %c0_82 = arith.constant 0 : index
    %c0_83 = arith.constant 0 : index
    %152 = vector.load %arg6[%c10, %c0_82, %c0_83] : memref<12x32x8xf32, #tpu.memory_space<vmem>>, vector<1x32x8xf32>
    %153 = vector.shape_cast %152 : vector<1x32x8xf32> to vector<32x8xf32>
    %154 = arith.truncf %32 : vector<4x32xf32> to vector<4x32xbf16>
    %155 = arith.truncf %153 : vector<32x8xf32> to vector<32x8xbf16>
    %cst_84 = arith.constant dense<0.000000e+00> : vector<4x8xf32>
    %156 = tpu.matmul %154, %155, %cst_84 {dimension_numbers = #tpu.dot_dimension_numbers<[1], [0], [0], [1], [0, 0, 1, 1], [], []>} : vector<4x32xbf16>, vector<32x8xbf16>, vector<4x8xf32> -> vector<4x8xf32>
    %c10_85 = arith.constant 10 : index
    %c0_86 = arith.constant 0 : index
    %c0_87 = arith.constant 0 : index
    %157 = vector.load %arg7[%c10_85, %c0_86, %c0_87] : memref<12x1x8xf32, #tpu.memory_space<vmem>>, vector<1x1x8xf32>
    %158 = vector.shape_cast %157 : vector<1x1x8xf32> to vector<1x8xf32>
    %159 = vector.broadcast %158 : vector<1x8xf32> to vector<4x8xf32>
    %160 = arith.addf %156, %159 : vector<4x8xf32>
    %161 = arith.truncf %142 : vector<4x8xf32> to vector<4x8xbf16>
    %162 = arith.truncf %151 : vector<4x8xf32> to vector<4x8xbf16>
    %cst_88 = arith.constant dense<0.000000e+00> : vector<4x4xf32>
    %163 = tpu.matmul %161, %162, %cst_88 {dimension_numbers = #tpu.dot_dimension_numbers<[1], [1], [0], [0], [0, 0, 1, 0], [], []>} : vector<4x8xbf16>, vector<4x8xbf16>, vector<4x4xf32> -> vector<4x4xf32>
    %cst_89 = arith.constant 0.353553385 : f32
    %164 = vector.broadcast %cst_89 : f32 to vector<4x4xf32>
    %165 = arith.mulf %163, %164 : vector<4x4xf32>
    %cst_90 = arith.constant dense<0xFF800000> : vector<4xf32>
    %166 = vector.multi_reduction <maximumf>, %165, %cst_90 [1] : vector<4x4xf32> to vector<4xf32>
    %167 = vector.shape_cast %166 : vector<4xf32> to vector<4x1xf32>
    %168 = vector.broadcast %167 : vector<4x1xf32> to vector<4x4xf32>
    %169 = arith.subf %165, %168 : vector<4x4xf32>
    %170 = math.exp %169 : vector<4x4xf32>
    %cst_91 = arith.constant dense<0.000000e+00> : vector<4xf32>
    %171 = vector.multi_reduction <add>, %170, %cst_91 [1] : vector<4x4xf32> to vector<4xf32>
    %172 = vector.shape_cast %171 : vector<4xf32> to vector<4x1xf32>
    %173 = tpu.reciprocal %172 {approx = true} : vector<4x1xf32> -> vector<4x1xf32>
    %174 = vector.broadcast %173 : vector<4x1xf32> to vector<4x4xf32>
    %175 = arith.mulf %170, %174 : vector<4x4xf32>
    %176 = arith.truncf %175 : vector<4x4xf32> to vector<4x4xbf16>
    %177 = arith.truncf %160 : vector<4x8xf32> to vector<4x8xbf16>
    %cst_92 = arith.constant dense<0.000000e+00> : vector<4x8xf32>
    %178 = tpu.matmul %176, %177, %cst_92 {dimension_numbers = #tpu.dot_dimension_numbers<[1], [0], [0], [1], [0, 0, 1, 1], [], []>} : vector<4x4xbf16>, vector<4x8xbf16>, vector<4x8xf32> -> vector<4x8xf32>
    %c2_93 = arith.constant 2 : index
    %c0_94 = arith.constant 0 : index
    %c0_95 = arith.constant 0 : index
    %179 = vector.load %arg8[%c2_93, %c0_94, %c0_95] : memref<4x8x32xf32, #tpu.memory_space<vmem>>, vector<1x8x32xf32>
    %180 = vector.shape_cast %179 : vector<1x8x32xf32> to vector<8x32xf32>
    %181 = arith.truncf %178 : vector<4x8xf32> to vector<4x8xbf16>
    %182 = arith.truncf %180 : vector<8x32xf32> to vector<8x32xbf16>
    %cst_96 = arith.constant dense<0.000000e+00> : vector<4x32xf32>
    %183 = tpu.matmul %181, %182, %cst_96 {dimension_numbers = #tpu.dot_dimension_numbers<[1], [0], [0], [1], [0, 0, 1, 1], [], []>} : vector<4x8xbf16>, vector<8x32xbf16>, vector<4x32xf32> -> vector<4x32xf32>
    %184 = arith.addf %133, %183 : vector<4x32xf32>
    %c3 = arith.constant 3 : index
    %c0_97 = arith.constant 0 : index
    %c0_98 = arith.constant 0 : index
    %185 = vector.load %arg6[%c3, %c0_97, %c0_98] : memref<12x32x8xf32, #tpu.memory_space<vmem>>, vector<1x32x8xf32>
    %186 = vector.shape_cast %185 : vector<1x32x8xf32> to vector<32x8xf32>
    %187 = arith.truncf %32 : vector<4x32xf32> to vector<4x32xbf16>
    %188 = arith.truncf %186 : vector<32x8xf32> to vector<32x8xbf16>
    %cst_99 = arith.constant dense<0.000000e+00> : vector<4x8xf32>
    %189 = tpu.matmul %187, %188, %cst_99 {dimension_numbers = #tpu.dot_dimension_numbers<[1], [0], [0], [1], [0, 0, 1, 1], [], []>} : vector<4x32xbf16>, vector<32x8xbf16>, vector<4x8xf32> -> vector<4x8xf32>
    %c3_100 = arith.constant 3 : index
    %c0_101 = arith.constant 0 : index
    %c0_102 = arith.constant 0 : index
    %190 = vector.load %arg7[%c3_100, %c0_101, %c0_102] : memref<12x1x8xf32, #tpu.memory_space<vmem>>, vector<1x1x8xf32>
    %191 = vector.shape_cast %190 : vector<1x1x8xf32> to vector<1x8xf32>
    %192 = vector.broadcast %191 : vector<1x8xf32> to vector<4x8xf32>
    %193 = arith.addf %189, %192 : vector<4x8xf32>
    %c7 = arith.constant 7 : index
    %c0_103 = arith.constant 0 : index
    %c0_104 = arith.constant 0 : index
    %194 = vector.load %arg6[%c7, %c0_103, %c0_104] : memref<12x32x8xf32, #tpu.memory_space<vmem>>, vector<1x32x8xf32>
    %195 = vector.shape_cast %194 : vector<1x32x8xf32> to vector<32x8xf32>
    %196 = arith.truncf %32 : vector<4x32xf32> to vector<4x32xbf16>
    %197 = arith.truncf %195 : vector<32x8xf32> to vector<32x8xbf16>
    %cst_105 = arith.constant dense<0.000000e+00> : vector<4x8xf32>
    %198 = tpu.matmul %196, %197, %cst_105 {dimension_numbers = #tpu.dot_dimension_numbers<[1], [0], [0], [1], [0, 0, 1, 1], [], []>} : vector<4x32xbf16>, vector<32x8xbf16>, vector<4x8xf32> -> vector<4x8xf32>
    %c7_106 = arith.constant 7 : index
    %c0_107 = arith.constant 0 : index
    %c0_108 = arith.constant 0 : index
    %199 = vector.load %arg7[%c7_106, %c0_107, %c0_108] : memref<12x1x8xf32, #tpu.memory_space<vmem>>, vector<1x1x8xf32>
    %200 = vector.shape_cast %199 : vector<1x1x8xf32> to vector<1x8xf32>
    %201 = vector.broadcast %200 : vector<1x8xf32> to vector<4x8xf32>
    %202 = arith.addf %198, %201 : vector<4x8xf32>
    %c11 = arith.constant 11 : index
    %c0_109 = arith.constant 0 : index
    %c0_110 = arith.constant 0 : index
    %203 = vector.load %arg6[%c11, %c0_109, %c0_110] : memref<12x32x8xf32, #tpu.memory_space<vmem>>, vector<1x32x8xf32>
    %204 = vector.shape_cast %203 : vector<1x32x8xf32> to vector<32x8xf32>
    %205 = arith.truncf %32 : vector<4x32xf32> to vector<4x32xbf16>
    %206 = arith.truncf %204 : vector<32x8xf32> to vector<32x8xbf16>
    %cst_111 = arith.constant dense<0.000000e+00> : vector<4x8xf32>
    %207 = tpu.matmul %205, %206, %cst_111 {dimension_numbers = #tpu.dot_dimension_numbers<[1], [0], [0], [1], [0, 0, 1, 1], [], []>} : vector<4x32xbf16>, vector<32x8xbf16>, vector<4x8xf32> -> vector<4x8xf32>
    %c11_112 = arith.constant 11 : index
    %c0_113 = arith.constant 0 : index
    %c0_114 = arith.constant 0 : index
    %208 = vector.load %arg7[%c11_112, %c0_113, %c0_114] : memref<12x1x8xf32, #tpu.memory_space<vmem>>, vector<1x1x8xf32>
    %209 = vector.shape_cast %208 : vector<1x1x8xf32> to vector<1x8xf32>
    %210 = vector.broadcast %209 : vector<1x8xf32> to vector<4x8xf32>
    %211 = arith.addf %207, %210 : vector<4x8xf32>
    %212 = arith.truncf %193 : vector<4x8xf32> to vector<4x8xbf16>
    %213 = arith.truncf %202 : vector<4x8xf32> to vector<4x8xbf16>
    %cst_115 = arith.constant dense<0.000000e+00> : vector<4x4xf32>
    %214 = tpu.matmul %212, %213, %cst_115 {dimension_numbers = #tpu.dot_dimension_numbers<[1], [1], [0], [0], [0, 0, 1, 0], [], []>} : vector<4x8xbf16>, vector<4x8xbf16>, vector<4x4xf32> -> vector<4x4xf32>
    %cst_116 = arith.constant 0.353553385 : f32
    %215 = vector.broadcast %cst_116 : f32 to vector<4x4xf32>
    %216 = arith.mulf %214, %215 : vector<4x4xf32>
    %cst_117 = arith.constant dense<0xFF800000> : vector<4xf32>
    %217 = vector.multi_reduction <maximumf>, %216, %cst_117 [1] : vector<4x4xf32> to vector<4xf32>
    %218 = vector.shape_cast %217 : vector<4xf32> to vector<4x1xf32>
    %219 = vector.broadcast %218 : vector<4x1xf32> to vector<4x4xf32>
    %220 = arith.subf %216, %219 : vector<4x4xf32>
    %221 = math.exp %220 : vector<4x4xf32>
    %cst_118 = arith.constant dense<0.000000e+00> : vector<4xf32>
    %222 = vector.multi_reduction <add>, %221, %cst_118 [1] : vector<4x4xf32> to vector<4xf32>
    %223 = vector.shape_cast %222 : vector<4xf32> to vector<4x1xf32>
    %224 = tpu.reciprocal %223 {approx = true} : vector<4x1xf32> -> vector<4x1xf32>
    %225 = vector.broadcast %224 : vector<4x1xf32> to vector<4x4xf32>
    %226 = arith.mulf %221, %225 : vector<4x4xf32>
    %227 = arith.truncf %226 : vector<4x4xf32> to vector<4x4xbf16>
    %228 = arith.truncf %211 : vector<4x8xf32> to vector<4x8xbf16>
    %cst_119 = arith.constant dense<0.000000e+00> : vector<4x8xf32>
    %229 = tpu.matmul %227, %228, %cst_119 {dimension_numbers = #tpu.dot_dimension_numbers<[1], [0], [0], [1], [0, 0, 1, 1], [], []>} : vector<4x4xbf16>, vector<4x8xbf16>, vector<4x8xf32> -> vector<4x8xf32>
    %c3_120 = arith.constant 3 : index
    %c0_121 = arith.constant 0 : index
    %c0_122 = arith.constant 0 : index
    %230 = vector.load %arg8[%c3_120, %c0_121, %c0_122] : memref<4x8x32xf32, #tpu.memory_space<vmem>>, vector<1x8x32xf32>
    %231 = vector.shape_cast %230 : vector<1x8x32xf32> to vector<8x32xf32>
    %232 = arith.truncf %229 : vector<4x8xf32> to vector<4x8xbf16>
    %233 = arith.truncf %231 : vector<8x32xf32> to vector<8x32xbf16>
    %cst_123 = arith.constant dense<0.000000e+00> : vector<4x32xf32>
    %234 = tpu.matmul %232, %233, %cst_123 {dimension_numbers = #tpu.dot_dimension_numbers<[1], [0], [0], [1], [0, 0, 1, 1], [], []>} : vector<4x8xbf16>, vector<8x32xbf16>, vector<4x32xf32> -> vector<4x32xf32>
    %235 = arith.addf %184, %234 : vector<4x32xf32>
    %236 = arith.addf %8, %235 : vector<4x32xf32>
    %c0_124 = arith.constant 0 : index
    %c0_125 = arith.constant 0 : index
    %237 = vector.load %arg9[%c0_124, %c0_125] : memref<1x32xf32, #tpu.memory_space<vmem>>, vector<1x32xf32>
    %238 = vector.broadcast %237 : vector<1x32xf32> to vector<4x32xf32>
    %239 = arith.addf %236, %238 : vector<4x32xf32>
    %c0_126 = arith.constant 0 : index
    %c0_127 = arith.constant 0 : index
    %240 = vector.load %arg10[%c0_126, %c0_127] : memref<1x32xf32, #tpu.memory_space<vmem>>, vector<1x32xf32>
    %c0_128 = arith.constant 0 : index
    %c0_129 = arith.constant 0 : index
    %241 = vector.load %arg11[%c0_128, %c0_129] : memref<1x32xf32, #tpu.memory_space<vmem>>, vector<1x32xf32>
    %cst_130 = arith.constant dense<0.000000e+00> : vector<4xf32>
    %242 = vector.multi_reduction <add>, %239, %cst_130 [1] : vector<4x32xf32> to vector<4xf32>
    %243 = vector.shape_cast %242 : vector<4xf32> to vector<4x1xf32>
    %cst_131 = arith.constant 3.200000e+01 : f32
    %244 = vector.broadcast %cst_131 : f32 to vector<4x1xf32>
    %245 = arith.divf %243, %244 : vector<4x1xf32>
    %246 = vector.broadcast %245 : vector<4x1xf32> to vector<4x32xf32>
    %247 = arith.subf %239, %246 : vector<4x32xf32>
    %248 = arith.mulf %247, %247 : vector<4x32xf32>
    %cst_132 = arith.constant dense<0.000000e+00> : vector<4xf32>
    %249 = vector.multi_reduction <add>, %248, %cst_132 [1] : vector<4x32xf32> to vector<4xf32>
    %250 = vector.shape_cast %249 : vector<4xf32> to vector<4x1xf32>
    %cst_133 = arith.constant 3.200000e+01 : f32
    %251 = vector.broadcast %cst_133 : f32 to vector<4x1xf32>
    %252 = arith.divf %250, %251 : vector<4x1xf32>
    %253 = vector.broadcast %245 : vector<4x1xf32> to vector<4x32xf32>
    %254 = arith.subf %239, %253 : vector<4x32xf32>
    %cst_134 = arith.constant 9.99999974E-6 : f32
    %255 = vector.broadcast %cst_134 : f32 to vector<4x1xf32>
    %256 = arith.addf %252, %255 : vector<4x1xf32>
    %257 = math.rsqrt %256 : vector<4x1xf32>
    %258 = vector.broadcast %257 : vector<4x1xf32> to vector<4x32xf32>
    %259 = arith.mulf %254, %258 : vector<4x32xf32>
    %260 = vector.broadcast %240 : vector<1x32xf32> to vector<4x32xf32>
    %261 = arith.mulf %259, %260 : vector<4x32xf32>
    %262 = vector.broadcast %241 : vector<1x32xf32> to vector<4x32xf32>
    %263 = arith.addf %261, %262 : vector<4x32xf32>
    %c0_135 = arith.constant 0 : index
    %c0_136 = arith.constant 0 : index
    %264 = vector.load %arg12[%c0_135, %c0_136] : memref<32x128xf32, #tpu.memory_space<vmem>>, vector<32x128xf32>
    %265 = arith.truncf %263 : vector<4x32xf32> to vector<4x32xbf16>
    %266 = arith.truncf %264 : vector<32x128xf32> to vector<32x128xbf16>
    %cst_137 = arith.constant dense<0.000000e+00> : vector<4x128xf32>
    %267 = tpu.matmul %265, %266, %cst_137 {dimension_numbers = #tpu.dot_dimension_numbers<[1], [0], [0], [1], [0, 0, 1, 1], [], []>} : vector<4x32xbf16>, vector<32x128xbf16>, vector<4x128xf32> -> vector<4x128xf32>
    %c0_138 = arith.constant 0 : index
    %c0_139 = arith.constant 0 : index
    %268 = vector.load %arg13[%c0_138, %c0_139] : memref<1x128xf32, #tpu.memory_space<vmem>>, vector<1x128xf32>
    %269 = vector.broadcast %268 : vector<1x128xf32> to vector<4x128xf32>
    %270 = arith.addf %267, %269 : vector<4x128xf32>
    %271 = arith.mulf %270, %270 : vector<4x128xf32>
    %272 = arith.mulf %270, %271 : vector<4x128xf32>
    %cst_140 = arith.constant 4.471500e-02 : f32
    %273 = vector.broadcast %cst_140 : f32 to vector<4x128xf32>
    %274 = arith.mulf %273, %272 : vector<4x128xf32>
    %275 = arith.addf %270, %274 : vector<4x128xf32>
    %cst_141 = arith.constant 0.797884583 : f32
    %276 = vector.broadcast %cst_141 : f32 to vector<4x128xf32>
    %277 = arith.mulf %276, %275 : vector<4x128xf32>
    %278 = math.tanh %277 : vector<4x128xf32>
    %cst_142 = arith.constant 1.000000e+00 : f32
    %279 = vector.broadcast %cst_142 : f32 to vector<4x128xf32>
    %280 = arith.addf %279, %278 : vector<4x128xf32>
    %cst_143 = arith.constant 5.000000e-01 : f32
    %281 = vector.broadcast %cst_143 : f32 to vector<4x128xf32>
    %282 = arith.mulf %281, %280 : vector<4x128xf32>
    %283 = arith.mulf %270, %282 : vector<4x128xf32>
    %c0_144 = arith.constant 0 : index
    %c0_145 = arith.constant 0 : index
    %284 = vector.load %arg14[%c0_144, %c0_145] : memref<128x32xf32, #tpu.memory_space<vmem>>, vector<128x32xf32>
    %285 = arith.truncf %283 : vector<4x128xf32> to vector<4x128xbf16>
    %286 = arith.truncf %284 : vector<128x32xf32> to vector<128x32xbf16>
    %cst_146 = arith.constant dense<0.000000e+00> : vector<4x32xf32>
    %287 = tpu.matmul %285, %286, %cst_146 {dimension_numbers = #tpu.dot_dimension_numbers<[1], [0], [0], [1], [0, 0, 1, 1], [], []>} : vector<4x128xbf16>, vector<128x32xbf16>, vector<4x32xf32> -> vector<4x32xf32>
    %288 = arith.addf %239, %287 : vector<4x32xf32>
    %c0_147 = arith.constant 0 : index
    %c0_148 = arith.constant 0 : index
    %289 = vector.load %arg15[%c0_147, %c0_148] : memref<1x32xf32, #tpu.memory_space<vmem>>, vector<1x32xf32>
    %290 = vector.broadcast %289 : vector<1x32xf32> to vector<4x32xf32>
    %291 = arith.addf %288, %290 : vector<4x32xf32>
    %c0_149 = arith.constant 0 : index
    %c0_150 = arith.constant 0 : index
    %292 = vector.load %arg16[%c0_149, %c0_150] : memref<32x4xf32, #tpu.memory_space<vmem>>, vector<32x4xf32>
    %293 = arith.truncf %291 : vector<4x32xf32> to vector<4x32xbf16>
    %294 = arith.truncf %292 : vector<32x4xf32> to vector<32x4xbf16>
    %cst_151 = arith.constant dense<0.000000e+00> : vector<4x4xf32>
    %295 = tpu.matmul %293, %294, %cst_151 {dimension_numbers = #tpu.dot_dimension_numbers<[1], [0], [0], [1], [0, 0, 1, 1], [], []>} : vector<4x32xbf16>, vector<32x4xbf16>, vector<4x4xf32> -> vector<4x4xf32>
    %c0_152 = arith.constant 0 : index
    %c0_153 = arith.constant 0 : index
    %296 = vector.load %arg17[%c0_152, %c0_153] : memref<1x4xf32, #tpu.memory_space<vmem>>, vector<1x4xf32>
    %297 = vector.broadcast %296 : vector<1x4xf32> to vector<4x4xf32>
    %298 = arith.addf %295, %297 : vector<4x4xf32>
    %c0_154 = arith.constant 0 : index
    %c0_155 = arith.constant 0 : index
    %c0_156 = arith.constant 0 : index
    %299 = vector.load %arg18[%c0_154, %c0_155, %c0_156] : memref<1x4x4xf32, #tpu.memory_space<vmem>>, vector<1x4x4xf32>
    %300 = vector.shape_cast %299 : vector<1x4x4xf32> to vector<4x4xf32>
    %301 = vector.shape_cast %298 : vector<4x4xf32> to vector<1x4x4xf32>
    tpu.vector_store %arg18[%c0_154, %c0_155, %c0_156], %301 {strides = array<i32>} : memref<1x4x4xf32, #tpu.memory_space<vmem>>, vector<1x4x4xf32>,
    return
  }
  func.func @transform_0(%arg0: i32) -> (i32, i32, i32) {
    %c0_i32 = arith.constant 0 : i32
    %c0_i32_0 = arith.constant 0 : i32
    %c0_i32_1 = arith.constant 0 : i32
    return %arg0, %c0_i32, %c0_i32_0 : i32, i32, i32
  }
  func.func @transform_1(%arg0: i32) -> (i32, i32) {
    %c0_i32 = arith.constant 0 : i32
    %c0_i32_0 = arith.constant 0 : i32
    %c0_i32_1 = arith.constant 0 : i32
    return %c0_i32, %c0_i32_0 : i32, i32
  }
  func.func @transform_2(%arg0: i32) -> (i32, i32) {
    %c0_i32 = arith.constant 0 : i32
    %c0_i32_0 = arith.constant 0 : i32
    %c0_i32_1 = arith.constant 0 : i32
    return %c0_i32, %c0_i32_0 : i32, i32
  }
  func.func @transform_3(%arg0: i32) -> (i32, i32) {
    %c0_i32 = arith.constant 0 : i32
    %c0_i32_0 = arith.constant 0 : i32
    %c0_i32_1 = arith.constant 0 : i32
    return %c0_i32, %c0_i32_0 : i32, i32
  }
  func.func @transform_4(%arg0: i32) -> (i32, i32) {
    %c0_i32 = arith.constant 0 : i32
    %c0_i32_0 = arith.constant 0 : i32
    %c0_i32_1 = arith.constant 0 : i32
    return %c0_i32, %c0_i32_0 : i32, i32
  }
  func.func @transform_5(%arg0: i32) -> (i32, i32, i32) {
    %c0_i32 = arith.constant 0 : i32
    %c0_i32_0 = arith.constant 0 : i32
    %c0_i32_1 = arith.constant 0 : i32
    %c0_i32_2 = arith.constant 0 : i32
    return %c0_i32, %c0_i32_0, %c0_i32_1 : i32, i32, i32
  }
  func.func @transform_6(%arg0: i32) -> (i32, i32, i32) {
    %c0_i32 = arith.constant 0 : i32
    %c0_i32_0 = arith.constant 0 : i32
    %c0_i32_1 = arith.constant 0 : i32
    %c0_i32_2 = arith.constant 0 : i32
    return %c0_i32, %c0_i32_0, %c0_i32_1 : i32, i32, i32
  }
  func.func @transform_7(%arg0: i32) -> (i32, i32, i32) {
    %c0_i32 = arith.constant 0 : i32
    %c0_i32_0 = arith.constant 0 : i32
    %c0_i32_1 = arith.constant 0 : i32
    %c0_i32_2 = arith.constant 0 : i32
    return %c0_i32, %c0_i32_0, %c0_i32_1 : i32, i32, i32
  }
  func.func @transform_8(%arg0: i32) -> (i32, i32) {
    %c0_i32 = arith.constant 0 : i32
    %c0_i32_0 = arith.constant 0 : i32
    %c0_i32_1 = arith.constant 0 : i32
    return %c0_i32, %c0_i32_0 : i32, i32
  }
  func.func @transform_9(%arg0: i32) -> (i32, i32) {
    %c0_i32 = arith.constant 0 : i32
    %c0_i32_0 = arith.constant 0 : i32
    %c0_i32_1 = arith.constant 0 : i32
    return %c0_i32, %c0_i32_0 : i32, i32
  }
  func.func @transform_10(%arg0: i32) -> (i32, i32) {
    %c0_i32 = arith.constant 0 : i32
    %c0_i32_0 = arith.constant 0 : i32
    %c0_i32_1 = arith.constant 0 : i32
    return %c0_i32, %c0_i32_0 : i32, i32
  }
  func.func @transform_11(%arg0: i32) -> (i32, i32) {
    %c0_i32 = arith.constant 0 : i32
    %c0_i32_0 = arith.constant 0 : i32
    %c0_i32_1 = arith.constant 0 : i32
    return %c0_i32, %c0_i32_0 : i32, i32
  }
  func.func @transform_12(%arg0: i32) -> (i32, i32) {
    %c0_i32 = arith.constant 0 : i32
    %c0_i32_0 = arith.constant 0 : i32
    %c0_i32_1 = arith.constant 0 : i32
    return %c0_i32, %c0_i32_0 : i32, i32
  }
  func.func @transform_13(%arg0: i32) -> (i32, i32) {
    %c0_i32 = arith.constant 0 : i32
    %c0_i32_0 = arith.constant 0 : i32
    %c0_i32_1 = arith.constant 0 : i32
    return %c0_i32, %c0_i32_0 : i32, i32
  }
  func.func @transform_14(%arg0: i32) -> (i32, i32) {
    %c0_i32 = arith.constant 0 : i32
    %c0_i32_0 = arith.constant 0 : i32
    %c0_i32_1 = arith.constant 0 : i32
    return %c0_i32, %c0_i32_0 : i32, i32
  }
  func.func @transform_15(%arg0: i32) -> (i32, i32) {
    %c0_i32 = arith.constant 0 : i32
    %c0_i32_0 = arith.constant 0 : i32
    %c0_i32_1 = arith.constant 0 : i32
    return %c0_i32, %c0_i32_0 : i32, i32
  }
  func.func @transform_16(%arg0: i32) -> (i32, i32) {
    %c0_i32 = arith.constant 0 : i32
    %c0_i32_0 = arith.constant 0 : i32
    %c0_i32_1 = arith.constant 0 : i32
    return %c0_i32, %c0_i32_0 : i32, i32
  }
  func.func @transform_17(%arg0: i32) -> (i32, i32, i32) {
    %c0_i32 = arith.constant 0 : i32
    %c0_i32_0 = arith.constant 0 : i32
    %c0_i32_1 = arith.constant 0 : i32
    return %arg0, %c0_i32, %c0_i32_0 : i32, i32, i32
  }
}

module attributes {stable_mosaic.version = 11 : i64} {
  func.func @_stage_kernel(%arg0: i32, %arg1: memref<1x4x4xf32, #tpu.memory_space<vmem>>, %arg2: memref<4x32xf32, #tpu.memory_space<vmem>>, %arg3: memref<1x32xf32, #tpu.memory_space<vmem>>, %arg4: memref<1x32xf32, #tpu.memory_space<vmem>>, %arg5: memref<1x32xf32, #tpu.memory_space<vmem>>, %arg6: memref<12x32x8xf32, #tpu.memory_space<vmem>>, %arg7: memref<12x1x8xf32, #tpu.memory_space<vmem>>, %arg8: memref<4x8x32xf32, #tpu.memory_space<vmem>>, %arg9: memref<1x32xf32, #tpu.memory_space<vmem>>, %arg10: memref<1x32xf32, #tpu.memory_space<vmem>>, %arg11: memref<1x32xf32, #tpu.memory_space<vmem>>, %arg12: memref<32x128xf32, #tpu.memory_space<vmem>>, %arg13: memref<1x128xf32, #tpu.memory_space<vmem>>, %arg14: memref<128x32xf32, #tpu.memory_space<vmem>>, %arg15: memref<1x32xf32, #tpu.memory_space<vmem>>, %arg16: memref<32x64xf32, #tpu.memory_space<vmem>>, %arg17: memref<1x64xf32, #tpu.memory_space<vmem>>, %arg18: memref<1x4x64xf32, #tpu.memory_space<vmem>>) attributes {dimension_semantics = [#tpu.dimension_semantics<parallel>], iteration_bounds = array<i64: 2>, scalar_prefetch = 0 : i64, scratch_operands = 0 : i64, tpu.core_type = #tpu.core_type<tc>, window_params = [{transform_indices = @transform_0, window_bounds = array<i64: 1, 4, 4>}, {pipeline_mode = #tpu.pipeline_mode<synchronous>, transform_indices = @transform_1, window_bounds = array<i64: 4, 32>}, {pipeline_mode = #tpu.pipeline_mode<synchronous>, transform_indices = @transform_2, window_bounds = array<i64: 1, 32>}, {pipeline_mode = #tpu.pipeline_mode<synchronous>, transform_indices = @transform_3, window_bounds = array<i64: 1, 32>}, {pipeline_mode = #tpu.pipeline_mode<synchronous>, transform_indices = @transform_4, window_bounds = array<i64: 1, 32>}, {pipeline_mode = #tpu.pipeline_mode<synchronous>, transform_indices = @transform_5, window_bounds = array<i64: 12, 32, 8>}, {pipeline_mode = #tpu.pipeline_mode<synchronous>, transform_indices = @transform_6, window_bounds = array<i64: 12, 1, 8>}, {pipeline_mode = #tpu.pipeline_mode<synchronous>, transform_indices = @transform_7, window_bounds = array<i64: 4, 8, 32>}, {pipeline_mode = #tpu.pipeline_mode<synchronous>, transform_indices = @transform_8, window_bounds = array<i64: 1, 32>}, {pipeline_mode = #tpu.pipeline_mode<synchronous>, transform_indices = @transform_9, window_bounds = array<i64: 1, 32>}, {pipeline_mode = #tpu.pipeline_mode<synchronous>, transform_indices = @transform_10, window_bounds = array<i64: 1, 32>}, {pipeline_mode = #tpu.pipeline_mode<synchronous>, transform_indices = @transform_11, window_bounds = array<i64: 32, 128>}, {pipeline_mode = #tpu.pipeline_mode<synchronous>, transform_indices = @transform_12, window_bounds = array<i64: 1, 128>}, {pipeline_mode = #tpu.pipeline_mode<synchronous>, transform_indices = @transform_13, window_bounds = array<i64: 128, 32>}, {pipeline_mode = #tpu.pipeline_mode<synchronous>, transform_indices = @transform_14, window_bounds = array<i64: 1, 32>}, {pipeline_mode = #tpu.pipeline_mode<synchronous>, transform_indices = @transform_15, window_bounds = array<i64: 32, 64>}, {pipeline_mode = #tpu.pipeline_mode<synchronous>, transform_indices = @transform_16, window_bounds = array<i64: 1, 64>}, {transform_indices = @transform_17, window_bounds = array<i64: 1, 4, 64>}]} {
    %c0 = arith.constant 0 : index
    %c0_0 = arith.constant 0 : index
    %c0_1 = arith.constant 0 : index
    %0 = vector.load %arg1[%c0, %c0_0, %c0_1] : memref<1x4x4xf32, #tpu.memory_space<vmem>>, vector<1x4x4xf32>
    %1 = vector.shape_cast %0 : vector<1x4x4xf32> to vector<4x4xf32>
    %c0_2 = arith.constant 0 : index
    %c0_3 = arith.constant 0 : index
    %2 = vector.load %arg2[%c0_2, %c0_3] : memref<4x32xf32, #tpu.memory_space<vmem>>, vector<4x32xf32>
    %3 = arith.truncf %1 : vector<4x4xf32> to vector<4x4xbf16>
    %4 = arith.truncf %2 : vector<4x32xf32> to vector<4x32xbf16>
    %cst = arith.constant dense<0.000000e+00> : vector<4x32xf32>
    %5 = tpu.matmul %3, %4, %cst {dimension_numbers = #tpu.dot_dimension_numbers<[1], [0], [0], [1], [0, 0, 1, 1], [], []>} : vector<4x4xbf16>, vector<4x32xbf16>, vector<4x32xf32> -> vector<4x32xf32>
    %c0_4 = arith.constant 0 : index
    %c0_5 = arith.constant 0 : index
    %6 = vector.load %arg3[%c0_4, %c0_5] : memref<1x32xf32, #tpu.memory_space<vmem>>, vector<1x32xf32>
    %7 = vector.broadcast %6 : vector<1x32xf32> to vector<4x32xf32>
    %8 = arith.addf %5, %7 : vector<4x32xf32>
    %c0_6 = arith.constant 0 : index
    %c0_7 = arith.constant 0 : index
    %9 = vector.load %arg4[%c0_6, %c0_7] : memref<1x32xf32, #tpu.memory_space<vmem>>, vector<1x32xf32>
    %c0_8 = arith.constant 0 : index
    %c0_9 = arith.constant 0 : index
    %10 = vector.load %arg5[%c0_8, %c0_9] : memref<1x32xf32, #tpu.memory_space<vmem>>, vector<1x32xf32>
    %cst_10 = arith.constant dense<0.000000e+00> : vector<4xf32>
    %11 = vector.multi_reduction <add>, %8, %cst_10 [1] : vector<4x32xf32> to vector<4xf32>
    %12 = vector.shape_cast %11 : vector<4xf32> to vector<4x1xf32>
    %cst_11 = arith.constant 3.200000e+01 : f32
    %13 = vector.broadcast %cst_11 : f32 to vector<4x1xf32>
    %14 = arith.divf %12, %13 : vector<4x1xf32>
    %15 = vector.broadcast %14 : vector<4x1xf32> to vector<4x32xf32>
    %16 = arith.subf %8, %15 : vector<4x32xf32>
    %17 = arith.mulf %16, %16 : vector<4x32xf32>
    %cst_12 = arith.constant dense<0.000000e+00> : vector<4xf32>
    %18 = vector.multi_reduction <add>, %17, %cst_12 [1] : vector<4x32xf32> to vector<4xf32>
    %19 = vector.shape_cast %18 : vector<4xf32> to vector<4x1xf32>
    %cst_13 = arith.constant 3.200000e+01 : f32
    %20 = vector.broadcast %cst_13 : f32 to vector<4x1xf32>
    %21 = arith.divf %19, %20 : vector<4x1xf32>
    %22 = vector.broadcast %14 : vector<4x1xf32> to vector<4x32xf32>
    %23 = arith.subf %8, %22 : vector<4x32xf32>
    %cst_14 = arith.constant 9.99999974E-6 : f32
    %24 = vector.broadcast %cst_14 : f32 to vector<4x1xf32>
    %25 = arith.addf %21, %24 : vector<4x1xf32>
    %26 = math.rsqrt %25 : vector<4x1xf32>
    %27 = vector.broadcast %26 : vector<4x1xf32> to vector<4x32xf32>
    %28 = arith.mulf %23, %27 : vector<4x32xf32>
    %29 = vector.broadcast %9 : vector<1x32xf32> to vector<4x32xf32>
    %30 = arith.mulf %28, %29 : vector<4x32xf32>
    %31 = vector.broadcast %10 : vector<1x32xf32> to vector<4x32xf32>
    %32 = arith.addf %30, %31 : vector<4x32xf32>
    %c0_15 = arith.constant 0 : index
    %c0_16 = arith.constant 0 : index
    %c0_17 = arith.constant 0 : index
    %33 = vector.load %arg6[%c0_15, %c0_16, %c0_17] : memref<12x32x8xf32, #tpu.memory_space<vmem>>, vector<1x32x8xf32>
    %34 = vector.shape_cast %33 : vector<1x32x8xf32> to vector<32x8xf32>
    %35 = arith.truncf %32 : vector<4x32xf32> to vector<4x32xbf16>
    %36 = arith.truncf %34 : vector<32x8xf32> to vector<32x8xbf16>
    %cst_18 = arith.constant dense<0.000000e+00> : vector<4x8xf32>
    %37 = tpu.matmul %35, %36, %cst_18 {dimension_numbers = #tpu.dot_dimension_numbers<[1], [0], [0], [1], [0, 0, 1, 1], [], []>} : vector<4x32xbf16>, vector<32x8xbf16>, vector<4x8xf32> -> vector<4x8xf32>
    %c0_19 = arith.constant 0 : index
    %c0_20 = arith.constant 0 : index
    %c0_21 = arith.constant 0 : index
    %38 = vector.load %arg7[%c0_19, %c0_20, %c0_21] : memref<12x1x8xf32, #tpu.memory_space<vmem>>, vector<1x1x8xf32>
    %39 = vector.shape_cast %38 : vector<1x1x8xf32> to vector<1x8xf32>
    %40 = vector.broadcast %39 : vector<1x8xf32> to vector<4x8xf32>
    %41 = arith.addf %37, %40 : vector<4x8xf32>
    %c4 = arith.constant 4 : index
    %c0_22 = arith.constant 0 : index
    %c0_23 = arith.constant 0 : index
    %42 = vector.load %arg6[%c4, %c0_22, %c0_23] : memref<12x32x8xf32, #tpu.memory_space<vmem>>, vector<1x32x8xf32>
    %43 = vector.shape_cast %42 : vector<1x32x8xf32> to vector<32x8xf32>
    %44 = arith.truncf %32 : vector<4x32xf32> to vector<4x32xbf16>
    %45 = arith.truncf %43 : vector<32x8xf32> to vector<32x8xbf16>
    %cst_24 = arith.constant dense<0.000000e+00> : vector<4x8xf32>
    %46 = tpu.matmul %44, %45, %cst_24 {dimension_numbers = #tpu.dot_dimension_numbers<[1], [0], [0], [1], [0, 0, 1, 1], [], []>} : vector<4x32xbf16>, vector<32x8xbf16>, vector<4x8xf32> -> vector<4x8xf32>
    %c4_25 = arith.constant 4 : index
    %c0_26 = arith.constant 0 : index
    %c0_27 = arith.constant 0 : index
    %47 = vector.load %arg7[%c4_25, %c0_26, %c0_27] : memref<12x1x8xf32, #tpu.memory_space<vmem>>, vector<1x1x8xf32>
    %48 = vector.shape_cast %47 : vector<1x1x8xf32> to vector<1x8xf32>
    %49 = vector.broadcast %48 : vector<1x8xf32> to vector<4x8xf32>
    %50 = arith.addf %46, %49 : vector<4x8xf32>
    %c8 = arith.constant 8 : index
    %c0_28 = arith.constant 0 : index
    %c0_29 = arith.constant 0 : index
    %51 = vector.load %arg6[%c8, %c0_28, %c0_29] : memref<12x32x8xf32, #tpu.memory_space<vmem>>, vector<1x32x8xf32>
    %52 = vector.shape_cast %51 : vector<1x32x8xf32> to vector<32x8xf32>
    %53 = arith.truncf %32 : vector<4x32xf32> to vector<4x32xbf16>
    %54 = arith.truncf %52 : vector<32x8xf32> to vector<32x8xbf16>
    %cst_30 = arith.constant dense<0.000000e+00> : vector<4x8xf32>
    %55 = tpu.matmul %53, %54, %cst_30 {dimension_numbers = #tpu.dot_dimension_numbers<[1], [0], [0], [1], [0, 0, 1, 1], [], []>} : vector<4x32xbf16>, vector<32x8xbf16>, vector<4x8xf32> -> vector<4x8xf32>
    %c8_31 = arith.constant 8 : index
    %c0_32 = arith.constant 0 : index
    %c0_33 = arith.constant 0 : index
    %56 = vector.load %arg7[%c8_31, %c0_32, %c0_33] : memref<12x1x8xf32, #tpu.memory_space<vmem>>, vector<1x1x8xf32>
    %57 = vector.shape_cast %56 : vector<1x1x8xf32> to vector<1x8xf32>
    %58 = vector.broadcast %57 : vector<1x8xf32> to vector<4x8xf32>
    %59 = arith.addf %55, %58 : vector<4x8xf32>
    %60 = arith.truncf %41 : vector<4x8xf32> to vector<4x8xbf16>
    %61 = arith.truncf %50 : vector<4x8xf32> to vector<4x8xbf16>
    %cst_34 = arith.constant dense<0.000000e+00> : vector<4x4xf32>
    %62 = tpu.matmul %60, %61, %cst_34 {dimension_numbers = #tpu.dot_dimension_numbers<[1], [1], [0], [0], [0, 0, 1, 0], [], []>} : vector<4x8xbf16>, vector<4x8xbf16>, vector<4x4xf32> -> vector<4x4xf32>
    %cst_35 = arith.constant 0.353553385 : f32
    %63 = vector.broadcast %cst_35 : f32 to vector<4x4xf32>
    %64 = arith.mulf %62, %63 : vector<4x4xf32>
    %cst_36 = arith.constant dense<0xFF800000> : vector<4xf32>
    %65 = vector.multi_reduction <maximumf>, %64, %cst_36 [1] : vector<4x4xf32> to vector<4xf32>
    %66 = vector.shape_cast %65 : vector<4xf32> to vector<4x1xf32>
    %67 = vector.broadcast %66 : vector<4x1xf32> to vector<4x4xf32>
    %68 = arith.subf %64, %67 : vector<4x4xf32>
    %69 = math.exp %68 : vector<4x4xf32>
    %cst_37 = arith.constant dense<0.000000e+00> : vector<4xf32>
    %70 = vector.multi_reduction <add>, %69, %cst_37 [1] : vector<4x4xf32> to vector<4xf32>
    %71 = vector.shape_cast %70 : vector<4xf32> to vector<4x1xf32>
    %72 = tpu.reciprocal %71 {approx = true} : vector<4x1xf32> -> vector<4x1xf32>
    %73 = vector.broadcast %72 : vector<4x1xf32> to vector<4x4xf32>
    %74 = arith.mulf %69, %73 : vector<4x4xf32>
    %75 = arith.truncf %74 : vector<4x4xf32> to vector<4x4xbf16>
    %76 = arith.truncf %59 : vector<4x8xf32> to vector<4x8xbf16>
    %cst_38 = arith.constant dense<0.000000e+00> : vector<4x8xf32>
    %77 = tpu.matmul %75, %76, %cst_38 {dimension_numbers = #tpu.dot_dimension_numbers<[1], [0], [0], [1], [0, 0, 1, 1], [], []>} : vector<4x4xbf16>, vector<4x8xbf16>, vector<4x8xf32> -> vector<4x8xf32>
    %c0_39 = arith.constant 0 : index
    %c0_40 = arith.constant 0 : index
    %c0_41 = arith.constant 0 : index
    %78 = vector.load %arg8[%c0_39, %c0_40, %c0_41] : memref<4x8x32xf32, #tpu.memory_space<vmem>>, vector<1x8x32xf32>
    %79 = vector.shape_cast %78 : vector<1x8x32xf32> to vector<8x32xf32>
    %80 = arith.truncf %77 : vector<4x8xf32> to vector<4x8xbf16>
    %81 = arith.truncf %79 : vector<8x32xf32> to vector<8x32xbf16>
    %cst_42 = arith.constant dense<0.000000e+00> : vector<4x32xf32>
    %82 = tpu.matmul %80, %81, %cst_42 {dimension_numbers = #tpu.dot_dimension_numbers<[1], [0], [0], [1], [0, 0, 1, 1], [], []>} : vector<4x8xbf16>, vector<8x32xbf16>, vector<4x32xf32> -> vector<4x32xf32>
    %c1 = arith.constant 1 : index
    %c0_43 = arith.constant 0 : index
    %c0_44 = arith.constant 0 : index
    %83 = vector.load %arg6[%c1, %c0_43, %c0_44] : memref<12x32x8xf32, #tpu.memory_space<vmem>>, vector<1x32x8xf32>
    %84 = vector.shape_cast %83 : vector<1x32x8xf32> to vector<32x8xf32>
    %85 = arith.truncf %32 : vector<4x32xf32> to vector<4x32xbf16>
    %86 = arith.truncf %84 : vector<32x8xf32> to vector<32x8xbf16>
    %cst_45 = arith.constant dense<0.000000e+00> : vector<4x8xf32>
    %87 = tpu.matmul %85, %86, %cst_45 {dimension_numbers = #tpu.dot_dimension_numbers<[1], [0], [0], [1], [0, 0, 1, 1], [], []>} : vector<4x32xbf16>, vector<32x8xbf16>, vector<4x8xf32> -> vector<4x8xf32>
    %c1_46 = arith.constant 1 : index
    %c0_47 = arith.constant 0 : index
    %c0_48 = arith.constant 0 : index
    %88 = vector.load %arg7[%c1_46, %c0_47, %c0_48] : memref<12x1x8xf32, #tpu.memory_space<vmem>>, vector<1x1x8xf32>
    %89 = vector.shape_cast %88 : vector<1x1x8xf32> to vector<1x8xf32>
    %90 = vector.broadcast %89 : vector<1x8xf32> to vector<4x8xf32>
    %91 = arith.addf %87, %90 : vector<4x8xf32>
    %c5 = arith.constant 5 : index
    %c0_49 = arith.constant 0 : index
    %c0_50 = arith.constant 0 : index
    %92 = vector.load %arg6[%c5, %c0_49, %c0_50] : memref<12x32x8xf32, #tpu.memory_space<vmem>>, vector<1x32x8xf32>
    %93 = vector.shape_cast %92 : vector<1x32x8xf32> to vector<32x8xf32>
    %94 = arith.truncf %32 : vector<4x32xf32> to vector<4x32xbf16>
    %95 = arith.truncf %93 : vector<32x8xf32> to vector<32x8xbf16>
    %cst_51 = arith.constant dense<0.000000e+00> : vector<4x8xf32>
    %96 = tpu.matmul %94, %95, %cst_51 {dimension_numbers = #tpu.dot_dimension_numbers<[1], [0], [0], [1], [0, 0, 1, 1], [], []>} : vector<4x32xbf16>, vector<32x8xbf16>, vector<4x8xf32> -> vector<4x8xf32>
    %c5_52 = arith.constant 5 : index
    %c0_53 = arith.constant 0 : index
    %c0_54 = arith.constant 0 : index
    %97 = vector.load %arg7[%c5_52, %c0_53, %c0_54] : memref<12x1x8xf32, #tpu.memory_space<vmem>>, vector<1x1x8xf32>
    %98 = vector.shape_cast %97 : vector<1x1x8xf32> to vector<1x8xf32>
    %99 = vector.broadcast %98 : vector<1x8xf32> to vector<4x8xf32>
    %100 = arith.addf %96, %99 : vector<4x8xf32>
    %c9 = arith.constant 9 : index
    %c0_55 = arith.constant 0 : index
    %c0_56 = arith.constant 0 : index
    %101 = vector.load %arg6[%c9, %c0_55, %c0_56] : memref<12x32x8xf32, #tpu.memory_space<vmem>>, vector<1x32x8xf32>
    %102 = vector.shape_cast %101 : vector<1x32x8xf32> to vector<32x8xf32>
    %103 = arith.truncf %32 : vector<4x32xf32> to vector<4x32xbf16>
    %104 = arith.truncf %102 : vector<32x8xf32> to vector<32x8xbf16>
    %cst_57 = arith.constant dense<0.000000e+00> : vector<4x8xf32>
    %105 = tpu.matmul %103, %104, %cst_57 {dimension_numbers = #tpu.dot_dimension_numbers<[1], [0], [0], [1], [0, 0, 1, 1], [], []>} : vector<4x32xbf16>, vector<32x8xbf16>, vector<4x8xf32> -> vector<4x8xf32>
    %c9_58 = arith.constant 9 : index
    %c0_59 = arith.constant 0 : index
    %c0_60 = arith.constant 0 : index
    %106 = vector.load %arg7[%c9_58, %c0_59, %c0_60] : memref<12x1x8xf32, #tpu.memory_space<vmem>>, vector<1x1x8xf32>
    %107 = vector.shape_cast %106 : vector<1x1x8xf32> to vector<1x8xf32>
    %108 = vector.broadcast %107 : vector<1x8xf32> to vector<4x8xf32>
    %109 = arith.addf %105, %108 : vector<4x8xf32>
    %110 = arith.truncf %91 : vector<4x8xf32> to vector<4x8xbf16>
    %111 = arith.truncf %100 : vector<4x8xf32> to vector<4x8xbf16>
    %cst_61 = arith.constant dense<0.000000e+00> : vector<4x4xf32>
    %112 = tpu.matmul %110, %111, %cst_61 {dimension_numbers = #tpu.dot_dimension_numbers<[1], [1], [0], [0], [0, 0, 1, 0], [], []>} : vector<4x8xbf16>, vector<4x8xbf16>, vector<4x4xf32> -> vector<4x4xf32>
    %cst_62 = arith.constant 0.353553385 : f32
    %113 = vector.broadcast %cst_62 : f32 to vector<4x4xf32>
    %114 = arith.mulf %112, %113 : vector<4x4xf32>
    %cst_63 = arith.constant dense<0xFF800000> : vector<4xf32>
    %115 = vector.multi_reduction <maximumf>, %114, %cst_63 [1] : vector<4x4xf32> to vector<4xf32>
    %116 = vector.shape_cast %115 : vector<4xf32> to vector<4x1xf32>
    %117 = vector.broadcast %116 : vector<4x1xf32> to vector<4x4xf32>
    %118 = arith.subf %114, %117 : vector<4x4xf32>
    %119 = math.exp %118 : vector<4x4xf32>
    %cst_64 = arith.constant dense<0.000000e+00> : vector<4xf32>
    %120 = vector.multi_reduction <add>, %119, %cst_64 [1] : vector<4x4xf32> to vector<4xf32>
    %121 = vector.shape_cast %120 : vector<4xf32> to vector<4x1xf32>
    %122 = tpu.reciprocal %121 {approx = true} : vector<4x1xf32> -> vector<4x1xf32>
    %123 = vector.broadcast %122 : vector<4x1xf32> to vector<4x4xf32>
    %124 = arith.mulf %119, %123 : vector<4x4xf32>
    %125 = arith.truncf %124 : vector<4x4xf32> to vector<4x4xbf16>
    %126 = arith.truncf %109 : vector<4x8xf32> to vector<4x8xbf16>
    %cst_65 = arith.constant dense<0.000000e+00> : vector<4x8xf32>
    %127 = tpu.matmul %125, %126, %cst_65 {dimension_numbers = #tpu.dot_dimension_numbers<[1], [0], [0], [1], [0, 0, 1, 1], [], []>} : vector<4x4xbf16>, vector<4x8xbf16>, vector<4x8xf32> -> vector<4x8xf32>
    %c1_66 = arith.constant 1 : index
    %c0_67 = arith.constant 0 : index
    %c0_68 = arith.constant 0 : index
    %128 = vector.load %arg8[%c1_66, %c0_67, %c0_68] : memref<4x8x32xf32, #tpu.memory_space<vmem>>, vector<1x8x32xf32>
    %129 = vector.shape_cast %128 : vector<1x8x32xf32> to vector<8x32xf32>
    %130 = arith.truncf %127 : vector<4x8xf32> to vector<4x8xbf16>
    %131 = arith.truncf %129 : vector<8x32xf32> to vector<8x32xbf16>
    %cst_69 = arith.constant dense<0.000000e+00> : vector<4x32xf32>
    %132 = tpu.matmul %130, %131, %cst_69 {dimension_numbers = #tpu.dot_dimension_numbers<[1], [0], [0], [1], [0, 0, 1, 1], [], []>} : vector<4x8xbf16>, vector<8x32xbf16>, vector<4x32xf32> -> vector<4x32xf32>
    %133 = arith.addf %82, %132 : vector<4x32xf32>
    %c2 = arith.constant 2 : index
    %c0_70 = arith.constant 0 : index
    %c0_71 = arith.constant 0 : index
    %134 = vector.load %arg6[%c2, %c0_70, %c0_71] : memref<12x32x8xf32, #tpu.memory_space<vmem>>, vector<1x32x8xf32>
    %135 = vector.shape_cast %134 : vector<1x32x8xf32> to vector<32x8xf32>
    %136 = arith.truncf %32 : vector<4x32xf32> to vector<4x32xbf16>
    %137 = arith.truncf %135 : vector<32x8xf32> to vector<32x8xbf16>
    %cst_72 = arith.constant dense<0.000000e+00> : vector<4x8xf32>
    %138 = tpu.matmul %136, %137, %cst_72 {dimension_numbers = #tpu.dot_dimension_numbers<[1], [0], [0], [1], [0, 0, 1, 1], [], []>} : vector<4x32xbf16>, vector<32x8xbf16>, vector<4x8xf32> -> vector<4x8xf32>
    %c2_73 = arith.constant 2 : index
    %c0_74 = arith.constant 0 : index
    %c0_75 = arith.constant 0 : index
    %139 = vector.load %arg7[%c2_73, %c0_74, %c0_75] : memref<12x1x8xf32, #tpu.memory_space<vmem>>, vector<1x1x8xf32>
    %140 = vector.shape_cast %139 : vector<1x1x8xf32> to vector<1x8xf32>
    %141 = vector.broadcast %140 : vector<1x8xf32> to vector<4x8xf32>
    %142 = arith.addf %138, %141 : vector<4x8xf32>
    %c6 = arith.constant 6 : index
    %c0_76 = arith.constant 0 : index
    %c0_77 = arith.constant 0 : index
    %143 = vector.load %arg6[%c6, %c0_76, %c0_77] : memref<12x32x8xf32, #tpu.memory_space<vmem>>, vector<1x32x8xf32>
    %144 = vector.shape_cast %143 : vector<1x32x8xf32> to vector<32x8xf32>
    %145 = arith.truncf %32 : vector<4x32xf32> to vector<4x32xbf16>
    %146 = arith.truncf %144 : vector<32x8xf32> to vector<32x8xbf16>
    %cst_78 = arith.constant dense<0.000000e+00> : vector<4x8xf32>
    %147 = tpu.matmul %145, %146, %cst_78 {dimension_numbers = #tpu.dot_dimension_numbers<[1], [0], [0], [1], [0, 0, 1, 1], [], []>} : vector<4x32xbf16>, vector<32x8xbf16>, vector<4x8xf32> -> vector<4x8xf32>
    %c6_79 = arith.constant 6 : index
    %c0_80 = arith.constant 0 : index
    %c0_81 = arith.constant 0 : index
    %148 = vector.load %arg7[%c6_79, %c0_80, %c0_81] : memref<12x1x8xf32, #tpu.memory_space<vmem>>, vector<1x1x8xf32>
    %149 = vector.shape_cast %148 : vector<1x1x8xf32> to vector<1x8xf32>
    %150 = vector.broadcast %149 : vector<1x8xf32> to vector<4x8xf32>
    %151 = arith.addf %147, %150 : vector<4x8xf32>
    %c10 = arith.constant 10 : index
    %c0_82 = arith.constant 0 : index
    %c0_83 = arith.constant 0 : index
    %152 = vector.load %arg6[%c10, %c0_82, %c0_83] : memref<12x32x8xf32, #tpu.memory_space<vmem>>, vector<1x32x8xf32>
    %153 = vector.shape_cast %152 : vector<1x32x8xf32> to vector<32x8xf32>
    %154 = arith.truncf %32 : vector<4x32xf32> to vector<4x32xbf16>
    %155 = arith.truncf %153 : vector<32x8xf32> to vector<32x8xbf16>
    %cst_84 = arith.constant dense<0.000000e+00> : vector<4x8xf32>
    %156 = tpu.matmul %154, %155, %cst_84 {dimension_numbers = #tpu.dot_dimension_numbers<[1], [0], [0], [1], [0, 0, 1, 1], [], []>} : vector<4x32xbf16>, vector<32x8xbf16>, vector<4x8xf32> -> vector<4x8xf32>
    %c10_85 = arith.constant 10 : index
    %c0_86 = arith.constant 0 : index
    %c0_87 = arith.constant 0 : index
    %157 = vector.load %arg7[%c10_85, %c0_86, %c0_87] : memref<12x1x8xf32, #tpu.memory_space<vmem>>, vector<1x1x8xf32>
    %158 = vector.shape_cast %157 : vector<1x1x8xf32> to vector<1x8xf32>
    %159 = vector.broadcast %158 : vector<1x8xf32> to vector<4x8xf32>
    %160 = arith.addf %156, %159 : vector<4x8xf32>
    %161 = arith.truncf %142 : vector<4x8xf32> to vector<4x8xbf16>
    %162 = arith.truncf %151 : vector<4x8xf32> to vector<4x8xbf16>
    %cst_88 = arith.constant dense<0.000000e+00> : vector<4x4xf32>
    %163 = tpu.matmul %161, %162, %cst_88 {dimension_numbers = #tpu.dot_dimension_numbers<[1], [1], [0], [0], [0, 0, 1, 0], [], []>} : vector<4x8xbf16>, vector<4x8xbf16>, vector<4x4xf32> -> vector<4x4xf32>
    %cst_89 = arith.constant 0.353553385 : f32
    %164 = vector.broadcast %cst_89 : f32 to vector<4x4xf32>
    %165 = arith.mulf %163, %164 : vector<4x4xf32>
    %cst_90 = arith.constant dense<0xFF800000> : vector<4xf32>
    %166 = vector.multi_reduction <maximumf>, %165, %cst_90 [1] : vector<4x4xf32> to vector<4xf32>
    %167 = vector.shape_cast %166 : vector<4xf32> to vector<4x1xf32>
    %168 = vector.broadcast %167 : vector<4x1xf32> to vector<4x4xf32>
    %169 = arith.subf %165, %168 : vector<4x4xf32>
    %170 = math.exp %169 : vector<4x4xf32>
    %cst_91 = arith.constant dense<0.000000e+00> : vector<4xf32>
    %171 = vector.multi_reduction <add>, %170, %cst_91 [1] : vector<4x4xf32> to vector<4xf32>
    %172 = vector.shape_cast %171 : vector<4xf32> to vector<4x1xf32>
    %173 = tpu.reciprocal %172 {approx = true} : vector<4x1xf32> -> vector<4x1xf32>
    %174 = vector.broadcast %173 : vector<4x1xf32> to vector<4x4xf32>
    %175 = arith.mulf %170, %174 : vector<4x4xf32>
    %176 = arith.truncf %175 : vector<4x4xf32> to vector<4x4xbf16>
    %177 = arith.truncf %160 : vector<4x8xf32> to vector<4x8xbf16>
    %cst_92 = arith.constant dense<0.000000e+00> : vector<4x8xf32>
    %178 = tpu.matmul %176, %177, %cst_92 {dimension_numbers = #tpu.dot_dimension_numbers<[1], [0], [0], [1], [0, 0, 1, 1], [], []>} : vector<4x4xbf16>, vector<4x8xbf16>, vector<4x8xf32> -> vector<4x8xf32>
    %c2_93 = arith.constant 2 : index
    %c0_94 = arith.constant 0 : index
    %c0_95 = arith.constant 0 : index
    %179 = vector.load %arg8[%c2_93, %c0_94, %c0_95] : memref<4x8x32xf32, #tpu.memory_space<vmem>>, vector<1x8x32xf32>
    %180 = vector.shape_cast %179 : vector<1x8x32xf32> to vector<8x32xf32>
    %181 = arith.truncf %178 : vector<4x8xf32> to vector<4x8xbf16>
    %182 = arith.truncf %180 : vector<8x32xf32> to vector<8x32xbf16>
    %cst_96 = arith.constant dense<0.000000e+00> : vector<4x32xf32>
    %183 = tpu.matmul %181, %182, %cst_96 {dimension_numbers = #tpu.dot_dimension_numbers<[1], [0], [0], [1], [0, 0, 1, 1], [], []>} : vector<4x8xbf16>, vector<8x32xbf16>, vector<4x32xf32> -> vector<4x32xf32>
    %184 = arith.addf %133, %183 : vector<4x32xf32>
    %c3 = arith.constant 3 : index
    %c0_97 = arith.constant 0 : index
    %c0_98 = arith.constant 0 : index
    %185 = vector.load %arg6[%c3, %c0_97, %c0_98] : memref<12x32x8xf32, #tpu.memory_space<vmem>>, vector<1x32x8xf32>
    %186 = vector.shape_cast %185 : vector<1x32x8xf32> to vector<32x8xf32>
    %187 = arith.truncf %32 : vector<4x32xf32> to vector<4x32xbf16>
    %188 = arith.truncf %186 : vector<32x8xf32> to vector<32x8xbf16>
    %cst_99 = arith.constant dense<0.000000e+00> : vector<4x8xf32>
    %189 = tpu.matmul %187, %188, %cst_99 {dimension_numbers = #tpu.dot_dimension_numbers<[1], [0], [0], [1], [0, 0, 1, 1], [], []>} : vector<4x32xbf16>, vector<32x8xbf16>, vector<4x8xf32> -> vector<4x8xf32>
    %c3_100 = arith.constant 3 : index
    %c0_101 = arith.constant 0 : index
    %c0_102 = arith.constant 0 : index
    %190 = vector.load %arg7[%c3_100, %c0_101, %c0_102] : memref<12x1x8xf32, #tpu.memory_space<vmem>>, vector<1x1x8xf32>
    %191 = vector.shape_cast %190 : vector<1x1x8xf32> to vector<1x8xf32>
    %192 = vector.broadcast %191 : vector<1x8xf32> to vector<4x8xf32>
    %193 = arith.addf %189, %192 : vector<4x8xf32>
    %c7 = arith.constant 7 : index
    %c0_103 = arith.constant 0 : index
    %c0_104 = arith.constant 0 : index
    %194 = vector.load %arg6[%c7, %c0_103, %c0_104] : memref<12x32x8xf32, #tpu.memory_space<vmem>>, vector<1x32x8xf32>
    %195 = vector.shape_cast %194 : vector<1x32x8xf32> to vector<32x8xf32>
    %196 = arith.truncf %32 : vector<4x32xf32> to vector<4x32xbf16>
    %197 = arith.truncf %195 : vector<32x8xf32> to vector<32x8xbf16>
    %cst_105 = arith.constant dense<0.000000e+00> : vector<4x8xf32>
    %198 = tpu.matmul %196, %197, %cst_105 {dimension_numbers = #tpu.dot_dimension_numbers<[1], [0], [0], [1], [0, 0, 1, 1], [], []>} : vector<4x32xbf16>, vector<32x8xbf16>, vector<4x8xf32> -> vector<4x8xf32>
    %c7_106 = arith.constant 7 : index
    %c0_107 = arith.constant 0 : index
    %c0_108 = arith.constant 0 : index
    %199 = vector.load %arg7[%c7_106, %c0_107, %c0_108] : memref<12x1x8xf32, #tpu.memory_space<vmem>>, vector<1x1x8xf32>
    %200 = vector.shape_cast %199 : vector<1x1x8xf32> to vector<1x8xf32>
    %201 = vector.broadcast %200 : vector<1x8xf32> to vector<4x8xf32>
    %202 = arith.addf %198, %201 : vector<4x8xf32>
    %c11 = arith.constant 11 : index
    %c0_109 = arith.constant 0 : index
    %c0_110 = arith.constant 0 : index
    %203 = vector.load %arg6[%c11, %c0_109, %c0_110] : memref<12x32x8xf32, #tpu.memory_space<vmem>>, vector<1x32x8xf32>
    %204 = vector.shape_cast %203 : vector<1x32x8xf32> to vector<32x8xf32>
    %205 = arith.truncf %32 : vector<4x32xf32> to vector<4x32xbf16>
    %206 = arith.truncf %204 : vector<32x8xf32> to vector<32x8xbf16>
    %cst_111 = arith.constant dense<0.000000e+00> : vector<4x8xf32>
    %207 = tpu.matmul %205, %206, %cst_111 {dimension_numbers = #tpu.dot_dimension_numbers<[1], [0], [0], [1], [0, 0, 1, 1], [], []>} : vector<4x32xbf16>, vector<32x8xbf16>, vector<4x8xf32> -> vector<4x8xf32>
    %c11_112 = arith.constant 11 : index
    %c0_113 = arith.constant 0 : index
    %c0_114 = arith.constant 0 : index
    %208 = vector.load %arg7[%c11_112, %c0_113, %c0_114] : memref<12x1x8xf32, #tpu.memory_space<vmem>>, vector<1x1x8xf32>
    %209 = vector.shape_cast %208 : vector<1x1x8xf32> to vector<1x8xf32>
    %210 = vector.broadcast %209 : vector<1x8xf32> to vector<4x8xf32>
    %211 = arith.addf %207, %210 : vector<4x8xf32>
    %212 = arith.truncf %193 : vector<4x8xf32> to vector<4x8xbf16>
    %213 = arith.truncf %202 : vector<4x8xf32> to vector<4x8xbf16>
    %cst_115 = arith.constant dense<0.000000e+00> : vector<4x4xf32>
    %214 = tpu.matmul %212, %213, %cst_115 {dimension_numbers = #tpu.dot_dimension_numbers<[1], [1], [0], [0], [0, 0, 1, 0], [], []>} : vector<4x8xbf16>, vector<4x8xbf16>, vector<4x4xf32> -> vector<4x4xf32>
    %cst_116 = arith.constant 0.353553385 : f32
    %215 = vector.broadcast %cst_116 : f32 to vector<4x4xf32>
    %216 = arith.mulf %214, %215 : vector<4x4xf32>
    %cst_117 = arith.constant dense<0xFF800000> : vector<4xf32>
    %217 = vector.multi_reduction <maximumf>, %216, %cst_117 [1] : vector<4x4xf32> to vector<4xf32>
    %218 = vector.shape_cast %217 : vector<4xf32> to vector<4x1xf32>
    %219 = vector.broadcast %218 : vector<4x1xf32> to vector<4x4xf32>
    %220 = arith.subf %216, %219 : vector<4x4xf32>
    %221 = math.exp %220 : vector<4x4xf32>
    %cst_118 = arith.constant dense<0.000000e+00> : vector<4xf32>
    %222 = vector.multi_reduction <add>, %221, %cst_118 [1] : vector<4x4xf32> to vector<4xf32>
    %223 = vector.shape_cast %222 : vector<4xf32> to vector<4x1xf32>
    %224 = tpu.reciprocal %223 {approx = true} : vector<4x1xf32> -> vector<4x1xf32>
    %225 = vector.broadcast %224 : vector<4x1xf32> to vector<4x4xf32>
    %226 = arith.mulf %221, %225 : vector<4x4xf32>
    %227 = arith.truncf %226 : vector<4x4xf32> to vector<4x4xbf16>
    %228 = arith.truncf %211 : vector<4x8xf32> to vector<4x8xbf16>
    %cst_119 = arith.constant dense<0.000000e+00> : vector<4x8xf32>
    %229 = tpu.matmul %227, %228, %cst_119 {dimension_numbers = #tpu.dot_dimension_numbers<[1], [0], [0], [1], [0, 0, 1, 1], [], []>} : vector<4x4xbf16>, vector<4x8xbf16>, vector<4x8xf32> -> vector<4x8xf32>
    %c3_120 = arith.constant 3 : index
    %c0_121 = arith.constant 0 : index
    %c0_122 = arith.constant 0 : index
    %230 = vector.load %arg8[%c3_120, %c0_121, %c0_122] : memref<4x8x32xf32, #tpu.memory_space<vmem>>, vector<1x8x32xf32>
    %231 = vector.shape_cast %230 : vector<1x8x32xf32> to vector<8x32xf32>
    %232 = arith.truncf %229 : vector<4x8xf32> to vector<4x8xbf16>
    %233 = arith.truncf %231 : vector<8x32xf32> to vector<8x32xbf16>
    %cst_123 = arith.constant dense<0.000000e+00> : vector<4x32xf32>
    %234 = tpu.matmul %232, %233, %cst_123 {dimension_numbers = #tpu.dot_dimension_numbers<[1], [0], [0], [1], [0, 0, 1, 1], [], []>} : vector<4x8xbf16>, vector<8x32xbf16>, vector<4x32xf32> -> vector<4x32xf32>
    %235 = arith.addf %184, %234 : vector<4x32xf32>
    %236 = arith.addf %8, %235 : vector<4x32xf32>
    %c0_124 = arith.constant 0 : index
    %c0_125 = arith.constant 0 : index
    %237 = vector.load %arg9[%c0_124, %c0_125] : memref<1x32xf32, #tpu.memory_space<vmem>>, vector<1x32xf32>
    %238 = vector.broadcast %237 : vector<1x32xf32> to vector<4x32xf32>
    %239 = arith.addf %236, %238 : vector<4x32xf32>
    %c0_126 = arith.constant 0 : index
    %c0_127 = arith.constant 0 : index
    %240 = vector.load %arg10[%c0_126, %c0_127] : memref<1x32xf32, #tpu.memory_space<vmem>>, vector<1x32xf32>
    %c0_128 = arith.constant 0 : index
    %c0_129 = arith.constant 0 : index
    %241 = vector.load %arg11[%c0_128, %c0_129] : memref<1x32xf32, #tpu.memory_space<vmem>>, vector<1x32xf32>
    %cst_130 = arith.constant dense<0.000000e+00> : vector<4xf32>
    %242 = vector.multi_reduction <add>, %239, %cst_130 [1] : vector<4x32xf32> to vector<4xf32>
    %243 = vector.shape_cast %242 : vector<4xf32> to vector<4x1xf32>
    %cst_131 = arith.constant 3.200000e+01 : f32
    %244 = vector.broadcast %cst_131 : f32 to vector<4x1xf32>
    %245 = arith.divf %243, %244 : vector<4x1xf32>
    %246 = vector.broadcast %245 : vector<4x1xf32> to vector<4x32xf32>
    %247 = arith.subf %239, %246 : vector<4x32xf32>
    %248 = arith.mulf %247, %247 : vector<4x32xf32>
    %cst_132 = arith.constant dense<0.000000e+00> : vector<4xf32>
    %249 = vector.multi_reduction <add>, %248, %cst_132 [1] : vector<4x32xf32> to vector<4xf32>
    %250 = vector.shape_cast %249 : vector<4xf32> to vector<4x1xf32>
    %cst_133 = arith.constant 3.200000e+01 : f32
    %251 = vector.broadcast %cst_133 : f32 to vector<4x1xf32>
    %252 = arith.divf %250, %251 : vector<4x1xf32>
    %253 = vector.broadcast %245 : vector<4x1xf32> to vector<4x32xf32>
    %254 = arith.subf %239, %253 : vector<4x32xf32>
    %cst_134 = arith.constant 9.99999974E-6 : f32
    %255 = vector.broadcast %cst_134 : f32 to vector<4x1xf32>
    %256 = arith.addf %252, %255 : vector<4x1xf32>
    %257 = math.rsqrt %256 : vector<4x1xf32>
    %258 = vector.broadcast %257 : vector<4x1xf32> to vector<4x32xf32>
    %259 = arith.mulf %254, %258 : vector<4x32xf32>
    %260 = vector.broadcast %240 : vector<1x32xf32> to vector<4x32xf32>
    %261 = arith.mulf %259, %260 : vector<4x32xf32>
    %262 = vector.broadcast %241 : vector<1x32xf32> to vector<4x32xf32>
    %263 = arith.addf %261, %262 : vector<4x32xf32>
    %c0_135 = arith.constant 0 : index
    %c0_136 = arith.constant 0 : index
    %264 = vector.load %arg12[%c0_135, %c0_136] : memref<32x128xf32, #tpu.memory_space<vmem>>, vector<32x128xf32>
    %265 = arith.truncf %263 : vector<4x32xf32> to vector<4x32xbf16>
    %266 = arith.truncf %264 : vector<32x128xf32> to vector<32x128xbf16>
    %cst_137 = arith.constant dense<0.000000e+00> : vector<4x128xf32>
    %267 = tpu.matmul %265, %266, %cst_137 {dimension_numbers = #tpu.dot_dimension_numbers<[1], [0], [0], [1], [0, 0, 1, 1], [], []>} : vector<4x32xbf16>, vector<32x128xbf16>, vector<4x128xf32> -> vector<4x128xf32>
    %c0_138 = arith.constant 0 : index
    %c0_139 = arith.constant 0 : index
    %268 = vector.load %arg13[%c0_138, %c0_139] : memref<1x128xf32, #tpu.memory_space<vmem>>, vector<1x128xf32>
    %269 = vector.broadcast %268 : vector<1x128xf32> to vector<4x128xf32>
    %270 = arith.addf %267, %269 : vector<4x128xf32>
    %271 = arith.mulf %270, %270 : vector<4x128xf32>
    %272 = arith.mulf %270, %271 : vector<4x128xf32>
    %cst_140 = arith.constant 4.471500e-02 : f32
    %273 = vector.broadcast %cst_140 : f32 to vector<4x128xf32>
    %274 = arith.mulf %273, %272 : vector<4x128xf32>
    %275 = arith.addf %270, %274 : vector<4x128xf32>
    %cst_141 = arith.constant 0.797884583 : f32
    %276 = vector.broadcast %cst_141 : f32 to vector<4x128xf32>
    %277 = arith.mulf %276, %275 : vector<4x128xf32>
    %278 = math.tanh %277 : vector<4x128xf32>
    %cst_142 = arith.constant 1.000000e+00 : f32
    %279 = vector.broadcast %cst_142 : f32 to vector<4x128xf32>
    %280 = arith.addf %279, %278 : vector<4x128xf32>
    %cst_143 = arith.constant 5.000000e-01 : f32
    %281 = vector.broadcast %cst_143 : f32 to vector<4x128xf32>
    %282 = arith.mulf %281, %280 : vector<4x128xf32>
    %283 = arith.mulf %270, %282 : vector<4x128xf32>
    %c0_144 = arith.constant 0 : index
    %c0_145 = arith.constant 0 : index
    %284 = vector.load %arg14[%c0_144, %c0_145] : memref<128x32xf32, #tpu.memory_space<vmem>>, vector<128x32xf32>
    %285 = arith.truncf %283 : vector<4x128xf32> to vector<4x128xbf16>
    %286 = arith.truncf %284 : vector<128x32xf32> to vector<128x32xbf16>
    %cst_146 = arith.constant dense<0.000000e+00> : vector<4x32xf32>
    %287 = tpu.matmul %285, %286, %cst_146 {dimension_numbers = #tpu.dot_dimension_numbers<[1], [0], [0], [1], [0, 0, 1, 1], [], []>} : vector<4x128xbf16>, vector<128x32xbf16>, vector<4x32xf32> -> vector<4x32xf32>
    %288 = arith.addf %239, %287 : vector<4x32xf32>
    %c0_147 = arith.constant 0 : index
    %c0_148 = arith.constant 0 : index
    %289 = vector.load %arg15[%c0_147, %c0_148] : memref<1x32xf32, #tpu.memory_space<vmem>>, vector<1x32xf32>
    %290 = vector.broadcast %289 : vector<1x32xf32> to vector<4x32xf32>
    %291 = arith.addf %288, %290 : vector<4x32xf32>
    %c0_149 = arith.constant 0 : index
    %c0_150 = arith.constant 0 : index
    %292 = vector.load %arg16[%c0_149, %c0_150] : memref<32x64xf32, #tpu.memory_space<vmem>>, vector<32x64xf32>
    %293 = arith.truncf %291 : vector<4x32xf32> to vector<4x32xbf16>
    %294 = arith.truncf %292 : vector<32x64xf32> to vector<32x64xbf16>
    %cst_151 = arith.constant dense<0.000000e+00> : vector<4x64xf32>
    %295 = tpu.matmul %293, %294, %cst_151 {dimension_numbers = #tpu.dot_dimension_numbers<[1], [0], [0], [1], [0, 0, 1, 1], [], []>} : vector<4x32xbf16>, vector<32x64xbf16>, vector<4x64xf32> -> vector<4x64xf32>
    %c0_152 = arith.constant 0 : index
    %c0_153 = arith.constant 0 : index
    %296 = vector.load %arg17[%c0_152, %c0_153] : memref<1x64xf32, #tpu.memory_space<vmem>>, vector<1x64xf32>
    %297 = vector.broadcast %296 : vector<1x64xf32> to vector<4x64xf32>
    %298 = arith.addf %295, %297 : vector<4x64xf32>
    %c0_154 = arith.constant 0 : index
    %c0_155 = arith.constant 0 : index
    %c0_156 = arith.constant 0 : index
    %299 = vector.load %arg18[%c0_154, %c0_155, %c0_156] : memref<1x4x64xf32, #tpu.memory_space<vmem>>, vector<1x4x64xf32>
    %300 = vector.shape_cast %299 : vector<1x4x64xf32> to vector<4x64xf32>
    %301 = vector.shape_cast %298 : vector<4x64xf32> to vector<1x4x64xf32>
    tpu.vector_store %arg18[%c0_154, %c0_155, %c0_156], %301 {strides = array<i32>} : memref<1x4x64xf32, #tpu.memory_space<vmem>>, vector<1x4x64xf32>,
    return
  }
  func.func @transform_0(%arg0: i32) -> (i32, i32, i32) {
    %c0_i32 = arith.constant 0 : i32
    %c0_i32_0 = arith.constant 0 : i32
    %c0_i32_1 = arith.constant 0 : i32
    return %arg0, %c0_i32, %c0_i32_0 : i32, i32, i32
  }
  func.func @transform_1(%arg0: i32) -> (i32, i32) {
    %c0_i32 = arith.constant 0 : i32
    %c0_i32_0 = arith.constant 0 : i32
    %c0_i32_1 = arith.constant 0 : i32
    return %c0_i32, %c0_i32_0 : i32, i32
  }
  func.func @transform_2(%arg0: i32) -> (i32, i32) {
    %c0_i32 = arith.constant 0 : i32
    %c0_i32_0 = arith.constant 0 : i32
    %c0_i32_1 = arith.constant 0 : i32
    return %c0_i32, %c0_i32_0 : i32, i32
  }
  func.func @transform_3(%arg0: i32) -> (i32, i32) {
    %c0_i32 = arith.constant 0 : i32
    %c0_i32_0 = arith.constant 0 : i32
    %c0_i32_1 = arith.constant 0 : i32
    return %c0_i32, %c0_i32_0 : i32, i32
  }
  func.func @transform_4(%arg0: i32) -> (i32, i32) {
    %c0_i32 = arith.constant 0 : i32
    %c0_i32_0 = arith.constant 0 : i32
    %c0_i32_1 = arith.constant 0 : i32
    return %c0_i32, %c0_i32_0 : i32, i32
  }
  func.func @transform_5(%arg0: i32) -> (i32, i32, i32) {
    %c0_i32 = arith.constant 0 : i32
    %c0_i32_0 = arith.constant 0 : i32
    %c0_i32_1 = arith.constant 0 : i32
    %c0_i32_2 = arith.constant 0 : i32
    return %c0_i32, %c0_i32_0, %c0_i32_1 : i32, i32, i32
  }
  func.func @transform_6(%arg0: i32) -> (i32, i32, i32) {
    %c0_i32 = arith.constant 0 : i32
    %c0_i32_0 = arith.constant 0 : i32
    %c0_i32_1 = arith.constant 0 : i32
    %c0_i32_2 = arith.constant 0 : i32
    return %c0_i32, %c0_i32_0, %c0_i32_1 : i32, i32, i32
  }
  func.func @transform_7(%arg0: i32) -> (i32, i32, i32) {
    %c0_i32 = arith.constant 0 : i32
    %c0_i32_0 = arith.constant 0 : i32
    %c0_i32_1 = arith.constant 0 : i32
    %c0_i32_2 = arith.constant 0 : i32
    return %c0_i32, %c0_i32_0, %c0_i32_1 : i32, i32, i32
  }
  func.func @transform_8(%arg0: i32) -> (i32, i32) {
    %c0_i32 = arith.constant 0 : i32
    %c0_i32_0 = arith.constant 0 : i32
    %c0_i32_1 = arith.constant 0 : i32
    return %c0_i32, %c0_i32_0 : i32, i32
  }
  func.func @transform_9(%arg0: i32) -> (i32, i32) {
    %c0_i32 = arith.constant 0 : i32
    %c0_i32_0 = arith.constant 0 : i32
    %c0_i32_1 = arith.constant 0 : i32
    return %c0_i32, %c0_i32_0 : i32, i32
  }
  func.func @transform_10(%arg0: i32) -> (i32, i32) {
    %c0_i32 = arith.constant 0 : i32
    %c0_i32_0 = arith.constant 0 : i32
    %c0_i32_1 = arith.constant 0 : i32
    return %c0_i32, %c0_i32_0 : i32, i32
  }
  func.func @transform_11(%arg0: i32) -> (i32, i32) {
    %c0_i32 = arith.constant 0 : i32
    %c0_i32_0 = arith.constant 0 : i32
    %c0_i32_1 = arith.constant 0 : i32
    return %c0_i32, %c0_i32_0 : i32, i32
  }
  func.func @transform_12(%arg0: i32) -> (i32, i32) {
    %c0_i32 = arith.constant 0 : i32
    %c0_i32_0 = arith.constant 0 : i32
    %c0_i32_1 = arith.constant 0 : i32
    return %c0_i32, %c0_i32_0 : i32, i32
  }
  func.func @transform_13(%arg0: i32) -> (i32, i32) {
    %c0_i32 = arith.constant 0 : i32
    %c0_i32_0 = arith.constant 0 : i32
    %c0_i32_1 = arith.constant 0 : i32
    return %c0_i32, %c0_i32_0 : i32, i32
  }
  func.func @transform_14(%arg0: i32) -> (i32, i32) {
    %c0_i32 = arith.constant 0 : i32
    %c0_i32_0 = arith.constant 0 : i32
    %c0_i32_1 = arith.constant 0 : i32
    return %c0_i32, %c0_i32_0 : i32, i32
  }
  func.func @transform_15(%arg0: i32) -> (i32, i32) {
    %c0_i32 = arith.constant 0 : i32
    %c0_i32_0 = arith.constant 0 : i32
    %c0_i32_1 = arith.constant 0 : i32
    return %c0_i32, %c0_i32_0 : i32, i32
  }
  func.func @transform_16(%arg0: i32) -> (i32, i32) {
    %c0_i32 = arith.constant 0 : i32
    %c0_i32_0 = arith.constant 0 : i32
    %c0_i32_1 = arith.constant 0 : i32
    return %c0_i32, %c0_i32_0 : i32, i32
  }
  func.func @transform_17(%arg0: i32) -> (i32, i32, i32) {
    %c0_i32 = arith.constant 0 : i32
    %c0_i32_0 = arith.constant 0 : i32
    %c0_i32_1 = arith.constant 0 : i32
    return %arg0, %c0_i32, %c0_i32_0 : i32, i32, i32
  }
}

module attributes {stable_mosaic.version = 11 : i64} {
  func.func @_stage_kernel(%arg0: i32, %arg1: memref<1x16x16xf32, #tpu.memory_space<vmem>>, %arg2: memref<1x16xf32, #tpu.memory_space<vmem>>, %arg3: memref<1x16xf32, #tpu.memory_space<vmem>>, %arg4: memref<6x16x8xf32, #tpu.memory_space<vmem>>, %arg5: memref<6x1x8xf32, #tpu.memory_space<vmem>>, %arg6: memref<2x8x16xf32, #tpu.memory_space<vmem>>, %arg7: memref<1x16xf32, #tpu.memory_space<vmem>>, %arg8: memref<1x16xf32, #tpu.memory_space<vmem>>, %arg9: memref<1x16xf32, #tpu.memory_space<vmem>>, %arg10: memref<16x64xf32, #tpu.memory_space<vmem>>, %arg11: memref<1x64xf32, #tpu.memory_space<vmem>>, %arg12: memref<64x16xf32, #tpu.memory_space<vmem>>, %arg13: memref<1x16xf32, #tpu.memory_space<vmem>>, %arg14: memref<16x16xf32, #tpu.memory_space<vmem>>, %arg15: memref<16x48xf32, #tpu.memory_space<vmem>>, %arg16: memref<1x48xf32, #tpu.memory_space<vmem>>, %arg17: memref<1x16x48xf32, #tpu.memory_space<vmem>>) attributes {dimension_semantics = [#tpu.dimension_semantics<parallel>], iteration_bounds = array<i64: 2>, scalar_prefetch = 0 : i64, scratch_operands = 0 : i64, tpu.core_type = #tpu.core_type<tc>, window_params = [{transform_indices = @transform_0, window_bounds = array<i64: 1, 16, 16>}, {pipeline_mode = #tpu.pipeline_mode<synchronous>, transform_indices = @transform_1, window_bounds = array<i64: 1, 16>}, {pipeline_mode = #tpu.pipeline_mode<synchronous>, transform_indices = @transform_2, window_bounds = array<i64: 1, 16>}, {pipeline_mode = #tpu.pipeline_mode<synchronous>, transform_indices = @transform_3, window_bounds = array<i64: 6, 16, 8>}, {pipeline_mode = #tpu.pipeline_mode<synchronous>, transform_indices = @transform_4, window_bounds = array<i64: 6, 1, 8>}, {pipeline_mode = #tpu.pipeline_mode<synchronous>, transform_indices = @transform_5, window_bounds = array<i64: 2, 8, 16>}, {pipeline_mode = #tpu.pipeline_mode<synchronous>, transform_indices = @transform_6, window_bounds = array<i64: 1, 16>}, {pipeline_mode = #tpu.pipeline_mode<synchronous>, transform_indices = @transform_7, window_bounds = array<i64: 1, 16>}, {pipeline_mode = #tpu.pipeline_mode<synchronous>, transform_indices = @transform_8, window_bounds = array<i64: 1, 16>}, {pipeline_mode = #tpu.pipeline_mode<synchronous>, transform_indices = @transform_9, window_bounds = array<i64: 16, 64>}, {pipeline_mode = #tpu.pipeline_mode<synchronous>, transform_indices = @transform_10, window_bounds = array<i64: 1, 64>}, {pipeline_mode = #tpu.pipeline_mode<synchronous>, transform_indices = @transform_11, window_bounds = array<i64: 64, 16>}, {pipeline_mode = #tpu.pipeline_mode<synchronous>, transform_indices = @transform_12, window_bounds = array<i64: 1, 16>}, {pipeline_mode = #tpu.pipeline_mode<synchronous>, transform_indices = @transform_13, window_bounds = array<i64: 16, 16>}, {pipeline_mode = #tpu.pipeline_mode<synchronous>, transform_indices = @transform_14, window_bounds = array<i64: 16, 48>}, {pipeline_mode = #tpu.pipeline_mode<synchronous>, transform_indices = @transform_15, window_bounds = array<i64: 1, 48>}, {transform_indices = @transform_16, window_bounds = array<i64: 1, 16, 48>}]} {
    %c0 = arith.constant 0 : index
    %c0_0 = arith.constant 0 : index
    %c0_1 = arith.constant 0 : index
    %0 = vector.load %arg1[%c0, %c0_0, %c0_1] : memref<1x16x16xf32, #tpu.memory_space<vmem>>, vector<1x16x16xf32>
    %1 = vector.shape_cast %0 : vector<1x16x16xf32> to vector<16x16xf32>
    %c0_2 = arith.constant 0 : index
    %c0_3 = arith.constant 0 : index
    %2 = vector.load %arg14[%c0_2, %c0_3] : memref<16x16xf32, #tpu.memory_space<vmem>>, vector<16x16xf32>
    %c0_4 = arith.constant 0 : index
    %c0_5 = arith.constant 0 : index
    %3 = vector.load %arg2[%c0_4, %c0_5] : memref<1x16xf32, #tpu.memory_space<vmem>>, vector<1x16xf32>
    %c0_6 = arith.constant 0 : index
    %c0_7 = arith.constant 0 : index
    %4 = vector.load %arg3[%c0_6, %c0_7] : memref<1x16xf32, #tpu.memory_space<vmem>>, vector<1x16xf32>
    %cst = arith.constant dense<0.000000e+00> : vector<16xf32>
    %5 = vector.multi_reduction <add>, %1, %cst [1] : vector<16x16xf32> to vector<16xf32>
    %6 = vector.shape_cast %5 : vector<16xf32> to vector<16x1xf32>
    %cst_8 = arith.constant 1.600000e+01 : f32
    %7 = vector.broadcast %cst_8 : f32 to vector<16x1xf32>
    %8 = arith.divf %6, %7 : vector<16x1xf32>
    %9 = vector.broadcast %8 : vector<16x1xf32> to vector<16x16xf32>
    %10 = arith.subf %1, %9 : vector<16x16xf32>
    %11 = arith.mulf %10, %10 : vector<16x16xf32>
    %cst_9 = arith.constant dense<0.000000e+00> : vector<16xf32>
    %12 = vector.multi_reduction <add>, %11, %cst_9 [1] : vector<16x16xf32> to vector<16xf32>
    %13 = vector.shape_cast %12 : vector<16xf32> to vector<16x1xf32>
    %cst_10 = arith.constant 1.600000e+01 : f32
    %14 = vector.broadcast %cst_10 : f32 to vector<16x1xf32>
    %15 = arith.divf %13, %14 : vector<16x1xf32>
    %16 = vector.broadcast %8 : vector<16x1xf32> to vector<16x16xf32>
    %17 = arith.subf %1, %16 : vector<16x16xf32>
    %cst_11 = arith.constant 9.99999974E-6 : f32
    %18 = vector.broadcast %cst_11 : f32 to vector<16x1xf32>
    %19 = arith.addf %15, %18 : vector<16x1xf32>
    %20 = math.rsqrt %19 : vector<16x1xf32>
    %21 = vector.broadcast %20 : vector<16x1xf32> to vector<16x16xf32>
    %22 = arith.mulf %17, %21 : vector<16x16xf32>
    %23 = vector.broadcast %3 : vector<1x16xf32> to vector<16x16xf32>
    %24 = arith.mulf %22, %23 : vector<16x16xf32>
    %25 = vector.broadcast %4 : vector<1x16xf32> to vector<16x16xf32>
    %26 = arith.addf %24, %25 : vector<16x16xf32>
    %c0_12 = arith.constant 0 : index
    %c0_13 = arith.constant 0 : index
    %c0_14 = arith.constant 0 : index
    %27 = vector.load %arg4[%c0_12, %c0_13, %c0_14] : memref<6x16x8xf32, #tpu.memory_space<vmem>>, vector<1x16x8xf32>
    %28 = vector.shape_cast %27 : vector<1x16x8xf32> to vector<16x8xf32>
    %29 = arith.truncf %26 : vector<16x16xf32> to vector<16x16xbf16>
    %30 = arith.truncf %28 : vector<16x8xf32> to vector<16x8xbf16>
    %cst_15 = arith.constant dense<0.000000e+00> : vector<16x8xf32>
    %31 = tpu.matmul %29, %30, %cst_15 {dimension_numbers = #tpu.dot_dimension_numbers<[1], [0], [0], [1], [0, 0, 1, 1], [], []>} : vector<16x16xbf16>, vector<16x8xbf16>, vector<16x8xf32> -> vector<16x8xf32>
    %c0_16 = arith.constant 0 : index
    %c0_17 = arith.constant 0 : index
    %c0_18 = arith.constant 0 : index
    %32 = vector.load %arg5[%c0_16, %c0_17, %c0_18] : memref<6x1x8xf32, #tpu.memory_space<vmem>>, vector<1x1x8xf32>
    %33 = vector.shape_cast %32 : vector<1x1x8xf32> to vector<1x8xf32>
    %34 = vector.broadcast %33 : vector<1x8xf32> to vector<16x8xf32>
    %35 = arith.addf %31, %34 : vector<16x8xf32>
    %c2 = arith.constant 2 : index
    %c0_19 = arith.constant 0 : index
    %c0_20 = arith.constant 0 : index
    %36 = vector.load %arg4[%c2, %c0_19, %c0_20] : memref<6x16x8xf32, #tpu.memory_space<vmem>>, vector<1x16x8xf32>
    %37 = vector.shape_cast %36 : vector<1x16x8xf32> to vector<16x8xf32>
    %38 = arith.truncf %26 : vector<16x16xf32> to vector<16x16xbf16>
    %39 = arith.truncf %37 : vector<16x8xf32> to vector<16x8xbf16>
    %cst_21 = arith.constant dense<0.000000e+00> : vector<16x8xf32>
    %40 = tpu.matmul %38, %39, %cst_21 {dimension_numbers = #tpu.dot_dimension_numbers<[1], [0], [0], [1], [0, 0, 1, 1], [], []>} : vector<16x16xbf16>, vector<16x8xbf16>, vector<16x8xf32> -> vector<16x8xf32>
    %c2_22 = arith.constant 2 : index
    %c0_23 = arith.constant 0 : index
    %c0_24 = arith.constant 0 : index
    %41 = vector.load %arg5[%c2_22, %c0_23, %c0_24] : memref<6x1x8xf32, #tpu.memory_space<vmem>>, vector<1x1x8xf32>
    %42 = vector.shape_cast %41 : vector<1x1x8xf32> to vector<1x8xf32>
    %43 = vector.broadcast %42 : vector<1x8xf32> to vector<16x8xf32>
    %44 = arith.addf %40, %43 : vector<16x8xf32>
    %c4 = arith.constant 4 : index
    %c0_25 = arith.constant 0 : index
    %c0_26 = arith.constant 0 : index
    %45 = vector.load %arg4[%c4, %c0_25, %c0_26] : memref<6x16x8xf32, #tpu.memory_space<vmem>>, vector<1x16x8xf32>
    %46 = vector.shape_cast %45 : vector<1x16x8xf32> to vector<16x8xf32>
    %47 = arith.truncf %26 : vector<16x16xf32> to vector<16x16xbf16>
    %48 = arith.truncf %46 : vector<16x8xf32> to vector<16x8xbf16>
    %cst_27 = arith.constant dense<0.000000e+00> : vector<16x8xf32>
    %49 = tpu.matmul %47, %48, %cst_27 {dimension_numbers = #tpu.dot_dimension_numbers<[1], [0], [0], [1], [0, 0, 1, 1], [], []>} : vector<16x16xbf16>, vector<16x8xbf16>, vector<16x8xf32> -> vector<16x8xf32>
    %c4_28 = arith.constant 4 : index
    %c0_29 = arith.constant 0 : index
    %c0_30 = arith.constant 0 : index
    %50 = vector.load %arg5[%c4_28, %c0_29, %c0_30] : memref<6x1x8xf32, #tpu.memory_space<vmem>>, vector<1x1x8xf32>
    %51 = vector.shape_cast %50 : vector<1x1x8xf32> to vector<1x8xf32>
    %52 = vector.broadcast %51 : vector<1x8xf32> to vector<16x8xf32>
    %53 = arith.addf %49, %52 : vector<16x8xf32>
    %54 = arith.truncf %35 : vector<16x8xf32> to vector<16x8xbf16>
    %55 = arith.truncf %44 : vector<16x8xf32> to vector<16x8xbf16>
    %cst_31 = arith.constant dense<0.000000e+00> : vector<16x16xf32>
    %56 = tpu.matmul %54, %55, %cst_31 {dimension_numbers = #tpu.dot_dimension_numbers<[1], [1], [0], [0], [0, 0, 1, 0], [], []>} : vector<16x8xbf16>, vector<16x8xbf16>, vector<16x16xf32> -> vector<16x16xf32>
    %cst_32 = arith.constant 0.353553385 : f32
    %57 = vector.broadcast %cst_32 : f32 to vector<16x16xf32>
    %58 = arith.mulf %56, %57 : vector<16x16xf32>
    %59 = arith.addf %58, %2 : vector<16x16xf32>
    %cst_33 = arith.constant dense<0xFF800000> : vector<16xf32>
    %60 = vector.multi_reduction <maximumf>, %59, %cst_33 [1] : vector<16x16xf32> to vector<16xf32>
    %61 = vector.shape_cast %60 : vector<16xf32> to vector<16x1xf32>
    %62 = vector.broadcast %61 : vector<16x1xf32> to vector<16x16xf32>
    %63 = arith.subf %59, %62 : vector<16x16xf32>
    %64 = math.exp %63 : vector<16x16xf32>
    %cst_34 = arith.constant dense<0.000000e+00> : vector<16xf32>
    %65 = vector.multi_reduction <add>, %64, %cst_34 [1] : vector<16x16xf32> to vector<16xf32>
    %66 = vector.shape_cast %65 : vector<16xf32> to vector<16x1xf32>
    %67 = tpu.reciprocal %66 {approx = true} : vector<16x1xf32> -> vector<16x1xf32>
    %68 = vector.broadcast %67 : vector<16x1xf32> to vector<16x16xf32>
    %69 = arith.mulf %64, %68 : vector<16x16xf32>
    %70 = arith.truncf %69 : vector<16x16xf32> to vector<16x16xbf16>
    %71 = arith.truncf %53 : vector<16x8xf32> to vector<16x8xbf16>
    %cst_35 = arith.constant dense<0.000000e+00> : vector<16x8xf32>
    %72 = tpu.matmul %70, %71, %cst_35 {dimension_numbers = #tpu.dot_dimension_numbers<[1], [0], [0], [1], [0, 0, 1, 1], [], []>} : vector<16x16xbf16>, vector<16x8xbf16>, vector<16x8xf32> -> vector<16x8xf32>
    %c0_36 = arith.constant 0 : index
    %c0_37 = arith.constant 0 : index
    %c0_38 = arith.constant 0 : index
    %73 = vector.load %arg6[%c0_36, %c0_37, %c0_38] : memref<2x8x16xf32, #tpu.memory_space<vmem>>, vector<1x8x16xf32>
    %74 = vector.shape_cast %73 : vector<1x8x16xf32> to vector<8x16xf32>
    %75 = arith.truncf %72 : vector<16x8xf32> to vector<16x8xbf16>
    %76 = arith.truncf %74 : vector<8x16xf32> to vector<8x16xbf16>
    %cst_39 = arith.constant dense<0.000000e+00> : vector<16x16xf32>
    %77 = tpu.matmul %75, %76, %cst_39 {dimension_numbers = #tpu.dot_dimension_numbers<[1], [0], [0], [1], [0, 0, 1, 1], [], []>} : vector<16x8xbf16>, vector<8x16xbf16>, vector<16x16xf32> -> vector<16x16xf32>
    %c1 = arith.constant 1 : index
    %c0_40 = arith.constant 0 : index
    %c0_41 = arith.constant 0 : index
    %78 = vector.load %arg4[%c1, %c0_40, %c0_41] : memref<6x16x8xf32, #tpu.memory_space<vmem>>, vector<1x16x8xf32>
    %79 = vector.shape_cast %78 : vector<1x16x8xf32> to vector<16x8xf32>
    %80 = arith.truncf %26 : vector<16x16xf32> to vector<16x16xbf16>
    %81 = arith.truncf %79 : vector<16x8xf32> to vector<16x8xbf16>
    %cst_42 = arith.constant dense<0.000000e+00> : vector<16x8xf32>
    %82 = tpu.matmul %80, %81, %cst_42 {dimension_numbers = #tpu.dot_dimension_numbers<[1], [0], [0], [1], [0, 0, 1, 1], [], []>} : vector<16x16xbf16>, vector<16x8xbf16>, vector<16x8xf32> -> vector<16x8xf32>
    %c1_43 = arith.constant 1 : index
    %c0_44 = arith.constant 0 : index
    %c0_45 = arith.constant 0 : index
    %83 = vector.load %arg5[%c1_43, %c0_44, %c0_45] : memref<6x1x8xf32, #tpu.memory_space<vmem>>, vector<1x1x8xf32>
    %84 = vector.shape_cast %83 : vector<1x1x8xf32> to vector<1x8xf32>
    %85 = vector.broadcast %84 : vector<1x8xf32> to vector<16x8xf32>
    %86 = arith.addf %82, %85 : vector<16x8xf32>
    %c3 = arith.constant 3 : index
    %c0_46 = arith.constant 0 : index
    %c0_47 = arith.constant 0 : index
    %87 = vector.load %arg4[%c3, %c0_46, %c0_47] : memref<6x16x8xf32, #tpu.memory_space<vmem>>, vector<1x16x8xf32>
    %88 = vector.shape_cast %87 : vector<1x16x8xf32> to vector<16x8xf32>
    %89 = arith.truncf %26 : vector<16x16xf32> to vector<16x16xbf16>
    %90 = arith.truncf %88 : vector<16x8xf32> to vector<16x8xbf16>
    %cst_48 = arith.constant dense<0.000000e+00> : vector<16x8xf32>
    %91 = tpu.matmul %89, %90, %cst_48 {dimension_numbers = #tpu.dot_dimension_numbers<[1], [0], [0], [1], [0, 0, 1, 1], [], []>} : vector<16x16xbf16>, vector<16x8xbf16>, vector<16x8xf32> -> vector<16x8xf32>
    %c3_49 = arith.constant 3 : index
    %c0_50 = arith.constant 0 : index
    %c0_51 = arith.constant 0 : index
    %92 = vector.load %arg5[%c3_49, %c0_50, %c0_51] : memref<6x1x8xf32, #tpu.memory_space<vmem>>, vector<1x1x8xf32>
    %93 = vector.shape_cast %92 : vector<1x1x8xf32> to vector<1x8xf32>
    %94 = vector.broadcast %93 : vector<1x8xf32> to vector<16x8xf32>
    %95 = arith.addf %91, %94 : vector<16x8xf32>
    %c5 = arith.constant 5 : index
    %c0_52 = arith.constant 0 : index
    %c0_53 = arith.constant 0 : index
    %96 = vector.load %arg4[%c5, %c0_52, %c0_53] : memref<6x16x8xf32, #tpu.memory_space<vmem>>, vector<1x16x8xf32>
    %97 = vector.shape_cast %96 : vector<1x16x8xf32> to vector<16x8xf32>
    %98 = arith.truncf %26 : vector<16x16xf32> to vector<16x16xbf16>
    %99 = arith.truncf %97 : vector<16x8xf32> to vector<16x8xbf16>
    %cst_54 = arith.constant dense<0.000000e+00> : vector<16x8xf32>
    %100 = tpu.matmul %98, %99, %cst_54 {dimension_numbers = #tpu.dot_dimension_numbers<[1], [0], [0], [1], [0, 0, 1, 1], [], []>} : vector<16x16xbf16>, vector<16x8xbf16>, vector<16x8xf32> -> vector<16x8xf32>
    %c5_55 = arith.constant 5 : index
    %c0_56 = arith.constant 0 : index
    %c0_57 = arith.constant 0 : index
    %101 = vector.load %arg5[%c5_55, %c0_56, %c0_57] : memref<6x1x8xf32, #tpu.memory_space<vmem>>, vector<1x1x8xf32>
    %102 = vector.shape_cast %101 : vector<1x1x8xf32> to vector<1x8xf32>
    %103 = vector.broadcast %102 : vector<1x8xf32> to vector<16x8xf32>
    %104 = arith.addf %100, %103 : vector<16x8xf32>
    %105 = arith.truncf %86 : vector<16x8xf32> to vector<16x8xbf16>
    %106 = arith.truncf %95 : vector<16x8xf32> to vector<16x8xbf16>
    %cst_58 = arith.constant dense<0.000000e+00> : vector<16x16xf32>
    %107 = tpu.matmul %105, %106, %cst_58 {dimension_numbers = #tpu.dot_dimension_numbers<[1], [1], [0], [0], [0, 0, 1, 0], [], []>} : vector<16x8xbf16>, vector<16x8xbf16>, vector<16x16xf32> -> vector<16x16xf32>
    %cst_59 = arith.constant 0.353553385 : f32
    %108 = vector.broadcast %cst_59 : f32 to vector<16x16xf32>
    %109 = arith.mulf %107, %108 : vector<16x16xf32>
    %110 = arith.addf %109, %2 : vector<16x16xf32>
    %cst_60 = arith.constant dense<0xFF800000> : vector<16xf32>
    %111 = vector.multi_reduction <maximumf>, %110, %cst_60 [1] : vector<16x16xf32> to vector<16xf32>
    %112 = vector.shape_cast %111 : vector<16xf32> to vector<16x1xf32>
    %113 = vector.broadcast %112 : vector<16x1xf32> to vector<16x16xf32>
    %114 = arith.subf %110, %113 : vector<16x16xf32>
    %115 = math.exp %114 : vector<16x16xf32>
    %cst_61 = arith.constant dense<0.000000e+00> : vector<16xf32>
    %116 = vector.multi_reduction <add>, %115, %cst_61 [1] : vector<16x16xf32> to vector<16xf32>
    %117 = vector.shape_cast %116 : vector<16xf32> to vector<16x1xf32>
    %118 = tpu.reciprocal %117 {approx = true} : vector<16x1xf32> -> vector<16x1xf32>
    %119 = vector.broadcast %118 : vector<16x1xf32> to vector<16x16xf32>
    %120 = arith.mulf %115, %119 : vector<16x16xf32>
    %121 = arith.truncf %120 : vector<16x16xf32> to vector<16x16xbf16>
    %122 = arith.truncf %104 : vector<16x8xf32> to vector<16x8xbf16>
    %cst_62 = arith.constant dense<0.000000e+00> : vector<16x8xf32>
    %123 = tpu.matmul %121, %122, %cst_62 {dimension_numbers = #tpu.dot_dimension_numbers<[1], [0], [0], [1], [0, 0, 1, 1], [], []>} : vector<16x16xbf16>, vector<16x8xbf16>, vector<16x8xf32> -> vector<16x8xf32>
    %c1_63 = arith.constant 1 : index
    %c0_64 = arith.constant 0 : index
    %c0_65 = arith.constant 0 : index
    %124 = vector.load %arg6[%c1_63, %c0_64, %c0_65] : memref<2x8x16xf32, #tpu.memory_space<vmem>>, vector<1x8x16xf32>
    %125 = vector.shape_cast %124 : vector<1x8x16xf32> to vector<8x16xf32>
    %126 = arith.truncf %123 : vector<16x8xf32> to vector<16x8xbf16>
    %127 = arith.truncf %125 : vector<8x16xf32> to vector<8x16xbf16>
    %cst_66 = arith.constant dense<0.000000e+00> : vector<16x16xf32>
    %128 = tpu.matmul %126, %127, %cst_66 {dimension_numbers = #tpu.dot_dimension_numbers<[1], [0], [0], [1], [0, 0, 1, 1], [], []>} : vector<16x8xbf16>, vector<8x16xbf16>, vector<16x16xf32> -> vector<16x16xf32>
    %129 = arith.addf %77, %128 : vector<16x16xf32>
    %130 = arith.addf %1, %129 : vector<16x16xf32>
    %c0_67 = arith.constant 0 : index
    %c0_68 = arith.constant 0 : index
    %131 = vector.load %arg7[%c0_67, %c0_68] : memref<1x16xf32, #tpu.memory_space<vmem>>, vector<1x16xf32>
    %132 = vector.broadcast %131 : vector<1x16xf32> to vector<16x16xf32>
    %133 = arith.addf %130, %132 : vector<16x16xf32>
    %c0_69 = arith.constant 0 : index
    %c0_70 = arith.constant 0 : index
    %134 = vector.load %arg8[%c0_69, %c0_70] : memref<1x16xf32, #tpu.memory_space<vmem>>, vector<1x16xf32>
    %c0_71 = arith.constant 0 : index
    %c0_72 = arith.constant 0 : index
    %135 = vector.load %arg9[%c0_71, %c0_72] : memref<1x16xf32, #tpu.memory_space<vmem>>, vector<1x16xf32>
    %cst_73 = arith.constant dense<0.000000e+00> : vector<16xf32>
    %136 = vector.multi_reduction <add>, %133, %cst_73 [1] : vector<16x16xf32> to vector<16xf32>
    %137 = vector.shape_cast %136 : vector<16xf32> to vector<16x1xf32>
    %cst_74 = arith.constant 1.600000e+01 : f32
    %138 = vector.broadcast %cst_74 : f32 to vector<16x1xf32>
    %139 = arith.divf %137, %138 : vector<16x1xf32>
    %140 = vector.broadcast %139 : vector<16x1xf32> to vector<16x16xf32>
    %141 = arith.subf %133, %140 : vector<16x16xf32>
    %142 = arith.mulf %141, %141 : vector<16x16xf32>
    %cst_75 = arith.constant dense<0.000000e+00> : vector<16xf32>
    %143 = vector.multi_reduction <add>, %142, %cst_75 [1] : vector<16x16xf32> to vector<16xf32>
    %144 = vector.shape_cast %143 : vector<16xf32> to vector<16x1xf32>
    %cst_76 = arith.constant 1.600000e+01 : f32
    %145 = vector.broadcast %cst_76 : f32 to vector<16x1xf32>
    %146 = arith.divf %144, %145 : vector<16x1xf32>
    %147 = vector.broadcast %139 : vector<16x1xf32> to vector<16x16xf32>
    %148 = arith.subf %133, %147 : vector<16x16xf32>
    %cst_77 = arith.constant 9.99999974E-6 : f32
    %149 = vector.broadcast %cst_77 : f32 to vector<16x1xf32>
    %150 = arith.addf %146, %149 : vector<16x1xf32>
    %151 = math.rsqrt %150 : vector<16x1xf32>
    %152 = vector.broadcast %151 : vector<16x1xf32> to vector<16x16xf32>
    %153 = arith.mulf %148, %152 : vector<16x16xf32>
    %154 = vector.broadcast %134 : vector<1x16xf32> to vector<16x16xf32>
    %155 = arith.mulf %153, %154 : vector<16x16xf32>
    %156 = vector.broadcast %135 : vector<1x16xf32> to vector<16x16xf32>
    %157 = arith.addf %155, %156 : vector<16x16xf32>
    %c0_78 = arith.constant 0 : index
    %c0_79 = arith.constant 0 : index
    %158 = vector.load %arg10[%c0_78, %c0_79] : memref<16x64xf32, #tpu.memory_space<vmem>>, vector<16x64xf32>
    %159 = arith.truncf %157 : vector<16x16xf32> to vector<16x16xbf16>
    %160 = arith.truncf %158 : vector<16x64xf32> to vector<16x64xbf16>
    %cst_80 = arith.constant dense<0.000000e+00> : vector<16x64xf32>
    %161 = tpu.matmul %159, %160, %cst_80 {dimension_numbers = #tpu.dot_dimension_numbers<[1], [0], [0], [1], [0, 0, 1, 1], [], []>} : vector<16x16xbf16>, vector<16x64xbf16>, vector<16x64xf32> -> vector<16x64xf32>
    %c0_81 = arith.constant 0 : index
    %c0_82 = arith.constant 0 : index
    %162 = vector.load %arg11[%c0_81, %c0_82] : memref<1x64xf32, #tpu.memory_space<vmem>>, vector<1x64xf32>
    %163 = vector.broadcast %162 : vector<1x64xf32> to vector<16x64xf32>
    %164 = arith.addf %161, %163 : vector<16x64xf32>
    %165 = arith.mulf %164, %164 : vector<16x64xf32>
    %166 = arith.mulf %164, %165 : vector<16x64xf32>
    %cst_83 = arith.constant 4.471500e-02 : f32
    %167 = vector.broadcast %cst_83 : f32 to vector<16x64xf32>
    %168 = arith.mulf %167, %166 : vector<16x64xf32>
    %169 = arith.addf %164, %168 : vector<16x64xf32>
    %cst_84 = arith.constant 0.797884583 : f32
    %170 = vector.broadcast %cst_84 : f32 to vector<16x64xf32>
    %171 = arith.mulf %170, %169 : vector<16x64xf32>
    %172 = math.tanh %171 : vector<16x64xf32>
    %cst_85 = arith.constant 1.000000e+00 : f32
    %173 = vector.broadcast %cst_85 : f32 to vector<16x64xf32>
    %174 = arith.addf %173, %172 : vector<16x64xf32>
    %cst_86 = arith.constant 5.000000e-01 : f32
    %175 = vector.broadcast %cst_86 : f32 to vector<16x64xf32>
    %176 = arith.mulf %175, %174 : vector<16x64xf32>
    %177 = arith.mulf %164, %176 : vector<16x64xf32>
    %c0_87 = arith.constant 0 : index
    %c0_88 = arith.constant 0 : index
    %178 = vector.load %arg12[%c0_87, %c0_88] : memref<64x16xf32, #tpu.memory_space<vmem>>, vector<64x16xf32>
    %179 = arith.truncf %177 : vector<16x64xf32> to vector<16x64xbf16>
    %180 = arith.truncf %178 : vector<64x16xf32> to vector<64x16xbf16>
    %cst_89 = arith.constant dense<0.000000e+00> : vector<16x16xf32>
    %181 = tpu.matmul %179, %180, %cst_89 {dimension_numbers = #tpu.dot_dimension_numbers<[1], [0], [0], [1], [0, 0, 1, 1], [], []>} : vector<16x64xbf16>, vector<64x16xbf16>, vector<16x16xf32> -> vector<16x16xf32>
    %182 = arith.addf %133, %181 : vector<16x16xf32>
    %c0_90 = arith.constant 0 : index
    %c0_91 = arith.constant 0 : index
    %183 = vector.load %arg13[%c0_90, %c0_91] : memref<1x16xf32, #tpu.memory_space<vmem>>, vector<1x16xf32>
    %184 = vector.broadcast %183 : vector<1x16xf32> to vector<16x16xf32>
    %185 = arith.addf %182, %184 : vector<16x16xf32>
    %c0_92 = arith.constant 0 : index
    %c0_93 = arith.constant 0 : index
    %186 = vector.load %arg15[%c0_92, %c0_93] : memref<16x48xf32, #tpu.memory_space<vmem>>, vector<16x48xf32>
    %187 = arith.truncf %185 : vector<16x16xf32> to vector<16x16xbf16>
    %188 = arith.truncf %186 : vector<16x48xf32> to vector<16x48xbf16>
    %cst_94 = arith.constant dense<0.000000e+00> : vector<16x48xf32>
    %189 = tpu.matmul %187, %188, %cst_94 {dimension_numbers = #tpu.dot_dimension_numbers<[1], [0], [0], [1], [0, 0, 1, 1], [], []>} : vector<16x16xbf16>, vector<16x48xbf16>, vector<16x48xf32> -> vector<16x48xf32>
    %c0_95 = arith.constant 0 : index
    %c0_96 = arith.constant 0 : index
    %190 = vector.load %arg16[%c0_95, %c0_96] : memref<1x48xf32, #tpu.memory_space<vmem>>, vector<1x48xf32>
    %191 = vector.broadcast %190 : vector<1x48xf32> to vector<16x48xf32>
    %192 = arith.addf %189, %191 : vector<16x48xf32>
    %193 = math.tanh %192 : vector<16x48xf32>
    %c0_97 = arith.constant 0 : index
    %c0_98 = arith.constant 0 : index
    %c0_99 = arith.constant 0 : index
    %194 = vector.load %arg17[%c0_97, %c0_98, %c0_99] : memref<1x16x48xf32, #tpu.memory_space<vmem>>, vector<1x16x48xf32>
    %195 = vector.shape_cast %194 : vector<1x16x48xf32> to vector<16x48xf32>
    %196 = vector.shape_cast %193 : vector<16x48xf32> to vector<1x16x48xf32>
    tpu.vector_store %arg17[%c0_97, %c0_98, %c0_99], %196 {strides = array<i32>} : memref<1x16x48xf32, #tpu.memory_space<vmem>>, vector<1x16x48xf32>,
    return
  }
  func.func @transform_0(%arg0: i32) -> (i32, i32, i32) {
    %c0_i32 = arith.constant 0 : i32
    %c0_i32_0 = arith.constant 0 : i32
    %c0_i32_1 = arith.constant 0 : i32
    return %arg0, %c0_i32, %c0_i32_0 : i32, i32, i32
  }
  func.func @transform_1(%arg0: i32) -> (i32, i32) {
    %c0_i32 = arith.constant 0 : i32
    %c0_i32_0 = arith.constant 0 : i32
    %c0_i32_1 = arith.constant 0 : i32
    return %c0_i32, %c0_i32_0 : i32, i32
  }
  func.func @transform_2(%arg0: i32) -> (i32, i32) {
    %c0_i32 = arith.constant 0 : i32
    %c0_i32_0 = arith.constant 0 : i32
    %c0_i32_1 = arith.constant 0 : i32
    return %c0_i32, %c0_i32_0 : i32, i32
  }
  func.func @transform_3(%arg0: i32) -> (i32, i32, i32) {
    %c0_i32 = arith.constant 0 : i32
    %c0_i32_0 = arith.constant 0 : i32
    %c0_i32_1 = arith.constant 0 : i32
    %c0_i32_2 = arith.constant 0 : i32
    return %c0_i32, %c0_i32_0, %c0_i32_1 : i32, i32, i32
  }
  func.func @transform_4(%arg0: i32) -> (i32, i32, i32) {
    %c0_i32 = arith.constant 0 : i32
    %c0_i32_0 = arith.constant 0 : i32
    %c0_i32_1 = arith.constant 0 : i32
    %c0_i32_2 = arith.constant 0 : i32
    return %c0_i32, %c0_i32_0, %c0_i32_1 : i32, i32, i32
  }
  func.func @transform_5(%arg0: i32) -> (i32, i32, i32) {
    %c0_i32 = arith.constant 0 : i32
    %c0_i32_0 = arith.constant 0 : i32
    %c0_i32_1 = arith.constant 0 : i32
    %c0_i32_2 = arith.constant 0 : i32
    return %c0_i32, %c0_i32_0, %c0_i32_1 : i32, i32, i32
  }
  func.func @transform_6(%arg0: i32) -> (i32, i32) {
    %c0_i32 = arith.constant 0 : i32
    %c0_i32_0 = arith.constant 0 : i32
    %c0_i32_1 = arith.constant 0 : i32
    return %c0_i32, %c0_i32_0 : i32, i32
  }
  func.func @transform_7(%arg0: i32) -> (i32, i32) {
    %c0_i32 = arith.constant 0 : i32
    %c0_i32_0 = arith.constant 0 : i32
    %c0_i32_1 = arith.constant 0 : i32
    return %c0_i32, %c0_i32_0 : i32, i32
  }
  func.func @transform_8(%arg0: i32) -> (i32, i32) {
    %c0_i32 = arith.constant 0 : i32
    %c0_i32_0 = arith.constant 0 : i32
    %c0_i32_1 = arith.constant 0 : i32
    return %c0_i32, %c0_i32_0 : i32, i32
  }
  func.func @transform_9(%arg0: i32) -> (i32, i32) {
    %c0_i32 = arith.constant 0 : i32
    %c0_i32_0 = arith.constant 0 : i32
    %c0_i32_1 = arith.constant 0 : i32
    return %c0_i32, %c0_i32_0 : i32, i32
  }
  func.func @transform_10(%arg0: i32) -> (i32, i32) {
    %c0_i32 = arith.constant 0 : i32
    %c0_i32_0 = arith.constant 0 : i32
    %c0_i32_1 = arith.constant 0 : i32
    return %c0_i32, %c0_i32_0 : i32, i32
  }
  func.func @transform_11(%arg0: i32) -> (i32, i32) {
    %c0_i32 = arith.constant 0 : i32
    %c0_i32_0 = arith.constant 0 : i32
    %c0_i32_1 = arith.constant 0 : i32
    return %c0_i32, %c0_i32_0 : i32, i32
  }
  func.func @transform_12(%arg0: i32) -> (i32, i32) {
    %c0_i32 = arith.constant 0 : i32
    %c0_i32_0 = arith.constant 0 : i32
    %c0_i32_1 = arith.constant 0 : i32
    return %c0_i32, %c0_i32_0 : i32, i32
  }
  func.func @transform_13(%arg0: i32) -> (i32, i32) {
    %c0_i32 = arith.constant 0 : i32
    %c0_i32_0 = arith.constant 0 : i32
    %c0_i32_1 = arith.constant 0 : i32
    return %c0_i32, %c0_i32_0 : i32, i32
  }
  func.func @transform_14(%arg0: i32) -> (i32, i32) {
    %c0_i32 = arith.constant 0 : i32
    %c0_i32_0 = arith.constant 0 : i32
    %c0_i32_1 = arith.constant 0 : i32
    return %c0_i32, %c0_i32_0 : i32, i32
  }
  func.func @transform_15(%arg0: i32) -> (i32, i32) {
    %c0_i32 = arith.constant 0 : i32
    %c0_i32_0 = arith.constant 0 : i32
    %c0_i32_1 = arith.constant 0 : i32
    return %c0_i32, %c0_i32_0 : i32, i32
  }
  func.func @transform_16(%arg0: i32) -> (i32, i32, i32) {
    %c0_i32 = arith.constant 0 : i32
    %c0_i32_0 = arith.constant 0 : i32
    %c0_i32_1 = arith.constant 0 : i32
    return %arg0, %c0_i32, %c0_i32_0 : i32, i32, i32
  }
}

</mosaic_0001>

<llo_original>
// kernel: hvit_vae_forward.4
$region0: #{hvit_vae_forward.4}
  #allocation0 [shape = 'u32[]', space=smem, size = 0x4, offset = 0x4, fixed_abs, tag = 'smem constant byte address 0x4 - core index']
  #allocation1 [shape = 'u32[144,128]{1,0:T(1,128)}', space=vmem, size = 0x12000, scoped, tag = 'internal scratch']
  %s0 = inlined_call_operand.vmem [shape: f32[2,16,48], index: 0, kind: input, shape index: {}]
  %s1 = inlined_call_operand.vmem [shape: f32[48,16], index: 1, kind: input, shape index: {}]
  %s2 = inlined_call_operand.vmem [shape: f32[1,16], index: 2, kind: input, shape index: {}]
  %s3 = inlined_call_operand.vmem [shape: f32[1,16], index: 3, kind: input, shape index: {}]
  %s4 = inlined_call_operand.vmem [shape: f32[1,16], index: 4, kind: input, shape index: {}]
  %s5 = inlined_call_operand.vmem [shape: f32[1,16], index: 5, kind: input, shape index: {}]
  %s6 = inlined_call_operand.vmem [shape: f32[1,16], index: 6, kind: input, shape index: {}]
  %s7 = inlined_call_operand.vmem [shape: f32[6,16,8], index: 7, kind: input, shape index: {}]
  %s8 = inlined_call_operand.vmem [shape: f32[6,1,8], index: 8, kind: input, shape index: {}]
  %s9 = inlined_call_operand.vmem [shape: f32[2,8,16], index: 9, kind: input, shape index: {}]
  %s10 = inlined_call_operand.vmem [shape: f32[1,16], index: 10, kind: input, shape index: {}]
  %s11 = inlined_call_operand.vmem [shape: f32[1,16], index: 11, kind: input, shape index: {}]
  %s12 = inlined_call_operand.vmem [shape: f32[1,16], index: 12, kind: input, shape index: {}]
  %s13 = inlined_call_operand.vmem [shape: f32[16,64], index: 13, kind: input, shape index: {}]
  %s14 = inlined_call_operand.vmem [shape: f32[1,64], index: 14, kind: input, shape index: {}]
  %s15 = inlined_call_operand.vmem [shape: f32[64,16], index: 15, kind: input, shape index: {}]
  %s16 = inlined_call_operand.vmem [shape: f32[1,16], index: 16, kind: input, shape index: {}]
  %s17 = inlined_call_operand.vmem [shape: f32[16,16], index: 17, kind: input, shape index: {}]
  %s18 = inlined_call_operand.vmem [shape: f32[2,16,16], index: 18, kind: output, shape index: {}]
  %s19 = sld [smem:[#allocation0]]
  $region105: #{hvit_vae_forward.4} parent=0
    _
  %s21 = ssub.s32 1, %s19
  %s22 = scalar_select 0, %s21, %s19
  loop: start=0, step=1, limit=4
  $region2: #{hvit_vae_forward.4} parent=0 // loop_pre_header
    _
  $region3: #{hvit_vae_forward.4} parent=0 // loop_header
    %s24 = sphi 0, %s28
    %p25 = scmp.ge.s32.totalorder %s24, 4
    %s34 = sphi 0, %s36
    %s37 = sphi 0, %s34
    %s38 = sphi 0, %s37
    %s54 = sphi 0, %s38
    %s58 = sphi 0, %s58
    %s60 = sphi 0, %s58
    %s61 = sphi 0, %s60
    %s75 = sphi 0, %s61
    %s79 = sphi 0, %s79
    %s81 = sphi 0, %s79
    %s82 = sphi 0, %s81
    %s96 = sphi 0, %s82
    %s100 = sphi 0, %s100
    %s102 = sphi 0, %s100
    %s103 = sphi 0, %s102
    %s117 = sphi 0, %s103
    %s121 = sphi 0, %s121
    %s123 = sphi 0, %s121
    %s124 = sphi 0, %s123
    %s138 = sphi 0, %s124
    %s142 = sphi 0, %s142
    %s144 = sphi 0, %s142
    %s145 = sphi 0, %s144
    %s159 = sphi 0, %s145
    %s163 = sphi 0, %s163
    %s165 = sphi 0, %s163
    %s166 = sphi 0, %s165
    %s180 = sphi 0, %s166
    %s184 = sphi 0, %s184
    %s186 = sphi 0, %s184
    %s187 = sphi 0, %s186
    %s201 = sphi 0, %s187
    %s205 = sphi 0, %s205
    %s207 = sphi 0, %s205
    %s208 = sphi 0, %s207
    %s222 = sphi 0, %s208
    %s226 = sphi 0, %s226
    %s228 = sphi 0, %s226
    %s229 = sphi 0, %s228
    %s243 = sphi 0, %s229
    %s247 = sphi 0, %s247
    %s249 = sphi 0, %s247
    %s250 = sphi 0, %s249
    %s264 = sphi 0, %s250
    %s268 = sphi 0, %s268
    %s270 = sphi 0, %s268
    %s271 = sphi 0, %s270
    %s285 = sphi 0, %s271
    %s289 = sphi 0, %s289
    %s291 = sphi 0, %s289
    %s292 = sphi 0, %s291
    %s306 = sphi 0, %s292
    %s310 = sphi 0, %s310
    %s312 = sphi 0, %s310
    %s313 = sphi 0, %s312
    %s327 = sphi 0, %s313
    %s331 = sphi 0, %s331
    %s333 = sphi 0, %s331
    %s334 = sphi 0, %s333
    %s348 = sphi 0, %s334
    %s352 = sphi 0, %s352
    %s354 = sphi 0, %s352
    %s355 = sphi 0, %s354
    %s369 = sphi 0, %s355
    %s373 = sphi 0, %s373
    %s375 = sphi 0, %s373
    %s376 = sphi 0, %s375
    %s390 = sphi 0, %s376
    %s394 = sphi 0, %s394
    %s396 = sphi 0, %s394
    %s397 = sphi 0, %s396
    %s411 = sphi 0, %s397
    %s417 = sphi 0, %s419
    %s420 = sphi 0, %s417
    %s421 = sphi 0, %s420
    %s437 = sphi 0, %s421
  $region4: #{hvit_vae_forward.4} parent=0 // loop_header_branch
    %27 = sbr.rel (%p25) target = $region8
  $region5: #{hvit_vae_forward.4} parent=0 // loop_body
    %s29 = ssub.s32 %s24, 1
    %s30 = ssub.s32 %s24, 2
    %s31 = sadd.s32 %s24, 1
    %s32 = ssub.s32 %s24, %s31
    %p33 = scmp.eq.s32.totalorder %s32, 0
    %s35 = sadd.s32 %s34, 1
    %s36 = scalar_select %p33, %s34, %s35
    %p39 = pneg %p33
    %p40 = scmp.eq.s32.totalorder %s24, 1
    %p41 = por %p39, %p40
    %p42 = scmp.ne.s32.totalorder %s34, %s37
    %p43 = scmp.eq.s32.totalorder %s24, 0
    %p44 = por %p42, %p43
    %p45 = scmp.ne.s32.totalorder %s34, %s37
    %p46 = scmp.eq.s32.totalorder %s29, 1
    %p47 = por %p45, %p46
    %p48 = scmp.ne.s32.totalorder %s37, %s38
    %p49 = scmp.eq.s32.totalorder %s29, 0
    %p50 = por %p48, %p49
    %p51 = scmp.ne.s32.totalorder %s37, %s38
    %p52 = scmp.eq.s32.totalorder %s30, 1
    %p53 = por %p51, %p52
    %p55 = scmp.ne.s32.totalorder %s38, %s54
    %p56 = scmp.eq.s32.totalorder %s30, 0
    %p57 = por %p55, %p56
    %s59 = sadd.s32 %s58, 1
    %p62 = scmp.eq.s32.totalorder %s24, 1
    %p63 = scmp.ne.s32.totalorder %s58, %s60
    %p64 = scmp.eq.s32.totalorder %s24, 0
    %p65 = por %p63, %p64
    %p66 = scmp.ne.s32.totalorder %s58, %s60
    %p67 = scmp.eq.s32.totalorder %s29, 1
    %p68 = por %p66, %p67
    %p69 = scmp.ne.s32.totalorder %s60, %s61
    %p70 = scmp.eq.s32.totalorder %s29, 0
    %p71 = por %p69, %p70
    %p72 = scmp.ne.s32.totalorder %s60, %s61
    %p73 = scmp.eq.s32.totalorder %s30, 1
    %p74 = por %p72, %p73
    %p76 = scmp.ne.s32.totalorder %s61, %s75
    %p77 = scmp.eq.s32.totalorder %s30, 0
    %p78 = por %p76, %p77
    %s80 = sadd.s32 %s79, 1
    %p83 = scmp.eq.s32.totalorder %s24, 1
    %p84 = scmp.ne.s32.totalorder %s79, %s81
    %p85 = scmp.eq.s32.totalorder %s24, 0
    %p86 = por %p84, %p85
    %p87 = scmp.ne.s32.totalorder %s79, %s81
    %p88 = scmp.eq.s32.totalorder %s29, 1
    %p89 = por %p87, %p88
    %p90 = scmp.ne.s32.totalorder %s81, %s82
    %p91 = scmp.eq.s32.totalorder %s29, 0
    %p92 = por %p90, %p91
    %p93 = scmp.ne.s32.totalorder %s81, %s82
    %p94 = scmp.eq.s32.totalorder %s30, 1
    %p95 = por %p93, %p94
    %p97 = scmp.ne.s32.totalorder %s82, %s96
    %p98 = scmp.eq.s32.totalorder %s30, 0
    %p99 = por %p97, %p98
    %s101 = sadd.s32 %s100, 1
    %p104 = scmp.eq.s32.totalorder %s24, 1
    %p105 = scmp.ne.s32.totalorder %s100, %s102
    %p106 = scmp.eq.s32.totalorder %s24, 0
    %p107 = por %p105, %p106
    %p108 = scmp.ne.s32.totalorder %s100, %s102
    %p109 = scmp.eq.s32.totalorder %s29, 1
    %p110 = por %p108, %p109
    %p111 = scmp.ne.s32.totalorder %s102, %s103
    %p112 = scmp.eq.s32.totalorder %s29, 0
    %p113 = por %p111, %p112
    %p114 = scmp.ne.s32.totalorder %s102, %s103
    %p115 = scmp.eq.s32.totalorder %s30, 1
    %p116 = por %p114, %p115
    %p118 = scmp.ne.s32.totalorder %s103, %s117
    %p119 = scmp.eq.s32.totalorder %s30, 0
    %p120 = por %p118, %p119
    %s122 = sadd.s32 %s121, 1
    %p125 = scmp.eq.s32.totalorder %s24, 1
    %p126 = scmp.ne.s32.totalorder %s121, %s123
    %p127 = scmp.eq.s32.totalorder %s24, 0
    %p128 = por %p126, %p127
    %p129 = scmp.ne.s32.totalorder %s121, %s123
    %p130 = scmp.eq.s32.totalorder %s29, 1
    %p131 = por %p129, %p130
    %p132 = scmp.ne.s32.totalorder %s123, %s124
    %p133 = scmp.eq.s32.totalorder %s29, 0
    %p134 = por %p132, %p133
    %p135 = scmp.ne.s32.totalorder %s123, %s124
    %p136 = scmp.eq.s32.totalorder %s30, 1
    %p137 = por %p135, %p136
    %p139 = scmp.ne.s32.totalorder %s124, %s138
    %p140 = scmp.eq.s32.totalorder %s30, 0
    %p141 = por %p139, %p140
    %s143 = sadd.s32 %s142, 1
    %p146 = scmp.eq.s32.totalorder %s24, 1
    %p147 = scmp.ne.s32.totalorder %s142, %s144
    %p148 = scmp.eq.s32.totalorder %s24, 0
    %p149 = por %p147, %p148
    %p150 = scmp.ne.s32.totalorder %s142, %s144
    %p151 = scmp.eq.s32.totalorder %s29, 1
    %p152 = por %p150, %p151
    %p153 = scmp.ne.s32.totalorder %s144, %s145
    %p154 = scmp.eq.s32.totalorder %s29, 0
    %p155 = por %p153, %p154
    %p156 = scmp.ne.s32.totalorder %s144, %s145
    %p157 = scmp.eq.s32.totalorder %s30, 1
    %p158 = por %p156, %p157
    %p160 = scmp.ne.s32.totalorder %s145, %s159
    %p161 = scmp.eq.s32.totalorder %s30, 0
    %p162 = por %p160, %p161
    %s164 = sadd.s32 %s163, 1
    %p167 = scmp.eq.s32.totalorder %s24, 1
    %p168 = scmp.ne.s32.totalorder %s163, %s165
    %p169 = scmp.eq.s32.totalorder %s24, 0
    %p170 = por %p168, %p169
    %p171 = scmp.ne.s32.totalorder %s163, %s165
    %p172 = scmp.eq.s32.totalorder %s29, 1
    %p173 = por %p171, %p172
    %p174 = scmp.ne.s32.totalorder %s165, %s166
    %p175 = scmp.eq.s32.totalorder %s29, 0
    %p176 = por %p174, %p175
    %p177 = scmp.ne.s32.totalorder %s165, %s166
    %p178 = scmp.eq.s32.totalorder %s30, 1
    %p179 = por %p177, %p178
    %p181 = scmp.ne.s32.totalorder %s166, %s180
    %p182 = scmp.eq.s32.totalorder %s30, 0
    %p183 = por %p181, %p182
    %s185 = sadd.s32 %s184, 1
    %p188 = scmp.eq.s32.totalorder %s24, 1
    %p189 = scmp.ne.s32.totalorder %s184, %s186
    %p190 = scmp.eq.s32.totalorder %s24, 0
    %p191 = por %p189, %p190
    %p192 = scmp.ne.s32.totalorder %s184, %s186
    %p193 = scmp.eq.s32.totalorder %s29, 1
    %p194 = por %p192, %p193
    %p195 = scmp.ne.s32.totalorder %s186, %s187
    %p196 = scmp.eq.s32.totalorder %s29, 0
    %p197 = por %p195, %p196
    %p198 = scmp.ne.s32.totalorder %s186, %s187
    %p199 = scmp.eq.s32.totalorder %s30, 1
    %p200 = por %p198, %p199
    %p202 = scmp.ne.s32.totalorder %s187, %s201
    %p203 = scmp.eq.s32.totalorder %s30, 0
    %p204 = por %p202, %p203
    %s206 = sadd.s32 %s205, 1
    %p209 = scmp.eq.s32.totalorder %s24, 1
    %p210 = scmp.ne.s32.totalorder %s205, %s207
    %p211 = scmp.eq.s32.totalorder %s24, 0
    %p212 = por %p210, %p211
    %p213 = scmp.ne.s32.totalorder %s205, %s207
    %p214 = scmp.eq.s32.totalorder %s29, 1
    %p215 = por %p213, %p214
    %p216 = scmp.ne.s32.totalorder %s207, %s208
    %p217 = scmp.eq.s32.totalorder %s29, 0
    %p218 = por %p216, %p217
    %p219 = scmp.ne.s32.totalorder %s207, %s208
    %p220 = scmp.eq.s32.totalorder %s30, 1
    %p221 = por %p219, %p220
    %p223 = scmp.ne.s32.totalorder %s208, %s222
    %p224 = scmp.eq.s32.totalorder %s30, 0
    %p225 = por %p223, %p224
    %s227 = sadd.s32 %s226, 1
    %p230 = scmp.eq.s32.totalorder %s24, 1
    %p231 = scmp.ne.s32.totalorder %s226, %s228
    %p232 = scmp.eq.s32.totalorder %s24, 0
    %p233 = por %p231, %p232
    %p234 = scmp.ne.s32.totalorder %s226, %s228
    %p235 = scmp.eq.s32.totalorder %s29, 1
    %p236 = por %p234, %p235
    %p237 = scmp.ne.s32.totalorder %s228, %s229
    %p238 = scmp.eq.s32.totalorder %s29, 0
    %p239 = por %p237, %p238
    %p240 = scmp.ne.s32.totalorder %s228, %s229
    %p241 = scmp.eq.s32.totalorder %s30, 1
    %p242 = por %p240, %p241
    %p244 = scmp.ne.s32.totalorder %s229, %s243
    %p245 = scmp.eq.s32.totalorder %s30, 0
    %p246 = por %p244, %p245
    %s248 = sadd.s32 %s247, 1
    %p251 = scmp.eq.s32.totalorder %s24, 1
    %p252 = scmp.ne.s32.totalorder %s247, %s249
    %p253 = scmp.eq.s32.totalorder %s24, 0
    %p254 = por %p252, %p253
    %p255 = scmp.ne.s32.totalorder %s247, %s249
    %p256 = scmp.eq.s32.totalorder %s29, 1
    %p257 = por %p255, %p256
    %p258 = scmp.ne.s32.totalorder %s249, %s250
    %p259 = scmp.eq.s32.totalorder %s29, 0
    %p260 = por %p258, %p259
    %p261 = scmp.ne.s32.totalorder %s249, %s250
    %p262 = scmp.eq.s32.totalorder %s30, 1
    %p263 = por %p261, %p262
    %p265 = scmp.ne.s32.totalorder %s250, %s264
    %p266 = scmp.eq.s32.totalorder %s30, 0
    %p267 = por %p265, %p266
    %s269 = sadd.s32 %s268, 1
    %p272 = scmp.eq.s32.totalorder %s24, 1
    %p273 = scmp.ne.s32.totalorder %s268, %s270
    %p274 = scmp.eq.s32.totalorder %s24, 0
    %p275 = por %p273, %p274
    %p276 = scmp.ne.s32.totalorder %s268, %s270
    %p277 = scmp.eq.s32.totalorder %s29, 1
    %p278 = por %p276, %p277
    %p279 = scmp.ne.s32.totalorder %s270, %s271
    %p280 = scmp.eq.s32.totalorder %s29, 0
    %p281 = por %p279, %p280
    %p282 = scmp.ne.s32.totalorder %s270, %s271
    %p283 = scmp.eq.s32.totalorder %s30, 1
    %p284 = por %p282, %p283
    %p286 = scmp.ne.s32.totalorder %s271, %s285
    %p287 = scmp.eq.s32.totalorder %s30, 0
    %p288 = por %p286, %p287
    %s290 = sadd.s32 %s289, 1
    %p293 = scmp.eq.s32.totalorder %s24, 1
    %p294 = scmp.ne.s32.totalorder %s289, %s291
    %p295 = scmp.eq.s32.totalorder %s24, 0
    %p296 = por %p294, %p295
    %p297 = scmp.ne.s32.totalorder %s289, %s291
    %p298 = scmp.eq.s32.totalorder %s29, 1
    %p299 = por %p297, %p298
    %p300 = scmp.ne.s32.totalorder %s291, %s292
    %p301 = scmp.eq.s32.totalorder %s29, 0
    %p302 = por %p300, %p301
    %p303 = scmp.ne.s32.totalorder %s291, %s292
    %p304 = scmp.eq.s32.totalorder %s30, 1
    %p305 = por %p303, %p304
    %p307 = scmp.ne.s32.totalorder %s292, %s306
    %p308 = scmp.eq.s32.totalorder %s30, 0
    %p309 = por %p307, %p308
    %s311 = sadd.s32 %s310, 1
    %p314 = scmp.eq.s32.totalorder %s24, 1
    %p315 = scmp.ne.s32.totalorder %s310, %s312
    %p316 = scmp.eq.s32.totalorder %s24, 0
    %p317 = por %p315, %p316
    %p318 = scmp.ne.s32.totalorder %s310, %s312
    %p319 = scmp.eq.s32.totalorder %s29, 1
    %p320 = por %p318, %p319
    %p321 = scmp.ne.s32.totalorder %s312, %s313
    %p322 = scmp.eq.s32.totalorder %s29, 0
    %p323 = por %p321, %p322
    %p324 = scmp.ne.s32.totalorder %s312, %s313
    %p325 = scmp.eq.s32.totalorder %s30, 1
    %p326 = por %p324, %p325
    %p328 = scmp.ne.s32.totalorder %s313, %s327
    %p329 = scmp.eq.s32.totalorder %s30, 0
    %p330 = por %p328, %p329
    %s332 = sadd.s32 %s331, 1
    %p335 = scmp.eq.s32.totalorder %s24, 1
    %p336 = scmp.ne.s32.totalorder %s331, %s333
    %p337 = scmp.eq.s32.totalorder %s24, 0
    %p338 = por %p336, %p337
    %p339 = scmp.ne.s32.totalorder %s331, %s333
    %p340 = scmp.eq.s32.totalorder %s29, 1
    %p341 = por %p339, %p340
    %p342 = scmp.ne.s32.totalorder %s333, %s334
    %p343 = scmp.eq.s32.totalorder %s29, 0
    %p344 = por %p342, %p343
    %p345 = scmp.ne.s32.totalorder %s333, %s334
    %p346 = scmp.eq.s32.totalorder %s30, 1
    %p347 = por %p345, %p346
    %p349 = scmp.ne.s32.totalorder %s334, %s348
    %p350 = scmp.eq.s32.totalorder %s30, 0
    %p351 = por %p349, %p350
    %s353 = sadd.s32 %s352, 1
    %p356 = scmp.eq.s32.totalorder %s24, 1
    %p357 = scmp.ne.s32.totalorder %s352, %s354
    %p358 = scmp.eq.s32.totalorder %s24, 0
    %p359 = por %p357, %p358
    %p360 = scmp.ne.s32.totalorder %s352, %s354
    %p361 = scmp.eq.s32.totalorder %s29, 1
    %p362 = por %p360, %p361
    %p363 = scmp.ne.s32.totalorder %s354, %s355
    %p364 = scmp.eq.s32.totalorder %s29, 0
    %p365 = por %p363, %p364
    %p366 = scmp.ne.s32.totalorder %s354, %s355
    %p367 = scmp.eq.s32.totalorder %s30, 1
    %p368 = por %p366, %p367
    %p370 = scmp.ne.s32.totalorder %s355, %s369
    %p371 = scmp.eq.s32.totalorder %s30, 0
    %p372 = por %p370, %p371
    %s374 = sadd.s32 %s373, 1
    %p377 = scmp.eq.s32.totalorder %s24, 1
    %p378 = scmp.ne.s32.totalorder %s373, %s375
    %p379 = scmp.eq.s32.totalorder %s24, 0
    %p380 = por %p378, %p379
    %p381 = scmp.ne.s32.totalorder %s373, %s375
    %p382 = scmp.eq.s32.totalorder %s29, 1
    %p383 = por %p381, %p382
    %p384 = scmp.ne.s32.totalorder %s375, %s376
    %p385 = scmp.eq.s32.totalorder %s29, 0
    %p386 = por %p384, %p385
    %p387 = scmp.ne.s32.totalorder %s375, %s376
    %p388 = scmp.eq.s32.totalorder %s30, 1
    %p389 = por %p387, %p388
    %p391 = scmp.ne.s32.totalorder %s376, %s390
    %p392 = scmp.eq.s32.totalorder %s30, 0
    %p393 = por %p391, %p392
    %s395 = sadd.s32 %s394, 1
    %p398 = scmp.eq.s32.totalorder %s24, 1
    %p399 = scmp.ne.s32.totalorder %s394, %s396
    %p400 = scmp.eq.s32.totalorder %s24, 0
    %p401 = por %p399, %p400
    %p402 = scmp.ne.s32.totalorder %s394, %s396
    %p403 = scmp.eq.s32.totalorder %s29, 1
    %p404 = por %p402, %p403
    %p405 = scmp.ne.s32.totalorder %s396, %s397
    %p406 = scmp.eq.s32.totalorder %s29, 0
    %p407 = por %p405, %p406
    %p408 = scmp.ne.s32.totalorder %s396, %s397
    %p409 = scmp.eq.s32.totalorder %s30, 1
    %p410 = por %p408, %p409
    %p412 = scmp.ne.s32.totalorder %s397, %s411
    %p413 = scmp.eq.s32.totalorder %s30, 0
    %p414 = por %p412, %p413
    %s415 = ssub.s32 %s24, %s31
    %p416 = scmp.eq.s32.totalorder %s415, 0
    %s418 = sadd.s32 %s417, 1
    %s419 = scalar_select %p416, %s417, %s418
    %p422 = pneg %p416
    %p423 = scmp.eq.s32.totalorder %s24, 1
    %p424 = por %p422, %p423
    %p425 = scmp.ne.s32.totalorder %s417, %s420
    %p426 = scmp.eq.s32.totalorder %s24, 0
    %p427 = por %p425, %p426
    %p428 = scmp.ne.s32.totalorder %s417, %s420
    %p429 = scmp.eq.s32.totalorder %s29, 1
    %p430 = por %p428, %p429
    %p431 = scmp.ne.s32.totalorder %s420, %s421
    %p432 = scmp.eq.s32.totalorder %s29, 0
    %p433 = por %p431, %p432
    %p434 = scmp.ne.s32.totalorder %s420, %s421
    %p435 = scmp.eq.s32.totalorder %s30, 1
    %p436 = por %p434, %p435
    %p438 = scmp.ne.s32.totalorder %s421, %s437
    %p439 = scmp.eq.s32.totalorder %s30, 0
    %p440 = por %p438, %p439
    %p441 = scmp.le.s32.totalorder 1, %s24
    %p442 = scmp.lt.s32.totalorder %s24, 3
    %p443 = pnand %p441, %p442
    %p444 = pneg %p443
    // Predicated region
    $region9: #{hvit_vae_forward.4} parent=5 // pred_check
      _
    $region10: #{hvit_vae_forward.4} parent=5 // pred_check_branch
      %446 = sbr.rel (%p443) target = $region12
    $region11: #{hvit_vae_forward.4} parent=5 // pred_region
      %s447 = ssub.s32 %s24, 1
      // Predicated region
      $region13: #{hvit_vae_forward.4} parent=11 // pred_check
        %p448 = pneg %p71
      $region14: #{hvit_vae_forward.4} parent=11 // pred_check_branch
        %450 = sbr.rel (%p448) target = $region16
      $region15: #{hvit_vae_forward.4} parent=11 // pred_region
        _
      $region16: #{hvit_vae_forward.4} parent=11 // pred_fallthru
        _
      // Predicated region
      $region17: #{hvit_vae_forward.4} parent=11 // pred_check
        %p451 = pneg %p92
      $region18: #{hvit_vae_forward.4} parent=11 // pred_check_branch
        %453 = sbr.rel (%p451) target = $region20
      $region19: #{hvit_vae_forward.4} parent=11 // pred_region
        _
      $region20: #{hvit_vae_forward.4} parent=11 // pred_fallthru
        _
      // Predicated region
      $region21: #{hvit_vae_forward.4} parent=11 // pred_check
        %p454 = pneg %p113
      $region22: #{hvit_vae_forward.4} parent=11 // pred_check_branch
        %456 = sbr.rel (%p454) target = $region24
      $region23: #{hvit_vae_forward.4} parent=11 // pred_region
        _
      $region24: #{hvit_vae_forward.4} parent=11 // pred_fallthru
        _
      // Predicated region
      $region25: #{hvit_vae_forward.4} parent=11 // pred_check
        %p457 = pneg %p134
      $region26: #{hvit_vae_forward.4} parent=11 // pred_check_branch
        %459 = sbr.rel (%p457) target = $region28
      $region27: #{hvit_vae_forward.4} parent=11 // pred_region
        _
      $region28: #{hvit_vae_forward.4} parent=11 // pred_fallthru
        _
      // Predicated region
      $region29: #{hvit_vae_forward.4} parent=11 // pred_check
        %p460 = pneg %p155
      $region30: #{hvit_vae_forward.4} parent=11 // pred_check_branch
        %462 = sbr.rel (%p460) target = $region32
      $region31: #{hvit_vae_forward.4} parent=11 // pred_region
        _
      $region32: #{hvit_vae_forward.4} parent=11 // pred_fallthru
        _
      // Predicated region
      $region33: #{hvit_vae_forward.4} parent=11 // pred_check
        %p463 = pneg %p176
      $region34: #{hvit_vae_forward.4} parent=11 // pred_check_branch
        %465 = sbr.rel (%p463) target = $region36
      $region35: #{hvit_vae_forward.4} parent=11 // pred_region
        _
      $region36: #{hvit_vae_forward.4} parent=11 // pred_fallthru
        _
      // Predicated region
      $region37: #{hvit_vae_forward.4} parent=11 // pred_check
        %p466 = pneg %p197
      $region38: #{hvit_vae_forward.4} parent=11 // pred_check_branch
        %468 = sbr.rel (%p466) target = $region40
      $region39: #{hvit_vae_forward.4} parent=11 // pred_region
        _
      $region40: #{hvit_vae_forward.4} parent=11 // pred_fallthru
        _
      // Predicated region
      $region41: #{hvit_vae_forward.4} parent=11 // pred_check
        %p469 = pneg %p218
      $region42: #{hvit_vae_forward.4} parent=11 // pred_check_branch
        %471 = sbr.rel (%p469) target = $region44
      $region43: #{hvit_vae_forward.4} parent=11 // pred_region
        _
      $region44: #{hvit_vae_forward.4} parent=11 // pred_fallthru
        _
      // Predicated region
      $region45: #{hvit_vae_forward.4} parent=11 // pred_check
        %p472 = pneg %p239
      $region46: #{hvit_vae_forward.4} parent=11 // pred_check_branch
        %474 = sbr.rel (%p472) target = $region48
      $region47: #{hvit_vae_forward.4} parent=11 // pred_region
        _
      $region48: #{hvit_vae_forward.4} parent=11 // pred_fallthru
        _
      // Predicated region
      $region49: #{hvit_vae_forward.4} parent=11 // pred_check
        %p475 = pneg %p260
      $region50: #{hvit_vae_forward.4} parent=11 // pred_check_branch
        %477 = sbr.rel (%p475) target = $region52
      $region51: #{hvit_vae_forward.4} parent=11 // pred_region
        _
      $region52: #{hvit_vae_forward.4} parent=11 // pred_fallthru
        _
      // Predicated region
      $region53: #{hvit_vae_forward.4} parent=11 // pred_check
        %p478 = pneg %p281
      $region54: #{hvit_vae_forward.4} parent=11 // pred_check_branch
        %480 = sbr.rel (%p478) target = $region56
      $region55: #{hvit_vae_forward.4} parent=11 // pred_region
        _
      $region56: #{hvit_vae_forward.4} parent=11 // pred_fallthru
        _
      // Predicated region
      $region57: #{hvit_vae_forward.4} parent=11 // pred_check
        %p481 = pneg %p302
      $region58: #{hvit_vae_forward.4} parent=11 // pred_check_branch
        %483 = sbr.rel (%p481) target = $region60
      $region59: #{hvit_vae_forward.4} parent=11 // pred_region
        _
      $region60: #{hvit_vae_forward.4} parent=11 // pred_fallthru
        _
      // Predicated region
      $region61: #{hvit_vae_forward.4} parent=11 // pred_check
        %p484 = pneg %p323
      $region62: #{hvit_vae_forward.4} parent=11 // pred_check_branch
        %486 = sbr.rel (%p484) target = $region64
      $region63: #{hvit_vae_forward.4} parent=11 // pred_region
        _
      $region64: #{hvit_vae_forward.4} parent=11 // pred_fallthru
        _
      // Predicated region
      $region65: #{hvit_vae_forward.4} parent=11 // pred_check
        %p487 = pneg %p344
      $region66: #{hvit_vae_forward.4} parent=11 // pred_check_branch
        %489 = sbr.rel (%p487) target = $region68
      $region67: #{hvit_vae_forward.4} parent=11 // pred_region
        _
      $region68: #{hvit_vae_forward.4} parent=11 // pred_fallthru
        _
      // Predicated region
      $region69: #{hvit_vae_forward.4} parent=11 // pred_check
        %p490 = pneg %p365
      $region70: #{hvit_vae_forward.4} parent=11 // pred_check_branch
        %492 = sbr.rel (%p490) target = $region72
      $region71: #{hvit_vae_forward.4} parent=11 // pred_region
        _
      $region72: #{hvit_vae_forward.4} parent=11 // pred_fallthru
        _
      // Predicated region
      $region73: #{hvit_vae_forward.4} parent=11 // pred_check
        %p493 = pneg %p386
      $region74: #{hvit_vae_forward.4} parent=11 // pred_check_branch
        %495 = sbr.rel (%p493) target = $region76
      $region75: #{hvit_vae_forward.4} parent=11 // pred_region
        _
      $region76: #{hvit_vae_forward.4} parent=11 // pred_fallthru
        _
      // Predicated region
      $region77: #{hvit_vae_forward.4} parent=11 // pred_check
        %p496 = pneg %p407
      $region78: #{hvit_vae_forward.4} parent=11 // pred_check_branch
        %498 = sbr.rel (%p496) target = $region80
      $region79: #{hvit_vae_forward.4} parent=11 // pred_region
        _
      $region80: #{hvit_vae_forward.4} parent=11 // pred_fallthru
        _
    $region12: #{hvit_vae_forward.4} parent=5 // pred_fallthru
      _
    %p499 = scmp.lt.s32.totalorder %s24, 2
    // Predicated region
    $region81: #{hvit_vae_forward.4} parent=5 // pred_check
      %p500 = pneg %p499
    $region82: #{hvit_vae_forward.4} parent=5 // pred_check_branch
      %502 = sbr.rel (%p500) target = $region84
    $region83: #{hvit_vae_forward.4} parent=5 // pred_region
      // Predicated region
      $region85: #{hvit_vae_forward.4} parent=83 // pred_check
        %p503 = pneg %p44
      $region86: #{hvit_vae_forward.4} parent=83 // pred_check_branch
        %505 = sbr.rel (%p503) target = $region88
      $region87: #{hvit_vae_forward.4} parent=83 // pred_region
        %p506 = scmp.lt.s32.totalorder %s24, 1
        %s507 = scalar_select %p506, %s24, 1
        %s508 = smul.addr %s507, 2
        %s509 = smul.addr %s508, 8
        %s510 = scalar_lea.vmem %s0, %s509
      $region88: #{hvit_vae_forward.4} parent=83 // pred_fallthru
        _
    $region84: #{hvit_vae_forward.4} parent=5 // pred_fallthru
      _
    %p511 = scmp.le.s32.totalorder 1, %s24
    %p512 = scmp.lt.s32.totalorder %s24, 3
    %p513 = pnand %p511, %p512
    %p514 = pneg %p513
    // Predicated region
    $region89: #{hvit_vae_forward.4} parent=5 // pred_check
      _
    $region90: #{hvit_vae_forward.4} parent=5 // pred_check_branch
      %516 = sbr.rel (%p513) target = $region92
    $region91: #{hvit_vae_forward.4} parent=5 // pred_region
      %s517 = ssub.s32 %s24, 1
      %p518 = scmp.lt.s32.totalorder %s29, 1
      %s519 = scalar_select %p518, %s29, 1
      %s520 = smul.addr %s519, 2
      %s521 = smul.addr %s520, 8
      %s522 = scalar_lea.vmem %s0, %s521
      %p523 = pneg %p50
      %p524 = pneg %p47
      %p525 = pneg %p71
      %p526 = pneg %p68
      %p527 = pneg %p92
      %p528 = pneg %p89
      %p529 = pneg %p113
      %p530 = pneg %p110
      %p531 = pneg %p134
      %p532 = pneg %p131
      %p533 = pneg %p155
      %p534 = pneg %p152
      %p535 = pneg %p176
      %p536 = pneg %p173
      %p537 = pneg %p197
      %p538 = pneg %p194
      %p539 = pneg %p218
      %p540 = pneg %p215
      %p541 = pneg %p239
      %p542 = pneg %p236
      %p543 = pneg %p260
      %p544 = pneg %p257
      %p545 = pneg %p281
      %p546 = pneg %p278
      %p547 = pneg %p302
      %p548 = pneg %p299
      %p549 = pneg %p323
      %p550 = pneg %p320
      %p551 = pneg %p344
      %p552 = pneg %p341
      %p553 = pneg %p365
      %p554 = pneg %p362
      %p555 = pneg %p386
      %p556 = pneg %p383
      %p557 = pneg %p407
      %p558 = pneg %p404
      %p559 = pneg %p433
      %p560 = pneg %p430
      %p561 = scmp.lt.s32.totalorder %s29, 1
      %s562 = scalar_select %p561, %s29, 1
      %s563 = smul.addr %s562, 2
      %s564 = smul.addr %s563, 8
      %s565 = scalar_lea.vmem %s18, %s564
      %p566 = scmp.lt.s32.totalorder %s29, 1
      %s567 = scalar_select %p566, %s29, 1
      %s568 = smul.addr %s567, 2
      %s569 = smul.addr %s568, 8
      %s570 = scalar_lea.vmem %s0, %s569
      %p571 = scmp.lt.s32.totalorder %s29, 1
      %s572 = scalar_select %p571, %s29, 1
      %s573 = smul.addr %s572, 2
      %s574 = smul.addr %s573, 8
      %s575 = scalar_lea.vmem %s18, %s574
      %v577 = vld [vmem:[%s570] sm:$0xff]
      %v578 = vld [vmem:[%s570 + $0x8] sm:$0xff]
      %v579 = vld [vmem:[%s1] sm:$0xff]
      %v580 = vld [vmem:[%s1 + $0x8] sm:$0xff]
      %v581 = vld [vmem:[%s1 + $0x10] sm:$0xff]
      %v582 = vld [vmem:[%s1 + $0x18] sm:$0xff]
      %v583 = vld [vmem:[%s1 + $0x20] sm:$0xff]
      %v584 = vld [vmem:[%s1 + $0x28] sm:$0xff]
      %v585 = vpack.c.bf16 %v578, %v577
      %v586 = vpack.c.bf16 %v580, %v579
      %v587 = vpack.c.bf16 %v582, %v581
      %v588 = vpack.c.bf16 %v584, %v583
      %v589 = vld [vmem:[%s2] sm:$0x1]
      %v591 = vlaneseq
      %v592 = vshrl.u32 %v591, 7
      %v593 = vsub.s32 0, %v592
      %v594 = vrot.slane %v589, %v593
      %vm596 = vcmask 392192
      %v598 = vsel %vm596, %v585, 0
      %600 = vmatprep.subr.bf16.mxu0 0
      %601 = vmatpush1.bf16.msra.mxu0 %v586
      %602 = vmatprep.subr.bf16.mxu0 0
      %603 = vmatpush1.bf16.msra.mxu0 %v587
      %604 = vmatprep.subr.bf16.mxu0 0
      %605 = vmatpush1.bf16.msra.mxu0 %v588
      %606 = vmatprep.subr.bf16.mxu0 0
      %607 = vmatpush1.bf16.msra.mxu0 0
      %608 = vmatprep.subr.bf16.mxu0 0
      %609 = vmatpush1.bf16.msra.mxu0 0
      %610 = vmatprep.subr.bf16.mxu0 0
      %611 = vmatpush1.bf16.msra.mxu0 0
      %612 = vmatprep.subr.bf16.mxu0 0
      %613 = vmatpush1.bf16.msra.mxu0 0
      %614 = vmatprep.subr.bf16.mxu0 0
      %615 = vmatpush1.bf16.msra.mxu0 0
      %616 = vmatprep.subr.bf16.mxu0 0
      %617 = vmatpush1.bf16.msra.mxu0 0
      %618 = vmatprep.subr.bf16.mxu0 0
      %619 = vmatpush1.bf16.msra.mxu0 0
      %620 = vmatprep.subr.bf16.mxu0 0
      %621 = vmatpush1.bf16.msra.mxu0 0
      %622 = vmatprep.subr.bf16.mxu0 0
      %623 = vmatpush1.bf16.msra.mxu0 0
      %624 = vmatprep.subr.bf16.mxu0 0
      %625 = vmatpush1.bf16.msra.mxu0 0
      %626 = vmatprep.subr.bf16.mxu0 0
      %627 = vmatpush1.bf16.msra.mxu0 0
      %628 = vmatprep.subr.bf16.mxu0 0
      %629 = vmatpush1.bf16.msra.mxu0 0
      %630 = vmatprep.subr.bf16.mxu0 0
      %631 = vmatpush1.bf16.msra.mxu0 0
      %632 = vmatprep.mubr.bf16.mxu0 0
      %633 = vmatmul.mubr.bf16.gmra.mrb[0].mxu0 %v598
      %v634 = vpop.f32.mrb[0].mxu0
      %v635 = vadd.f32 %v594, %v634
      %v636 = vpop.f32.mrb[0].mxu0
      %v637 = vpop.f32.mrb[0].mxu0
      %v638 = vadd.f32 %v594, %v637
      %v639 = vpop.f32.mrb[0].mxu0
      %640 = vdwg.mxu0
      %v641 = vld [vmem:[%s3] sm:$0x1]
      %v642 = vld [vmem:[%s4] sm:$0x1]
      %vm643 = vcmask 130048
      %v644 = vsel %vm643, %v635, 0.0
      %645 = vadd.xlane.f32.xlu0 %v644
      %v646 = vpop.xlane.xlu0 %645
      %v647 = vsel %vm643, %v638, 0.0
      %648 = vadd.xlane.f32.xlu0 %v647
      %v649 = vpop.xlane.xlu0 %648
      %v650 = vrcp.pop 16.0
      %v651 = vmul.f32 %v646, %v650
      %v652 = vmul.f32 %v649, %v650
      %v653 = vsub.f32 %v635, %v651
      %v654 = vsub.f32 %v638, %v652
      %v655 = vmul.f32 %v653, %v653
      %v656 = vmul.f32 %v654, %v654
      %v657 = vsel %vm643, %v655, 0.0
      %658 = vadd.xlane.f32.xlu0 %v657
      %v659 = vpop.xlane.xlu0 %658
      %v660 = vsel %vm643, %v656, 0.0
      %661 = vadd.xlane.f32.xlu0 %v660
      %v662 = vpop.xlane.xlu0 %661
      %v663 = vmul.f32 %v659, %v650
      %v664 = vmul.f32 %v662, %v650
      %v665 = vadd.f32 %v663, 1e-05
      %v666 = vadd.f32 %v664, 1e-05
      %v667 = vrsqrt.pop %v665
      %v668 = vrsqrt.pop %v666
      %v669 = vmul.f32 %v653, %v667
      %v670 = vmul.f32 %v654, %v668
      %v672 = vlaneseq
      %v673 = vshrl.u32 %v672, 7
      %v674 = vsub.s32 0, %v673
      %v675 = vrot.slane %v641, %v674
      %v677 = vmul.f32 %v669, %v675
      %v678 = vmul.f32 %v670, %v675
      %v680 = vlaneseq
      %v681 = vshrl.u32 %v680, 7
      %v682 = vsub.s32 0, %v681
      %v683 = vrot.slane %v642, %v682
      %v685 = vadd.f32 %v677, %v683
      %v686 = vadd.f32 %v678, %v683
      %v687 = vld [vmem:[%s17] sm:$0xff]
      %v688 = vld [vmem:[%s17 + $0x8] sm:$0xff]
      %v689 = vld [vmem:[%s5] sm:$0x1]
      %v690 = vld [vmem:[%s6] sm:$0x1]
      %v691 = vsel %vm643, %v685, 0.0
      %692 = vadd.xlane.f32.xlu0 %v691
      %v693 = vpop.xlane.xlu0 %692
      %v694 = vsel %vm643, %v686, 0.0
      %695 = vadd.xlane.f32.xlu0 %v694
      %v696 = vpop.xlane.xlu0 %695
      %v697 = vmul.f32 %v693, %v650
      %v698 = vmul.f32 %v696, %v650
      %v699 = vsub.f32 %v685, %v697
      %v700 = vsub.f32 %v686, %v698
      %v701 = vmul.f32 %v699, %v699
      %v702 = vmul.f32 %v700, %v700
      %v703 = vsel %vm643, %v701, 0.0
      %704 = vadd.xlane.f32.xlu0 %v703
      %v705 = vpop.xlane.xlu0 %704
      %v706 = vsel %vm643, %v702, 0.0
      %707 = vadd.xlane.f32.xlu0 %v706
      %v708 = vpop.xlane.xlu0 %707
      %v709 = vmul.f32 %v705, %v650
      %v710 = vmul.f32 %v708, %v650
      %v711 = vadd.f32 %v709, 1e-05
      %v712 = vadd.f32 %v710, 1e-05
      %v713 = vrsqrt.pop %v711
      %v714 = vrsqrt.pop %v712
      %v715 = vmul.f32 %v699, %v713
      %v716 = vmul.f32 %v700, %v714
      %v718 = vlaneseq
      %v719 = vshrl.u32 %v718, 7
      %v720 = vsub.s32 0, %v719
      %v721 = vrot.slane %v689, %v720
      %v723 = vmul.f32 %v715, %v721
      %v724 = vmul.f32 %v716, %v721
      %v726 = vlaneseq
      %v727 = vshrl.u32 %v726, 7
      %v728 = vsub.s32 0, %v727
      %v729 = vrot.slane %v690, %v728
      %v731 = vadd.f32 %v723, %v729
      %v732 = vadd.f32 %v724, %v729
      %v733 = vld [vmem:[%s7] sm:$0xff]
      %v734 = vld [vmem:[%s7 + $0x8] sm:$0xff]
      %v735 = vpack.c.bf16 %v732, %v731
      %v736 = vpack.c.bf16 %v734, %v733
      %v737 = vld [vmem:[%s8] sm:$0x1]
      %v739 = vlaneseq
      %v740 = vshrl.u32 %v739, 7
      %v741 = vsub.s32 0, %v740
      %v742 = vrot.slane %v737, %v741
      %v745 = vsel %vm643, %v735, 0
      %747 = vmatprep.subr.bf16.mxu0 0
      %748 = vmatpush1.bf16.msra.mxu0 %v736
      %749 = vmatprep.subr.bf16.mxu0 0
      %750 = vmatpush1.bf16.msra.mxu0 0
      %751 = vmatprep.subr.bf16.mxu0 0
      %752 = vmatpush1.bf16.msra.mxu0 0
      %753 = vmatprep.subr.bf16.mxu0 0
      %754 = vmatpush1.bf16.msra.mxu0 0
      %755 = vmatprep.subr.bf16.mxu0 0
      %756 = vmatpush1.bf16.msra.mxu0 0
      %757 = vmatprep.subr.bf16.mxu0 0
      %758 = vmatpush1.bf16.msra.mxu0 0
      %759 = vmatprep.subr.bf16.mxu0 0
      %760 = vmatpush1.bf16.msra.mxu0 0
      %761 = vmatprep.subr.bf16.mxu0 0
      %762 = vmatpush1.bf16.msra.mxu0 0
      %763 = vmatprep.subr.bf16.mxu0 0
      %764 = vmatpush1.bf16.msra.mxu0 0
      %765 = vmatprep.subr.bf16.mxu0 0
      %766 = vmatpush1.bf16.msra.mxu0 0
      %767 = vmatprep.subr.bf16.mxu0 0
      %768 = vmatpush1.bf16.msra.mxu0 0
      %769 = vmatprep.subr.bf16.mxu0 0
      %770 = vmatpush1.bf16.msra.mxu0 0
      %771 = vmatprep.subr.bf16.mxu0 0
      %772 = vmatpush1.bf16.msra.mxu0 0
      %773 = vmatprep.subr.bf16.mxu0 0
      %774 = vmatpush1.bf16.msra.mxu0 0
      %775 = vmatprep.subr.bf16.mxu0 0
      %776 = vmatpush1.bf16.msra.mxu0 0
      %777 = vmatprep.subr.bf16.mxu0 0
      %778 = vmatpush1.bf16.msra.mxu0 0
      %779 = vmatprep.mubr.bf16.mxu0 0
      %780 = vmatmul.mubr.bf16.gmra.mrb[0].mxu0 %v745
      %v781 = vpop.f32.mrb[0].mxu0
      %v782 = vadd.f32 %v742, %v781
      %v783 = vpop.f32.mrb[0].mxu0
      %v784 = vpop.f32.mrb[0].mxu0
      %v785 = vadd.f32 %v742, %v784
      %v786 = vpop.f32.mrb[0].mxu0
      %787 = vdwg.mxu0
      %s788 = scalar_lea.vmem %s7, 32
      %v789 = vld [vmem:[%s788] sm:$0xff]
      %v790 = vld [vmem:[%s788 + $0x8] sm:$0xff]
      %v791 = vpack.c.bf16 %v790, %v789
      %s792 = scalar_lea.vmem %s8, 2
      %v793 = vld [vmem:[%s792] sm:$0x1]
      %v795 = vlaneseq
      %v796 = vshrl.u32 %v795, 7
      %v797 = vsub.s32 0, %v796
      %v798 = vrot.slane %v793, %v797
      %800 = vmatprep.subr.bf16.mxu0 0
      %801 = vmatpush1.bf16.msra.mxu0 %v791
      %802 = vmatprep.subr.bf16.mxu0 0
      %803 = vmatpush1.bf16.msra.mxu0 0
      %804 = vmatprep.subr.bf16.mxu0 0
      %805 = vmatpush1.bf16.msra.mxu0 0
      %806 = vmatprep.subr.bf16.mxu0 0
      %807 = vmatpush1.bf16.msra.mxu0 0
      %808 = vmatprep.subr.bf16.mxu0 0
      %809 = vmatpush1.bf16.msra.mxu0 0
      %810 = vmatprep.subr.bf16.mxu0 0
      %811 = vmatpush1.bf16.msra.mxu0 0
      %812 = vmatprep.subr.bf16.mxu0 0
      %813 = vmatpush1.bf16.msra.mxu0 0
      %814 = vmatprep.subr.bf16.mxu0 0
      %815 = vmatpush1.bf16.msra.mxu0 0
      %816 = vmatprep.subr.bf16.mxu0 0
      %817 = vmatpush1.bf16.msra.mxu0 0
      %818 = vmatprep.subr.bf16.mxu0 0
      %819 = vmatpush1.bf16.msra.mxu0 0
      %820 = vmatprep.subr.bf16.mxu0 0
      %821 = vmatpush1.bf16.msra.mxu0 0
      %822 = vmatprep.subr.bf16.mxu0 0
      %823 = vmatpush1.bf16.msra.mxu0 0
      %824 = vmatprep.subr.bf16.mxu0 0
      %825 = vmatpush1.bf16.msra.mxu0 0
      %826 = vmatprep.subr.bf16.mxu0 0
      %827 = vmatpush1.bf16.msra.mxu0 0
      %828 = vmatprep.subr.bf16.mxu0 0
      %829 = vmatpush1.bf16.msra.mxu0 0
      %830 = vmatprep.subr.bf16.mxu0 0
      %831 = vmatpush1.bf16.msra.mxu0 0
      %832 = vmatprep.mubr.bf16.mxu0 0
      %833 = vmatmul.mubr.bf16.gmra.mrb[0].mxu0 %v745
      %v834 = vpop.f32.mrb[0].mxu0
      %v835 = vadd.f32 %v798, %v834
      %v836 = vpop.f32.mrb[0].mxu0
      %v837 = vpop.f32.mrb[0].mxu0
      %v838 = vadd.f32 %v798, %v837
      %v839 = vpop.f32.mrb[0].mxu0
      %840 = vdwg.mxu0
      %s841 = scalar_lea.vmem %s7, 64
      %v842 = vld [vmem:[%s841] sm:$0xff]
      %v843 = vld [vmem:[%s841 + $0x8] sm:$0xff]
      %v844 = vpack.c.bf16 %v843, %v842
      %s845 = scalar_lea.vmem %s8, 4
      %v846 = vld [vmem:[%s845] sm:$0x1]
      %v848 = vlaneseq
      %v849 = vshrl.u32 %v848, 7
      %v850 = vsub.s32 0, %v849
      %v851 = vrot.slane %v846, %v850
      %853 = vmatprep.subr.bf16.mxu0 0
      %854 = vmatpush1.bf16.msra.mxu0 %v844
      %855 = vmatprep.subr.bf16.mxu0 0
      %856 = vmatpush1.bf16.msra.mxu0 0
      %857 = vmatprep.subr.bf16.mxu0 0
      %858 = vmatpush1.bf16.msra.mxu0 0
      %859 = vmatprep.subr.bf16.mxu0 0
      %860 = vmatpush1.bf16.msra.mxu0 0
      %861 = vmatprep.subr.bf16.mxu0 0
      %862 = vmatpush1.bf16.msra.mxu0 0
      %863 = vmatprep.subr.bf16.mxu0 0
      %864 = vmatpush1.bf16.msra.mxu0 0
      %865 = vmatprep.subr.bf16.mxu0 0
      %866 = vmatpush1.bf16.msra.mxu0 0
      %867 = vmatprep.subr.bf16.mxu0 0
      %868 = vmatpush1.bf16.msra.mxu0 0
      %869 = vmatprep.subr.bf16.mxu0 0
      %870 = vmatpush1.bf16.msra.mxu0 0
      %871 = vmatprep.subr.bf16.mxu0 0
      %872 = vmatpush1.bf16.msra.mxu0 0
      %873 = vmatprep.subr.bf16.mxu0 0
      %874 = vmatpush1.bf16.msra.mxu0 0
      %875 = vmatprep.subr.bf16.mxu0 0
      %876 = vmatpush1.bf16.msra.mxu0 0
      %877 = vmatprep.subr.bf16.mxu0 0
      %878 = vmatpush1.bf16.msra.mxu0 0
      %879 = vmatprep.subr.bf16.mxu0 0
      %880 = vmatpush1.bf16.msra.mxu0 0
      %881 = vmatprep.subr.bf16.mxu0 0
      %882 = vmatpush1.bf16.msra.mxu0 0
      %883 = vmatprep.subr.bf16.mxu0 0
      %884 = vmatpush1.bf16.msra.mxu0 0
      %885 = vmatprep.mubr.bf16.mxu0 0
      %886 = vmatmul.mubr.bf16.gmra.mrb[0].mxu0 %v745
      %v887 = vpop.f32.mrb[0].mxu0
      %v888 = vadd.f32 %v851, %v887
      %v889 = vpop.f32.mrb[0].mxu0
      %v890 = vpop.f32.mrb[0].mxu0
      %v891 = vadd.f32 %v851, %v890
      %v892 = vpop.f32.mrb[0].mxu0
      %893 = vdwg.mxu0
      %v894 = vpack.c.bf16 %v785, %v782
      %v895 = vpack.c.bf16 %v838, %v835
      %vm896 = vcmask 64512
      %v898 = vsel %vm896, %v894, 0
      %v901 = vsel %vm896, %v895, 0
      %903 = vmatprep.subr.bf16.mxu0 0
      %904 = vmatpush1.bf16.xpose.msra.mxu0 %v901
      %905 = vmatprep.subr.bf16.mxu0 0
      %906 = vmatpush1.bf16.xpose.msra.mxu0 0
      %907 = vmatprep.subr.bf16.mxu0 0
      %908 = vmatpush1.bf16.xpose.msra.mxu0 0
      %909 = vmatprep.subr.bf16.mxu0 0
      %910 = vmatpush1.bf16.xpose.msra.mxu0 0
      %911 = vmatprep.subr.bf16.mxu0 0
      %912 = vmatpush1.bf16.xpose.msra.mxu0 0
      %913 = vmatprep.subr.bf16.mxu0 0
      %914 = vmatpush1.bf16.xpose.msra.mxu0 0
      %915 = vmatprep.subr.bf16.mxu0 0
      %916 = vmatpush1.bf16.xpose.msra.mxu0 0
      %917 = vmatprep.subr.bf16.mxu0 0
      %918 = vmatpush1.bf16.xpose.msra.mxu0 0
      %919 = vmatprep.subr.bf16.mxu0 0
      %920 = vmatpush1.bf16.xpose.msra.mxu0 0
      %921 = vmatprep.subr.bf16.mxu0 0
      %922 = vmatpush1.bf16.xpose.msra.mxu0 0
      %923 = vmatprep.subr.bf16.mxu0 0
      %924 = vmatpush1.bf16.xpose.msra.mxu0 0
      %925 = vmatprep.subr.bf16.mxu0 0
      %926 = vmatpush1.bf16.xpose.msra.mxu0 0
      %927 = vmatprep.subr.bf16.mxu0 0
      %928 = vmatpush1.bf16.xpose.msra.mxu0 0
      %929 = vmatprep.subr.bf16.mxu0 0
      %930 = vmatpush1.bf16.xpose.msra.mxu0 0
      %931 = vmatprep.subr.bf16.mxu0 0
      %932 = vmatpush1.bf16.xpose.msra.mxu0 0
      %933 = vmatprep.subr.bf16.mxu0 0
      %934 = vmatpush1.bf16.xpose.msra.mxu0 0
      %935 = vmatprep.mubr.bf16.mxu0 0
      %936 = vmatmul.mubr.bf16.gmra.mrb[0].mxu0 %v898
      %v937 = vpop.f32.mrb[0].mxu0
      %v938 = vadd.f32 0.0, %v937
      %v939 = vpop.f32.mrb[0].mxu0
      %v940 = vpop.f32.mrb[0].mxu0
      %v941 = vadd.f32 0.0, %v940
      %v942 = vpop.f32.mrb[0].mxu0
      %943 = vdwg.mxu0
      %v944 = vmul.f32 %v938, 0.35355338
      %v945 = vmul.f32 %v941, 0.35355338
      %v946 = vadd.f32 %v944, %v687
      %v947 = vadd.f32 %v945, %v688
      %v948 = vsel %vm643, %v946, -inf
      %949 = vmax.xlane.f32.xlu0 %v948
      %v950 = vpop.xlane.xlu0 %949
      %v951 = vsel %vm643, %v947, -inf
      %952 = vmax.xlane.f32.xlu0 %v951
      %v953 = vpop.xlane.xlu0 %952
      %v954 = vsub.f32 %v946, %v950
      %v955 = vsub.f32 %v947, %v953
      %v956 = vmul.f32 %v954, 1.442695
      %v957 = vpow.pop %v956
      %v958 = vmul.f32 %v955, 1.442695
      %v959 = vpow.pop %v958
      %v960 = vsel %vm643, %v957, 0.0
      %961 = vadd.xlane.f32.xlu0 %v960
      %v962 = vpop.xlane.xlu0 %961
      %v963 = vsel %vm643, %v959, 0.0
      %964 = vadd.xlane.f32.xlu0 %v963
      %v965 = vpop.xlane.xlu0 %964
      %v966 = vrcp.pop %v962
      %v967 = vrcp.pop %v965
      %v968 = vmul.f32 %v957, %v966
      %v969 = vmul.f32 %v959, %v967
      %v970 = vpack.c.bf16 %v969, %v968
      %v971 = vpack.c.bf16 %v891, %v888
      %v973 = vsel %vm643, %v970, 0
      %975 = vmatprep.subr.bf16.mxu0 0
      %976 = vmatpush1.bf16.msra.mxu0 %v971
      %977 = vmatprep.subr.bf16.mxu0 0
      %978 = vmatpush1.bf16.msra.mxu0 0
      %979 = vmatprep.subr.bf16.mxu0 0
      %980 = vmatpush1.bf16.msra.mxu0 0
      %981 = vmatprep.subr.bf16.mxu0 0
      %982 = vmatpush1.bf16.msra.mxu0 0
      %983 = vmatprep.subr.bf16.mxu0 0
      %984 = vmatpush1.bf16.msra.mxu0 0
      %985 = vmatprep.subr.bf16.mxu0 0
      %986 = vmatpush1.bf16.msra.mxu0 0
      %987 = vmatprep.subr.bf16.mxu0 0
      %988 = vmatpush1.bf16.msra.mxu0 0
      %989 = vmatprep.subr.bf16.mxu0 0
      %990 = vmatpush1.bf16.msra.mxu0 0
      %991 = vmatprep.subr.bf16.mxu0 0
      %992 = vmatpush1.bf16.msra.mxu0 0
      %993 = vmatprep.subr.bf16.mxu0 0
      %994 = vmatpush1.bf16.msra.mxu0 0
      %995 = vmatprep.subr.bf16.mxu0 0
      %996 = vmatpush1.bf16.msra.mxu0 0
      %997 = vmatprep.subr.bf16.mxu0 0
      %998 = vmatpush1.bf16.msra.mxu0 0
      %999 = vmatprep.subr.bf16.mxu0 0
      %1000 = vmatpush1.bf16.msra.mxu0 0
      %1001 = vmatprep.subr.bf16.mxu0 0
      %1002 = vmatpush1.bf16.msra.mxu0 0
      %1003 = vmatprep.subr.bf16.mxu0 0
      %1004 = vmatpush1.bf16.msra.mxu0 0
      %1005 = vmatprep.subr.bf16.mxu0 0
      %1006 = vmatpush1.bf16.msra.mxu0 0
      %1007 = vmatprep.mubr.bf16.mxu0 0
      %1008 = vmatmul.mubr.bf16.gmra.mrb[0].mxu0 %v973
      %v1009 = vpop.f32.mrb[0].mxu0
      %v1010 = vadd.f32 0.0, %v1009
      %v1011 = vpop.f32.mrb[0].mxu0
      %v1012 = vpop.f32.mrb[0].mxu0
      %v1013 = vadd.f32 0.0, %v1012
      %v1014 = vpop.f32.mrb[0].mxu0
      %1015 = vdwg.mxu0
      %v1016 = vld [vmem:[%s9] sm:$0xff]
      %v1017 = vpack.c.bf16 %v1013, %v1010
      %v1018 = vpack.c.bf16 %v1016, %v1016
      %s1019 = scalar_lea.vmem %s7, 16
      %v1020 = vld [vmem:[%s1019] sm:$0xff]
      %v1021 = vld [vmem:[%s1019 + $0x8] sm:$0xff]
      %v1022 = vpack.c.bf16 %v1021, %v1020
      %s1023 = scalar_lea.vmem %s8, 1
      %v1024 = vld [vmem:[%s1023] sm:$0x1]
      %v1026 = vlaneseq
      %v1027 = vshrl.u32 %v1026, 7
      %v1028 = vsub.s32 0, %v1027
      %v1029 = vrot.slane %v1024, %v1028
      %1031 = vmatprep.subr.bf16.mxu0 0
      %1032 = vmatpush1.bf16.msra.mxu0 %v1022
      %1033 = vmatprep.subr.bf16.mxu0 0
      %1034 = vmatpush1.bf16.msra.mxu0 0
      %1035 = vmatprep.subr.bf16.mxu0 0
      %1036 = vmatpush1.bf16.msra.mxu0 0
      %1037 = vmatprep.subr.bf16.mxu0 0
      %1038 = vmatpush1.bf16.msra.mxu0 0
      %1039 = vmatprep.subr.bf16.mxu0 0
      %1040 = vmatpush1.bf16.msra.mxu0 0
      %1041 = vmatprep.subr.bf16.mxu0 0
      %1042 = vmatpush1.bf16.msra.mxu0 0
      %1043 = vmatprep.subr.bf16.mxu0 0
      %1044 = vmatpush1.bf16.msra.mxu0 0
      %1045 = vmatprep.subr.bf16.mxu0 0
      %1046 = vmatpush1.bf16.msra.mxu0 0
      %1047 = vmatprep.subr.bf16.mxu0 0
      %1048 = vmatpush1.bf16.msra.mxu0 0
      %1049 = vmatprep.subr.bf16.mxu0 0
      %1050 = vmatpush1.bf16.msra.mxu0 0
      %1051 = vmatprep.subr.bf16.mxu0 0
      %1052 = vmatpush1.bf16.msra.mxu0 0
      %1053 = vmatprep.subr.bf16.mxu0 0
      %1054 = vmatpush1.bf16.msra.mxu0 0
      %1055 = vmatprep.subr.bf16.mxu0 0
      %1056 = vmatpush1.bf16.msra.mxu0 0
      %1057 = vmatprep.subr.bf16.mxu0 0
      %1058 = vmatpush1.bf16.msra.mxu0 0
      %1059 = vmatprep.subr.bf16.mxu0 0
      %1060 = vmatpush1.bf16.msra.mxu0 0
      %1061 = vmatprep.subr.bf16.mxu0 0
      %1062 = vmatpush1.bf16.msra.mxu0 0
      %1063 = vmatprep.mubr.bf16.mxu0 0
      %1064 = vmatmul.mubr.bf16.gmra.mrb[0].mxu0 %v745
      %v1065 = vpop.f32.mrb[0].mxu0
      %v1066 = vadd.f32 %v1029, %v1065
      %v1067 = vpop.f32.mrb[0].mxu0
      %v1068 = vpop.f32.mrb[0].mxu0
      %v1069 = vadd.f32 %v1029, %v1068
      %v1070 = vpop.f32.mrb[0].mxu0
      %1071 = vdwg.mxu0
      %s1072 = scalar_lea.vmem %s7, 48
      %v1073 = vld [vmem:[%s1072] sm:$0xff]
      %v1074 = vld [vmem:[%s1072 + $0x8] sm:$0xff]
      %v1075 = vpack.c.bf16 %v1074, %v1073
      %s1076 = scalar_lea.vmem %s8, 3
      %v1077 = vld [vmem:[%s1076] sm:$0x1]
      %v1079 = vlaneseq
      %v1080 = vshrl.u32 %v1079, 7
      %v1081 = vsub.s32 0, %v1080
      %v1082 = vrot.slane %v1077, %v1081
      %1084 = vmatprep.subr.bf16.mxu0 0
      %1085 = vmatpush1.bf16.msra.mxu0 %v1075
      %1086 = vmatprep.subr.bf16.mxu0 0
      %1087 = vmatpush1.bf16.msra.mxu0 0
      %1088 = vmatprep.subr.bf16.mxu0 0
      %1089 = vmatpush1.bf16.msra.mxu0 0
      %1090 = vmatprep.subr.bf16.mxu0 0
      %1091 = vmatpush1.bf16.msra.mxu0 0
      %1092 = vmatprep.subr.bf16.mxu0 0
      %1093 = vmatpush1.bf16.msra.mxu0 0
      %1094 = vmatprep.subr.bf16.mxu0 0
      %1095 = vmatpush1.bf16.msra.mxu0 0
      %1096 = vmatprep.subr.bf16.mxu0 0
      %1097 = vmatpush1.bf16.msra.mxu0 0
      %1098 = vmatprep.subr.bf16.mxu0 0
      %1099 = vmatpush1.bf16.msra.mxu0 0
      %1100 = vmatprep.subr.bf16.mxu0 0
      %1101 = vmatpush1.bf16.msra.mxu0 0
      %1102 = vmatprep.subr.bf16.mxu0 0
      %1103 = vmatpush1.bf16.msra.mxu0 0
      %1104 = vmatprep.subr.bf16.mxu0 0
      %1105 = vmatpush1.bf16.msra.mxu0 0
      %1106 = vmatprep.subr.bf16.mxu0 0
      %1107 = vmatpush1.bf16.msra.mxu0 0
      %1108 = vmatprep.subr.bf16.mxu0 0
      %1109 = vmatpush1.bf16.msra.mxu0 0
      %1110 = vmatprep.subr.bf16.mxu0 0
      %1111 = vmatpush1.bf16.msra.mxu0 0
      %1112 = vmatprep.subr.bf16.mxu0 0
      %1113 = vmatpush1.bf16.msra.mxu0 0
      %1114 = vmatprep.subr.bf16.mxu0 0
      %1115 = vmatpush1.bf16.msra.mxu0 0
      %1116 = vmatprep.mubr.bf16.mxu0 0
      %1117 = vmatmul.mubr.bf16.gmra.mrb[0].mxu0 %v745
      %v1118 = vpop.f32.mrb[0].mxu0
      %v1119 = vadd.f32 %v1082, %v1118
      %v1120 = vpop.f32.mrb[0].mxu0
      %v1121 = vpop.f32.mrb[0].mxu0
      %v1122 = vadd.f32 %v1082, %v1121
      %v1123 = vpop.f32.mrb[0].mxu0
      %1124 = vdwg.mxu0
      %s1125 = scalar_lea.vmem %s7, 80
      %v1126 = vld [vmem:[%s1125] sm:$0xff]
      %v1127 = vld [vmem:[%s1125 + $0x8] sm:$0xff]
      %v1128 = vpack.c.bf16 %v1127, %v1126
      %s1129 = scalar_lea.vmem %s8, 5
      %v1130 = vld [vmem:[%s1129] sm:$0x1]
      %v1132 = vlaneseq
      %v1133 = vshrl.u32 %v1132, 7
      %v1134 = vsub.s32 0, %v1133
      %v1135 = vrot.slane %v1130, %v1134
      %1137 = vmatprep.subr.bf16.mxu0 0
      %1138 = vmatpush1.bf16.msra.mxu0 %v1128
      %1139 = vmatprep.subr.bf16.mxu0 0
      %1140 = vmatpush1.bf16.msra.mxu0 0
      %1141 = vmatprep.subr.bf16.mxu0 0
      %1142 = vmatpush1.bf16.msra.mxu0 0
      %1143 = vmatprep.subr.bf16.mxu0 0
      %1144 = vmatpush1.bf16.msra.mxu0 0
      %1145 = vmatprep.subr.bf16.mxu0 0
      %1146 = vmatpush1.bf16.msra.mxu0 0
      %1147 = vmatprep.subr.bf16.mxu0 0
      %1148 = vmatpush1.bf16.msra.mxu0 0
      %1149 = vmatprep.subr.bf16.mxu0 0
      %1150 = vmatpush1.bf16.msra.mxu0 0
      %1151 = vmatprep.subr.bf16.mxu0 0
      %1152 = vmatpush1.bf16.msra.mxu0 0
      %1153 = vmatprep.subr.bf16.mxu0 0
      %1154 = vmatpush1.bf16.msra.mxu0 0
      %1155 = vmatprep.subr.bf16.mxu0 0
      %1156 = vmatpush1.bf16.msra.mxu0 0
      %1157 = vmatprep.subr.bf16.mxu0 0
      %1158 = vmatpush1.bf16.msra.mxu0 0
      %1159 = vmatprep.subr.bf16.mxu0 0
      %1160 = vmatpush1.bf16.msra.mxu0 0
      %1161 = vmatprep.subr.bf16.mxu0 0
      %1162 = vmatpush1.bf16.msra.mxu0 0
      %1163 = vmatprep.subr.bf16.mxu0 0
      %1164 = vmatpush1.bf16.msra.mxu0 0
      %1165 = vmatprep.subr.bf16.mxu0 0
      %1166 = vmatpush1.bf16.msra.mxu0 0
      %1167 = vmatprep.subr.bf16.mxu0 0
      %1168 = vmatpush1.bf16.msra.mxu0 0
      %1169 = vmatprep.mubr.bf16.mxu0 0
      %1170 = vmatmul.mubr.bf16.gmra.mrb[0].mxu0 %v745
      %v1171 = vpop.f32.mrb[0].mxu0
      %v1172 = vadd.f32 %v1135, %v1171
      %v1173 = vpop.f32.mrb[0].mxu0
      %v1174 = vpop.f32.mrb[0].mxu0
      %v1175 = vadd.f32 %v1135, %v1174
      %v1176 = vpop.f32.mrb[0].mxu0
      %1177 = vdwg.mxu0
      %v1178 = vpack.c.bf16 %v1069, %v1066
      %v1179 = vpack.c.bf16 %v1122, %v1119
      %v1181 = vsel %vm896, %v1178, 0
      %v1184 = vsel %vm896, %v1179, 0
      %1186 = vmatprep.subr.bf16.mxu0 0
      %1187 = vmatpush1.bf16.xpose.msra.mxu0 %v1184
      %1188 = vmatprep.subr.bf16.mxu0 0
      %1189 = vmatpush1.bf16.xpose.msra.mxu0 0
      %1190 = vmatprep.subr.bf16.mxu0 0
      %1191 = vmatpush1.bf16.xpose.msra.mxu0 0
      %1192 = vmatprep.subr.bf16.mxu0 0
      %1193 = vmatpush1.bf16.xpose.msra.mxu0 0
      %1194 = vmatprep.subr.bf16.mxu0 0
      %1195 = vmatpush1.bf16.xpose.msra.mxu0 0
      %1196 = vmatprep.subr.bf16.mxu0 0
      %1197 = vmatpush1.bf16.xpose.msra.mxu0 0
      %1198 = vmatprep.subr.bf16.mxu0 0
      %1199 = vmatpush1.bf16.xpose.msra.mxu0 0
      %1200 = vmatprep.subr.bf16.mxu0 0
      %1201 = vmatpush1.bf16.xpose.msra.mxu0 0
      %1202 = vmatprep.subr.bf16.mxu0 0
      %1203 = vmatpush1.bf16.xpose.msra.mxu0 0
      %1204 = vmatprep.subr.bf16.mxu0 0
      %1205 = vmatpush1.bf16.xpose.msra.mxu0 0
      %1206 = vmatprep.subr.bf16.mxu0 0
      %1207 = vmatpush1.bf16.xpose.msra.mxu0 0
      %1208 = vmatprep.subr.bf16.mxu0 0
      %1209 = vmatpush1.bf16.xpose.msra.mxu0 0
      %1210 = vmatprep.subr.bf16.mxu0 0
      %1211 = vmatpush1.bf16.xpose.msra.mxu0 0
      %1212 = vmatprep.subr.bf16.mxu0 0
      %1213 = vmatpush1.bf16.xpose.msra.mxu0 0
      %1214 = vmatprep.subr.bf16.mxu0 0
      %1215 = vmatpush1.bf16.xpose.msra.mxu0 0
      %1216 = vmatprep.subr.bf16.mxu0 0
      %1217 = vmatpush1.bf16.xpose.msra.mxu0 0
      %1218 = vmatprep.mubr.bf16.mxu0 0
      %1219 = vmatmul.mubr.bf16.gmra.mrb[0].mxu0 %v1181
      %v1220 = vpop.f32.mrb[0].mxu0
      %v1221 = vadd.f32 0.0, %v1220
      %v1222 = vpop.f32.mrb[0].mxu0
      %v1223 = vpop.f32.mrb[0].mxu0
      %v1224 = vadd.f32 0.0, %v1223
      %v1225 = vpop.f32.mrb[0].mxu0
      %1226 = vdwg.mxu0
      %v1227 = vmul.f32 %v1221, 0.35355338
      %v1228 = vmul.f32 %v1224, 0.35355338
      %v1229 = vadd.f32 %v1227, %v687
      %v1230 = vadd.f32 %v1228, %v688
      %v1231 = vsel %vm643, %v1229, -inf
      %1232 = vmax.xlane.f32.xlu0 %v1231
      %v1233 = vpop.xlane.xlu0 %1232
      %v1234 = vsel %vm643, %v1230, -inf
      %1235 = vmax.xlane.f32.xlu0 %v1234
      %v1236 = vpop.xlane.xlu0 %1235
      %v1237 = vsub.f32 %v1229, %v1233
      %v1238 = vsub.f32 %v1230, %v1236
      %v1239 = vmul.f32 %v1237, 1.442695
      %v1240 = vpow.pop %v1239
      %v1241 = vmul.f32 %v1238, 1.442695
      %v1242 = vpow.pop %v1241
      %v1243 = vsel %vm643, %v1240, 0.0
      %1244 = vadd.xlane.f32.xlu0 %v1243
      %v1245 = vpop.xlane.xlu0 %1244
      %v1246 = vsel %vm643, %v1242, 0.0
      %1247 = vadd.xlane.f32.xlu0 %v1246
      %v1248 = vpop.xlane.xlu0 %1247
      %v1249 = vrcp.pop %v1245
      %v1250 = vrcp.pop %v1248
      %v1251 = vmul.f32 %v1240, %v1249
      %v1252 = vmul.f32 %v1242, %v1250
      %v1253 = vpack.c.bf16 %v1252, %v1251
      %v1254 = vpack.c.bf16 %v1175, %v1172
      %v1256 = vsel %vm643, %v1253, 0
      %1258 = vmatprep.subr.bf16.mxu0 0
      %1259 = vmatpush1.bf16.msra.mxu0 %v1254
      %1260 = vmatprep.subr.bf16.mxu0 0
      %1261 = vmatpush1.bf16.msra.mxu0 0
      %1262 = vmatprep.subr.bf16.mxu0 0
      %1263 = vmatpush1.bf16.msra.mxu0 0
      %1264 = vmatprep.subr.bf16.mxu0 0
      %1265 = vmatpush1.bf16.msra.mxu0 0
      %1266 = vmatprep.subr.bf16.mxu0 0
      %1267 = vmatpush1.bf16.msra.mxu0 0
      %1268 = vmatprep.subr.bf16.mxu0 0
      %1269 = vmatpush1.bf16.msra.mxu0 0
      %1270 = vmatprep.subr.bf16.mxu0 0
      %1271 = vmatpush1.bf16.msra.mxu0 0
      %1272 = vmatprep.subr.bf16.mxu0 0
      %1273 = vmatpush1.bf16.msra.mxu0 0
      %1274 = vmatprep.subr.bf16.mxu0 0
      %1275 = vmatpush1.bf16.msra.mxu0 0
      %1276 = vmatprep.subr.bf16.mxu0 0
      %1277 = vmatpush1.bf16.msra.mxu0 0
      %1278 = vmatprep.subr.bf16.mxu0 0
      %1279 = vmatpush1.bf16.msra.mxu0 0
      %1280 = vmatprep.subr.bf16.mxu0 0
      %1281 = vmatpush1.bf16.msra.mxu0 0
      %1282 = vmatprep.subr.bf16.mxu0 0
      %1283 = vmatpush1.bf16.msra.mxu0 0
      %1284 = vmatprep.subr.bf16.mxu0 0
      %1285 = vmatpush1.bf16.msra.mxu0 0
      %1286 = vmatprep.subr.bf16.mxu0 0
      %1287 = vmatpush1.bf16.msra.mxu0 0
      %1288 = vmatprep.subr.bf16.mxu0 0
      %1289 = vmatpush1.bf16.msra.mxu0 0
      %1290 = vmatprep.mubr.bf16.mxu0 0
      %1291 = vmatmul.mubr.bf16.gmra.mrb[0].mxu0 %v1256
      %v1292 = vpop.f32.mrb[0].mxu0
      %v1293 = vadd.f32 0.0, %v1292
      %v1294 = vpop.f32.mrb[0].mxu0
      %v1295 = vpop.f32.mrb[0].mxu0
      %v1296 = vadd.f32 0.0, %v1295
      %v1297 = vpop.f32.mrb[0].mxu0
      %1298 = vdwg.mxu0
      %s1299 = scalar_lea.vmem %s9, 8
      %v1300 = vld [vmem:[%s1299] sm:$0xff]
      %v1301 = vpack.c.bf16 %v1296, %v1293
      %v1302 = vpack.c.bf16 %v1300, %v1300
      %v1304 = vsel %vm896, %v1301, 0
      %vm1306 = vcmask 1043456
      %v1308 = vsel %vm1306, %v1302, 0
      %1310 = vmatprep.subr.bf16.mxu0 0
      %1311 = vmatpush1.bf16.msra.mxu0 %v1308
      %1312 = vmatprep.subr.bf16.mxu0 0
      %1313 = vmatpush1.bf16.msra.mxu0 0
      %1314 = vmatprep.subr.bf16.mxu0 0
      %1315 = vmatpush1.bf16.msra.mxu0 0
      %1316 = vmatprep.subr.bf16.mxu0 0
      %1317 = vmatpush1.bf16.msra.mxu0 0
      %1318 = vmatprep.subr.bf16.mxu0 0
      %1319 = vmatpush1.bf16.msra.mxu0 0
      %1320 = vmatprep.subr.bf16.mxu0 0
      %1321 = vmatpush1.bf16.msra.mxu0 0
      %1322 = vmatprep.subr.bf16.mxu0 0
      %1323 = vmatpush1.bf16.msra.mxu0 0
      %1324 = vmatprep.subr.bf16.mxu0 0
      %1325 = vmatpush1.bf16.msra.mxu0 0
      %1326 = vmatprep.subr.bf16.mxu0 0
      %1327 = vmatpush1.bf16.msra.mxu0 0
      %1328 = vmatprep.subr.bf16.mxu0 0
      %1329 = vmatpush1.bf16.msra.mxu0 0
      %1330 = vmatprep.subr.bf16.mxu0 0
      %1331 = vmatpush1.bf16.msra.mxu0 0
      %1332 = vmatprep.subr.bf16.mxu0 0
      %1333 = vmatpush1.bf16.msra.mxu0 0
      %1334 = vmatprep.subr.bf16.mxu0 0
      %1335 = vmatpush1.bf16.msra.mxu0 0
      %1336 = vmatprep.subr.bf16.mxu0 0
      %1337 = vmatpush1.bf16.msra.mxu0 0
      %1338 = vmatprep.subr.bf16.mxu0 0
      %1339 = vmatpush1.bf16.msra.mxu0 0
      %1340 = vmatprep.subr.bf16.mxu0 0
      %1341 = vmatpush1.bf16.msra.mxu0 0
      %1342 = vmatprep.mubr.bf16.mxu0 0
      %1343 = vmatmul.mubr.bf16.gmra.mrb[0].mxu0 %v1304
      %v1344 = vpop.f32.mrb[0].mxu0
      %v1345 = vadd.f32 0.0, %v1344
      %v1346 = vpop.f32.mrb[0].mxu0
      %v1347 = vpop.f32.mrb[0].mxu0
      %v1348 = vadd.f32 0.0, %v1347
      %v1349 = vpop.f32.mrb[0].mxu0
      %1350 = vdwg.mxu0
      %v1352 = vsel %vm896, %v1017, 0
      %v1355 = vsel %vm1306, %v1018, 0
      %1357 = vmatprep.subr.bf16.mxu0 0
      %1358 = vmatpush1.bf16.msra.mxu0 %v1355
      %1359 = vmatprep.subr.bf16.mxu0 0
      %1360 = vmatpush1.bf16.msra.mxu0 0
      %1361 = vmatprep.subr.bf16.mxu0 0
      %1362 = vmatpush1.bf16.msra.mxu0 0
      %1363 = vmatprep.subr.bf16.mxu0 0
      %1364 = vmatpush1.bf16.msra.mxu0 0
      %1365 = vmatprep.subr.bf16.mxu0 0
      %1366 = vmatpush1.bf16.msra.mxu0 0
      %1367 = vmatprep.subr.bf16.mxu0 0
      %1368 = vmatpush1.bf16.msra.mxu0 0
      %1369 = vmatprep.subr.bf16.mxu0 0
      %1370 = vmatpush1.bf16.msra.mxu0 0
      %1371 = vmatprep.subr.bf16.mxu0 0
      %1372 = vmatpush1.bf16.msra.mxu0 0
      %1373 = vmatprep.subr.bf16.mxu0 0
      %1374 = vmatpush1.bf16.msra.mxu0 0
      %1375 = vmatprep.subr.bf16.mxu0 0
      %1376 = vmatpush1.bf16.msra.mxu0 0
      %1377 = vmatprep.subr.bf16.mxu0 0
      %1378 = vmatpush1.bf16.msra.mxu0 0
      %1379 = vmatprep.subr.bf16.mxu0 0
      %1380 = vmatpush1.bf16.msra.mxu0 0
      %1381 = vmatprep.subr.bf16.mxu0 0
      %1382 = vmatpush1.bf16.msra.mxu0 0
      %1383 = vmatprep.subr.bf16.mxu0 0
      %1384 = vmatpush1.bf16.msra.mxu0 0
      %1385 = vmatprep.subr.bf16.mxu0 0
      %1386 = vmatpush1.bf16.msra.mxu0 0
      %1387 = vmatprep.subr.bf16.mxu0 0
      %1388 = vmatpush1.bf16.msra.mxu0 0
      %1389 = vmatprep.mubr.bf16.mxu0 0
      %1390 = vmatmul.mubr.bf16.gmra.mrb[0].mxu0 %v1352
      %v1391 = vpop.f32.mrb[0].mxu0
      %v1392 = vadd.f32 %v1345, %v1391
      %v1393 = vpop.f32.mrb[0].mxu0
      %v1394 = vpop.f32.mrb[0].mxu0
      %v1395 = vadd.f32 %v1348, %v1394
      %v1396 = vpop.f32.mrb[0].mxu0
      %1397 = vdwg.mxu0
      %v1398 = vadd.f32 %v685, %v1392
      %v1399 = vadd.f32 %v686, %v1395
      %v1400 = vld [vmem:[%s10] sm:$0x1]
      %v1402 = vlaneseq
      %v1403 = vshrl.u32 %v1402, 7
      %v1404 = vsub.s32 0, %v1403
      %v1405 = vrot.slane %v1400, %v1404
      %v1407 = vadd.f32 %v1398, %v1405
      %v1408 = vadd.f32 %v1399, %v1405
      %v1409 = vld [vmem:[%s11] sm:$0x1]
      %v1410 = vld [vmem:[%s12] sm:$0x1]
      %v1411 = vsel %vm643, %v1407, 0.0
      %1412 = vadd.xlane.f32.xlu0 %v1411
      %v1413 = vpop.xlane.xlu0 %1412
      %v1414 = vsel %vm643, %v1408, 0.0
      %1415 = vadd.xlane.f32.xlu0 %v1414
      %v1416 = vpop.xlane.xlu0 %1415
      %v1417 = vmul.f32 %v1413, %v650
      %v1418 = vmul.f32 %v1416, %v650
      %v1419 = vsub.f32 %v1407, %v1417
      %v1420 = vsub.f32 %v1408, %v1418
      %v1421 = vmul.f32 %v1419, %v1419
      %v1422 = vmul.f32 %v1420, %v1420
      %v1423 = vsel %vm643, %v1421, 0.0
      %1424 = vadd.xlane.f32.xlu0 %v1423
      %v1425 = vpop.xlane.xlu0 %1424
      %v1426 = vsel %vm643, %v1422, 0.0
      %1427 = vadd.xlane.f32.xlu0 %v1426
      %v1428 = vpop.xlane.xlu0 %1427
      %v1429 = vmul.f32 %v1425, %v650
      %v1430 = vmul.f32 %v1428, %v650
      %v1431 = vadd.f32 %v1429, 1e-05
      %v1432 = vadd.f32 %v1430, 1e-05
      %v1433 = vrsqrt.pop %v1431
      %v1434 = vrsqrt.pop %v1432
      %v1435 = vmul.f32 %v1419, %v1433
      %v1436 = vmul.f32 %v1420, %v1434
      %v1438 = vlaneseq
      %v1439 = vshrl.u32 %v1438, 7
      %v1440 = vsub.s32 0, %v1439
      %v1441 = vrot.slane %v1409, %v1440
      %v1443 = vmul.f32 %v1435, %v1441
      %v1444 = vmul.f32 %v1436, %v1441
      %v1446 = vlaneseq
      %v1447 = vshrl.u32 %v1446, 7
      %v1448 = vsub.s32 0, %v1447
      %v1449 = vrot.slane %v1410, %v1448
      %v1451 = vadd.f32 %v1443, %v1449
      %v1452 = vadd.f32 %v1444, %v1449
      %v1453 = vld [vmem:[%s13] sm:$0xff]
      %v1454 = vld [vmem:[%s13 + $0x8] sm:$0xff]
      %v1455 = vpack.c.bf16 %v1452, %v1451
      %v1456 = vpack.c.bf16 %v1454, %v1453
      %v1457 = vld [vmem:[%s14] sm:$0x1]
      %v1459 = vlaneseq
      %v1460 = vshrl.u32 %v1459, 7
      %v1461 = vsub.s32 0, %v1460
      %v1462 = vrot.slane %v1457, %v1461
      %v1465 = vsel %vm643, %v1455, 0
      %1467 = vmatprep.subr.bf16.mxu0 0
      %1468 = vmatpush1.bf16.msra.mxu0 %v1456
      %1469 = vmatprep.subr.bf16.mxu0 0
      %1470 = vmatpush1.bf16.msra.mxu0 0
      %1471 = vmatprep.subr.bf16.mxu0 0
      %1472 = vmatpush1.bf16.msra.mxu0 0
      %1473 = vmatprep.subr.bf16.mxu0 0
      %1474 = vmatpush1.bf16.msra.mxu0 0
      %1475 = vmatprep.subr.bf16.mxu0 0
      %1476 = vmatpush1.bf16.msra.mxu0 0
      %1477 = vmatprep.subr.bf16.mxu0 0
      %1478 = vmatpush1.bf16.msra.mxu0 0
      %1479 = vmatprep.subr.bf16.mxu0 0
      %1480 = vmatpush1.bf16.msra.mxu0 0
      %1481 = vmatprep.subr.bf16.mxu0 0
      %1482 = vmatpush1.bf16.msra.mxu0 0
      %1483 = vmatprep.subr.bf16.mxu0 0
      %1484 = vmatpush1.bf16.msra.mxu0 0
      %1485 = vmatprep.subr.bf16.mxu0 0
      %1486 = vmatpush1.bf16.msra.mxu0 0
      %1487 = vmatprep.subr.bf16.mxu0 0
      %1488 = vmatpush1.bf16.msra.mxu0 0
      %1489 = vmatprep.subr.bf16.mxu0 0
      %1490 = vmatpush1.bf16.msra.mxu0 0
      %1491 = vmatprep.subr.bf16.mxu0 0
      %1492 = vmatpush1.bf16.msra.mxu0 0
      %1493 = vmatprep.subr.bf16.mxu0 0
      %1494 = vmatpush1.bf16.msra.mxu0 0
      %1495 = vmatprep.subr.bf16.mxu0 0
      %1496 = vmatpush1.bf16.msra.mxu0 0
      %1497 = vmatprep.subr.bf16.mxu0 0
      %1498 = vmatpush1.bf16.msra.mxu0 0
      %1499 = vmatprep.mubr.bf16.mxu0 0
      %1500 = vmatmul.mubr.bf16.gmra.mrb[0].mxu0 %v1465
      %v1501 = vpop.f32.mrb[0].mxu0
      %v1502 = vadd.f32 %v1462, %v1501
      %v1503 = vpop.f32.mrb[0].mxu0
      %v1504 = vpop.f32.mrb[0].mxu0
      %v1505 = vadd.f32 %v1462, %v1504
      %v1506 = vpop.f32.mrb[0].mxu0
      %1507 = vdwg.mxu0
      %v1508 = vmul.f32 %v1502, %v1502
      %v1509 = vmul.f32 %v1505, %v1505
      %v1510 = vmul.f32 %v1502, %v1508
      %v1511 = vmul.f32 %v1505, %v1509
      %v1512 = vmul.f32 %v1510, 0.044715
      %v1513 = vmul.f32 %v1511, 0.044715
      %v1514 = vadd.f32 %v1502, %v1512
      %v1515 = vadd.f32 %v1505, %v1513
      %v1516 = vmul.f32 %v1514, 0.7978846
      %v1517 = vmul.f32 %v1515, 0.7978846
      %v1518 = vtanh.pop %v1516
      %v1519 = vtanh.pop %v1517
      %v1520 = vadd.f32 %v1518, 1.0
      %v1521 = vadd.f32 %v1519, 1.0
      %v1522 = vmul.f32 %v1520, 0.5
      %v1523 = vmul.f32 %v1521, 0.5
      %v1524 = vmul.f32 %v1502, %v1522
      %v1525 = vmul.f32 %v1505, %v1523
      %v1526 = vld [vmem:[%s15] sm:$0xff]
      %v1527 = vld [vmem:[%s15 + $0x8] sm:$0xff]
      %v1528 = vld [vmem:[%s15 + $0x10] sm:$0xff]
      %v1529 = vld [vmem:[%s15 + $0x18] sm:$0xff]
      %v1530 = vld [vmem:[%s15 + $0x20] sm:$0xff]
      %v1531 = vld [vmem:[%s15 + $0x28] sm:$0xff]
      %v1532 = vld [vmem:[%s15 + $0x30] sm:$0xff]
      %v1533 = vld [vmem:[%s15 + $0x38] sm:$0xff]
      %v1534 = vpack.c.bf16 %v1525, %v1524
      %v1535 = vpack.c.bf16 %v1527, %v1526
      %v1536 = vpack.c.bf16 %v1529, %v1528
      %v1537 = vpack.c.bf16 %v1531, %v1530
      %v1538 = vpack.c.bf16 %v1533, %v1532
      %vm1539 = vcmask 523264
      %v1541 = vsel %vm1539, %v1534, 0
      %1543 = vmatprep.subr.bf16.mxu0 0
      %1544 = vmatpush1.bf16.msra.mxu0 %v1535
      %1545 = vmatprep.subr.bf16.mxu0 0
      %1546 = vmatpush1.bf16.msra.mxu0 %v1536
      %1547 = vmatprep.subr.bf16.mxu0 0
      %1548 = vmatpush1.bf16.msra.mxu0 %v1537
      %1549 = vmatprep.subr.bf16.mxu0 0
      %1550 = vmatpush1.bf16.msra.mxu0 %v1538
      %1551 = vmatprep.subr.bf16.mxu0 0
      %1552 = vmatpush1.bf16.msra.mxu0 0
      %1553 = vmatprep.subr.bf16.mxu0 0
      %1554 = vmatpush1.bf16.msra.mxu0 0
      %1555 = vmatprep.subr.bf16.mxu0 0
      %1556 = vmatpush1.bf16.msra.mxu0 0
      %1557 = vmatprep.subr.bf16.mxu0 0
      %1558 = vmatpush1.bf16.msra.mxu0 0
      %1559 = vmatprep.subr.bf16.mxu0 0
      %1560 = vmatpush1.bf16.msra.mxu0 0
      %1561 = vmatprep.subr.bf16.mxu0 0
      %1562 = vmatpush1.bf16.msra.mxu0 0
      %1563 = vmatprep.subr.bf16.mxu0 0
      %1564 = vmatpush1.bf16.msra.mxu0 0
      %1565 = vmatprep.subr.bf16.mxu0 0
      %1566 = vmatpush1.bf16.msra.mxu0 0
      %1567 = vmatprep.subr.bf16.mxu0 0
      %1568 = vmatpush1.bf16.msra.mxu0 0
      %1569 = vmatprep.subr.bf16.mxu0 0
      %1570 = vmatpush1.bf16.msra.mxu0 0
      %1571 = vmatprep.subr.bf16.mxu0 0
      %1572 = vmatpush1.bf16.msra.mxu0 0
      %1573 = vmatprep.subr.bf16.mxu0 0
      %1574 = vmatpush1.bf16.msra.mxu0 0
      %1575 = vmatprep.mubr.bf16.mxu0 0
      %1576 = vmatmul.mubr.bf16.gmra.mrb[0].mxu0 %v1541
      %v1577 = vpop.f32.mrb[0].mxu0
      %v1578 = vadd.f32 0.0, %v1577
      %v1579 = vpop.f32.mrb[0].mxu0
      %v1580 = vpop.f32.mrb[0].mxu0
      %v1581 = vadd.f32 0.0, %v1580
      %v1582 = vpop.f32.mrb[0].mxu0
      %1583 = vdwg.mxu0
      %v1584 = vadd.f32 %v1407, %v1578
      %v1585 = vadd.f32 %v1408, %v1581
      %v1586 = vld [vmem:[%s16] sm:$0x1]
      %v1588 = vlaneseq
      %v1589 = vshrl.u32 %v1588, 7
      %v1590 = vsub.s32 0, %v1589
      %v1591 = vrot.slane %v1586, %v1590
      %v1593 = vadd.f32 %v1584, %v1591
      %v1594 = vadd.f32 %v1585, %v1591
      %1595 = vst.msk [vmem:[%s575] sm:$0xff] %vm643, %v1593
      %1596 = vst.msk [vmem:[%s575 + $0x8] sm:$0xff] %vm643, %v1594
      %p1597 = scmp.lt.s32.totalorder %s29, 1
      %s1598 = scalar_select %p1597, %s29, 1
      %s1599 = smul.addr %s1598, 2
      %s1600 = smul.addr %s1599, 8
      %s1601 = scalar_lea.vmem %s18, %s1600
      // Predicated region
      $region93: #{hvit_vae_forward.4} parent=91 // pred_check
        %p1602 = pneg %p430
      $region94: #{hvit_vae_forward.4} parent=91 // pred_check_branch
        %1604 = sbr.rel (%p1602) target = $region96
      $region95: #{hvit_vae_forward.4} parent=91 // pred_region
        _
      $region96: #{hvit_vae_forward.4} parent=91 // pred_fallthru
        _
    $region92: #{hvit_vae_forward.4} parent=5 // pred_fallthru
      _
    %p1605 = scmp.le.s32.totalorder 2, %s24
    // Predicated region
    $region97: #{hvit_vae_forward.4} parent=5 // pred_check
      %p1606 = pneg %p1605
    $region98: #{hvit_vae_forward.4} parent=5 // pred_check_branch
      %1608 = sbr.rel (%p1606) target = $region100
    $region99: #{hvit_vae_forward.4} parent=5 // pred_region
      %s1609 = ssub.s32 %s24, 2
      // Predicated region
      $region101: #{hvit_vae_forward.4} parent=99 // pred_check
        %p1610 = pneg %p436
      $region102: #{hvit_vae_forward.4} parent=99 // pred_check_branch
        %1612 = sbr.rel (%p1610) target = $region104
      $region103: #{hvit_vae_forward.4} parent=99 // pred_region
        %p1613 = scmp.lt.s32.totalorder %s30, 1
        %s1614 = scalar_select %p1613, %s30, 1
        %s1615 = smul.addr %s1614, 2
        %s1616 = smul.addr %s1615, 8
        %s1617 = scalar_lea.vmem %s18, %s1616
      $region104: #{hvit_vae_forward.4} parent=99 // pred_fallthru
        _
    $region100: #{hvit_vae_forward.4} parent=5 // pred_fallthru
      _
  $region6: #{hvit_vae_forward.4} parent=0 // loop_footer
    %s28 = sadd.s32 1, %s24
  $region7: #{hvit_vae_forward.4} parent=0 // loop_footer_branch
    %23 = sbr.rel target = $region3
  $region8: #{hvit_vae_forward.4} parent=0 // loop_exit
    _

// kernel: hvit_vae_forward.7
$region0: #{hvit_vae_forward.7}
  #allocation0 [shape = 'u32[]', space=smem, size = 0x4, offset = 0x4, fixed_abs, tag = 'smem constant byte address 0x4 - core index']
  #allocation1 [shape = 'u32[144,128]{1,0:T(1,128)}', space=vmem, size = 0x12000, scoped, tag = 'internal scratch']
  %s0 = inlined_call_operand.vmem [shape: f32[2,16,16], index: 0, kind: input, shape index: {}]
  %s1 = inlined_call_operand.vmem [shape: f32[1,16], index: 1, kind: input, shape index: {}]
  %s2 = inlined_call_operand.vmem [shape: f32[1,16], index: 2, kind: input, shape index: {}]
  %s3 = inlined_call_operand.vmem [shape: f32[6,16,8], index: 3, kind: input, shape index: {}]
  %s4 = inlined_call_operand.vmem [shape: f32[6,1,8], index: 4, kind: input, shape index: {}]
  %s5 = inlined_call_operand.vmem [shape: f32[2,8,16], index: 5, kind: input, shape index: {}]
  %s6 = inlined_call_operand.vmem [shape: f32[1,16], index: 6, kind: input, shape index: {}]
  %s7 = inlined_call_operand.vmem [shape: f32[1,16], index: 7, kind: input, shape index: {}]
  %s8 = inlined_call_operand.vmem [shape: f32[1,16], index: 8, kind: input, shape index: {}]
  %s9 = inlined_call_operand.vmem [shape: f32[16,64], index: 9, kind: input, shape index: {}]
  %s10 = inlined_call_operand.vmem [shape: f32[1,64], index: 10, kind: input, shape index: {}]
  %s11 = inlined_call_operand.vmem [shape: f32[64,16], index: 11, kind: input, shape index: {}]
  %s12 = inlined_call_operand.vmem [shape: f32[1,16], index: 12, kind: input, shape index: {}]
  %s13 = inlined_call_operand.vmem [shape: f32[16,16], index: 13, kind: input, shape index: {}]
  %s14 = inlined_call_operand.vmem [shape: f32[16,48], index: 14, kind: input, shape index: {}]
  %s15 = inlined_call_operand.vmem [shape: f32[1,48], index: 15, kind: input, shape index: {}]
  %s16 = inlined_call_operand.vmem [shape: f32[2,16,48], index: 16, kind: output, shape index: {}]
  %s17 = sld [smem:[#allocation0]]
  $region97: #{hvit_vae_forward.7} parent=0
    _
  %s19 = ssub.s32 1, %s17
  %s20 = scalar_select 0, %s19, %s17
  loop: start=0, step=1, limit=4
  $region2: #{hvit_vae_forward.7} parent=0 // loop_pre_header
    _
  $region3: #{hvit_vae_forward.7} parent=0 // loop_header
    %s22 = sphi 0, %s26
    %p23 = scmp.ge.s32.totalorder %s22, 4
    %s32 = sphi 0, %s34
    %s35 = sphi 0, %s32
    %s36 = sphi 0, %s35
    %s52 = sphi 0, %s36
    %s56 = sphi 0, %s56
    %s58 = sphi 0, %s56
    %s59 = sphi 0, %s58
    %s73 = sphi 0, %s59
    %s77 = sphi 0, %s77
    %s79 = sphi 0, %s77
    %s80 = sphi 0, %s79
    %s94 = sphi 0, %s80
    %s98 = sphi 0, %s98
    %s100 = sphi 0, %s98
    %s101 = sphi 0, %s100
    %s115 = sphi 0, %s101
    %s119 = sphi 0, %s119
    %s121 = sphi 0, %s119
    %s122 = sphi 0, %s121
    %s136 = sphi 0, %s122
    %s140 = sphi 0, %s140
    %s142 = sphi 0, %s140
    %s143 = sphi 0, %s142
    %s157 = sphi 0, %s143
    %s161 = sphi 0, %s161
    %s163 = sphi 0, %s161
    %s164 = sphi 0, %s163
    %s178 = sphi 0, %s164
    %s182 = sphi 0, %s182
    %s184 = sphi 0, %s182
    %s185 = sphi 0, %s184
    %s199 = sphi 0, %s185
    %s203 = sphi 0, %s203
    %s205 = sphi 0, %s203
    %s206 = sphi 0, %s205
    %s220 = sphi 0, %s206
    %s224 = sphi 0, %s224
    %s226 = sphi 0, %s224
    %s227 = sphi 0, %s226
    %s241 = sphi 0, %s227
    %s245 = sphi 0, %s245
    %s247 = sphi 0, %s245
    %s248 = sphi 0, %s247
    %s262 = sphi 0, %s248
    %s266 = sphi 0, %s266
    %s268 = sphi 0, %s266
    %s269 = sphi 0, %s268
    %s283 = sphi 0, %s269
    %s287 = sphi 0, %s287
    %s289 = sphi 0, %s287
    %s290 = sphi 0, %s289
    %s304 = sphi 0, %s290
    %s308 = sphi 0, %s308
    %s310 = sphi 0, %s308
    %s311 = sphi 0, %s310
    %s325 = sphi 0, %s311
    %s329 = sphi 0, %s329
    %s331 = sphi 0, %s329
    %s332 = sphi 0, %s331
    %s346 = sphi 0, %s332
    %s350 = sphi 0, %s350
    %s352 = sphi 0, %s350
    %s353 = sphi 0, %s352
    %s367 = sphi 0, %s353
    %s373 = sphi 0, %s375
    %s376 = sphi 0, %s373
    %s377 = sphi 0, %s376
    %s393 = sphi 0, %s377
  $region4: #{hvit_vae_forward.7} parent=0 // loop_header_branch
    %25 = sbr.rel (%p23) target = $region8
  $region5: #{hvit_vae_forward.7} parent=0 // loop_body
    %s27 = ssub.s32 %s22, 1
    %s28 = ssub.s32 %s22, 2
    %s29 = sadd.s32 %s22, 1
    %s30 = ssub.s32 %s22, %s29
    %p31 = scmp.eq.s32.totalorder %s30, 0
    %s33 = sadd.s32 %s32, 1
    %s34 = scalar_select %p31, %s32, %s33
    %p37 = pneg %p31
    %p38 = scmp.eq.s32.totalorder %s22, 1
    %p39 = por %p37, %p38
    %p40 = scmp.ne.s32.totalorder %s32, %s35
    %p41 = scmp.eq.s32.totalorder %s22, 0
    %p42 = por %p40, %p41
    %p43 = scmp.ne.s32.totalorder %s32, %s35
    %p44 = scmp.eq.s32.totalorder %s27, 1
    %p45 = por %p43, %p44
    %p46 = scmp.ne.s32.totalorder %s35, %s36
    %p47 = scmp.eq.s32.totalorder %s27, 0
    %p48 = por %p46, %p47
    %p49 = scmp.ne.s32.totalorder %s35, %s36
    %p50 = scmp.eq.s32.totalorder %s28, 1
    %p51 = por %p49, %p50
    %p53 = scmp.ne.s32.totalorder %s36, %s52
    %p54 = scmp.eq.s32.totalorder %s28, 0
    %p55 = por %p53, %p54
    %s57 = sadd.s32 %s56, 1
    %p60 = scmp.eq.s32.totalorder %s22, 1
    %p61 = scmp.ne.s32.totalorder %s56, %s58
    %p62 = scmp.eq.s32.totalorder %s22, 0
    %p63 = por %p61, %p62
    %p64 = scmp.ne.s32.totalorder %s56, %s58
    %p65 = scmp.eq.s32.totalorder %s27, 1
    %p66 = por %p64, %p65
    %p67 = scmp.ne.s32.totalorder %s58, %s59
    %p68 = scmp.eq.s32.totalorder %s27, 0
    %p69 = por %p67, %p68
    %p70 = scmp.ne.s32.totalorder %s58, %s59
    %p71 = scmp.eq.s32.totalorder %s28, 1
    %p72 = por %p70, %p71
    %p74 = scmp.ne.s32.totalorder %s59, %s73
    %p75 = scmp.eq.s32.totalorder %s28, 0
    %p76 = por %p74, %p75
    %s78 = sadd.s32 %s77, 1
    %p81 = scmp.eq.s32.totalorder %s22, 1
    %p82 = scmp.ne.s32.totalorder %s77, %s79
    %p83 = scmp.eq.s32.totalorder %s22, 0
    %p84 = por %p82, %p83
    %p85 = scmp.ne.s32.totalorder %s77, %s79
    %p86 = scmp.eq.s32.totalorder %s27, 1
    %p87 = por %p85, %p86
    %p88 = scmp.ne.s32.totalorder %s79, %s80
    %p89 = scmp.eq.s32.totalorder %s27, 0
    %p90 = por %p88, %p89
    %p91 = scmp.ne.s32.totalorder %s79, %s80
    %p92 = scmp.eq.s32.totalorder %s28, 1
    %p93 = por %p91, %p92
    %p95 = scmp.ne.s32.totalorder %s80, %s94
    %p96 = scmp.eq.s32.totalorder %s28, 0
    %p97 = por %p95, %p96
    %s99 = sadd.s32 %s98, 1
    %p102 = scmp.eq.s32.totalorder %s22, 1
    %p103 = scmp.ne.s32.totalorder %s98, %s100
    %p104 = scmp.eq.s32.totalorder %s22, 0
    %p105 = por %p103, %p104
    %p106 = scmp.ne.s32.totalorder %s98, %s100
    %p107 = scmp.eq.s32.totalorder %s27, 1
    %p108 = por %p106, %p107
    %p109 = scmp.ne.s32.totalorder %s100, %s101
    %p110 = scmp.eq.s32.totalorder %s27, 0
    %p111 = por %p109, %p110
    %p112 = scmp.ne.s32.totalorder %s100, %s101
    %p113 = scmp.eq.s32.totalorder %s28, 1
    %p114 = por %p112, %p113
    %p116 = scmp.ne.s32.totalorder %s101, %s115
    %p117 = scmp.eq.s32.totalorder %s28, 0
    %p118 = por %p116, %p117
    %s120 = sadd.s32 %s119, 1
    %p123 = scmp.eq.s32.totalorder %s22, 1
    %p124 = scmp.ne.s32.totalorder %s119, %s121
    %p125 = scmp.eq.s32.totalorder %s22, 0
    %p126 = por %p124, %p125
    %p127 = scmp.ne.s32.totalorder %s119, %s121
    %p128 = scmp.eq.s32.totalorder %s27, 1
    %p129 = por %p127, %p128
    %p130 = scmp.ne.s32.totalorder %s121, %s122
    %p131 = scmp.eq.s32.totalorder %s27, 0
    %p132 = por %p130, %p131
    %p133 = scmp.ne.s32.totalorder %s121, %s122
    %p134 = scmp.eq.s32.totalorder %s28, 1
    %p135 = por %p133, %p134
    %p137 = scmp.ne.s32.totalorder %s122, %s136
    %p138 = scmp.eq.s32.totalorder %s28, 0
    %p139 = por %p137, %p138
    %s141 = sadd.s32 %s140, 1
    %p144 = scmp.eq.s32.totalorder %s22, 1
    %p145 = scmp.ne.s32.totalorder %s140, %s142
    %p146 = scmp.eq.s32.totalorder %s22, 0
    %p147 = por %p145, %p146
    %p148 = scmp.ne.s32.totalorder %s140, %s142
    %p149 = scmp.eq.s32.totalorder %s27, 1
    %p150 = por %p148, %p149
    %p151 = scmp.ne.s32.totalorder %s142, %s143
    %p152 = scmp.eq.s32.totalorder %s27, 0
    %p153 = por %p151, %p152
    %p154 = scmp.ne.s32.totalorder %s142, %s143
    %p155 = scmp.eq.s32.totalorder %s28, 1
    %p156 = por %p154, %p155
    %p158 = scmp.ne.s32.totalorder %s143, %s157
    %p159 = scmp.eq.s32.totalorder %s28, 0
    %p160 = por %p158, %p159
    %s162 = sadd.s32 %s161, 1
    %p165 = scmp.eq.s32.totalorder %s22, 1
    %p166 = scmp.ne.s32.totalorder %s161, %s163
    %p167 = scmp.eq.s32.totalorder %s22, 0
    %p168 = por %p166, %p167
    %p169 = scmp.ne.s32.totalorder %s161, %s163
    %p170 = scmp.eq.s32.totalorder %s27, 1
    %p171 = por %p169, %p170
    %p172 = scmp.ne.s32.totalorder %s163, %s164
    %p173 = scmp.eq.s32.totalorder %s27, 0
    %p174 = por %p172, %p173
    %p175 = scmp.ne.s32.totalorder %s163, %s164
    %p176 = scmp.eq.s32.totalorder %s28, 1
    %p177 = por %p175, %p176
    %p179 = scmp.ne.s32.totalorder %s164, %s178
    %p180 = scmp.eq.s32.totalorder %s28, 0
    %p181 = por %p179, %p180
    %s183 = sadd.s32 %s182, 1
    %p186 = scmp.eq.s32.totalorder %s22, 1
    %p187 = scmp.ne.s32.totalorder %s182, %s184
    %p188 = scmp.eq.s32.totalorder %s22, 0
    %p189 = por %p187, %p188
    %p190 = scmp.ne.s32.totalorder %s182, %s184
    %p191 = scmp.eq.s32.totalorder %s27, 1
    %p192 = por %p190, %p191
    %p193 = scmp.ne.s32.totalorder %s184, %s185
    %p194 = scmp.eq.s32.totalorder %s27, 0
    %p195 = por %p193, %p194
    %p196 = scmp.ne.s32.totalorder %s184, %s185
    %p197 = scmp.eq.s32.totalorder %s28, 1
    %p198 = por %p196, %p197
    %p200 = scmp.ne.s32.totalorder %s185, %s199
    %p201 = scmp.eq.s32.totalorder %s28, 0
    %p202 = por %p200, %p201
    %s204 = sadd.s32 %s203, 1
    %p207 = scmp.eq.s32.totalorder %s22, 1
    %p208 = scmp.ne.s32.totalorder %s203, %s205
    %p209 = scmp.eq.s32.totalorder %s22, 0
    %p210 = por %p208, %p209
    %p211 = scmp.ne.s32.totalorder %s203, %s205
    %p212 = scmp.eq.s32.totalorder %s27, 1
    %p213 = por %p211, %p212
    %p214 = scmp.ne.s32.totalorder %s205, %s206
    %p215 = scmp.eq.s32.totalorder %s27, 0
    %p216 = por %p214, %p215
    %p217 = scmp.ne.s32.totalorder %s205, %s206
    %p218 = scmp.eq.s32.totalorder %s28, 1
    %p219 = por %p217, %p218
    %p221 = scmp.ne.s32.totalorder %s206, %s220
    %p222 = scmp.eq.s32.totalorder %s28, 0
    %p223 = por %p221, %p222
    %s225 = sadd.s32 %s224, 1
    %p228 = scmp.eq.s32.totalorder %s22, 1
    %p229 = scmp.ne.s32.totalorder %s224, %s226
    %p230 = scmp.eq.s32.totalorder %s22, 0
    %p231 = por %p229, %p230
    %p232 = scmp.ne.s32.totalorder %s224, %s226
    %p233 = scmp.eq.s32.totalorder %s27, 1
    %p234 = por %p232, %p233
    %p235 = scmp.ne.s32.totalorder %s226, %s227
    %p236 = scmp.eq.s32.totalorder %s27, 0
    %p237 = por %p235, %p236
    %p238 = scmp.ne.s32.totalorder %s226, %s227
    %p239 = scmp.eq.s32.totalorder %s28, 1
    %p240 = por %p238, %p239
    %p242 = scmp.ne.s32.totalorder %s227, %s241
    %p243 = scmp.eq.s32.totalorder %s28, 0
    %p244 = por %p242, %p243
    %s246 = sadd.s32 %s245, 1
    %p249 = scmp.eq.s32.totalorder %s22, 1
    %p250 = scmp.ne.s32.totalorder %s245, %s247
    %p251 = scmp.eq.s32.totalorder %s22, 0
    %p252 = por %p250, %p251
    %p253 = scmp.ne.s32.totalorder %s245, %s247
    %p254 = scmp.eq.s32.totalorder %s27, 1
    %p255 = por %p253, %p254
    %p256 = scmp.ne.s32.totalorder %s247, %s248
    %p257 = scmp.eq.s32.totalorder %s27, 0
    %p258 = por %p256, %p257
    %p259 = scmp.ne.s32.totalorder %s247, %s248
    %p260 = scmp.eq.s32.totalorder %s28, 1
    %p261 = por %p259, %p260
    %p263 = scmp.ne.s32.totalorder %s248, %s262
    %p264 = scmp.eq.s32.totalorder %s28, 0
    %p265 = por %p263, %p264
    %s267 = sadd.s32 %s266, 1
    %p270 = scmp.eq.s32.totalorder %s22, 1
    %p271 = scmp.ne.s32.totalorder %s266, %s268
    %p272 = scmp.eq.s32.totalorder %s22, 0
    %p273 = por %p271, %p272
    %p274 = scmp.ne.s32.totalorder %s266, %s268
    %p275 = scmp.eq.s32.totalorder %s27, 1
    %p276 = por %p274, %p275
    %p277 = scmp.ne.s32.totalorder %s268, %s269
    %p278 = scmp.eq.s32.totalorder %s27, 0
    %p279 = por %p277, %p278
    %p280 = scmp.ne.s32.totalorder %s268, %s269
    %p281 = scmp.eq.s32.totalorder %s28, 1
    %p282 = por %p280, %p281
    %p284 = scmp.ne.s32.totalorder %s269, %s283
    %p285 = scmp.eq.s32.totalorder %s28, 0
    %p286 = por %p284, %p285
    %s288 = sadd.s32 %s287, 1
    %p291 = scmp.eq.s32.totalorder %s22, 1
    %p292 = scmp.ne.s32.totalorder %s287, %s289
    %p293 = scmp.eq.s32.totalorder %s22, 0
    %p294 = por %p292, %p293
    %p295 = scmp.ne.s32.totalorder %s287, %s289
    %p296 = scmp.eq.s32.totalorder %s27, 1
    %p297 = por %p295, %p296
    %p298 = scmp.ne.s32.totalorder %s289, %s290
    %p299 = scmp.eq.s32.totalorder %s27, 0
    %p300 = por %p298, %p299
    %p301 = scmp.ne.s32.totalorder %s289, %s290
    %p302 = scmp.eq.s32.totalorder %s28, 1
    %p303 = por %p301, %p302
    %p305 = scmp.ne.s32.totalorder %s290, %s304
    %p306 = scmp.eq.s32.totalorder %s28, 0
    %p307 = por %p305, %p306
    %s309 = sadd.s32 %s308, 1
    %p312 = scmp.eq.s32.totalorder %s22, 1
    %p313 = scmp.ne.s32.totalorder %s308, %s310
    %p314 = scmp.eq.s32.totalorder %s22, 0
    %p315 = por %p313, %p314
    %p316 = scmp.ne.s32.totalorder %s308, %s310
    %p317 = scmp.eq.s32.totalorder %s27, 1
    %p318 = por %p316, %p317
    %p319 = scmp.ne.s32.totalorder %s310, %s311
    %p320 = scmp.eq.s32.totalorder %s27, 0
    %p321 = por %p319, %p320
    %p322 = scmp.ne.s32.totalorder %s310, %s311
    %p323 = scmp.eq.s32.totalorder %s28, 1
    %p324 = por %p322, %p323
    %p326 = scmp.ne.s32.totalorder %s311, %s325
    %p327 = scmp.eq.s32.totalorder %s28, 0
    %p328 = por %p326, %p327
    %s330 = sadd.s32 %s329, 1
    %p333 = scmp.eq.s32.totalorder %s22, 1
    %p334 = scmp.ne.s32.totalorder %s329, %s331
    %p335 = scmp.eq.s32.totalorder %s22, 0
    %p336 = por %p334, %p335
    %p337 = scmp.ne.s32.totalorder %s329, %s331
    %p338 = scmp.eq.s32.totalorder %s27, 1
    %p339 = por %p337, %p338
    %p340 = scmp.ne.s32.totalorder %s331, %s332
    %p341 = scmp.eq.s32.totalorder %s27, 0
    %p342 = por %p340, %p341
    %p343 = scmp.ne.s32.totalorder %s331, %s332
    %p344 = scmp.eq.s32.totalorder %s28, 1
    %p345 = por %p343, %p344
    %p347 = scmp.ne.s32.totalorder %s332, %s346
    %p348 = scmp.eq.s32.totalorder %s28, 0
    %p349 = por %p347, %p348
    %s351 = sadd.s32 %s350, 1
    %p354 = scmp.eq.s32.totalorder %s22, 1
    %p355 = scmp.ne.s32.totalorder %s350, %s352
    %p356 = scmp.eq.s32.totalorder %s22, 0
    %p357 = por %p355, %p356
    %p358 = scmp.ne.s32.totalorder %s350, %s352
    %p359 = scmp.eq.s32.totalorder %s27, 1
    %p360 = por %p358, %p359
    %p361 = scmp.ne.s32.totalorder %s352, %s353
    %p362 = scmp.eq.s32.totalorder %s27, 0
    %p363 = por %p361, %p362
    %p364 = scmp.ne.s32.totalorder %s352, %s353
    %p365 = scmp.eq.s32.totalorder %s28, 1
    %p366 = por %p364, %p365
    %p368 = scmp.ne.s32.totalorder %s353, %s367
    %p369 = scmp.eq.s32.totalorder %s28, 0
    %p370 = por %p368, %p369
    %s371 = ssub.s32 %s22, %s29
    %p372 = scmp.eq.s32.totalorder %s371, 0
    %s374 = sadd.s32 %s373, 1
    %s375 = scalar_select %p372, %s373, %s374
    %p378 = pneg %p372
    %p379 = scmp.eq.s32.totalorder %s22, 1
    %p380 = por %p378, %p379
    %p381 = scmp.ne.s32.totalorder %s373, %s376
    %p382 = scmp.eq.s32.totalorder %s22, 0
    %p383 = por %p381, %p382
    %p384 = scmp.ne.s32.totalorder %s373, %s376
    %p385 = scmp.eq.s32.totalorder %s27, 1
    %p386 = por %p384, %p385
    %p387 = scmp.ne.s32.totalorder %s376, %s377
    %p388 = scmp.eq.s32.totalorder %s27, 0
    %p389 = por %p387, %p388
    %p390 = scmp.ne.s32.totalorder %s376, %s377
    %p391 = scmp.eq.s32.totalorder %s28, 1
    %p392 = por %p390, %p391
    %p394 = scmp.ne.s32.totalorder %s377, %s393
    %p395 = scmp.eq.s32.totalorder %s28, 0
    %p396 = por %p394, %p395
    %p397 = scmp.le.s32.totalorder 1, %s22
    %p398 = scmp.lt.s32.totalorder %s22, 3
    %p399 = pnand %p397, %p398
    %p400 = pneg %p399
    // Predicated region
    $region9: #{hvit_vae_forward.7} parent=5 // pred_check
      _
    $region10: #{hvit_vae_forward.7} parent=5 // pred_check_branch
      %402 = sbr.rel (%p399) target = $region12
    $region11: #{hvit_vae_forward.7} parent=5 // pred_region
      %s403 = ssub.s32 %s22, 1
      // Predicated region
      $region13: #{hvit_vae_forward.7} parent=11 // pred_check
        %p404 = pneg %p69
      $region14: #{hvit_vae_forward.7} parent=11 // pred_check_branch
        %406 = sbr.rel (%p404) target = $region16
      $region15: #{hvit_vae_forward.7} parent=11 // pred_region
        _
      $region16: #{hvit_vae_forward.7} parent=11 // pred_fallthru
        _
      // Predicated region
      $region17: #{hvit_vae_forward.7} parent=11 // pred_check
        %p407 = pneg %p90
      $region18: #{hvit_vae_forward.7} parent=11 // pred_check_branch
        %409 = sbr.rel (%p407) target = $region20
      $region19: #{hvit_vae_forward.7} parent=11 // pred_region
        _
      $region20: #{hvit_vae_forward.7} parent=11 // pred_fallthru
        _
      // Predicated region
      $region21: #{hvit_vae_forward.7} parent=11 // pred_check
        %p410 = pneg %p111
      $region22: #{hvit_vae_forward.7} parent=11 // pred_check_branch
        %412 = sbr.rel (%p410) target = $region24
      $region23: #{hvit_vae_forward.7} parent=11 // pred_region
        _
      $region24: #{hvit_vae_forward.7} parent=11 // pred_fallthru
        _
      // Predicated region
      $region25: #{hvit_vae_forward.7} parent=11 // pred_check
        %p413 = pneg %p132
      $region26: #{hvit_vae_forward.7} parent=11 // pred_check_branch
        %415 = sbr.rel (%p413) target = $region28
      $region27: #{hvit_vae_forward.7} parent=11 // pred_region
        _
      $region28: #{hvit_vae_forward.7} parent=11 // pred_fallthru
        _
      // Predicated region
      $region29: #{hvit_vae_forward.7} parent=11 // pred_check
        %p416 = pneg %p153
      $region30: #{hvit_vae_forward.7} parent=11 // pred_check_branch
        %418 = sbr.rel (%p416) target = $region32
      $region31: #{hvit_vae_forward.7} parent=11 // pred_region
        _
      $region32: #{hvit_vae_forward.7} parent=11 // pred_fallthru
        _
      // Predicated region
      $region33: #{hvit_vae_forward.7} parent=11 // pred_check
        %p419 = pneg %p174
      $region34: #{hvit_vae_forward.7} parent=11 // pred_check_branch
        %421 = sbr.rel (%p419) target = $region36
      $region35: #{hvit_vae_forward.7} parent=11 // pred_region
        _
      $region36: #{hvit_vae_forward.7} parent=11 // pred_fallthru
        _
      // Predicated region
      $region37: #{hvit_vae_forward.7} parent=11 // pred_check
        %p422 = pneg %p195
      $region38: #{hvit_vae_forward.7} parent=11 // pred_check_branch
        %424 = sbr.rel (%p422) target = $region40
      $region39: #{hvit_vae_forward.7} parent=11 // pred_region
        _
      $region40: #{hvit_vae_forward.7} parent=11 // pred_fallthru
        _
      // Predicated region
      $region41: #{hvit_vae_forward.7} parent=11 // pred_check
        %p425 = pneg %p216
      $region42: #{hvit_vae_forward.7} parent=11 // pred_check_branch
        %427 = sbr.rel (%p425) target = $region44
      $region43: #{hvit_vae_forward.7} parent=11 // pred_region
        _
      $region44: #{hvit_vae_forward.7} parent=11 // pred_fallthru
        _
      // Predicated region
      $region45: #{hvit_vae_forward.7} parent=11 // pred_check
        %p428 = pneg %p237
      $region46: #{hvit_vae_forward.7} parent=11 // pred_check_branch
        %430 = sbr.rel (%p428) target = $region48
      $region47: #{hvit_vae_forward.7} parent=11 // pred_region
        _
      $region48: #{hvit_vae_forward.7} parent=11 // pred_fallthru
        _
      // Predicated region
      $region49: #{hvit_vae_forward.7} parent=11 // pred_check
        %p431 = pneg %p258
      $region50: #{hvit_vae_forward.7} parent=11 // pred_check_branch
        %433 = sbr.rel (%p431) target = $region52
      $region51: #{hvit_vae_forward.7} parent=11 // pred_region
        _
      $region52: #{hvit_vae_forward.7} parent=11 // pred_fallthru
        _
      // Predicated region
      $region53: #{hvit_vae_forward.7} parent=11 // pred_check
        %p434 = pneg %p279
      $region54: #{hvit_vae_forward.7} parent=11 // pred_check_branch
        %436 = sbr.rel (%p434) target = $region56
      $region55: #{hvit_vae_forward.7} parent=11 // pred_region
        _
      $region56: #{hvit_vae_forward.7} parent=11 // pred_fallthru
        _
      // Predicated region
      $region57: #{hvit_vae_forward.7} parent=11 // pred_check
        %p437 = pneg %p300
      $region58: #{hvit_vae_forward.7} parent=11 // pred_check_branch
        %439 = sbr.rel (%p437) target = $region60
      $region59: #{hvit_vae_forward.7} parent=11 // pred_region
        _
      $region60: #{hvit_vae_forward.7} parent=11 // pred_fallthru
        _
      // Predicated region
      $region61: #{hvit_vae_forward.7} parent=11 // pred_check
        %p440 = pneg %p321
      $region62: #{hvit_vae_forward.7} parent=11 // pred_check_branch
        %442 = sbr.rel (%p440) target = $region64
      $region63: #{hvit_vae_forward.7} parent=11 // pred_region
        _
      $region64: #{hvit_vae_forward.7} parent=11 // pred_fallthru
        _
      // Predicated region
      $region65: #{hvit_vae_forward.7} parent=11 // pred_check
        %p443 = pneg %p342
      $region66: #{hvit_vae_forward.7} parent=11 // pred_check_branch
        %445 = sbr.rel (%p443) target = $region68
      $region67: #{hvit_vae_forward.7} parent=11 // pred_region
        _
      $region68: #{hvit_vae_forward.7} parent=11 // pred_fallthru
        _
      // Predicated region
      $region69: #{hvit_vae_forward.7} parent=11 // pred_check
        %p446 = pneg %p363
      $region70: #{hvit_vae_forward.7} parent=11 // pred_check_branch
        %448 = sbr.rel (%p446) target = $region72
      $region71: #{hvit_vae_forward.7} parent=11 // pred_region
        _
      $region72: #{hvit_vae_forward.7} parent=11 // pred_fallthru
        _
    $region12: #{hvit_vae_forward.7} parent=5 // pred_fallthru
      _
    %p449 = scmp.lt.s32.totalorder %s22, 2
    // Predicated region
    $region73: #{hvit_vae_forward.7} parent=5 // pred_check
      %p450 = pneg %p449
    $region74: #{hvit_vae_forward.7} parent=5 // pred_check_branch
      %452 = sbr.rel (%p450) target = $region76
    $region75: #{hvit_vae_forward.7} parent=5 // pred_region
      // Predicated region
      $region77: #{hvit_vae_forward.7} parent=75 // pred_check
        %p453 = pneg %p42
      $region78: #{hvit_vae_forward.7} parent=75 // pred_check_branch
        %455 = sbr.rel (%p453) target = $region80
      $region79: #{hvit_vae_forward.7} parent=75 // pred_region
        %p456 = scmp.lt.s32.totalorder %s22, 1
        %s457 = scalar_select %p456, %s22, 1
        %s458 = smul.addr %s457, 2
        %s459 = smul.addr %s458, 8
        %s460 = scalar_lea.vmem %s0, %s459
      $region80: #{hvit_vae_forward.7} parent=75 // pred_fallthru
        _
    $region76: #{hvit_vae_forward.7} parent=5 // pred_fallthru
      _
    %p461 = scmp.le.s32.totalorder 1, %s22
    %p462 = scmp.lt.s32.totalorder %s22, 3
    %p463 = pnand %p461, %p462
    %p464 = pneg %p463
    // Predicated region
    $region81: #{hvit_vae_forward.7} parent=5 // pred_check
      _
    $region82: #{hvit_vae_forward.7} parent=5 // pred_check_branch
      %466 = sbr.rel (%p463) target = $region84
    $region83: #{hvit_vae_forward.7} parent=5 // pred_region
      %s467 = ssub.s32 %s22, 1
      %p468 = scmp.lt.s32.totalorder %s27, 1
      %s469 = scalar_select %p468, %s27, 1
      %s470 = smul.addr %s469, 2
      %s471 = smul.addr %s470, 8
      %s472 = scalar_lea.vmem %s0, %s471
      %p473 = pneg %p48
      %p474 = pneg %p45
      %p475 = pneg %p69
      %p476 = pneg %p66
      %p477 = pneg %p90
      %p478 = pneg %p87
      %p479 = pneg %p111
      %p480 = pneg %p108
      %p481 = pneg %p132
      %p482 = pneg %p129
      %p483 = pneg %p153
      %p484 = pneg %p150
      %p485 = pneg %p174
      %p486 = pneg %p171
      %p487 = pneg %p195
      %p488 = pneg %p192
      %p489 = pneg %p216
      %p490 = pneg %p213
      %p491 = pneg %p237
      %p492 = pneg %p234
      %p493 = pneg %p258
      %p494 = pneg %p255
      %p495 = pneg %p279
      %p496 = pneg %p276
      %p497 = pneg %p300
      %p498 = pneg %p297
      %p499 = pneg %p321
      %p500 = pneg %p318
      %p501 = pneg %p342
      %p502 = pneg %p339
      %p503 = pneg %p363
      %p504 = pneg %p360
      %p505 = pneg %p389
      %p506 = pneg %p386
      %p507 = scmp.lt.s32.totalorder %s27, 1
      %s508 = scalar_select %p507, %s27, 1
      %s509 = smul.addr %s508, 2
      %s510 = smul.addr %s509, 8
      %s511 = scalar_lea.vmem %s16, %s510
      %p512 = scmp.lt.s32.totalorder %s27, 1
      %s513 = scalar_select %p512, %s27, 1
      %s514 = smul.addr %s513, 2
      %s515 = smul.addr %s514, 8
      %s516 = scalar_lea.vmem %s0, %s515
      %p517 = scmp.lt.s32.totalorder %s27, 1
      %s518 = scalar_select %p517, %s27, 1
      %s519 = smul.addr %s518, 2
      %s520 = smul.addr %s519, 8
      %s521 = scalar_lea.vmem %s16, %s520
      %v523 = vld [vmem:[%s516] sm:$0xff]
      %v524 = vld [vmem:[%s516 + $0x8] sm:$0xff]
      %v525 = vld [vmem:[%s13] sm:$0xff]
      %v526 = vld [vmem:[%s13 + $0x8] sm:$0xff]
      %v527 = vld [vmem:[%s1] sm:$0x1]
      %v528 = vld [vmem:[%s2] sm:$0x1]
      %vm529 = vcmask 130048
      %v530 = vsel %vm529, %v523, 0.0
      %531 = vadd.xlane.f32.xlu0 %v530
      %v532 = vpop.xlane.xlu0 %531
      %v533 = vsel %vm529, %v524, 0.0
      %534 = vadd.xlane.f32.xlu0 %v533
      %v535 = vpop.xlane.xlu0 %534
      %v536 = vrcp.pop 16.0
      %v537 = vmul.f32 %v532, %v536
      %v538 = vmul.f32 %v535, %v536
      %v539 = vsub.f32 %v523, %v537
      %v540 = vsub.f32 %v524, %v538
      %v541 = vmul.f32 %v539, %v539
      %v542 = vmul.f32 %v540, %v540
      %v543 = vsel %vm529, %v541, 0.0
      %544 = vadd.xlane.f32.xlu0 %v543
      %v545 = vpop.xlane.xlu0 %544
      %v546 = vsel %vm529, %v542, 0.0
      %547 = vadd.xlane.f32.xlu0 %v546
      %v548 = vpop.xlane.xlu0 %547
      %v549 = vmul.f32 %v545, %v536
      %v550 = vmul.f32 %v548, %v536
      %v551 = vadd.f32 %v549, 1e-05
      %v552 = vadd.f32 %v550, 1e-05
      %v553 = vrsqrt.pop %v551
      %v554 = vrsqrt.pop %v552
      %v555 = vmul.f32 %v539, %v553
      %v556 = vmul.f32 %v540, %v554
      %v558 = vlaneseq
      %v559 = vshrl.u32 %v558, 7
      %v560 = vsub.s32 0, %v559
      %v561 = vrot.slane %v527, %v560
      %v563 = vmul.f32 %v555, %v561
      %v564 = vmul.f32 %v556, %v561
      %v566 = vlaneseq
      %v567 = vshrl.u32 %v566, 7
      %v568 = vsub.s32 0, %v567
      %v569 = vrot.slane %v528, %v568
      %v571 = vadd.f32 %v563, %v569
      %v572 = vadd.f32 %v564, %v569
      %v573 = vld [vmem:[%s3] sm:$0xff]
      %v574 = vld [vmem:[%s3 + $0x8] sm:$0xff]
      %v575 = vpack.c.bf16 %v572, %v571
      %v576 = vpack.c.bf16 %v574, %v573
      %v577 = vld [vmem:[%s4] sm:$0x1]
      %v579 = vlaneseq
      %v580 = vshrl.u32 %v579, 7
      %v581 = vsub.s32 0, %v580
      %v582 = vrot.slane %v577, %v581
      %v585 = vsel %vm529, %v575, 0
      %587 = vmatprep.subr.bf16.mxu0 0
      %588 = vmatpush1.bf16.msra.mxu0 %v576
      %589 = vmatprep.subr.bf16.mxu0 0
      %590 = vmatpush1.bf16.msra.mxu0 0
      %591 = vmatprep.subr.bf16.mxu0 0
      %592 = vmatpush1.bf16.msra.mxu0 0
      %593 = vmatprep.subr.bf16.mxu0 0
      %594 = vmatpush1.bf16.msra.mxu0 0
      %595 = vmatprep.subr.bf16.mxu0 0
      %596 = vmatpush1.bf16.msra.mxu0 0
      %597 = vmatprep.subr.bf16.mxu0 0
      %598 = vmatpush1.bf16.msra.mxu0 0
      %599 = vmatprep.subr.bf16.mxu0 0
      %600 = vmatpush1.bf16.msra.mxu0 0
      %601 = vmatprep.subr.bf16.mxu0 0
      %602 = vmatpush1.bf16.msra.mxu0 0
      %603 = vmatprep.subr.bf16.mxu0 0
      %604 = vmatpush1.bf16.msra.mxu0 0
      %605 = vmatprep.subr.bf16.mxu0 0
      %606 = vmatpush1.bf16.msra.mxu0 0
      %607 = vmatprep.subr.bf16.mxu0 0
      %608 = vmatpush1.bf16.msra.mxu0 0
      %609 = vmatprep.subr.bf16.mxu0 0
      %610 = vmatpush1.bf16.msra.mxu0 0
      %611 = vmatprep.subr.bf16.mxu0 0
      %612 = vmatpush1.bf16.msra.mxu0 0
      %613 = vmatprep.subr.bf16.mxu0 0
      %614 = vmatpush1.bf16.msra.mxu0 0
      %615 = vmatprep.subr.bf16.mxu0 0
      %616 = vmatpush1.bf16.msra.mxu0 0
      %617 = vmatprep.subr.bf16.mxu0 0
      %618 = vmatpush1.bf16.msra.mxu0 0
      %619 = vmatprep.mubr.bf16.mxu0 0
      %620 = vmatmul.mubr.bf16.gmra.mrb[0].mxu0 %v585
      %v621 = vpop.f32.mrb[0].mxu0
      %v622 = vadd.f32 %v582, %v621
      %v623 = vpop.f32.mrb[0].mxu0
      %v624 = vpop.f32.mrb[0].mxu0
      %v625 = vadd.f32 %v582, %v624
      %v626 = vpop.f32.mrb[0].mxu0
      %627 = vdwg.mxu0
      %s628 = scalar_lea.vmem %s3, 32
      %v629 = vld [vmem:[%s628] sm:$0xff]
      %v630 = vld [vmem:[%s628 + $0x8] sm:$0xff]
      %v631 = vpack.c.bf16 %v630, %v629
      %s632 = scalar_lea.vmem %s4, 2
      %v633 = vld [vmem:[%s632] sm:$0x1]
      %v635 = vlaneseq
      %v636 = vshrl.u32 %v635, 7
      %v637 = vsub.s32 0, %v636
      %v638 = vrot.slane %v633, %v637
      %640 = vmatprep.subr.bf16.mxu0 0
      %641 = vmatpush1.bf16.msra.mxu0 %v631
      %642 = vmatprep.subr.bf16.mxu0 0
      %643 = vmatpush1.bf16.msra.mxu0 0
      %644 = vmatprep.subr.bf16.mxu0 0
      %645 = vmatpush1.bf16.msra.mxu0 0
      %646 = vmatprep.subr.bf16.mxu0 0
      %647 = vmatpush1.bf16.msra.mxu0 0
      %648 = vmatprep.subr.bf16.mxu0 0
      %649 = vmatpush1.bf16.msra.mxu0 0
      %650 = vmatprep.subr.bf16.mxu0 0
      %651 = vmatpush1.bf16.msra.mxu0 0
      %652 = vmatprep.subr.bf16.mxu0 0
      %653 = vmatpush1.bf16.msra.mxu0 0
      %654 = vmatprep.subr.bf16.mxu0 0
      %655 = vmatpush1.bf16.msra.mxu0 0
      %656 = vmatprep.subr.bf16.mxu0 0
      %657 = vmatpush1.bf16.msra.mxu0 0
      %658 = vmatprep.subr.bf16.mxu0 0
      %659 = vmatpush1.bf16.msra.mxu0 0
      %660 = vmatprep.subr.bf16.mxu0 0
      %661 = vmatpush1.bf16.msra.mxu0 0
      %662 = vmatprep.subr.bf16.mxu0 0
      %663 = vmatpush1.bf16.msra.mxu0 0
      %664 = vmatprep.subr.bf16.mxu0 0
      %665 = vmatpush1.bf16.msra.mxu0 0
      %666 = vmatprep.subr.bf16.mxu0 0
      %667 = vmatpush1.bf16.msra.mxu0 0
      %668 = vmatprep.subr.bf16.mxu0 0
      %669 = vmatpush1.bf16.msra.mxu0 0
      %670 = vmatprep.subr.bf16.mxu0 0
      %671 = vmatpush1.bf16.msra.mxu0 0
      %672 = vmatprep.mubr.bf16.mxu0 0
      %673 = vmatmul.mubr.bf16.gmra.mrb[0].mxu0 %v585
      %v674 = vpop.f32.mrb[0].mxu0
      %v675 = vadd.f32 %v638, %v674
      %v676 = vpop.f32.mrb[0].mxu0
      %v677 = vpop.f32.mrb[0].mxu0
      %v678 = vadd.f32 %v638, %v677
      %v679 = vpop.f32.mrb[0].mxu0
      %680 = vdwg.mxu0
      %s681 = scalar_lea.vmem %s3, 64
      %v682 = vld [vmem:[%s681] sm:$0xff]
      %v683 = vld [vmem:[%s681 + $0x8] sm:$0xff]
      %v684 = vpack.c.bf16 %v683, %v682
      %s685 = scalar_lea.vmem %s4, 4
      %v686 = vld [vmem:[%s685] sm:$0x1]
      %v688 = vlaneseq
      %v689 = vshrl.u32 %v688, 7
      %v690 = vsub.s32 0, %v689
      %v691 = vrot.slane %v686, %v690
      %693 = vmatprep.subr.bf16.mxu0 0
      %694 = vmatpush1.bf16.msra.mxu0 %v684
      %695 = vmatprep.subr.bf16.mxu0 0
      %696 = vmatpush1.bf16.msra.mxu0 0
      %697 = vmatprep.subr.bf16.mxu0 0
      %698 = vmatpush1.bf16.msra.mxu0 0
      %699 = vmatprep.subr.bf16.mxu0 0
      %700 = vmatpush1.bf16.msra.mxu0 0
      %701 = vmatprep.subr.bf16.mxu0 0
      %702 = vmatpush1.bf16.msra.mxu0 0
      %703 = vmatprep.subr.bf16.mxu0 0
      %704 = vmatpush1.bf16.msra.mxu0 0
      %705 = vmatprep.subr.bf16.mxu0 0
      %706 = vmatpush1.bf16.msra.mxu0 0
      %707 = vmatprep.subr.bf16.mxu0 0
      %708 = vmatpush1.bf16.msra.mxu0 0
      %709 = vmatprep.subr.bf16.mxu0 0
      %710 = vmatpush1.bf16.msra.mxu0 0
      %711 = vmatprep.subr.bf16.mxu0 0
      %712 = vmatpush1.bf16.msra.mxu0 0
      %713 = vmatprep.subr.bf16.mxu0 0
      %714 = vmatpush1.bf16.msra.mxu0 0
      %715 = vmatprep.subr.bf16.mxu0 0
      %716 = vmatpush1.bf16.msra.mxu0 0
      %717 = vmatprep.subr.bf16.mxu0 0
      %718 = vmatpush1.bf16.msra.mxu0 0
      %719 = vmatprep.subr.bf16.mxu0 0
      %720 = vmatpush1.bf16.msra.mxu0 0
      %721 = vmatprep.subr.bf16.mxu0 0
      %722 = vmatpush1.bf16.msra.mxu0 0
      %723 = vmatprep.subr.bf16.mxu0 0
      %724 = vmatpush1.bf16.msra.mxu0 0
      %725 = vmatprep.mubr.bf16.mxu0 0
      %726 = vmatmul.mubr.bf16.gmra.mrb[0].mxu0 %v585
      %v727 = vpop.f32.mrb[0].mxu0
      %v728 = vadd.f32 %v691, %v727
      %v729 = vpop.f32.mrb[0].mxu0
      %v730 = vpop.f32.mrb[0].mxu0
      %v731 = vadd.f32 %v691, %v730
      %v732 = vpop.f32.mrb[0].mxu0
      %733 = vdwg.mxu0
      %v734 = vpack.c.bf16 %v625, %v622
      %v735 = vpack.c.bf16 %v678, %v675
      %vm736 = vcmask 64512
      %v738 = vsel %vm736, %v734, 0
      %v741 = vsel %vm736, %v735, 0
      %743 = vmatprep.subr.bf16.mxu0 0
      %744 = vmatpush1.bf16.xpose.msra.mxu0 %v741
      %745 = vmatprep.subr.bf16.mxu0 0
      %746 = vmatpush1.bf16.xpose.msra.mxu0 0
      %747 = vmatprep.subr.bf16.mxu0 0
      %748 = vmatpush1.bf16.xpose.msra.mxu0 0
      %749 = vmatprep.subr.bf16.mxu0 0
      %750 = vmatpush1.bf16.xpose.msra.mxu0 0
      %751 = vmatprep.subr.bf16.mxu0 0
      %752 = vmatpush1.bf16.xpose.msra.mxu0 0
      %753 = vmatprep.subr.bf16.mxu0 0
      %754 = vmatpush1.bf16.xpose.msra.mxu0 0
      %755 = vmatprep.subr.bf16.mxu0 0
      %756 = vmatpush1.bf16.xpose.msra.mxu0 0
      %757 = vmatprep.subr.bf16.mxu0 0
      %758 = vmatpush1.bf16.xpose.msra.mxu0 0
      %759 = vmatprep.subr.bf16.mxu0 0
      %760 = vmatpush1.bf16.xpose.msra.mxu0 0
      %761 = vmatprep.subr.bf16.mxu0 0
      %762 = vmatpush1.bf16.xpose.msra.mxu0 0
      %763 = vmatprep.subr.bf16.mxu0 0
      %764 = vmatpush1.bf16.xpose.msra.mxu0 0
      %765 = vmatprep.subr.bf16.mxu0 0
      %766 = vmatpush1.bf16.xpose.msra.mxu0 0
      %767 = vmatprep.subr.bf16.mxu0 0
      %768 = vmatpush1.bf16.xpose.msra.mxu0 0
      %769 = vmatprep.subr.bf16.mxu0 0
      %770 = vmatpush1.bf16.xpose.msra.mxu0 0
      %771 = vmatprep.subr.bf16.mxu0 0
      %772 = vmatpush1.bf16.xpose.msra.mxu0 0
      %773 = vmatprep.subr.bf16.mxu0 0
      %774 = vmatpush1.bf16.xpose.msra.mxu0 0
      %775 = vmatprep.mubr.bf16.mxu0 0
      %776 = vmatmul.mubr.bf16.gmra.mrb[0].mxu0 %v738
      %v777 = vpop.f32.mrb[0].mxu0
      %v778 = vadd.f32 0.0, %v777
      %v779 = vpop.f32.mrb[0].mxu0
      %v780 = vpop.f32.mrb[0].mxu0
      %v781 = vadd.f32 0.0, %v780
      %v782 = vpop.f32.mrb[0].mxu0
      %783 = vdwg.mxu0
      %v784 = vmul.f32 %v778, 0.35355338
      %v785 = vmul.f32 %v781, 0.35355338
      %v786 = vadd.f32 %v784, %v525
      %v787 = vadd.f32 %v785, %v526
      %v788 = vsel %vm529, %v786, -inf
      %789 = vmax.xlane.f32.xlu0 %v788
      %v790 = vpop.xlane.xlu0 %789
      %v791 = vsel %vm529, %v787, -inf
      %792 = vmax.xlane.f32.xlu0 %v791
      %v793 = vpop.xlane.xlu0 %792
      %v794 = vsub.f32 %v786, %v790
      %v795 = vsub.f32 %v787, %v793
      %v796 = vmul.f32 %v794, 1.442695
      %v797 = vpow.pop %v796
      %v798 = vmul.f32 %v795, 1.442695
      %v799 = vpow.pop %v798
      %v800 = vsel %vm529, %v797, 0.0
      %801 = vadd.xlane.f32.xlu0 %v800
      %v802 = vpop.xlane.xlu0 %801
      %v803 = vsel %vm529, %v799, 0.0
      %804 = vadd.xlane.f32.xlu0 %v803
      %v805 = vpop.xlane.xlu0 %804
      %v806 = vrcp.pop %v802
      %v807 = vrcp.pop %v805
      %v808 = vmul.f32 %v797, %v806
      %v809 = vmul.f32 %v799, %v807
      %v810 = vpack.c.bf16 %v809, %v808
      %v811 = vpack.c.bf16 %v731, %v728
      %v813 = vsel %vm529, %v810, 0
      %815 = vmatprep.subr.bf16.mxu0 0
      %816 = vmatpush1.bf16.msra.mxu0 %v811
      %817 = vmatprep.subr.bf16.mxu0 0
      %818 = vmatpush1.bf16.msra.mxu0 0
      %819 = vmatprep.subr.bf16.mxu0 0
      %820 = vmatpush1.bf16.msra.mxu0 0
      %821 = vmatprep.subr.bf16.mxu0 0
      %822 = vmatpush1.bf16.msra.mxu0 0
      %823 = vmatprep.subr.bf16.mxu0 0
      %824 = vmatpush1.bf16.msra.mxu0 0
      %825 = vmatprep.subr.bf16.mxu0 0
      %826 = vmatpush1.bf16.msra.mxu0 0
      %827 = vmatprep.subr.bf16.mxu0 0
      %828 = vmatpush1.bf16.msra.mxu0 0
      %829 = vmatprep.subr.bf16.mxu0 0
      %830 = vmatpush1.bf16.msra.mxu0 0
      %831 = vmatprep.subr.bf16.mxu0 0
      %832 = vmatpush1.bf16.msra.mxu0 0
      %833 = vmatprep.subr.bf16.mxu0 0
      %834 = vmatpush1.bf16.msra.mxu0 0
      %835 = vmatprep.subr.bf16.mxu0 0
      %836 = vmatpush1.bf16.msra.mxu0 0
      %837 = vmatprep.subr.bf16.mxu0 0
      %838 = vmatpush1.bf16.msra.mxu0 0
      %839 = vmatprep.subr.bf16.mxu0 0
      %840 = vmatpush1.bf16.msra.mxu0 0
      %841 = vmatprep.subr.bf16.mxu0 0
      %842 = vmatpush1.bf16.msra.mxu0 0
      %843 = vmatprep.subr.bf16.mxu0 0
      %844 = vmatpush1.bf16.msra.mxu0 0
      %845 = vmatprep.subr.bf16.mxu0 0
      %846 = vmatpush1.bf16.msra.mxu0 0
      %847 = vmatprep.mubr.bf16.mxu0 0
      %848 = vmatmul.mubr.bf16.gmra.mrb[0].mxu0 %v813
      %v849 = vpop.f32.mrb[0].mxu0
      %v850 = vadd.f32 0.0, %v849
      %v851 = vpop.f32.mrb[0].mxu0
      %v852 = vpop.f32.mrb[0].mxu0
      %v853 = vadd.f32 0.0, %v852
      %v854 = vpop.f32.mrb[0].mxu0
      %855 = vdwg.mxu0
      %v856 = vld [vmem:[%s5] sm:$0xff]
      %v857 = vpack.c.bf16 %v853, %v850
      %v858 = vpack.c.bf16 %v856, %v856
      %s859 = scalar_lea.vmem %s3, 16
      %v860 = vld [vmem:[%s859] sm:$0xff]
      %v861 = vld [vmem:[%s859 + $0x8] sm:$0xff]
      %v862 = vpack.c.bf16 %v861, %v860
      %s863 = scalar_lea.vmem %s4, 1
      %v864 = vld [vmem:[%s863] sm:$0x1]
      %v866 = vlaneseq
      %v867 = vshrl.u32 %v866, 7
      %v868 = vsub.s32 0, %v867
      %v869 = vrot.slane %v864, %v868
      %871 = vmatprep.subr.bf16.mxu0 0
      %872 = vmatpush1.bf16.msra.mxu0 %v862
      %873 = vmatprep.subr.bf16.mxu0 0
      %874 = vmatpush1.bf16.msra.mxu0 0
      %875 = vmatprep.subr.bf16.mxu0 0
      %876 = vmatpush1.bf16.msra.mxu0 0
      %877 = vmatprep.subr.bf16.mxu0 0
      %878 = vmatpush1.bf16.msra.mxu0 0
      %879 = vmatprep.subr.bf16.mxu0 0
      %880 = vmatpush1.bf16.msra.mxu0 0
      %881 = vmatprep.subr.bf16.mxu0 0
      %882 = vmatpush1.bf16.msra.mxu0 0
      %883 = vmatprep.subr.bf16.mxu0 0
      %884 = vmatpush1.bf16.msra.mxu0 0
      %885 = vmatprep.subr.bf16.mxu0 0
      %886 = vmatpush1.bf16.msra.mxu0 0
      %887 = vmatprep.subr.bf16.mxu0 0
      %888 = vmatpush1.bf16.msra.mxu0 0
      %889 = vmatprep.subr.bf16.mxu0 0
      %890 = vmatpush1.bf16.msra.mxu0 0
      %891 = vmatprep.subr.bf16.mxu0 0
      %892 = vmatpush1.bf16.msra.mxu0 0
      %893 = vmatprep.subr.bf16.mxu0 0
      %894 = vmatpush1.bf16.msra.mxu0 0
      %895 = vmatprep.subr.bf16.mxu0 0
      %896 = vmatpush1.bf16.msra.mxu0 0
      %897 = vmatprep.subr.bf16.mxu0 0
      %898 = vmatpush1.bf16.msra.mxu0 0
      %899 = vmatprep.subr.bf16.mxu0 0
      %900 = vmatpush1.bf16.msra.mxu0 0
      %901 = vmatprep.subr.bf16.mxu0 0
      %902 = vmatpush1.bf16.msra.mxu0 0
      %903 = vmatprep.mubr.bf16.mxu0 0
      %904 = vmatmul.mubr.bf16.gmra.mrb[0].mxu0 %v585
      %v905 = vpop.f32.mrb[0].mxu0
      %v906 = vadd.f32 %v869, %v905
      %v907 = vpop.f32.mrb[0].mxu0
      %v908 = vpop.f32.mrb[0].mxu0
      %v909 = vadd.f32 %v869, %v908
      %v910 = vpop.f32.mrb[0].mxu0
      %911 = vdwg.mxu0
      %s912 = scalar_lea.vmem %s3, 48
      %v913 = vld [vmem:[%s912] sm:$0xff]
      %v914 = vld [vmem:[%s912 + $0x8] sm:$0xff]
      %v915 = vpack.c.bf16 %v914, %v913
      %s916 = scalar_lea.vmem %s4, 3
      %v917 = vld [vmem:[%s916] sm:$0x1]
      %v919 = vlaneseq
      %v920 = vshrl.u32 %v919, 7
      %v921 = vsub.s32 0, %v920
      %v922 = vrot.slane %v917, %v921
      %924 = vmatprep.subr.bf16.mxu0 0
      %925 = vmatpush1.bf16.msra.mxu0 %v915
      %926 = vmatprep.subr.bf16.mxu0 0
      %927 = vmatpush1.bf16.msra.mxu0 0
      %928 = vmatprep.subr.bf16.mxu0 0
      %929 = vmatpush1.bf16.msra.mxu0 0
      %930 = vmatprep.subr.bf16.mxu0 0
      %931 = vmatpush1.bf16.msra.mxu0 0
      %932 = vmatprep.subr.bf16.mxu0 0
      %933 = vmatpush1.bf16.msra.mxu0 0
      %934 = vmatprep.subr.bf16.mxu0 0
      %935 = vmatpush1.bf16.msra.mxu0 0
      %936 = vmatprep.subr.bf16.mxu0 0
      %937 = vmatpush1.bf16.msra.mxu0 0
      %938 = vmatprep.subr.bf16.mxu0 0
      %939 = vmatpush1.bf16.msra.mxu0 0
      %940 = vmatprep.subr.bf16.mxu0 0
      %941 = vmatpush1.bf16.msra.mxu0 0
      %942 = vmatprep.subr.bf16.mxu0 0
      %943 = vmatpush1.bf16.msra.mxu0 0
      %944 = vmatprep.subr.bf16.mxu0 0
      %945 = vmatpush1.bf16.msra.mxu0 0
      %946 = vmatprep.subr.bf16.mxu0 0
      %947 = vmatpush1.bf16.msra.mxu0 0
      %948 = vmatprep.subr.bf16.mxu0 0
      %949 = vmatpush1.bf16.msra.mxu0 0
      %950 = vmatprep.subr.bf16.mxu0 0
      %951 = vmatpush1.bf16.msra.mxu0 0
      %952 = vmatprep.subr.bf16.mxu0 0
      %953 = vmatpush1.bf16.msra.mxu0 0
      %954 = vmatprep.subr.bf16.mxu0 0
      %955 = vmatpush1.bf16.msra.mxu0 0
      %956 = vmatprep.mubr.bf16.mxu0 0
      %957 = vmatmul.mubr.bf16.gmra.mrb[0].mxu0 %v585
      %v958 = vpop.f32.mrb[0].mxu0
      %v959 = vadd.f32 %v922, %v958
      %v960 = vpop.f32.mrb[0].mxu0
      %v961 = vpop.f32.mrb[0].mxu0
      %v962 = vadd.f32 %v922, %v961
      %v963 = vpop.f32.mrb[0].mxu0
      %964 = vdwg.mxu0
      %s965 = scalar_lea.vmem %s3, 80
      %v966 = vld [vmem:[%s965] sm:$0xff]
      %v967 = vld [vmem:[%s965 + $0x8] sm:$0xff]
      %v968 = vpack.c.bf16 %v967, %v966
      %s969 = scalar_lea.vmem %s4, 5
      %v970 = vld [vmem:[%s969] sm:$0x1]
      %v972 = vlaneseq
      %v973 = vshrl.u32 %v972, 7
      %v974 = vsub.s32 0, %v973
      %v975 = vrot.slane %v970, %v974
      %977 = vmatprep.subr.bf16.mxu0 0
      %978 = vmatpush1.bf16.msra.mxu0 %v968
      %979 = vmatprep.subr.bf16.mxu0 0
      %980 = vmatpush1.bf16.msra.mxu0 0
      %981 = vmatprep.subr.bf16.mxu0 0
      %982 = vmatpush1.bf16.msra.mxu0 0
      %983 = vmatprep.subr.bf16.mxu0 0
      %984 = vmatpush1.bf16.msra.mxu0 0
      %985 = vmatprep.subr.bf16.mxu0 0
      %986 = vmatpush1.bf16.msra.mxu0 0
      %987 = vmatprep.subr.bf16.mxu0 0
      %988 = vmatpush1.bf16.msra.mxu0 0
      %989 = vmatprep.subr.bf16.mxu0 0
      %990 = vmatpush1.bf16.msra.mxu0 0
      %991 = vmatprep.subr.bf16.mxu0 0
      %992 = vmatpush1.bf16.msra.mxu0 0
      %993 = vmatprep.subr.bf16.mxu0 0
      %994 = vmatpush1.bf16.msra.mxu0 0
      %995 = vmatprep.subr.bf16.mxu0 0
      %996 = vmatpush1.bf16.msra.mxu0 0
      %997 = vmatprep.subr.bf16.mxu0 0
      %998 = vmatpush1.bf16.msra.mxu0 0
      %999 = vmatprep.subr.bf16.mxu0 0
      %1000 = vmatpush1.bf16.msra.mxu0 0
      %1001 = vmatprep.subr.bf16.mxu0 0
      %1002 = vmatpush1.bf16.msra.mxu0 0
      %1003 = vmatprep.subr.bf16.mxu0 0
      %1004 = vmatpush1.bf16.msra.mxu0 0
      %1005 = vmatprep.subr.bf16.mxu0 0
      %1006 = vmatpush1.bf16.msra.mxu0 0
      %1007 = vmatprep.subr.bf16.mxu0 0
      %1008 = vmatpush1.bf16.msra.mxu0 0
      %1009 = vmatprep.mubr.bf16.mxu0 0
      %1010 = vmatmul.mubr.bf16.gmra.mrb[0].mxu0 %v585
      %v1011 = vpop.f32.mrb[0].mxu0
      %v1012 = vadd.f32 %v975, %v1011
      %v1013 = vpop.f32.mrb[0].mxu0
      %v1014 = vpop.f32.mrb[0].mxu0
      %v1015 = vadd.f32 %v975, %v1014
      %v1016 = vpop.f32.mrb[0].mxu0
      %1017 = vdwg.mxu0
      %v1018 = vpack.c.bf16 %v909, %v906
      %v1019 = vpack.c.bf16 %v962, %v959
      %v1021 = vsel %vm736, %v1018, 0
      %v1024 = vsel %vm736, %v1019, 0
      %1026 = vmatprep.subr.bf16.mxu0 0
      %1027 = vmatpush1.bf16.xpose.msra.mxu0 %v1024
      %1028 = vmatprep.subr.bf16.mxu0 0
      %1029 = vmatpush1.bf16.xpose.msra.mxu0 0
      %1030 = vmatprep.subr.bf16.mxu0 0
      %1031 = vmatpush1.bf16.xpose.msra.mxu0 0
      %1032 = vmatprep.subr.bf16.mxu0 0
      %1033 = vmatpush1.bf16.xpose.msra.mxu0 0
      %1034 = vmatprep.subr.bf16.mxu0 0
      %1035 = vmatpush1.bf16.xpose.msra.mxu0 0
      %1036 = vmatprep.subr.bf16.mxu0 0
      %1037 = vmatpush1.bf16.xpose.msra.mxu0 0
      %1038 = vmatprep.subr.bf16.mxu0 0
      %1039 = vmatpush1.bf16.xpose.msra.mxu0 0
      %1040 = vmatprep.subr.bf16.mxu0 0
      %1041 = vmatpush1.bf16.xpose.msra.mxu0 0
      %1042 = vmatprep.subr.bf16.mxu0 0
      %1043 = vmatpush1.bf16.xpose.msra.mxu0 0
      %1044 = vmatprep.subr.bf16.mxu0 0
      %1045 = vmatpush1.bf16.xpose.msra.mxu0 0
      %1046 = vmatprep.subr.bf16.mxu0 0
      %1047 = vmatpush1.bf16.xpose.msra.mxu0 0
      %1048 = vmatprep.subr.bf16.mxu0 0
      %1049 = vmatpush1.bf16.xpose.msra.mxu0 0
      %1050 = vmatprep.subr.bf16.mxu0 0
      %1051 = vmatpush1.bf16.xpose.msra.mxu0 0
      %1052 = vmatprep.subr.bf16.mxu0 0
      %1053 = vmatpush1.bf16.xpose.msra.mxu0 0
      %1054 = vmatprep.subr.bf16.mxu0 0
      %1055 = vmatpush1.bf16.xpose.msra.mxu0 0
      %1056 = vmatprep.subr.bf16.mxu0 0
      %1057 = vmatpush1.bf16.xpose.msra.mxu0 0
      %1058 = vmatprep.mubr.bf16.mxu0 0
      %1059 = vmatmul.mubr.bf16.gmra.mrb[0].mxu0 %v1021
      %v1060 = vpop.f32.mrb[0].mxu0
      %v1061 = vadd.f32 0.0, %v1060
      %v1062 = vpop.f32.mrb[0].mxu0
      %v1063 = vpop.f32.mrb[0].mxu0
      %v1064 = vadd.f32 0.0, %v1063
      %v1065 = vpop.f32.mrb[0].mxu0
      %1066 = vdwg.mxu0
      %v1067 = vmul.f32 %v1061, 0.35355338
      %v1068 = vmul.f32 %v1064, 0.35355338
      %v1069 = vadd.f32 %v1067, %v525
      %v1070 = vadd.f32 %v1068, %v526
      %v1071 = vsel %vm529, %v1069, -inf
      %1072 = vmax.xlane.f32.xlu0 %v1071
      %v1073 = vpop.xlane.xlu0 %1072
      %v1074 = vsel %vm529, %v1070, -inf
      %1075 = vmax.xlane.f32.xlu0 %v1074
      %v1076 = vpop.xlane.xlu0 %1075
      %v1077 = vsub.f32 %v1069, %v1073
      %v1078 = vsub.f32 %v1070, %v1076
      %v1079 = vmul.f32 %v1077, 1.442695
      %v1080 = vpow.pop %v1079
      %v1081 = vmul.f32 %v1078, 1.442695
      %v1082 = vpow.pop %v1081
      %v1083 = vsel %vm529, %v1080, 0.0
      %1084 = vadd.xlane.f32.xlu0 %v1083
      %v1085 = vpop.xlane.xlu0 %1084
      %v1086 = vsel %vm529, %v1082, 0.0
      %1087 = vadd.xlane.f32.xlu0 %v1086
      %v1088 = vpop.xlane.xlu0 %1087
      %v1089 = vrcp.pop %v1085
      %v1090 = vrcp.pop %v1088
      %v1091 = vmul.f32 %v1080, %v1089
      %v1092 = vmul.f32 %v1082, %v1090
      %v1093 = vpack.c.bf16 %v1092, %v1091
      %v1094 = vpack.c.bf16 %v1015, %v1012
      %v1096 = vsel %vm529, %v1093, 0
      %1098 = vmatprep.subr.bf16.mxu0 0
      %1099 = vmatpush1.bf16.msra.mxu0 %v1094
      %1100 = vmatprep.subr.bf16.mxu0 0
      %1101 = vmatpush1.bf16.msra.mxu0 0
      %1102 = vmatprep.subr.bf16.mxu0 0
      %1103 = vmatpush1.bf16.msra.mxu0 0
      %1104 = vmatprep.subr.bf16.mxu0 0
      %1105 = vmatpush1.bf16.msra.mxu0 0
      %1106 = vmatprep.subr.bf16.mxu0 0
      %1107 = vmatpush1.bf16.msra.mxu0 0
      %1108 = vmatprep.subr.bf16.mxu0 0
      %1109 = vmatpush1.bf16.msra.mxu0 0
      %1110 = vmatprep.subr.bf16.mxu0 0
      %1111 = vmatpush1.bf16.msra.mxu0 0
      %1112 = vmatprep.subr.bf16.mxu0 0
      %1113 = vmatpush1.bf16.msra.mxu0 0
      %1114 = vmatprep.subr.bf16.mxu0 0
      %1115 = vmatpush1.bf16.msra.mxu0 0
      %1116 = vmatprep.subr.bf16.mxu0 0
      %1117 = vmatpush1.bf16.msra.mxu0 0
      %1118 = vmatprep.subr.bf16.mxu0 0
      %1119 = vmatpush1.bf16.msra.mxu0 0
      %1120 = vmatprep.subr.bf16.mxu0 0
      %1121 = vmatpush1.bf16.msra.mxu0 0
      %1122 = vmatprep.subr.bf16.mxu0 0
      %1123 = vmatpush1.bf16.msra.mxu0 0
      %1124 = vmatprep.subr.bf16.mxu0 0
      %1125 = vmatpush1.bf16.msra.mxu0 0
      %1126 = vmatprep.subr.bf16.mxu0 0
      %1127 = vmatpush1.bf16.msra.mxu0 0
      %1128 = vmatprep.subr.bf16.mxu0 0
      %1129 = vmatpush1.bf16.msra.mxu0 0
      %1130 = vmatprep.mubr.bf16.mxu0 0
      %1131 = vmatmul.mubr.bf16.gmra.mrb[0].mxu0 %v1096
      %v1132 = vpop.f32.mrb[0].mxu0
      %v1133 = vadd.f32 0.0, %v1132
      %v1134 = vpop.f32.mrb[0].mxu0
      %v1135 = vpop.f32.mrb[0].mxu0
      %v1136 = vadd.f32 0.0, %v1135
      %v1137 = vpop.f32.mrb[0].mxu0
      %1138 = vdwg.mxu0
      %s1139 = scalar_lea.vmem %s5, 8
      %v1140 = vld [vmem:[%s1139] sm:$0xff]
      %v1141 = vpack.c.bf16 %v1136, %v1133
      %v1142 = vpack.c.bf16 %v1140, %v1140
      %v1144 = vsel %vm736, %v1141, 0
      %vm1146 = vcmask 1043456
      %v1148 = vsel %vm1146, %v1142, 0
      %1150 = vmatprep.subr.bf16.mxu0 0
      %1151 = vmatpush1.bf16.msra.mxu0 %v1148
      %1152 = vmatprep.subr.bf16.mxu0 0
      %1153 = vmatpush1.bf16.msra.mxu0 0
      %1154 = vmatprep.subr.bf16.mxu0 0
      %1155 = vmatpush1.bf16.msra.mxu0 0
      %1156 = vmatprep.subr.bf16.mxu0 0
      %1157 = vmatpush1.bf16.msra.mxu0 0
      %1158 = vmatprep.subr.bf16.mxu0 0
      %1159 = vmatpush1.bf16.msra.mxu0 0
      %1160 = vmatprep.subr.bf16.mxu0 0
      %1161 = vmatpush1.bf16.msra.mxu0 0
      %1162 = vmatprep.subr.bf16.mxu0 0
      %1163 = vmatpush1.bf16.msra.mxu0 0
      %1164 = vmatprep.subr.bf16.mxu0 0
      %1165 = vmatpush1.bf16.msra.mxu0 0
      %1166 = vmatprep.subr.bf16.mxu0 0
      %1167 = vmatpush1.bf16.msra.mxu0 0
      %1168 = vmatprep.subr.bf16.mxu0 0
      %1169 = vmatpush1.bf16.msra.mxu0 0
      %1170 = vmatprep.subr.bf16.mxu0 0
      %1171 = vmatpush1.bf16.msra.mxu0 0
      %1172 = vmatprep.subr.bf16.mxu0 0
      %1173 = vmatpush1.bf16.msra.mxu0 0
      %1174 = vmatprep.subr.bf16.mxu0 0
      %1175 = vmatpush1.bf16.msra.mxu0 0
      %1176 = vmatprep.subr.bf16.mxu0 0
      %1177 = vmatpush1.bf16.msra.mxu0 0
      %1178 = vmatprep.subr.bf16.mxu0 0
      %1179 = vmatpush1.bf16.msra.mxu0 0
      %1180 = vmatprep.subr.bf16.mxu0 0
      %1181 = vmatpush1.bf16.msra.mxu0 0
      %1182 = vmatprep.mubr.bf16.mxu0 0
      %1183 = vmatmul.mubr.bf16.gmra.mrb[0].mxu0 %v1144
      %v1184 = vpop.f32.mrb[0].mxu0
      %v1185 = vadd.f32 0.0, %v1184
      %v1186 = vpop.f32.mrb[0].mxu0
      %v1187 = vpop.f32.mrb[0].mxu0
      %v1188 = vadd.f32 0.0, %v1187
      %v1189 = vpop.f32.mrb[0].mxu0
      %1190 = vdwg.mxu0
      %v1192 = vsel %vm736, %v857, 0
      %v1195 = vsel %vm1146, %v858, 0
      %1197 = vmatprep.subr.bf16.mxu0 0
      %1198 = vmatpush1.bf16.msra.mxu0 %v1195
      %1199 = vmatprep.subr.bf16.mxu0 0
      %1200 = vmatpush1.bf16.msra.mxu0 0
      %1201 = vmatprep.subr.bf16.mxu0 0
      %1202 = vmatpush1.bf16.msra.mxu0 0
      %1203 = vmatprep.subr.bf16.mxu0 0
      %1204 = vmatpush1.bf16.msra.mxu0 0
      %1205 = vmatprep.subr.bf16.mxu0 0
      %1206 = vmatpush1.bf16.msra.mxu0 0
      %1207 = vmatprep.subr.bf16.mxu0 0
      %1208 = vmatpush1.bf16.msra.mxu0 0
      %1209 = vmatprep.subr.bf16.mxu0 0
      %1210 = vmatpush1.bf16.msra.mxu0 0
      %1211 = vmatprep.subr.bf16.mxu0 0
      %1212 = vmatpush1.bf16.msra.mxu0 0
      %1213 = vmatprep.subr.bf16.mxu0 0
      %1214 = vmatpush1.bf16.msra.mxu0 0
      %1215 = vmatprep.subr.bf16.mxu0 0
      %1216 = vmatpush1.bf16.msra.mxu0 0
      %1217 = vmatprep.subr.bf16.mxu0 0
      %1218 = vmatpush1.bf16.msra.mxu0 0
      %1219 = vmatprep.subr.bf16.mxu0 0
      %1220 = vmatpush1.bf16.msra.mxu0 0
      %1221 = vmatprep.subr.bf16.mxu0 0
      %1222 = vmatpush1.bf16.msra.mxu0 0
      %1223 = vmatprep.subr.bf16.mxu0 0
      %1224 = vmatpush1.bf16.msra.mxu0 0
      %1225 = vmatprep.subr.bf16.mxu0 0
      %1226 = vmatpush1.bf16.msra.mxu0 0
      %1227 = vmatprep.subr.bf16.mxu0 0
      %1228 = vmatpush1.bf16.msra.mxu0 0
      %1229 = vmatprep.mubr.bf16.mxu0 0
      %1230 = vmatmul.mubr.bf16.gmra.mrb[0].mxu0 %v1192
      %v1231 = vpop.f32.mrb[0].mxu0
      %v1232 = vadd.f32 %v1185, %v1231
      %v1233 = vpop.f32.mrb[0].mxu0
      %v1234 = vpop.f32.mrb[0].mxu0
      %v1235 = vadd.f32 %v1188, %v1234
      %v1236 = vpop.f32.mrb[0].mxu0
      %1237 = vdwg.mxu0
      %v1238 = vadd.f32 %v523, %v1232
      %v1239 = vadd.f32 %v524, %v1235
      %v1240 = vld [vmem:[%s6] sm:$0x1]
      %v1242 = vlaneseq
      %v1243 = vshrl.u32 %v1242, 7
      %v1244 = vsub.s32 0, %v1243
      %v1245 = vrot.slane %v1240, %v1244
      %v1247 = vadd.f32 %v1238, %v1245
      %v1248 = vadd.f32 %v1239, %v1245
      %v1249 = vld [vmem:[%s7] sm:$0x1]
      %v1250 = vld [vmem:[%s8] sm:$0x1]
      %v1251 = vsel %vm529, %v1247, 0.0
      %1252 = vadd.xlane.f32.xlu0 %v1251
      %v1253 = vpop.xlane.xlu0 %1252
      %v1254 = vsel %vm529, %v1248, 0.0
      %1255 = vadd.xlane.f32.xlu0 %v1254
      %v1256 = vpop.xlane.xlu0 %1255
      %v1257 = vmul.f32 %v1253, %v536
      %v1258 = vmul.f32 %v1256, %v536
      %v1259 = vsub.f32 %v1247, %v1257
      %v1260 = vsub.f32 %v1248, %v1258
      %v1261 = vmul.f32 %v1259, %v1259
      %v1262 = vmul.f32 %v1260, %v1260
      %v1263 = vsel %vm529, %v1261, 0.0
      %1264 = vadd.xlane.f32.xlu0 %v1263
      %v1265 = vpop.xlane.xlu0 %1264
      %v1266 = vsel %vm529, %v1262, 0.0
      %1267 = vadd.xlane.f32.xlu0 %v1266
      %v1268 = vpop.xlane.xlu0 %1267
      %v1269 = vmul.f32 %v1265, %v536
      %v1270 = vmul.f32 %v1268, %v536
      %v1271 = vadd.f32 %v1269, 1e-05
      %v1272 = vadd.f32 %v1270, 1e-05
      %v1273 = vrsqrt.pop %v1271
      %v1274 = vrsqrt.pop %v1272
      %v1275 = vmul.f32 %v1259, %v1273
      %v1276 = vmul.f32 %v1260, %v1274
      %v1278 = vlaneseq
      %v1279 = vshrl.u32 %v1278, 7
      %v1280 = vsub.s32 0, %v1279
      %v1281 = vrot.slane %v1249, %v1280
      %v1283 = vmul.f32 %v1275, %v1281
      %v1284 = vmul.f32 %v1276, %v1281
      %v1286 = vlaneseq
      %v1287 = vshrl.u32 %v1286, 7
      %v1288 = vsub.s32 0, %v1287
      %v1289 = vrot.slane %v1250, %v1288
      %v1291 = vadd.f32 %v1283, %v1289
      %v1292 = vadd.f32 %v1284, %v1289
      %v1293 = vld [vmem:[%s9] sm:$0xff]
      %v1294 = vld [vmem:[%s9 + $0x8] sm:$0xff]
      %v1295 = vpack.c.bf16 %v1292, %v1291
      %v1296 = vpack.c.bf16 %v1294, %v1293
      %v1297 = vld [vmem:[%s10] sm:$0x1]
      %v1299 = vlaneseq
      %v1300 = vshrl.u32 %v1299, 7
      %v1301 = vsub.s32 0, %v1300
      %v1302 = vrot.slane %v1297, %v1301
      %v1305 = vsel %vm529, %v1295, 0
      %1307 = vmatprep.subr.bf16.mxu0 0
      %1308 = vmatpush1.bf16.msra.mxu0 %v1296
      %1309 = vmatprep.subr.bf16.mxu0 0
      %1310 = vmatpush1.bf16.msra.mxu0 0
      %1311 = vmatprep.subr.bf16.mxu0 0
      %1312 = vmatpush1.bf16.msra.mxu0 0
      %1313 = vmatprep.subr.bf16.mxu0 0
      %1314 = vmatpush1.bf16.msra.mxu0 0
      %1315 = vmatprep.subr.bf16.mxu0 0
      %1316 = vmatpush1.bf16.msra.mxu0 0
      %1317 = vmatprep.subr.bf16.mxu0 0
      %1318 = vmatpush1.bf16.msra.mxu0 0
      %1319 = vmatprep.subr.bf16.mxu0 0
      %1320 = vmatpush1.bf16.msra.mxu0 0
      %1321 = vmatprep.subr.bf16.mxu0 0
      %1322 = vmatpush1.bf16.msra.mxu0 0
      %1323 = vmatprep.subr.bf16.mxu0 0
      %1324 = vmatpush1.bf16.msra.mxu0 0
      %1325 = vmatprep.subr.bf16.mxu0 0
      %1326 = vmatpush1.bf16.msra.mxu0 0
      %1327 = vmatprep.subr.bf16.mxu0 0
      %1328 = vmatpush1.bf16.msra.mxu0 0
      %1329 = vmatprep.subr.bf16.mxu0 0
      %1330 = vmatpush1.bf16.msra.mxu0 0
      %1331 = vmatprep.subr.bf16.mxu0 0
      %1332 = vmatpush1.bf16.msra.mxu0 0
      %1333 = vmatprep.subr.bf16.mxu0 0
      %1334 = vmatpush1.bf16.msra.mxu0 0
      %1335 = vmatprep.subr.bf16.mxu0 0
      %1336 = vmatpush1.bf16.msra.mxu0 0
      %1337 = vmatprep.subr.bf16.mxu0 0
      %1338 = vmatpush1.bf16.msra.mxu0 0
      %1339 = vmatprep.mubr.bf16.mxu0 0
      %1340 = vmatmul.mubr.bf16.gmra.mrb[0].mxu0 %v1305
      %v1341 = vpop.f32.mrb[0].mxu0
      %v1342 = vadd.f32 %v1302, %v1341
      %v1343 = vpop.f32.mrb[0].mxu0
      %v1344 = vpop.f32.mrb[0].mxu0
      %v1345 = vadd.f32 %v1302, %v1344
      %v1346 = vpop.f32.mrb[0].mxu0
      %1347 = vdwg.mxu0
      %v1348 = vmul.f32 %v1342, %v1342
      %v1349 = vmul.f32 %v1345, %v1345
      %v1350 = vmul.f32 %v1342, %v1348
      %v1351 = vmul.f32 %v1345, %v1349
      %v1352 = vmul.f32 %v1350, 0.044715
      %v1353 = vmul.f32 %v1351, 0.044715
      %v1354 = vadd.f32 %v1342, %v1352
      %v1355 = vadd.f32 %v1345, %v1353
      %v1356 = vmul.f32 %v1354, 0.7978846
      %v1357 = vmul.f32 %v1355, 0.7978846
      %v1358 = vtanh.pop %v1356
      %v1359 = vtanh.pop %v1357
      %v1360 = vadd.f32 %v1358, 1.0
      %v1361 = vadd.f32 %v1359, 1.0
      %v1362 = vmul.f32 %v1360, 0.5
      %v1363 = vmul.f32 %v1361, 0.5
      %v1364 = vmul.f32 %v1342, %v1362
      %v1365 = vmul.f32 %v1345, %v1363
      %v1366 = vld [vmem:[%s11] sm:$0xff]
      %v1367 = vld [vmem:[%s11 + $0x8] sm:$0xff]
      %v1368 = vld [vmem:[%s11 + $0x10] sm:$0xff]
      %v1369 = vld [vmem:[%s11 + $0x18] sm:$0xff]
      %v1370 = vld [vmem:[%s11 + $0x20] sm:$0xff]
      %v1371 = vld [vmem:[%s11 + $0x28] sm:$0xff]
      %v1372 = vld [vmem:[%s11 + $0x30] sm:$0xff]
      %v1373 = vld [vmem:[%s11 + $0x38] sm:$0xff]
      %v1374 = vpack.c.bf16 %v1365, %v1364
      %v1375 = vpack.c.bf16 %v1367, %v1366
      %v1376 = vpack.c.bf16 %v1369, %v1368
      %v1377 = vpack.c.bf16 %v1371, %v1370
      %v1378 = vpack.c.bf16 %v1373, %v1372
      %vm1379 = vcmask 523264
      %v1381 = vsel %vm1379, %v1374, 0
      %1383 = vmatprep.subr.bf16.mxu0 0
      %1384 = vmatpush1.bf16.msra.mxu0 %v1375
      %1385 = vmatprep.subr.bf16.mxu0 0
      %1386 = vmatpush1.bf16.msra.mxu0 %v1376
      %1387 = vmatprep.subr.bf16.mxu0 0
      %1388 = vmatpush1.bf16.msra.mxu0 %v1377
      %1389 = vmatprep.subr.bf16.mxu0 0
      %1390 = vmatpush1.bf16.msra.mxu0 %v1378
      %1391 = vmatprep.subr.bf16.mxu0 0
      %1392 = vmatpush1.bf16.msra.mxu0 0
      %1393 = vmatprep.subr.bf16.mxu0 0
      %1394 = vmatpush1.bf16.msra.mxu0 0
      %1395 = vmatprep.subr.bf16.mxu0 0
      %1396 = vmatpush1.bf16.msra.mxu0 0
      %1397 = vmatprep.subr.bf16.mxu0 0
      %1398 = vmatpush1.bf16.msra.mxu0 0
      %1399 = vmatprep.subr.bf16.mxu0 0
      %1400 = vmatpush1.bf16.msra.mxu0 0
      %1401 = vmatprep.subr.bf16.mxu0 0
      %1402 = vmatpush1.bf16.msra.mxu0 0
      %1403 = vmatprep.subr.bf16.mxu0 0
      %1404 = vmatpush1.bf16.msra.mxu0 0
      %1405 = vmatprep.subr.bf16.mxu0 0
      %1406 = vmatpush1.bf16.msra.mxu0 0
      %1407 = vmatprep.subr.bf16.mxu0 0
      %1408 = vmatpush1.bf16.msra.mxu0 0
      %1409 = vmatprep.subr.bf16.mxu0 0
      %1410 = vmatpush1.bf16.msra.mxu0 0
      %1411 = vmatprep.subr.bf16.mxu0 0
      %1412 = vmatpush1.bf16.msra.mxu0 0
      %1413 = vmatprep.subr.bf16.mxu0 0
      %1414 = vmatpush1.bf16.msra.mxu0 0
      %1415 = vmatprep.mubr.bf16.mxu0 0
      %1416 = vmatmul.mubr.bf16.gmra.mrb[0].mxu0 %v1381
      %v1417 = vpop.f32.mrb[0].mxu0
      %v1418 = vadd.f32 0.0, %v1417
      %v1419 = vpop.f32.mrb[0].mxu0
      %v1420 = vpop.f32.mrb[0].mxu0
      %v1421 = vadd.f32 0.0, %v1420
      %v1422 = vpop.f32.mrb[0].mxu0
      %1423 = vdwg.mxu0
      %v1424 = vadd.f32 %v1247, %v1418
      %v1425 = vadd.f32 %v1248, %v1421
      %v1426 = vld [vmem:[%s12] sm:$0x1]
      %v1428 = vlaneseq
      %v1429 = vshrl.u32 %v1428, 7
      %v1430 = vsub.s32 0, %v1429
      %v1431 = vrot.slane %v1426, %v1430
      %v1433 = vadd.f32 %v1424, %v1431
      %v1434 = vadd.f32 %v1425, %v1431
      %v1435 = vld [vmem:[%s14] sm:$0xff]
      %v1436 = vld [vmem:[%s14 + $0x8] sm:$0xff]
      %v1437 = vpack.c.bf16 %v1434, %v1433
      %v1438 = vpack.c.bf16 %v1436, %v1435
      %v1439 = vld [vmem:[%s15] sm:$0x1]
      %v1441 = vlaneseq
      %v1442 = vshrl.u32 %v1441, 7
      %v1443 = vsub.s32 0, %v1442
      %v1444 = vrot.slane %v1439, %v1443
      %v1447 = vsel %vm529, %v1437, 0
      %1449 = vmatprep.subr.bf16.mxu0 0
      %1450 = vmatpush1.bf16.msra.mxu0 %v1438
      %1451 = vmatprep.subr.bf16.mxu0 0
      %1452 = vmatpush1.bf16.msra.mxu0 0
      %1453 = vmatprep.subr.bf16.mxu0 0
      %1454 = vmatpush1.bf16.msra.mxu0 0
      %1455 = vmatprep.subr.bf16.mxu0 0
      %1456 = vmatpush1.bf16.msra.mxu0 0
      %1457 = vmatprep.subr.bf16.mxu0 0
      %1458 = vmatpush1.bf16.msra.mxu0 0
      %1459 = vmatprep.subr.bf16.mxu0 0
      %1460 = vmatpush1.bf16.msra.mxu0 0
      %1461 = vmatprep.subr.bf16.mxu0 0
      %1462 = vmatpush1.bf16.msra.mxu0 0
      %1463 = vmatprep.subr.bf16.mxu0 0
      %1464 = vmatpush1.bf16.msra.mxu0 0
      %1465 = vmatprep.subr.bf16.mxu0 0
      %1466 = vmatpush1.bf16.msra.mxu0 0
      %1467 = vmatprep.subr.bf16.mxu0 0
      %1468 = vmatpush1.bf16.msra.mxu0 0
      %1469 = vmatprep.subr.bf16.mxu0 0
      %1470 = vmatpush1.bf16.msra.mxu0 0
      %1471 = vmatprep.subr.bf16.mxu0 0
      %1472 = vmatpush1.bf16.msra.mxu0 0
      %1473 = vmatprep.subr.bf16.mxu0 0
      %1474 = vmatpush1.bf16.msra.mxu0 0
      %1475 = vmatprep.subr.bf16.mxu0 0
      %1476 = vmatpush1.bf16.msra.mxu0 0
      %1477 = vmatprep.subr.bf16.mxu0 0
      %1478 = vmatpush1.bf16.msra.mxu0 0
      %1479 = vmatprep.subr.bf16.mxu0 0
      %1480 = vmatpush1.bf16.msra.mxu0 0
      %1481 = vmatprep.mubr.bf16.mxu0 0
      %1482 = vmatmul.mubr.bf16.gmra.mrb[0].mxu0 %v1447
      %v1483 = vpop.f32.mrb[0].mxu0
      %v1484 = vadd.f32 %v1444, %v1483
      %v1485 = vpop.f32.mrb[0].mxu0
      %v1486 = vpop.f32.mrb[0].mxu0
      %v1487 = vadd.f32 %v1444, %v1486
      %v1488 = vpop.f32.mrb[0].mxu0
      %1489 = vdwg.mxu0
      %v1490 = vtanh.pop %v1484
      %v1491 = vtanh.pop %v1487
      %vm1492 = vcmask 392192
      %1493 = vst.msk [vmem:[%s521] sm:$0xff] %vm1492, %v1490
      %1494 = vst.msk [vmem:[%s521 + $0x8] sm:$0xff] %vm1492, %v1491
      %p1495 = scmp.lt.s32.totalorder %s27, 1
      %s1496 = scalar_select %p1495, %s27, 1
      %s1497 = smul.addr %s1496, 2
      %s1498 = smul.addr %s1497, 8
      %s1499 = scalar_lea.vmem %s16, %s1498
      // Predicated region
      $region85: #{hvit_vae_forward.7} parent=83 // pred_check
        %p1500 = pneg %p386
      $region86: #{hvit_vae_forward.7} parent=83 // pred_check_branch
        %1502 = sbr.rel (%p1500) target = $region88
      $region87: #{hvit_vae_forward.7} parent=83 // pred_region
        _
      $region88: #{hvit_vae_forward.7} parent=83 // pred_fallthru
        _
    $region84: #{hvit_vae_forward.7} parent=5 // pred_fallthru
      _
    %p1503 = scmp.le.s32.totalorder 2, %s22
    // Predicated region
    $region89: #{hvit_vae_forward.7} parent=5 // pred_check
      %p1504 = pneg %p1503
    $region90: #{hvit_vae_forward.7} parent=5 // pred_check_branch
      %1506 = sbr.rel (%p1504) target = $region92
    $region91: #{hvit_vae_forward.7} parent=5 // pred_region
      %s1507 = ssub.s32 %s22, 2
      // Predicated region
      $region93: #{hvit_vae_forward.7} parent=91 // pred_check
        %p1508 = pneg %p392
      $region94: #{hvit_vae_forward.7} parent=91 // pred_check_branch
        %1510 = sbr.rel (%p1508) target = $region96
      $region95: #{hvit_vae_forward.7} parent=91 // pred_region
        %p1511 = scmp.lt.s32.totalorder %s28, 1
        %s1512 = scalar_select %p1511, %s28, 1
        %s1513 = smul.addr %s1512, 2
        %s1514 = smul.addr %s1513, 8
        %s1515 = scalar_lea.vmem %s16, %s1514
      $region96: #{hvit_vae_forward.7} parent=91 // pred_fallthru
        _
    $region92: #{hvit_vae_forward.7} parent=5 // pred_fallthru
      _
  $region6: #{hvit_vae_forward.7} parent=0 // loop_footer
    %s26 = sadd.s32 1, %s22
  $region7: #{hvit_vae_forward.7} parent=0 // loop_footer_branch
    %21 = sbr.rel target = $region3
  $region8: #{hvit_vae_forward.7} parent=0 // loop_exit
    _

// kernel: hvit_vae_forward.5
$region0: #{hvit_vae_forward.5}
  #allocation0 [shape = 'u32[]', space=smem, size = 0x4, offset = 0x4, fixed_abs, tag = 'smem constant byte address 0x4 - core index']
  #allocation1 [shape = 'u32[144,128]{1,0:T(1,128)}', space=vmem, size = 0x12000, scoped, tag = 'internal scratch']
  %s0 = inlined_call_operand.vmem [shape: f32[2,4,64], index: 0, kind: input, shape index: {}]
  %s1 = inlined_call_operand.vmem [shape: f32[64,32], index: 1, kind: input, shape index: {}]
  %s2 = inlined_call_operand.vmem [shape: f32[1,32], index: 2, kind: input, shape index: {}]
  %s3 = inlined_call_operand.vmem [shape: f32[1,32], index: 3, kind: input, shape index: {}]
  %s4 = inlined_call_operand.vmem [shape: f32[1,32], index: 4, kind: input, shape index: {}]
  %s5 = inlined_call_operand.vmem [shape: f32[12,32,8], index: 5, kind: input, shape index: {}]
  %s6 = inlined_call_operand.vmem [shape: f32[12,1,8], index: 6, kind: input, shape index: {}]
  %s7 = inlined_call_operand.vmem [shape: f32[4,8,32], index: 7, kind: input, shape index: {}]
  %s8 = inlined_call_operand.vmem [shape: f32[1,32], index: 8, kind: input, shape index: {}]
  %s9 = inlined_call_operand.vmem [shape: f32[1,32], index: 9, kind: input, shape index: {}]
  %s10 = inlined_call_operand.vmem [shape: f32[1,32], index: 10, kind: input, shape index: {}]
  %s11 = inlined_call_operand.vmem [shape: f32[32,128], index: 11, kind: input, shape index: {}]
  %s12 = inlined_call_operand.vmem [shape: f32[1,128], index: 12, kind: input, shape index: {}]
  %s13 = inlined_call_operand.vmem [shape: f32[128,32], index: 13, kind: input, shape index: {}]
  %s14 = inlined_call_operand.vmem [shape: f32[1,32], index: 14, kind: input, shape index: {}]
  %s15 = inlined_call_operand.vmem [shape: f32[32,4], index: 15, kind: input, shape index: {}]
  %s16 = inlined_call_operand.vmem [shape: f32[1,4], index: 16, kind: input, shape index: {}]
  %s17 = inlined_call_operand.vmem [shape: f32[2,4,4], index: 17, kind: output, shape index: {}]
  %s18 = sld [smem:[#allocation0]]
  $region101: #{hvit_vae_forward.5} parent=0
    _
  %s20 = ssub.s32 1, %s18
  %s21 = scalar_select 0, %s20, %s18
  loop: start=0, step=1, limit=4
  $region2: #{hvit_vae_forward.5} parent=0 // loop_pre_header
    _
  $region3: #{hvit_vae_forward.5} parent=0 // loop_header
    %s23 = sphi 0, %s27
    %p24 = scmp.ge.s32.totalorder %s23, 4
    %s33 = sphi 0, %s35
    %s36 = sphi 0, %s33
    %s37 = sphi 0, %s36
    %s53 = sphi 0, %s37
    %s57 = sphi 0, %s57
    %s59 = sphi 0, %s57
    %s60 = sphi 0, %s59
    %s74 = sphi 0, %s60
    %s78 = sphi 0, %s78
    %s80 = sphi 0, %s78
    %s81 = sphi 0, %s80
    %s95 = sphi 0, %s81
    %s99 = sphi 0, %s99
    %s101 = sphi 0, %s99
    %s102 = sphi 0, %s101
    %s116 = sphi 0, %s102
    %s120 = sphi 0, %s120
    %s122 = sphi 0, %s120
    %s123 = sphi 0, %s122
    %s137 = sphi 0, %s123
    %s141 = sphi 0, %s141
    %s143 = sphi 0, %s141
    %s144 = sphi 0, %s143
    %s158 = sphi 0, %s144
    %s162 = sphi 0, %s162
    %s164 = sphi 0, %s162
    %s165 = sphi 0, %s164
    %s179 = sphi 0, %s165
    %s183 = sphi 0, %s183
    %s185 = sphi 0, %s183
    %s186 = sphi 0, %s185
    %s200 = sphi 0, %s186
    %s204 = sphi 0, %s204
    %s206 = sphi 0, %s204
    %s207 = sphi 0, %s206
    %s221 = sphi 0, %s207
    %s225 = sphi 0, %s225
    %s227 = sphi 0, %s225
    %s228 = sphi 0, %s227
    %s242 = sphi 0, %s228
    %s246 = sphi 0, %s246
    %s248 = sphi 0, %s246
    %s249 = sphi 0, %s248
    %s263 = sphi 0, %s249
    %s267 = sphi 0, %s267
    %s269 = sphi 0, %s267
    %s270 = sphi 0, %s269
    %s284 = sphi 0, %s270
    %s288 = sphi 0, %s288
    %s290 = sphi 0, %s288
    %s291 = sphi 0, %s290
    %s305 = sphi 0, %s291
    %s309 = sphi 0, %s309
    %s311 = sphi 0, %s309
    %s312 = sphi 0, %s311
    %s326 = sphi 0, %s312
    %s330 = sphi 0, %s330
    %s332 = sphi 0, %s330
    %s333 = sphi 0, %s332
    %s347 = sphi 0, %s333
    %s351 = sphi 0, %s351
    %s353 = sphi 0, %s351
    %s354 = sphi 0, %s353
    %s368 = sphi 0, %s354
    %s372 = sphi 0, %s372
    %s374 = sphi 0, %s372
    %s375 = sphi 0, %s374
    %s389 = sphi 0, %s375
    %s395 = sphi 0, %s397
    %s398 = sphi 0, %s395
    %s399 = sphi 0, %s398
    %s415 = sphi 0, %s399
  $region4: #{hvit_vae_forward.5} parent=0 // loop_header_branch
    %26 = sbr.rel (%p24) target = $region8
  $region5: #{hvit_vae_forward.5} parent=0 // loop_body
    %s28 = ssub.s32 %s23, 1
    %s29 = ssub.s32 %s23, 2
    %s30 = sadd.s32 %s23, 1
    %s31 = ssub.s32 %s23, %s30
    %p32 = scmp.eq.s32.totalorder %s31, 0
    %s34 = sadd.s32 %s33, 1
    %s35 = scalar_select %p32, %s33, %s34
    %p38 = pneg %p32
    %p39 = scmp.eq.s32.totalorder %s23, 1
    %p40 = por %p38, %p39
    %p41 = scmp.ne.s32.totalorder %s33, %s36
    %p42 = scmp.eq.s32.totalorder %s23, 0
    %p43 = por %p41, %p42
    %p44 = scmp.ne.s32.totalorder %s33, %s36
    %p45 = scmp.eq.s32.totalorder %s28, 1
    %p46 = por %p44, %p45
    %p47 = scmp.ne.s32.totalorder %s36, %s37
    %p48 = scmp.eq.s32.totalorder %s28, 0
    %p49 = por %p47, %p48
    %p50 = scmp.ne.s32.totalorder %s36, %s37
    %p51 = scmp.eq.s32.totalorder %s29, 1
    %p52 = por %p50, %p51
    %p54 = scmp.ne.s32.totalorder %s37, %s53
    %p55 = scmp.eq.s32.totalorder %s29, 0
    %p56 = por %p54, %p55
    %s58 = sadd.s32 %s57, 1
    %p61 = scmp.eq.s32.totalorder %s23, 1
    %p62 = scmp.ne.s32.totalorder %s57, %s59
    %p63 = scmp.eq.s32.totalorder %s23, 0
    %p64 = por %p62, %p63
    %p65 = scmp.ne.s32.totalorder %s57, %s59
    %p66 = scmp.eq.s32.totalorder %s28, 1
    %p67 = por %p65, %p66
    %p68 = scmp.ne.s32.totalorder %s59, %s60
    %p69 = scmp.eq.s32.totalorder %s28, 0
    %p70 = por %p68, %p69
    %p71 = scmp.ne.s32.totalorder %s59, %s60
    %p72 = scmp.eq.s32.totalorder %s29, 1
    %p73 = por %p71, %p72
    %p75 = scmp.ne.s32.totalorder %s60, %s74
    %p76 = scmp.eq.s32.totalorder %s29, 0
    %p77 = por %p75, %p76
    %s79 = sadd.s32 %s78, 1
    %p82 = scmp.eq.s32.totalorder %s23, 1
    %p83 = scmp.ne.s32.totalorder %s78, %s80
    %p84 = scmp.eq.s32.totalorder %s23, 0
    %p85 = por %p83, %p84
    %p86 = scmp.ne.s32.totalorder %s78, %s80
    %p87 = scmp.eq.s32.totalorder %s28, 1
    %p88 = por %p86, %p87
    %p89 = scmp.ne.s32.totalorder %s80, %s81
    %p90 = scmp.eq.s32.totalorder %s28, 0
    %p91 = por %p89, %p90
    %p92 = scmp.ne.s32.totalorder %s80, %s81
    %p93 = scmp.eq.s32.totalorder %s29, 1
    %p94 = por %p92, %p93
    %p96 = scmp.ne.s32.totalorder %s81, %s95
    %p97 = scmp.eq.s32.totalorder %s29, 0
    %p98 = por %p96, %p97
    %s100 = sadd.s32 %s99, 1
    %p103 = scmp.eq.s32.totalorder %s23, 1
    %p104 = scmp.ne.s32.totalorder %s99, %s101
    %p105 = scmp.eq.s32.totalorder %s23, 0
    %p106 = por %p104, %p105
    %p107 = scmp.ne.s32.totalorder %s99, %s101
    %p108 = scmp.eq.s32.totalorder %s28, 1
    %p109 = por %p107, %p108
    %p110 = scmp.ne.s32.totalorder %s101, %s102
    %p111 = scmp.eq.s32.totalorder %s28, 0
    %p112 = por %p110, %p111
    %p113 = scmp.ne.s32.totalorder %s101, %s102
    %p114 = scmp.eq.s32.totalorder %s29, 1
    %p115 = por %p113, %p114
    %p117 = scmp.ne.s32.totalorder %s102, %s116
    %p118 = scmp.eq.s32.totalorder %s29, 0
    %p119 = por %p117, %p118
    %s121 = sadd.s32 %s120, 1
    %p124 = scmp.eq.s32.totalorder %s23, 1
    %p125 = scmp.ne.s32.totalorder %s120, %s122
    %p126 = scmp.eq.s32.totalorder %s23, 0
    %p127 = por %p125, %p126
    %p128 = scmp.ne.s32.totalorder %s120, %s122
    %p129 = scmp.eq.s32.totalorder %s28, 1
    %p130 = por %p128, %p129
    %p131 = scmp.ne.s32.totalorder %s122, %s123
    %p132 = scmp.eq.s32.totalorder %s28, 0
    %p133 = por %p131, %p132
    %p134 = scmp.ne.s32.totalorder %s122, %s123
    %p135 = scmp.eq.s32.totalorder %s29, 1
    %p136 = por %p134, %p135
    %p138 = scmp.ne.s32.totalorder %s123, %s137
    %p139 = scmp.eq.s32.totalorder %s29, 0
    %p140 = por %p138, %p139
    %s142 = sadd.s32 %s141, 1
    %p145 = scmp.eq.s32.totalorder %s23, 1
    %p146 = scmp.ne.s32.totalorder %s141, %s143
    %p147 = scmp.eq.s32.totalorder %s23, 0
    %p148 = por %p146, %p147
    %p149 = scmp.ne.s32.totalorder %s141, %s143
    %p150 = scmp.eq.s32.totalorder %s28, 1
    %p151 = por %p149, %p150
    %p152 = scmp.ne.s32.totalorder %s143, %s144
    %p153 = scmp.eq.s32.totalorder %s28, 0
    %p154 = por %p152, %p153
    %p155 = scmp.ne.s32.totalorder %s143, %s144
    %p156 = scmp.eq.s32.totalorder %s29, 1
    %p157 = por %p155, %p156
    %p159 = scmp.ne.s32.totalorder %s144, %s158
    %p160 = scmp.eq.s32.totalorder %s29, 0
    %p161 = por %p159, %p160
    %s163 = sadd.s32 %s162, 1
    %p166 = scmp.eq.s32.totalorder %s23, 1
    %p167 = scmp.ne.s32.totalorder %s162, %s164
    %p168 = scmp.eq.s32.totalorder %s23, 0
    %p169 = por %p167, %p168
    %p170 = scmp.ne.s32.totalorder %s162, %s164
    %p171 = scmp.eq.s32.totalorder %s28, 1
    %p172 = por %p170, %p171
    %p173 = scmp.ne.s32.totalorder %s164, %s165
    %p174 = scmp.eq.s32.totalorder %s28, 0
    %p175 = por %p173, %p174
    %p176 = scmp.ne.s32.totalorder %s164, %s165
    %p177 = scmp.eq.s32.totalorder %s29, 1
    %p178 = por %p176, %p177
    %p180 = scmp.ne.s32.totalorder %s165, %s179
    %p181 = scmp.eq.s32.totalorder %s29, 0
    %p182 = por %p180, %p181
    %s184 = sadd.s32 %s183, 1
    %p187 = scmp.eq.s32.totalorder %s23, 1
    %p188 = scmp.ne.s32.totalorder %s183, %s185
    %p189 = scmp.eq.s32.totalorder %s23, 0
    %p190 = por %p188, %p189
    %p191 = scmp.ne.s32.totalorder %s183, %s185
    %p192 = scmp.eq.s32.totalorder %s28, 1
    %p193 = por %p191, %p192
    %p194 = scmp.ne.s32.totalorder %s185, %s186
    %p195 = scmp.eq.s32.totalorder %s28, 0
    %p196 = por %p194, %p195
    %p197 = scmp.ne.s32.totalorder %s185, %s186
    %p198 = scmp.eq.s32.totalorder %s29, 1
    %p199 = por %p197, %p198
    %p201 = scmp.ne.s32.totalorder %s186, %s200
    %p202 = scmp.eq.s32.totalorder %s29, 0
    %p203 = por %p201, %p202
    %s205 = sadd.s32 %s204, 1
    %p208 = scmp.eq.s32.totalorder %s23, 1
    %p209 = scmp.ne.s32.totalorder %s204, %s206
    %p210 = scmp.eq.s32.totalorder %s23, 0
    %p211 = por %p209, %p210
    %p212 = scmp.ne.s32.totalorder %s204, %s206
    %p213 = scmp.eq.s32.totalorder %s28, 1
    %p214 = por %p212, %p213
    %p215 = scmp.ne.s32.totalorder %s206, %s207
    %p216 = scmp.eq.s32.totalorder %s28, 0
    %p217 = por %p215, %p216
    %p218 = scmp.ne.s32.totalorder %s206, %s207
    %p219 = scmp.eq.s32.totalorder %s29, 1
    %p220 = por %p218, %p219
    %p222 = scmp.ne.s32.totalorder %s207, %s221
    %p223 = scmp.eq.s32.totalorder %s29, 0
    %p224 = por %p222, %p223
    %s226 = sadd.s32 %s225, 1
    %p229 = scmp.eq.s32.totalorder %s23, 1
    %p230 = scmp.ne.s32.totalorder %s225, %s227
    %p231 = scmp.eq.s32.totalorder %s23, 0
    %p232 = por %p230, %p231
    %p233 = scmp.ne.s32.totalorder %s225, %s227
    %p234 = scmp.eq.s32.totalorder %s28, 1
    %p235 = por %p233, %p234
    %p236 = scmp.ne.s32.totalorder %s227, %s228
    %p237 = scmp.eq.s32.totalorder %s28, 0
    %p238 = por %p236, %p237
    %p239 = scmp.ne.s32.totalorder %s227, %s228
    %p240 = scmp.eq.s32.totalorder %s29, 1
    %p241 = por %p239, %p240
    %p243 = scmp.ne.s32.totalorder %s228, %s242
    %p244 = scmp.eq.s32.totalorder %s29, 0
    %p245 = por %p243, %p244
    %s247 = sadd.s32 %s246, 1
    %p250 = scmp.eq.s32.totalorder %s23, 1
    %p251 = scmp.ne.s32.totalorder %s246, %s248
    %p252 = scmp.eq.s32.totalorder %s23, 0
    %p253 = por %p251, %p252
    %p254 = scmp.ne.s32.totalorder %s246, %s248
    %p255 = scmp.eq.s32.totalorder %s28, 1
    %p256 = por %p254, %p255
    %p257 = scmp.ne.s32.totalorder %s248, %s249
    %p258 = scmp.eq.s32.totalorder %s28, 0
    %p259 = por %p257, %p258
    %p260 = scmp.ne.s32.totalorder %s248, %s249
    %p261 = scmp.eq.s32.totalorder %s29, 1
    %p262 = por %p260, %p261
    %p264 = scmp.ne.s32.totalorder %s249, %s263
    %p265 = scmp.eq.s32.totalorder %s29, 0
    %p266 = por %p264, %p265
    %s268 = sadd.s32 %s267, 1
    %p271 = scmp.eq.s32.totalorder %s23, 1
    %p272 = scmp.ne.s32.totalorder %s267, %s269
    %p273 = scmp.eq.s32.totalorder %s23, 0
    %p274 = por %p272, %p273
    %p275 = scmp.ne.s32.totalorder %s267, %s269
    %p276 = scmp.eq.s32.totalorder %s28, 1
    %p277 = por %p275, %p276
    %p278 = scmp.ne.s32.totalorder %s269, %s270
    %p279 = scmp.eq.s32.totalorder %s28, 0
    %p280 = por %p278, %p279
    %p281 = scmp.ne.s32.totalorder %s269, %s270
    %p282 = scmp.eq.s32.totalorder %s29, 1
    %p283 = por %p281, %p282
    %p285 = scmp.ne.s32.totalorder %s270, %s284
    %p286 = scmp.eq.s32.totalorder %s29, 0
    %p287 = por %p285, %p286
    %s289 = sadd.s32 %s288, 1
    %p292 = scmp.eq.s32.totalorder %s23, 1
    %p293 = scmp.ne.s32.totalorder %s288, %s290
    %p294 = scmp.eq.s32.totalorder %s23, 0
    %p295 = por %p293, %p294
    %p296 = scmp.ne.s32.totalorder %s288, %s290
    %p297 = scmp.eq.s32.totalorder %s28, 1
    %p298 = por %p296, %p297
    %p299 = scmp.ne.s32.totalorder %s290, %s291
    %p300 = scmp.eq.s32.totalorder %s28, 0
    %p301 = por %p299, %p300
    %p302 = scmp.ne.s32.totalorder %s290, %s291
    %p303 = scmp.eq.s32.totalorder %s29, 1
    %p304 = por %p302, %p303
    %p306 = scmp.ne.s32.totalorder %s291, %s305
    %p307 = scmp.eq.s32.totalorder %s29, 0
    %p308 = por %p306, %p307
    %s310 = sadd.s32 %s309, 1
    %p313 = scmp.eq.s32.totalorder %s23, 1
    %p314 = scmp.ne.s32.totalorder %s309, %s311
    %p315 = scmp.eq.s32.totalorder %s23, 0
    %p316 = por %p314, %p315
    %p317 = scmp.ne.s32.totalorder %s309, %s311
    %p318 = scmp.eq.s32.totalorder %s28, 1
    %p319 = por %p317, %p318
    %p320 = scmp.ne.s32.totalorder %s311, %s312
    %p321 = scmp.eq.s32.totalorder %s28, 0
    %p322 = por %p320, %p321
    %p323 = scmp.ne.s32.totalorder %s311, %s312
    %p324 = scmp.eq.s32.totalorder %s29, 1
    %p325 = por %p323, %p324
    %p327 = scmp.ne.s32.totalorder %s312, %s326
    %p328 = scmp.eq.s32.totalorder %s29, 0
    %p329 = por %p327, %p328
    %s331 = sadd.s32 %s330, 1
    %p334 = scmp.eq.s32.totalorder %s23, 1
    %p335 = scmp.ne.s32.totalorder %s330, %s332
    %p336 = scmp.eq.s32.totalorder %s23, 0
    %p337 = por %p335, %p336
    %p338 = scmp.ne.s32.totalorder %s330, %s332
    %p339 = scmp.eq.s32.totalorder %s28, 1
    %p340 = por %p338, %p339
    %p341 = scmp.ne.s32.totalorder %s332, %s333
    %p342 = scmp.eq.s32.totalorder %s28, 0
    %p343 = por %p341, %p342
    %p344 = scmp.ne.s32.totalorder %s332, %s333
    %p345 = scmp.eq.s32.totalorder %s29, 1
    %p346 = por %p344, %p345
    %p348 = scmp.ne.s32.totalorder %s333, %s347
    %p349 = scmp.eq.s32.totalorder %s29, 0
    %p350 = por %p348, %p349
    %s352 = sadd.s32 %s351, 1
    %p355 = scmp.eq.s32.totalorder %s23, 1
    %p356 = scmp.ne.s32.totalorder %s351, %s353
    %p357 = scmp.eq.s32.totalorder %s23, 0
    %p358 = por %p356, %p357
    %p359 = scmp.ne.s32.totalorder %s351, %s353
    %p360 = scmp.eq.s32.totalorder %s28, 1
    %p361 = por %p359, %p360
    %p362 = scmp.ne.s32.totalorder %s353, %s354
    %p363 = scmp.eq.s32.totalorder %s28, 0
    %p364 = por %p362, %p363
    %p365 = scmp.ne.s32.totalorder %s353, %s354
    %p366 = scmp.eq.s32.totalorder %s29, 1
    %p367 = por %p365, %p366
    %p369 = scmp.ne.s32.totalorder %s354, %s368
    %p370 = scmp.eq.s32.totalorder %s29, 0
    %p371 = por %p369, %p370
    %s373 = sadd.s32 %s372, 1
    %p376 = scmp.eq.s32.totalorder %s23, 1
    %p377 = scmp.ne.s32.totalorder %s372, %s374
    %p378 = scmp.eq.s32.totalorder %s23, 0
    %p379 = por %p377, %p378
    %p380 = scmp.ne.s32.totalorder %s372, %s374
    %p381 = scmp.eq.s32.totalorder %s28, 1
    %p382 = por %p380, %p381
    %p383 = scmp.ne.s32.totalorder %s374, %s375
    %p384 = scmp.eq.s32.totalorder %s28, 0
    %p385 = por %p383, %p384
    %p386 = scmp.ne.s32.totalorder %s374, %s375
    %p387 = scmp.eq.s32.totalorder %s29, 1
    %p388 = por %p386, %p387
    %p390 = scmp.ne.s32.totalorder %s375, %s389
    %p391 = scmp.eq.s32.totalorder %s29, 0
    %p392 = por %p390, %p391
    %s393 = ssub.s32 %s23, %s30
    %p394 = scmp.eq.s32.totalorder %s393, 0
    %s396 = sadd.s32 %s395, 1
    %s397 = scalar_select %p394, %s395, %s396
    %p400 = pneg %p394
    %p401 = scmp.eq.s32.totalorder %s23, 1
    %p402 = por %p400, %p401
    %p403 = scmp.ne.s32.totalorder %s395, %s398
    %p404 = scmp.eq.s32.totalorder %s23, 0
    %p405 = por %p403, %p404
    %p406 = scmp.ne.s32.totalorder %s395, %s398
    %p407 = scmp.eq.s32.totalorder %s28, 1
    %p408 = por %p406, %p407
    %p409 = scmp.ne.s32.totalorder %s398, %s399
    %p410 = scmp.eq.s32.totalorder %s28, 0
    %p411 = por %p409, %p410
    %p412 = scmp.ne.s32.totalorder %s398, %s399
    %p413 = scmp.eq.s32.totalorder %s29, 1
    %p414 = por %p412, %p413
    %p416 = scmp.ne.s32.totalorder %s399, %s415
    %p417 = scmp.eq.s32.totalorder %s29, 0
    %p418 = por %p416, %p417
    %p419 = scmp.le.s32.totalorder 1, %s23
    %p420 = scmp.lt.s32.totalorder %s23, 3
    %p421 = pnand %p419, %p420
    %p422 = pneg %p421
    // Predicated region
    $region9: #{hvit_vae_forward.5} parent=5 // pred_check
      _
    $region10: #{hvit_vae_forward.5} parent=5 // pred_check_branch
      %424 = sbr.rel (%p421) target = $region12
    $region11: #{hvit_vae_forward.5} parent=5 // pred_region
      %s425 = ssub.s32 %s23, 1
      // Predicated region
      $region13: #{hvit_vae_forward.5} parent=11 // pred_check
        %p426 = pneg %p70
      $region14: #{hvit_vae_forward.5} parent=11 // pred_check_branch
        %428 = sbr.rel (%p426) target = $region16
      $region15: #{hvit_vae_forward.5} parent=11 // pred_region
        _
      $region16: #{hvit_vae_forward.5} parent=11 // pred_fallthru
        _
      // Predicated region
      $region17: #{hvit_vae_forward.5} parent=11 // pred_check
        %p429 = pneg %p91
      $region18: #{hvit_vae_forward.5} parent=11 // pred_check_branch
        %431 = sbr.rel (%p429) target = $region20
      $region19: #{hvit_vae_forward.5} parent=11 // pred_region
        _
      $region20: #{hvit_vae_forward.5} parent=11 // pred_fallthru
        _
      // Predicated region
      $region21: #{hvit_vae_forward.5} parent=11 // pred_check
        %p432 = pneg %p112
      $region22: #{hvit_vae_forward.5} parent=11 // pred_check_branch
        %434 = sbr.rel (%p432) target = $region24
      $region23: #{hvit_vae_forward.5} parent=11 // pred_region
        _
      $region24: #{hvit_vae_forward.5} parent=11 // pred_fallthru
        _
      // Predicated region
      $region25: #{hvit_vae_forward.5} parent=11 // pred_check
        %p435 = pneg %p133
      $region26: #{hvit_vae_forward.5} parent=11 // pred_check_branch
        %437 = sbr.rel (%p435) target = $region28
      $region27: #{hvit_vae_forward.5} parent=11 // pred_region
        _
      $region28: #{hvit_vae_forward.5} parent=11 // pred_fallthru
        _
      // Predicated region
      $region29: #{hvit_vae_forward.5} parent=11 // pred_check
        %p438 = pneg %p154
      $region30: #{hvit_vae_forward.5} parent=11 // pred_check_branch
        %440 = sbr.rel (%p438) target = $region32
      $region31: #{hvit_vae_forward.5} parent=11 // pred_region
        _
      $region32: #{hvit_vae_forward.5} parent=11 // pred_fallthru
        _
      // Predicated region
      $region33: #{hvit_vae_forward.5} parent=11 // pred_check
        %p441 = pneg %p175
      $region34: #{hvit_vae_forward.5} parent=11 // pred_check_branch
        %443 = sbr.rel (%p441) target = $region36
      $region35: #{hvit_vae_forward.5} parent=11 // pred_region
        _
      $region36: #{hvit_vae_forward.5} parent=11 // pred_fallthru
        _
      // Predicated region
      $region37: #{hvit_vae_forward.5} parent=11 // pred_check
        %p444 = pneg %p196
      $region38: #{hvit_vae_forward.5} parent=11 // pred_check_branch
        %446 = sbr.rel (%p444) target = $region40
      $region39: #{hvit_vae_forward.5} parent=11 // pred_region
        _
      $region40: #{hvit_vae_forward.5} parent=11 // pred_fallthru
        _
      // Predicated region
      $region41: #{hvit_vae_forward.5} parent=11 // pred_check
        %p447 = pneg %p217
      $region42: #{hvit_vae_forward.5} parent=11 // pred_check_branch
        %449 = sbr.rel (%p447) target = $region44
      $region43: #{hvit_vae_forward.5} parent=11 // pred_region
        _
      $region44: #{hvit_vae_forward.5} parent=11 // pred_fallthru
        _
      // Predicated region
      $region45: #{hvit_vae_forward.5} parent=11 // pred_check
        %p450 = pneg %p238
      $region46: #{hvit_vae_forward.5} parent=11 // pred_check_branch
        %452 = sbr.rel (%p450) target = $region48
      $region47: #{hvit_vae_forward.5} parent=11 // pred_region
        _
      $region48: #{hvit_vae_forward.5} parent=11 // pred_fallthru
        _
      // Predicated region
      $region49: #{hvit_vae_forward.5} parent=11 // pred_check
        %p453 = pneg %p259
      $region50: #{hvit_vae_forward.5} parent=11 // pred_check_branch
        %455 = sbr.rel (%p453) target = $region52
      $region51: #{hvit_vae_forward.5} parent=11 // pred_region
        _
      $region52: #{hvit_vae_forward.5} parent=11 // pred_fallthru
        _
      // Predicated region
      $region53: #{hvit_vae_forward.5} parent=11 // pred_check
        %p456 = pneg %p280
      $region54: #{hvit_vae_forward.5} parent=11 // pred_check_branch
        %458 = sbr.rel (%p456) target = $region56
      $region55: #{hvit_vae_forward.5} parent=11 // pred_region
        _
      $region56: #{hvit_vae_forward.5} parent=11 // pred_fallthru
        _
      // Predicated region
      $region57: #{hvit_vae_forward.5} parent=11 // pred_check
        %p459 = pneg %p301
      $region58: #{hvit_vae_forward.5} parent=11 // pred_check_branch
        %461 = sbr.rel (%p459) target = $region60
      $region59: #{hvit_vae_forward.5} parent=11 // pred_region
        _
      $region60: #{hvit_vae_forward.5} parent=11 // pred_fallthru
        _
      // Predicated region
      $region61: #{hvit_vae_forward.5} parent=11 // pred_check
        %p462 = pneg %p322
      $region62: #{hvit_vae_forward.5} parent=11 // pred_check_branch
        %464 = sbr.rel (%p462) target = $region64
      $region63: #{hvit_vae_forward.5} parent=11 // pred_region
        _
      $region64: #{hvit_vae_forward.5} parent=11 // pred_fallthru
        _
      // Predicated region
      $region65: #{hvit_vae_forward.5} parent=11 // pred_check
        %p465 = pneg %p343
      $region66: #{hvit_vae_forward.5} parent=11 // pred_check_branch
        %467 = sbr.rel (%p465) target = $region68
      $region67: #{hvit_vae_forward.5} parent=11 // pred_region
        _
      $region68: #{hvit_vae_forward.5} parent=11 // pred_fallthru
        _
      // Predicated region
      $region69: #{hvit_vae_forward.5} parent=11 // pred_check
        %p468 = pneg %p364
      $region70: #{hvit_vae_forward.5} parent=11 // pred_check_branch
        %470 = sbr.rel (%p468) target = $region72
      $region71: #{hvit_vae_forward.5} parent=11 // pred_region
        _
      $region72: #{hvit_vae_forward.5} parent=11 // pred_fallthru
        _
      // Predicated region
      $region73: #{hvit_vae_forward.5} parent=11 // pred_check
        %p471 = pneg %p385
      $region74: #{hvit_vae_forward.5} parent=11 // pred_check_branch
        %473 = sbr.rel (%p471) target = $region76
      $region75: #{hvit_vae_forward.5} parent=11 // pred_region
        _
      $region76: #{hvit_vae_forward.5} parent=11 // pred_fallthru
        _
    $region12: #{hvit_vae_forward.5} parent=5 // pred_fallthru
      _
    %p474 = scmp.lt.s32.totalorder %s23, 2
    // Predicated region
    $region77: #{hvit_vae_forward.5} parent=5 // pred_check
      %p475 = pneg %p474
    $region78: #{hvit_vae_forward.5} parent=5 // pred_check_branch
      %477 = sbr.rel (%p475) target = $region80
    $region79: #{hvit_vae_forward.5} parent=5 // pred_region
      // Predicated region
      $region81: #{hvit_vae_forward.5} parent=79 // pred_check
        %p478 = pneg %p43
      $region82: #{hvit_vae_forward.5} parent=79 // pred_check_branch
        %480 = sbr.rel (%p478) target = $region84
      $region83: #{hvit_vae_forward.5} parent=79 // pred_region
        %p481 = scmp.lt.s32.totalorder %s23, 1
        %s482 = scalar_select %p481, %s23, 1
        %s483 = smul.addr %s482, 4
        %s484 = scalar_lea.vmem %s0, %s483
      $region84: #{hvit_vae_forward.5} parent=79 // pred_fallthru
        _
    $region80: #{hvit_vae_forward.5} parent=5 // pred_fallthru
      _
    %p485 = scmp.le.s32.totalorder 1, %s23
    %p486 = scmp.lt.s32.totalorder %s23, 3
    %p487 = pnand %p485, %p486
    %p488 = pneg %p487
    // Predicated region
    $region85: #{hvit_vae_forward.5} parent=5 // pred_check
      _
    $region86: #{hvit_vae_forward.5} parent=5 // pred_check_branch
      %490 = sbr.rel (%p487) target = $region88
    $region87: #{hvit_vae_forward.5} parent=5 // pred_region
      %s491 = ssub.s32 %s23, 1
      %p492 = scmp.lt.s32.totalorder %s28, 1
      %s493 = scalar_select %p492, %s28, 1
      %s494 = smul.addr %s493, 4
      %s495 = scalar_lea.vmem %s0, %s494
      %p496 = pneg %p49
      %p497 = pneg %p46
      %p498 = pneg %p70
      %p499 = pneg %p67
      %p500 = pneg %p91
      %p501 = pneg %p88
      %p502 = pneg %p112
      %p503 = pneg %p109
      %p504 = pneg %p133
      %p505 = pneg %p130
      %p506 = pneg %p154
      %p507 = pneg %p151
      %p508 = pneg %p175
      %p509 = pneg %p172
      %p510 = pneg %p196
      %p511 = pneg %p193
      %p512 = pneg %p217
      %p513 = pneg %p214
      %p514 = pneg %p238
      %p515 = pneg %p235
      %p516 = pneg %p259
      %p517 = pneg %p256
      %p518 = pneg %p280
      %p519 = pneg %p277
      %p520 = pneg %p301
      %p521 = pneg %p298
      %p522 = pneg %p322
      %p523 = pneg %p319
      %p524 = pneg %p343
      %p525 = pneg %p340
      %p526 = pneg %p364
      %p527 = pneg %p361
      %p528 = pneg %p385
      %p529 = pneg %p382
      %p530 = pneg %p411
      %p531 = pneg %p408
      %p532 = scmp.lt.s32.totalorder %s28, 1
      %s533 = scalar_select %p532, %s28, 1
      %s534 = smul.addr %s533, 4
      %s535 = scalar_lea.vmem %s17, %s534
      %p536 = scmp.lt.s32.totalorder %s28, 1
      %s537 = scalar_select %p536, %s28, 1
      %s538 = smul.addr %s537, 4
      %s539 = scalar_lea.vmem %s0, %s538
      %p540 = scmp.lt.s32.totalorder %s28, 1
      %s541 = scalar_select %p540, %s28, 1
      %s542 = smul.addr %s541, 4
      %s543 = scalar_lea.vmem %s17, %s542
      %v545 = vld [vmem:[%s539] sm:$0xf]
      %v546 = vld [vmem:[%s1] sm:$0xff]
      %v547 = vld [vmem:[%s1 + $0x8] sm:$0xff]
      %v548 = vld [vmem:[%s1 + $0x10] sm:$0xff]
      %v549 = vld [vmem:[%s1 + $0x18] sm:$0xff]
      %v550 = vld [vmem:[%s1 + $0x20] sm:$0xff]
      %v551 = vld [vmem:[%s1 + $0x28] sm:$0xff]
      %v552 = vld [vmem:[%s1 + $0x30] sm:$0xff]
      %v553 = vld [vmem:[%s1 + $0x38] sm:$0xff]
      %v554 = vpack.c.bf16 %v545, %v545
      %v555 = vpack.c.bf16 %v547, %v546
      %v556 = vpack.c.bf16 %v549, %v548
      %v557 = vpack.c.bf16 %v551, %v550
      %v558 = vpack.c.bf16 %v553, %v552
      %v559 = vld [vmem:[%s2] sm:$0x1]
      %v561 = vlaneseq
      %v562 = vshrl.u32 %v561, 7
      %v563 = vsub.s32 0, %v562
      %v564 = vrot.slane %v559, %v563
      %vm566 = vcmask 523264
      %v568 = vsel %vm566, %v554, 0
      %570 = vmatprep.subr.bf16.mxu0 0
      %571 = vmatpush1.bf16.msra.mxu0 %v555
      %572 = vmatprep.subr.bf16.mxu0 0
      %573 = vmatpush1.bf16.msra.mxu0 %v556
      %574 = vmatprep.subr.bf16.mxu0 0
      %575 = vmatpush1.bf16.msra.mxu0 %v557
      %576 = vmatprep.subr.bf16.mxu0 0
      %577 = vmatpush1.bf16.msra.mxu0 %v558
      %578 = vmatprep.subr.bf16.mxu0 0
      %579 = vmatpush1.bf16.msra.mxu0 0
      %580 = vmatprep.subr.bf16.mxu0 0
      %581 = vmatpush1.bf16.msra.mxu0 0
      %582 = vmatprep.subr.bf16.mxu0 0
      %583 = vmatpush1.bf16.msra.mxu0 0
      %584 = vmatprep.subr.bf16.mxu0 0
      %585 = vmatpush1.bf16.msra.mxu0 0
      %586 = vmatprep.subr.bf16.mxu0 0
      %587 = vmatpush1.bf16.msra.mxu0 0
      %588 = vmatprep.subr.bf16.mxu0 0
      %589 = vmatpush1.bf16.msra.mxu0 0
      %590 = vmatprep.subr.bf16.mxu0 0
      %591 = vmatpush1.bf16.msra.mxu0 0
      %592 = vmatprep.subr.bf16.mxu0 0
      %593 = vmatpush1.bf16.msra.mxu0 0
      %594 = vmatprep.subr.bf16.mxu0 0
      %595 = vmatpush1.bf16.msra.mxu0 0
      %596 = vmatprep.subr.bf16.mxu0 0
      %597 = vmatpush1.bf16.msra.mxu0 0
      %598 = vmatprep.subr.bf16.mxu0 0
      %599 = vmatpush1.bf16.msra.mxu0 0
      %600 = vmatprep.subr.bf16.mxu0 0
      %601 = vmatpush1.bf16.msra.mxu0 0
      %602 = vmatprep.mubr.bf16.mxu0 0
      %603 = vmatmul.mubr.bf16.gmra.mrb[0].mxu0 %v568
      %v604 = vpop.f32.mrb[0].mxu0
      %v605 = vadd.f32 %v564, %v604
      %v606 = vpop.f32.mrb[0].mxu0
      %v607 = vpop.f32.mrb[0].mxu0
      %v608 = vpop.f32.mrb[0].mxu0
      %609 = vdwg.mxu0
      %v610 = vld [vmem:[%s3] sm:$0x1]
      %v611 = vld [vmem:[%s4] sm:$0x1]
      %vm612 = vcmask 257024
      %v613 = vsel %vm612, %v605, 0.0
      %614 = vadd.xlane.f32.xlu0 %v613
      %v615 = vpop.xlane.xlu0 %614
      %v616 = vrcp.pop 32.0
      %v617 = vmul.f32 %v615, %v616
      %v618 = vsub.f32 %v605, %v617
      %v619 = vmul.f32 %v618, %v618
      %v620 = vsel %vm612, %v619, 0.0
      %621 = vadd.xlane.f32.xlu0 %v620
      %v622 = vpop.xlane.xlu0 %621
      %v623 = vmul.f32 %v622, %v616
      %v624 = vadd.f32 %v623, 1e-05
      %v625 = vrsqrt.pop %v624
      %v626 = vmul.f32 %v618, %v625
      %v628 = vlaneseq
      %v629 = vshrl.u32 %v628, 7
      %v630 = vsub.s32 0, %v629
      %v631 = vrot.slane %v610, %v630
      %v633 = vmul.f32 %v626, %v631
      %v635 = vlaneseq
      %v636 = vshrl.u32 %v635, 7
      %v637 = vsub.s32 0, %v636
      %v638 = vrot.slane %v611, %v637
      %v640 = vadd.f32 %v633, %v638
      %v641 = vld [vmem:[%s5] sm:$0xff]
      %v642 = vld [vmem:[%s5 + $0x8] sm:$0xff]
      %v643 = vld [vmem:[%s5 + $0x10] sm:$0xff]
      %v644 = vld [vmem:[%s5 + $0x18] sm:$0xff]
      %v645 = vpack.c.bf16 %v640, %v640
      %v646 = vpack.c.bf16 %v642, %v641
      %v647 = vpack.c.bf16 %v644, %v643
      %v648 = vld [vmem:[%s6] sm:$0x1]
      %v650 = vlaneseq
      %v651 = vshrl.u32 %v650, 7
      %v652 = vsub.s32 0, %v651
      %v653 = vrot.slane %v648, %v652
      %vm655 = vcmask 261120
      %v657 = vsel %vm655, %v645, 0
      %659 = vmatprep.subr.bf16.mxu0 0
      %660 = vmatpush1.bf16.msra.mxu0 %v646
      %661 = vmatprep.subr.bf16.mxu0 0
      %662 = vmatpush1.bf16.msra.mxu0 %v647
      %663 = vmatprep.subr.bf16.mxu0 0
      %664 = vmatpush1.bf16.msra.mxu0 0
      %665 = vmatprep.subr.bf16.mxu0 0
      %666 = vmatpush1.bf16.msra.mxu0 0
      %667 = vmatprep.subr.bf16.mxu0 0
      %668 = vmatpush1.bf16.msra.mxu0 0
      %669 = vmatprep.subr.bf16.mxu0 0
      %670 = vmatpush1.bf16.msra.mxu0 0
      %671 = vmatprep.subr.bf16.mxu0 0
      %672 = vmatpush1.bf16.msra.mxu0 0
      %673 = vmatprep.subr.bf16.mxu0 0
      %674 = vmatpush1.bf16.msra.mxu0 0
      %675 = vmatprep.subr.bf16.mxu0 0
      %676 = vmatpush1.bf16.msra.mxu0 0
      %677 = vmatprep.subr.bf16.mxu0 0
      %678 = vmatpush1.bf16.msra.mxu0 0
      %679 = vmatprep.subr.bf16.mxu0 0
      %680 = vmatpush1.bf16.msra.mxu0 0
      %681 = vmatprep.subr.bf16.mxu0 0
      %682 = vmatpush1.bf16.msra.mxu0 0
      %683 = vmatprep.subr.bf16.mxu0 0
      %684 = vmatpush1.bf16.msra.mxu0 0
      %685 = vmatprep.subr.bf16.mxu0 0
      %686 = vmatpush1.bf16.msra.mxu0 0
      %687 = vmatprep.subr.bf16.mxu0 0
      %688 = vmatpush1.bf16.msra.mxu0 0
      %689 = vmatprep.subr.bf16.mxu0 0
      %690 = vmatpush1.bf16.msra.mxu0 0
      %691 = vmatprep.mubr.bf16.mxu0 0
      %692 = vmatmul.mubr.bf16.gmra.mrb[0].mxu0 %v657
      %v693 = vpop.f32.mrb[0].mxu0
      %v694 = vadd.f32 %v653, %v693
      %v695 = vpop.f32.mrb[0].mxu0
      %v696 = vpop.f32.mrb[0].mxu0
      %v697 = vpop.f32.mrb[0].mxu0
      %698 = vdwg.mxu0
      %s699 = scalar_lea.vmem %s5, 128
      %v700 = vld [vmem:[%s699] sm:$0xff]
      %v701 = vld [vmem:[%s699 + $0x8] sm:$0xff]
      %v702 = vld [vmem:[%s699 + $0x10] sm:$0xff]
      %v703 = vld [vmem:[%s699 + $0x18] sm:$0xff]
      %v704 = vpack.c.bf16 %v701, %v700
      %v705 = vpack.c.bf16 %v703, %v702
      %s706 = scalar_lea.vmem %s6, 4
      %v707 = vld [vmem:[%s706] sm:$0x1]
      %v709 = vlaneseq
      %v710 = vshrl.u32 %v709, 7
      %v711 = vsub.s32 0, %v710
      %v712 = vrot.slane %v707, %v711
      %714 = vmatprep.subr.bf16.mxu0 0
      %715 = vmatpush1.bf16.msra.mxu0 %v704
      %716 = vmatprep.subr.bf16.mxu0 0
      %717 = vmatpush1.bf16.msra.mxu0 %v705
      %718 = vmatprep.subr.bf16.mxu0 0
      %719 = vmatpush1.bf16.msra.mxu0 0
      %720 = vmatprep.subr.bf16.mxu0 0
      %721 = vmatpush1.bf16.msra.mxu0 0
      %722 = vmatprep.subr.bf16.mxu0 0
      %723 = vmatpush1.bf16.msra.mxu0 0
      %724 = vmatprep.subr.bf16.mxu0 0
      %725 = vmatpush1.bf16.msra.mxu0 0
      %726 = vmatprep.subr.bf16.mxu0 0
      %727 = vmatpush1.bf16.msra.mxu0 0
      %728 = vmatprep.subr.bf16.mxu0 0
      %729 = vmatpush1.bf16.msra.mxu0 0
      %730 = vmatprep.subr.bf16.mxu0 0
      %731 = vmatpush1.bf16.msra.mxu0 0
      %732 = vmatprep.subr.bf16.mxu0 0
      %733 = vmatpush1.bf16.msra.mxu0 0
      %734 = vmatprep.subr.bf16.mxu0 0
      %735 = vmatpush1.bf16.msra.mxu0 0
      %736 = vmatprep.subr.bf16.mxu0 0
      %737 = vmatpush1.bf16.msra.mxu0 0
      %738 = vmatprep.subr.bf16.mxu0 0
      %739 = vmatpush1.bf16.msra.mxu0 0
      %740 = vmatprep.subr.bf16.mxu0 0
      %741 = vmatpush1.bf16.msra.mxu0 0
      %742 = vmatprep.subr.bf16.mxu0 0
      %743 = vmatpush1.bf16.msra.mxu0 0
      %744 = vmatprep.subr.bf16.mxu0 0
      %745 = vmatpush1.bf16.msra.mxu0 0
      %746 = vmatprep.mubr.bf16.mxu0 0
      %747 = vmatmul.mubr.bf16.gmra.mrb[0].mxu0 %v657
      %v748 = vpop.f32.mrb[0].mxu0
      %v749 = vadd.f32 %v712, %v748
      %v750 = vpop.f32.mrb[0].mxu0
      %v751 = vpop.f32.mrb[0].mxu0
      %v752 = vpop.f32.mrb[0].mxu0
      %753 = vdwg.mxu0
      %s754 = scalar_lea.vmem %s5, 256
      %v755 = vld [vmem:[%s754] sm:$0xff]
      %v756 = vld [vmem:[%s754 + $0x8] sm:$0xff]
      %v757 = vld [vmem:[%s754 + $0x10] sm:$0xff]
      %v758 = vld [vmem:[%s754 + $0x18] sm:$0xff]
      %v759 = vpack.c.bf16 %v756, %v755
      %v760 = vpack.c.bf16 %v758, %v757
      %s761 = scalar_lea.vmem %s6, 8
      %v762 = vld [vmem:[%s761] sm:$0x1]
      %v764 = vlaneseq
      %v765 = vshrl.u32 %v764, 7
      %v766 = vsub.s32 0, %v765
      %v767 = vrot.slane %v762, %v766
      %769 = vmatprep.subr.bf16.mxu0 0
      %770 = vmatpush1.bf16.msra.mxu0 %v759
      %771 = vmatprep.subr.bf16.mxu0 0
      %772 = vmatpush1.bf16.msra.mxu0 %v760
      %773 = vmatprep.subr.bf16.mxu0 0
      %774 = vmatpush1.bf16.msra.mxu0 0
      %775 = vmatprep.subr.bf16.mxu0 0
      %776 = vmatpush1.bf16.msra.mxu0 0
      %777 = vmatprep.subr.bf16.mxu0 0
      %778 = vmatpush1.bf16.msra.mxu0 0
      %779 = vmatprep.subr.bf16.mxu0 0
      %780 = vmatpush1.bf16.msra.mxu0 0
      %781 = vmatprep.subr.bf16.mxu0 0
      %782 = vmatpush1.bf16.msra.mxu0 0
      %783 = vmatprep.subr.bf16.mxu0 0
      %784 = vmatpush1.bf16.msra.mxu0 0
      %785 = vmatprep.subr.bf16.mxu0 0
      %786 = vmatpush1.bf16.msra.mxu0 0
      %787 = vmatprep.subr.bf16.mxu0 0
      %788 = vmatpush1.bf16.msra.mxu0 0
      %789 = vmatprep.subr.bf16.mxu0 0
      %790 = vmatpush1.bf16.msra.mxu0 0
      %791 = vmatprep.subr.bf16.mxu0 0
      %792 = vmatpush1.bf16.msra.mxu0 0
      %793 = vmatprep.subr.bf16.mxu0 0
      %794 = vmatpush1.bf16.msra.mxu0 0
      %795 = vmatprep.subr.bf16.mxu0 0
      %796 = vmatpush1.bf16.msra.mxu0 0
      %797 = vmatprep.subr.bf16.mxu0 0
      %798 = vmatpush1.bf16.msra.mxu0 0
      %799 = vmatprep.subr.bf16.mxu0 0
      %800 = vmatpush1.bf16.msra.mxu0 0
      %801 = vmatprep.mubr.bf16.mxu0 0
      %802 = vmatmul.mubr.bf16.gmra.mrb[0].mxu0 %v657
      %v803 = vpop.f32.mrb[0].mxu0
      %v804 = vadd.f32 %v767, %v803
      %v805 = vpop.f32.mrb[0].mxu0
      %v806 = vpop.f32.mrb[0].mxu0
      %v807 = vpop.f32.mrb[0].mxu0
      %808 = vdwg.mxu0
      %v809 = vpack.c.bf16 %v694, %v694
      %v810 = vpack.c.bf16 %v749, %v749
      %vm811 = vcmask 64512
      %v813 = vsel %vm811, %v809, 0
      %v816 = vsel %vm811, %v810, 0
      %818 = vmatprep.subr.bf16.mxu0 0
      %819 = vmatpush1.bf16.xpose.msra.mxu0 %v816
      %820 = vmatprep.subr.bf16.mxu0 0
      %821 = vmatpush1.bf16.xpose.msra.mxu0 0
      %822 = vmatprep.subr.bf16.mxu0 0
      %823 = vmatpush1.bf16.xpose.msra.mxu0 0
      %824 = vmatprep.subr.bf16.mxu0 0
      %825 = vmatpush1.bf16.xpose.msra.mxu0 0
      %826 = vmatprep.subr.bf16.mxu0 0
      %827 = vmatpush1.bf16.xpose.msra.mxu0 0
      %828 = vmatprep.subr.bf16.mxu0 0
      %829 = vmatpush1.bf16.xpose.msra.mxu0 0
      %830 = vmatprep.subr.bf16.mxu0 0
      %831 = vmatpush1.bf16.xpose.msra.mxu0 0
      %832 = vmatprep.subr.bf16.mxu0 0
      %833 = vmatpush1.bf16.xpose.msra.mxu0 0
      %834 = vmatprep.subr.bf16.mxu0 0
      %835 = vmatpush1.bf16.xpose.msra.mxu0 0
      %836 = vmatprep.subr.bf16.mxu0 0
      %837 = vmatpush1.bf16.xpose.msra.mxu0 0
      %838 = vmatprep.subr.bf16.mxu0 0
      %839 = vmatpush1.bf16.xpose.msra.mxu0 0
      %840 = vmatprep.subr.bf16.mxu0 0
      %841 = vmatpush1.bf16.xpose.msra.mxu0 0
      %842 = vmatprep.subr.bf16.mxu0 0
      %843 = vmatpush1.bf16.xpose.msra.mxu0 0
      %844 = vmatprep.subr.bf16.mxu0 0
      %845 = vmatpush1.bf16.xpose.msra.mxu0 0
      %846 = vmatprep.subr.bf16.mxu0 0
      %847 = vmatpush1.bf16.xpose.msra.mxu0 0
      %848 = vmatprep.subr.bf16.mxu0 0
      %849 = vmatpush1.bf16.xpose.msra.mxu0 0
      %850 = vmatprep.mubr.bf16.mxu0 0
      %851 = vmatmul.mubr.bf16.gmra.mrb[0].mxu0 %v813
      %v852 = vpop.f32.mrb[0].mxu0
      %v853 = vadd.f32 0.0, %v852
      %v854 = vpop.f32.mrb[0].mxu0
      %v855 = vpop.f32.mrb[0].mxu0
      %v856 = vpop.f32.mrb[0].mxu0
      %857 = vdwg.mxu0
      %v858 = vmul.f32 %v853, 0.35355338
      %vm859 = vcmask 27648
      %v860 = vsel %vm859, %v858, -inf
      %861 = vmax.xlane.f32.xlu0 %v860
      %v862 = vpop.xlane.xlu0 %861
      %v863 = vsub.f32 %v858, %v862
      %v864 = vmul.f32 %v863, 1.442695
      %v865 = vpow.pop %v864
      %v866 = vsel %vm859, %v865, 0.0
      %867 = vadd.xlane.f32.xlu0 %v866
      %v868 = vpop.xlane.xlu0 %867
      %v869 = vrcp.pop %v868
      %v870 = vmul.f32 %v865, %v869
      %v871 = vpack.c.bf16 %v870, %v870
      %v872 = vpack.c.bf16 %v804, %v804
      %vm873 = vcmask 31744
      %v875 = vsel %vm873, %v871, 0
      %vm877 = vcmask 1041408
      %v879 = vsel %vm877, %v872, 0
      %881 = vmatprep.subr.bf16.mxu0 0
      %882 = vmatpush1.bf16.msra.mxu0 %v879
      %883 = vmatprep.subr.bf16.mxu0 0
      %884 = vmatpush1.bf16.msra.mxu0 0
      %885 = vmatprep.subr.bf16.mxu0 0
      %886 = vmatpush1.bf16.msra.mxu0 0
      %887 = vmatprep.subr.bf16.mxu0 0
      %888 = vmatpush1.bf16.msra.mxu0 0
      %889 = vmatprep.subr.bf16.mxu0 0
      %890 = vmatpush1.bf16.msra.mxu0 0
      %891 = vmatprep.subr.bf16.mxu0 0
      %892 = vmatpush1.bf16.msra.mxu0 0
      %893 = vmatprep.subr.bf16.mxu0 0
      %894 = vmatpush1.bf16.msra.mxu0 0
      %895 = vmatprep.subr.bf16.mxu0 0
      %896 = vmatpush1.bf16.msra.mxu0 0
      %897 = vmatprep.subr.bf16.mxu0 0
      %898 = vmatpush1.bf16.msra.mxu0 0
      %899 = vmatprep.subr.bf16.mxu0 0
      %900 = vmatpush1.bf16.msra.mxu0 0
      %901 = vmatprep.subr.bf16.mxu0 0
      %902 = vmatpush1.bf16.msra.mxu0 0
      %903 = vmatprep.subr.bf16.mxu0 0
      %904 = vmatpush1.bf16.msra.mxu0 0
      %905 = vmatprep.subr.bf16.mxu0 0
      %906 = vmatpush1.bf16.msra.mxu0 0
      %907 = vmatprep.subr.bf16.mxu0 0
      %908 = vmatpush1.bf16.msra.mxu0 0
      %909 = vmatprep.subr.bf16.mxu0 0
      %910 = vmatpush1.bf16.msra.mxu0 0
      %911 = vmatprep.subr.bf16.mxu0 0
      %912 = vmatpush1.bf16.msra.mxu0 0
      %913 = vmatprep.mubr.bf16.mxu0 0
      %914 = vmatmul.mubr.bf16.gmra.mrb[0].mxu0 %v875
      %v915 = vpop.f32.mrb[0].mxu0
      %v916 = vadd.f32 0.0, %v915
      %v917 = vpop.f32.mrb[0].mxu0
      %v918 = vpop.f32.mrb[0].mxu0
      %v919 = vpop.f32.mrb[0].mxu0
      %920 = vdwg.mxu0
      %v921 = vld [vmem:[%s7] sm:$0xff]
      %v922 = vpack.c.bf16 %v916, %v916
      %v923 = vpack.c.bf16 %v921, %v921
      %s924 = scalar_lea.vmem %s5, 32
      %v925 = vld [vmem:[%s924] sm:$0xff]
      %v926 = vld [vmem:[%s924 + $0x8] sm:$0xff]
      %v927 = vld [vmem:[%s924 + $0x10] sm:$0xff]
      %v928 = vld [vmem:[%s924 + $0x18] sm:$0xff]
      %v929 = vpack.c.bf16 %v926, %v925
      %v930 = vpack.c.bf16 %v928, %v927
      %s931 = scalar_lea.vmem %s6, 1
      %v932 = vld [vmem:[%s931] sm:$0x1]
      %v934 = vlaneseq
      %v935 = vshrl.u32 %v934, 7
      %v936 = vsub.s32 0, %v935
      %v937 = vrot.slane %v932, %v936
      %939 = vmatprep.subr.bf16.mxu0 0
      %940 = vmatpush1.bf16.msra.mxu0 %v929
      %941 = vmatprep.subr.bf16.mxu0 0
      %942 = vmatpush1.bf16.msra.mxu0 %v930
      %943 = vmatprep.subr.bf16.mxu0 0
      %944 = vmatpush1.bf16.msra.mxu0 0
      %945 = vmatprep.subr.bf16.mxu0 0
      %946 = vmatpush1.bf16.msra.mxu0 0
      %947 = vmatprep.subr.bf16.mxu0 0
      %948 = vmatpush1.bf16.msra.mxu0 0
      %949 = vmatprep.subr.bf16.mxu0 0
      %950 = vmatpush1.bf16.msra.mxu0 0
      %951 = vmatprep.subr.bf16.mxu0 0
      %952 = vmatpush1.bf16.msra.mxu0 0
      %953 = vmatprep.subr.bf16.mxu0 0
      %954 = vmatpush1.bf16.msra.mxu0 0
      %955 = vmatprep.subr.bf16.mxu0 0
      %956 = vmatpush1.bf16.msra.mxu0 0
      %957 = vmatprep.subr.bf16.mxu0 0
      %958 = vmatpush1.bf16.msra.mxu0 0
      %959 = vmatprep.subr.bf16.mxu0 0
      %960 = vmatpush1.bf16.msra.mxu0 0
      %961 = vmatprep.subr.bf16.mxu0 0
      %962 = vmatpush1.bf16.msra.mxu0 0
      %963 = vmatprep.subr.bf16.mxu0 0
      %964 = vmatpush1.bf16.msra.mxu0 0
      %965 = vmatprep.subr.bf16.mxu0 0
      %966 = vmatpush1.bf16.msra.mxu0 0
      %967 = vmatprep.subr.bf16.mxu0 0
      %968 = vmatpush1.bf16.msra.mxu0 0
      %969 = vmatprep.subr.bf16.mxu0 0
      %970 = vmatpush1.bf16.msra.mxu0 0
      %971 = vmatprep.mubr.bf16.mxu0 0
      %972 = vmatmul.mubr.bf16.gmra.mrb[0].mxu0 %v657
      %v973 = vpop.f32.mrb[0].mxu0
      %v974 = vadd.f32 %v937, %v973
      %v975 = vpop.f32.mrb[0].mxu0
      %v976 = vpop.f32.mrb[0].mxu0
      %v977 = vpop.f32.mrb[0].mxu0
      %978 = vdwg.mxu0
      %s979 = scalar_lea.vmem %s5, 160
      %v980 = vld [vmem:[%s979] sm:$0xff]
      %v981 = vld [vmem:[%s979 + $0x8] sm:$0xff]
      %v982 = vld [vmem:[%s979 + $0x10] sm:$0xff]
      %v983 = vld [vmem:[%s979 + $0x18] sm:$0xff]
      %v984 = vpack.c.bf16 %v981, %v980
      %v985 = vpack.c.bf16 %v983, %v982
      %s986 = scalar_lea.vmem %s6, 5
      %v987 = vld [vmem:[%s986] sm:$0x1]
      %v989 = vlaneseq
      %v990 = vshrl.u32 %v989, 7
      %v991 = vsub.s32 0, %v990
      %v992 = vrot.slane %v987, %v991
      %994 = vmatprep.subr.bf16.mxu0 0
      %995 = vmatpush1.bf16.msra.mxu0 %v984
      %996 = vmatprep.subr.bf16.mxu0 0
      %997 = vmatpush1.bf16.msra.mxu0 %v985
      %998 = vmatprep.subr.bf16.mxu0 0
      %999 = vmatpush1.bf16.msra.mxu0 0
      %1000 = vmatprep.subr.bf16.mxu0 0
      %1001 = vmatpush1.bf16.msra.mxu0 0
      %1002 = vmatprep.subr.bf16.mxu0 0
      %1003 = vmatpush1.bf16.msra.mxu0 0
      %1004 = vmatprep.subr.bf16.mxu0 0
      %1005 = vmatpush1.bf16.msra.mxu0 0
      %1006 = vmatprep.subr.bf16.mxu0 0
      %1007 = vmatpush1.bf16.msra.mxu0 0
      %1008 = vmatprep.subr.bf16.mxu0 0
      %1009 = vmatpush1.bf16.msra.mxu0 0
      %1010 = vmatprep.subr.bf16.mxu0 0
      %1011 = vmatpush1.bf16.msra.mxu0 0
      %1012 = vmatprep.subr.bf16.mxu0 0
      %1013 = vmatpush1.bf16.msra.mxu0 0
      %1014 = vmatprep.subr.bf16.mxu0 0
      %1015 = vmatpush1.bf16.msra.mxu0 0
      %1016 = vmatprep.subr.bf16.mxu0 0
      %1017 = vmatpush1.bf16.msra.mxu0 0
      %1018 = vmatprep.subr.bf16.mxu0 0
      %1019 = vmatpush1.bf16.msra.mxu0 0
      %1020 = vmatprep.subr.bf16.mxu0 0
      %1021 = vmatpush1.bf16.msra.mxu0 0
      %1022 = vmatprep.subr.bf16.mxu0 0
      %1023 = vmatpush1.bf16.msra.mxu0 0
      %1024 = vmatprep.subr.bf16.mxu0 0
      %1025 = vmatpush1.bf16.msra.mxu0 0
      %1026 = vmatprep.mubr.bf16.mxu0 0
      %1027 = vmatmul.mubr.bf16.gmra.mrb[0].mxu0 %v657
      %v1028 = vpop.f32.mrb[0].mxu0
      %v1029 = vadd.f32 %v992, %v1028
      %v1030 = vpop.f32.mrb[0].mxu0
      %v1031 = vpop.f32.mrb[0].mxu0
      %v1032 = vpop.f32.mrb[0].mxu0
      %1033 = vdwg.mxu0
      %s1034 = scalar_lea.vmem %s5, 288
      %v1035 = vld [vmem:[%s1034] sm:$0xff]
      %v1036 = vld [vmem:[%s1034 + $0x8] sm:$0xff]
      %v1037 = vld [vmem:[%s1034 + $0x10] sm:$0xff]
      %v1038 = vld [vmem:[%s1034 + $0x18] sm:$0xff]
      %v1039 = vpack.c.bf16 %v1036, %v1035
      %v1040 = vpack.c.bf16 %v1038, %v1037
      %s1041 = scalar_lea.vmem %s6, 9
      %v1042 = vld [vmem:[%s1041] sm:$0x1]
      %v1044 = vlaneseq
      %v1045 = vshrl.u32 %v1044, 7
      %v1046 = vsub.s32 0, %v1045
      %v1047 = vrot.slane %v1042, %v1046
      %1049 = vmatprep.subr.bf16.mxu0 0
      %1050 = vmatpush1.bf16.msra.mxu0 %v1039
      %1051 = vmatprep.subr.bf16.mxu0 0
      %1052 = vmatpush1.bf16.msra.mxu0 %v1040
      %1053 = vmatprep.subr.bf16.mxu0 0
      %1054 = vmatpush1.bf16.msra.mxu0 0
      %1055 = vmatprep.subr.bf16.mxu0 0
      %1056 = vmatpush1.bf16.msra.mxu0 0
      %1057 = vmatprep.subr.bf16.mxu0 0
      %1058 = vmatpush1.bf16.msra.mxu0 0
      %1059 = vmatprep.subr.bf16.mxu0 0
      %1060 = vmatpush1.bf16.msra.mxu0 0
      %1061 = vmatprep.subr.bf16.mxu0 0
      %1062 = vmatpush1.bf16.msra.mxu0 0
      %1063 = vmatprep.subr.bf16.mxu0 0
      %1064 = vmatpush1.bf16.msra.mxu0 0
      %1065 = vmatprep.subr.bf16.mxu0 0
      %1066 = vmatpush1.bf16.msra.mxu0 0
      %1067 = vmatprep.subr.bf16.mxu0 0
      %1068 = vmatpush1.bf16.msra.mxu0 0
      %1069 = vmatprep.subr.bf16.mxu0 0
      %1070 = vmatpush1.bf16.msra.mxu0 0
      %1071 = vmatprep.subr.bf16.mxu0 0
      %1072 = vmatpush1.bf16.msra.mxu0 0
      %1073 = vmatprep.subr.bf16.mxu0 0
      %1074 = vmatpush1.bf16.msra.mxu0 0
      %1075 = vmatprep.subr.bf16.mxu0 0
      %1076 = vmatpush1.bf16.msra.mxu0 0
      %1077 = vmatprep.subr.bf16.mxu0 0
      %1078 = vmatpush1.bf16.msra.mxu0 0
      %1079 = vmatprep.subr.bf16.mxu0 0
      %1080 = vmatpush1.bf16.msra.mxu0 0
      %1081 = vmatprep.mubr.bf16.mxu0 0
      %1082 = vmatmul.mubr.bf16.gmra.mrb[0].mxu0 %v657
      %v1083 = vpop.f32.mrb[0].mxu0
      %v1084 = vadd.f32 %v1047, %v1083
      %v1085 = vpop.f32.mrb[0].mxu0
      %v1086 = vpop.f32.mrb[0].mxu0
      %v1087 = vpop.f32.mrb[0].mxu0
      %1088 = vdwg.mxu0
      %v1089 = vpack.c.bf16 %v974, %v974
      %v1090 = vpack.c.bf16 %v1029, %v1029
      %v1092 = vsel %vm811, %v1089, 0
      %v1095 = vsel %vm811, %v1090, 0
      %1097 = vmatprep.subr.bf16.mxu0 0
      %1098 = vmatpush1.bf16.xpose.msra.mxu0 %v1095
      %1099 = vmatprep.subr.bf16.mxu0 0
      %1100 = vmatpush1.bf16.xpose.msra.mxu0 0
      %1101 = vmatprep.subr.bf16.mxu0 0
      %1102 = vmatpush1.bf16.xpose.msra.mxu0 0
      %1103 = vmatprep.subr.bf16.mxu0 0
      %1104 = vmatpush1.bf16.xpose.msra.mxu0 0
      %1105 = vmatprep.subr.bf16.mxu0 0
      %1106 = vmatpush1.bf16.xpose.msra.mxu0 0
      %1107 = vmatprep.subr.bf16.mxu0 0
      %1108 = vmatpush1.bf16.xpose.msra.mxu0 0
      %1109 = vmatprep.subr.bf16.mxu0 0
      %1110 = vmatpush1.bf16.xpose.msra.mxu0 0
      %1111 = vmatprep.subr.bf16.mxu0 0
      %1112 = vmatpush1.bf16.xpose.msra.mxu0 0
      %1113 = vmatprep.subr.bf16.mxu0 0
      %1114 = vmatpush1.bf16.xpose.msra.mxu0 0
      %1115 = vmatprep.subr.bf16.mxu0 0
      %1116 = vmatpush1.bf16.xpose.msra.mxu0 0
      %1117 = vmatprep.subr.bf16.mxu0 0
      %1118 = vmatpush1.bf16.xpose.msra.mxu0 0
      %1119 = vmatprep.subr.bf16.mxu0 0
      %1120 = vmatpush1.bf16.xpose.msra.mxu0 0
      %1121 = vmatprep.subr.bf16.mxu0 0
      %1122 = vmatpush1.bf16.xpose.msra.mxu0 0
      %1123 = vmatprep.subr.bf16.mxu0 0
      %1124 = vmatpush1.bf16.xpose.msra.mxu0 0
      %1125 = vmatprep.subr.bf16.mxu0 0
      %1126 = vmatpush1.bf16.xpose.msra.mxu0 0
      %1127 = vmatprep.subr.bf16.mxu0 0
      %1128 = vmatpush1.bf16.xpose.msra.mxu0 0
      %1129 = vmatprep.mubr.bf16.mxu0 0
      %1130 = vmatmul.mubr.bf16.gmra.mrb[0].mxu0 %v1092
      %v1131 = vpop.f32.mrb[0].mxu0
      %v1132 = vadd.f32 0.0, %v1131
      %v1133 = vpop.f32.mrb[0].mxu0
      %v1134 = vpop.f32.mrb[0].mxu0
      %v1135 = vpop.f32.mrb[0].mxu0
      %1136 = vdwg.mxu0
      %v1137 = vmul.f32 %v1132, 0.35355338
      %v1138 = vsel %vm859, %v1137, -inf
      %1139 = vmax.xlane.f32.xlu0 %v1138
      %v1140 = vpop.xlane.xlu0 %1139
      %v1141 = vsub.f32 %v1137, %v1140
      %v1142 = vmul.f32 %v1141, 1.442695
      %v1143 = vpow.pop %v1142
      %v1144 = vsel %vm859, %v1143, 0.0
      %1145 = vadd.xlane.f32.xlu0 %v1144
      %v1146 = vpop.xlane.xlu0 %1145
      %v1147 = vrcp.pop %v1146
      %v1148 = vmul.f32 %v1143, %v1147
      %v1149 = vpack.c.bf16 %v1148, %v1148
      %v1150 = vpack.c.bf16 %v1084, %v1084
      %v1152 = vsel %vm873, %v1149, 0
      %v1155 = vsel %vm877, %v1150, 0
      %1157 = vmatprep.subr.bf16.mxu0 0
      %1158 = vmatpush1.bf16.msra.mxu0 %v1155
      %1159 = vmatprep.subr.bf16.mxu0 0
      %1160 = vmatpush1.bf16.msra.mxu0 0
      %1161 = vmatprep.subr.bf16.mxu0 0
      %1162 = vmatpush1.bf16.msra.mxu0 0
      %1163 = vmatprep.subr.bf16.mxu0 0
      %1164 = vmatpush1.bf16.msra.mxu0 0
      %1165 = vmatprep.subr.bf16.mxu0 0
      %1166 = vmatpush1.bf16.msra.mxu0 0
      %1167 = vmatprep.subr.bf16.mxu0 0
      %1168 = vmatpush1.bf16.msra.mxu0 0
      %1169 = vmatprep.subr.bf16.mxu0 0
      %1170 = vmatpush1.bf16.msra.mxu0 0
      %1171 = vmatprep.subr.bf16.mxu0 0
      %1172 = vmatpush1.bf16.msra.mxu0 0
      %1173 = vmatprep.subr.bf16.mxu0 0
      %1174 = vmatpush1.bf16.msra.mxu0 0
      %1175 = vmatprep.subr.bf16.mxu0 0
      %1176 = vmatpush1.bf16.msra.mxu0 0
      %1177 = vmatprep.subr.bf16.mxu0 0
      %1178 = vmatpush1.bf16.msra.mxu0 0
      %1179 = vmatprep.subr.bf16.mxu0 0
      %1180 = vmatpush1.bf16.msra.mxu0 0
      %1181 = vmatprep.subr.bf16.mxu0 0
      %1182 = vmatpush1.bf16.msra.mxu0 0
      %1183 = vmatprep.subr.bf16.mxu0 0
      %1184 = vmatpush1.bf16.msra.mxu0 0
      %1185 = vmatprep.subr.bf16.mxu0 0
      %1186 = vmatpush1.bf16.msra.mxu0 0
      %1187 = vmatprep.subr.bf16.mxu0 0
      %1188 = vmatpush1.bf16.msra.mxu0 0
      %1189 = vmatprep.mubr.bf16.mxu0 0
      %1190 = vmatmul.mubr.bf16.gmra.mrb[0].mxu0 %v1152
      %v1191 = vpop.f32.mrb[0].mxu0
      %v1192 = vadd.f32 0.0, %v1191
      %v1193 = vpop.f32.mrb[0].mxu0
      %v1194 = vpop.f32.mrb[0].mxu0
      %v1195 = vpop.f32.mrb[0].mxu0
      %1196 = vdwg.mxu0
      %s1197 = scalar_lea.vmem %s7, 8
      %v1198 = vld [vmem:[%s1197] sm:$0xff]
      %v1199 = vpack.c.bf16 %v1192, %v1192
      %v1200 = vpack.c.bf16 %v1198, %v1198
      %v1202 = vsel %vm811, %v1199, 0
      %vm1204 = vcmask 1043456
      %v1206 = vsel %vm1204, %v1200, 0
      %1208 = vmatprep.subr.bf16.mxu0 0
      %1209 = vmatpush1.bf16.msra.mxu0 %v1206
      %1210 = vmatprep.subr.bf16.mxu0 0
      %1211 = vmatpush1.bf16.msra.mxu0 0
      %1212 = vmatprep.subr.bf16.mxu0 0
      %1213 = vmatpush1.bf16.msra.mxu0 0
      %1214 = vmatprep.subr.bf16.mxu0 0
      %1215 = vmatpush1.bf16.msra.mxu0 0
      %1216 = vmatprep.subr.bf16.mxu0 0
      %1217 = vmatpush1.bf16.msra.mxu0 0
      %1218 = vmatprep.subr.bf16.mxu0 0
      %1219 = vmatpush1.bf16.msra.mxu0 0
      %1220 = vmatprep.subr.bf16.mxu0 0
      %1221 = vmatpush1.bf16.msra.mxu0 0
      %1222 = vmatprep.subr.bf16.mxu0 0
      %1223 = vmatpush1.bf16.msra.mxu0 0
      %1224 = vmatprep.subr.bf16.mxu0 0
      %1225 = vmatpush1.bf16.msra.mxu0 0
      %1226 = vmatprep.subr.bf16.mxu0 0
      %1227 = vmatpush1.bf16.msra.mxu0 0
      %1228 = vmatprep.subr.bf16.mxu0 0
      %1229 = vmatpush1.bf16.msra.mxu0 0
      %1230 = vmatprep.subr.bf16.mxu0 0
      %1231 = vmatpush1.bf16.msra.mxu0 0
      %1232 = vmatprep.subr.bf16.mxu0 0
      %1233 = vmatpush1.bf16.msra.mxu0 0
      %1234 = vmatprep.subr.bf16.mxu0 0
      %1235 = vmatpush1.bf16.msra.mxu0 0
      %1236 = vmatprep.subr.bf16.mxu0 0
      %1237 = vmatpush1.bf16.msra.mxu0 0
      %1238 = vmatprep.subr.bf16.mxu0 0
      %1239 = vmatpush1.bf16.msra.mxu0 0
      %1240 = vmatprep.mubr.bf16.mxu0 0
      %1241 = vmatmul.mubr.bf16.gmra.mrb[0].mxu0 %v1202
      %v1242 = vpop.f32.mrb[0].mxu0
      %v1243 = vadd.f32 0.0, %v1242
      %v1244 = vpop.f32.mrb[0].mxu0
      %v1245 = vpop.f32.mrb[0].mxu0
      %v1246 = vpop.f32.mrb[0].mxu0
      %1247 = vdwg.mxu0
      %v1249 = vsel %vm811, %v922, 0
      %v1252 = vsel %vm1204, %v923, 0
      %1254 = vmatprep.subr.bf16.mxu0 0
      %1255 = vmatpush1.bf16.msra.mxu0 %v1252
      %1256 = vmatprep.subr.bf16.mxu0 0
      %1257 = vmatpush1.bf16.msra.mxu0 0
      %1258 = vmatprep.subr.bf16.mxu0 0
      %1259 = vmatpush1.bf16.msra.mxu0 0
      %1260 = vmatprep.subr.bf16.mxu0 0
      %1261 = vmatpush1.bf16.msra.mxu0 0
      %1262 = vmatprep.subr.bf16.mxu0 0
      %1263 = vmatpush1.bf16.msra.mxu0 0
      %1264 = vmatprep.subr.bf16.mxu0 0
      %1265 = vmatpush1.bf16.msra.mxu0 0
      %1266 = vmatprep.subr.bf16.mxu0 0
      %1267 = vmatpush1.bf16.msra.mxu0 0
      %1268 = vmatprep.subr.bf16.mxu0 0
      %1269 = vmatpush1.bf16.msra.mxu0 0
      %1270 = vmatprep.subr.bf16.mxu0 0
      %1271 = vmatpush1.bf16.msra.mxu0 0
      %1272 = vmatprep.subr.bf16.mxu0 0
      %1273 = vmatpush1.bf16.msra.mxu0 0
      %1274 = vmatprep.subr.bf16.mxu0 0
      %1275 = vmatpush1.bf16.msra.mxu0 0
      %1276 = vmatprep.subr.bf16.mxu0 0
      %1277 = vmatpush1.bf16.msra.mxu0 0
      %1278 = vmatprep.subr.bf16.mxu0 0
      %1279 = vmatpush1.bf16.msra.mxu0 0
      %1280 = vmatprep.subr.bf16.mxu0 0
      %1281 = vmatpush1.bf16.msra.mxu0 0
      %1282 = vmatprep.subr.bf16.mxu0 0
      %1283 = vmatpush1.bf16.msra.mxu0 0
      %1284 = vmatprep.subr.bf16.mxu0 0
      %1285 = vmatpush1.bf16.msra.mxu0 0
      %1286 = vmatprep.mubr.bf16.mxu0 0
      %1287 = vmatmul.mubr.bf16.gmra.mrb[0].mxu0 %v1249
      %v1288 = vpop.f32.mrb[0].mxu0
      %v1289 = vadd.f32 %v1243, %v1288
      %v1290 = vpop.f32.mrb[0].mxu0
      %v1291 = vpop.f32.mrb[0].mxu0
      %v1292 = vpop.f32.mrb[0].mxu0
      %1293 = vdwg.mxu0
      %s1294 = scalar_lea.vmem %s5, 64
      %v1295 = vld [vmem:[%s1294] sm:$0xff]
      %v1296 = vld [vmem:[%s1294 + $0x8] sm:$0xff]
      %v1297 = vld [vmem:[%s1294 + $0x10] sm:$0xff]
      %v1298 = vld [vmem:[%s1294 + $0x18] sm:$0xff]
      %v1299 = vpack.c.bf16 %v1296, %v1295
      %v1300 = vpack.c.bf16 %v1298, %v1297
      %s1301 = scalar_lea.vmem %s6, 2
      %v1302 = vld [vmem:[%s1301] sm:$0x1]
      %v1304 = vlaneseq
      %v1305 = vshrl.u32 %v1304, 7
      %v1306 = vsub.s32 0, %v1305
      %v1307 = vrot.slane %v1302, %v1306
      %1309 = vmatprep.subr.bf16.mxu0 0
      %1310 = vmatpush1.bf16.msra.mxu0 %v1299
      %1311 = vmatprep.subr.bf16.mxu0 0
      %1312 = vmatpush1.bf16.msra.mxu0 %v1300
      %1313 = vmatprep.subr.bf16.mxu0 0
      %1314 = vmatpush1.bf16.msra.mxu0 0
      %1315 = vmatprep.subr.bf16.mxu0 0
      %1316 = vmatpush1.bf16.msra.mxu0 0
      %1317 = vmatprep.subr.bf16.mxu0 0
      %1318 = vmatpush1.bf16.msra.mxu0 0
      %1319 = vmatprep.subr.bf16.mxu0 0
      %1320 = vmatpush1.bf16.msra.mxu0 0
      %1321 = vmatprep.subr.bf16.mxu0 0
      %1322 = vmatpush1.bf16.msra.mxu0 0
      %1323 = vmatprep.subr.bf16.mxu0 0
      %1324 = vmatpush1.bf16.msra.mxu0 0
      %1325 = vmatprep.subr.bf16.mxu0 0
      %1326 = vmatpush1.bf16.msra.mxu0 0
      %1327 = vmatprep.subr.bf16.mxu0 0
      %1328 = vmatpush1.bf16.msra.mxu0 0
      %1329 = vmatprep.subr.bf16.mxu0 0
      %1330 = vmatpush1.bf16.msra.mxu0 0
      %1331 = vmatprep.subr.bf16.mxu0 0
      %1332 = vmatpush1.bf16.msra.mxu0 0
      %1333 = vmatprep.subr.bf16.mxu0 0
      %1334 = vmatpush1.bf16.msra.mxu0 0
      %1335 = vmatprep.subr.bf16.mxu0 0
      %1336 = vmatpush1.bf16.msra.mxu0 0
      %1337 = vmatprep.subr.bf16.mxu0 0
      %1338 = vmatpush1.bf16.msra.mxu0 0
      %1339 = vmatprep.subr.bf16.mxu0 0
      %1340 = vmatpush1.bf16.msra.mxu0 0
      %1341 = vmatprep.mubr.bf16.mxu0 0
      %1342 = vmatmul.mubr.bf16.gmra.mrb[0].mxu0 %v657
      %v1343 = vpop.f32.mrb[0].mxu0
      %v1344 = vadd.f32 %v1307, %v1343
      %v1345 = vpop.f32.mrb[0].mxu0
      %v1346 = vpop.f32.mrb[0].mxu0
      %v1347 = vpop.f32.mrb[0].mxu0
      %1348 = vdwg.mxu0
      %s1349 = scalar_lea.vmem %s5, 192
      %v1350 = vld [vmem:[%s1349] sm:$0xff]
      %v1351 = vld [vmem:[%s1349 + $0x8] sm:$0xff]
      %v1352 = vld [vmem:[%s1349 + $0x10] sm:$0xff]
      %v1353 = vld [vmem:[%s1349 + $0x18] sm:$0xff]
      %v1354 = vpack.c.bf16 %v1351, %v1350
      %v1355 = vpack.c.bf16 %v1353, %v1352
      %s1356 = scalar_lea.vmem %s6, 6
      %v1357 = vld [vmem:[%s1356] sm:$0x1]
      %v1359 = vlaneseq
      %v1360 = vshrl.u32 %v1359, 7
      %v1361 = vsub.s32 0, %v1360
      %v1362 = vrot.slane %v1357, %v1361
      %1364 = vmatprep.subr.bf16.mxu0 0
      %1365 = vmatpush1.bf16.msra.mxu0 %v1354
      %1366 = vmatprep.subr.bf16.mxu0 0
      %1367 = vmatpush1.bf16.msra.mxu0 %v1355
      %1368 = vmatprep.subr.bf16.mxu0 0
      %1369 = vmatpush1.bf16.msra.mxu0 0
      %1370 = vmatprep.subr.bf16.mxu0 0
      %1371 = vmatpush1.bf16.msra.mxu0 0
      %1372 = vmatprep.subr.bf16.mxu0 0
      %1373 = vmatpush1.bf16.msra.mxu0 0
      %1374 = vmatprep.subr.bf16.mxu0 0
      %1375 = vmatpush1.bf16.msra.mxu0 0
      %1376 = vmatprep.subr.bf16.mxu0 0
      %1377 = vmatpush1.bf16.msra.mxu0 0
      %1378 = vmatprep.subr.bf16.mxu0 0
      %1379 = vmatpush1.bf16.msra.mxu0 0
      %1380 = vmatprep.subr.bf16.mxu0 0
      %1381 = vmatpush1.bf16.msra.mxu0 0
      %1382 = vmatprep.subr.bf16.mxu0 0
      %1383 = vmatpush1.bf16.msra.mxu0 0
      %1384 = vmatprep.subr.bf16.mxu0 0
      %1385 = vmatpush1.bf16.msra.mxu0 0
      %1386 = vmatprep.subr.bf16.mxu0 0
      %1387 = vmatpush1.bf16.msra.mxu0 0
      %1388 = vmatprep.subr.bf16.mxu0 0
      %1389 = vmatpush1.bf16.msra.mxu0 0
      %1390 = vmatprep.subr.bf16.mxu0 0
      %1391 = vmatpush1.bf16.msra.mxu0 0
      %1392 = vmatprep.subr.bf16.mxu0 0
      %1393 = vmatpush1.bf16.msra.mxu0 0
      %1394 = vmatprep.subr.bf16.mxu0 0
      %1395 = vmatpush1.bf16.msra.mxu0 0
      %1396 = vmatprep.mubr.bf16.mxu0 0
      %1397 = vmatmul.mubr.bf16.gmra.mrb[0].mxu0 %v657
      %v1398 = vpop.f32.mrb[0].mxu0
      %v1399 = vadd.f32 %v1362, %v1398
      %v1400 = vpop.f32.mrb[0].mxu0
      %v1401 = vpop.f32.mrb[0].mxu0
      %v1402 = vpop.f32.mrb[0].mxu0
      %1403 = vdwg.mxu0
      %s1404 = scalar_lea.vmem %s5, 320
      %v1405 = vld [vmem:[%s1404] sm:$0xff]
      %v1406 = vld [vmem:[%s1404 + $0x8] sm:$0xff]
      %v1407 = vld [vmem:[%s1404 + $0x10] sm:$0xff]
      %v1408 = vld [vmem:[%s1404 + $0x18] sm:$0xff]
      %v1409 = vpack.c.bf16 %v1406, %v1405
      %v1410 = vpack.c.bf16 %v1408, %v1407
      %s1411 = scalar_lea.vmem %s6, 10
      %v1412 = vld [vmem:[%s1411] sm:$0x1]
      %v1414 = vlaneseq
      %v1415 = vshrl.u32 %v1414, 7
      %v1416 = vsub.s32 0, %v1415
      %v1417 = vrot.slane %v1412, %v1416
      %1419 = vmatprep.subr.bf16.mxu0 0
      %1420 = vmatpush1.bf16.msra.mxu0 %v1409
      %1421 = vmatprep.subr.bf16.mxu0 0
      %1422 = vmatpush1.bf16.msra.mxu0 %v1410
      %1423 = vmatprep.subr.bf16.mxu0 0
      %1424 = vmatpush1.bf16.msra.mxu0 0
      %1425 = vmatprep.subr.bf16.mxu0 0
      %1426 = vmatpush1.bf16.msra.mxu0 0
      %1427 = vmatprep.subr.bf16.mxu0 0
      %1428 = vmatpush1.bf16.msra.mxu0 0
      %1429 = vmatprep.subr.bf16.mxu0 0
      %1430 = vmatpush1.bf16.msra.mxu0 0
      %1431 = vmatprep.subr.bf16.mxu0 0
      %1432 = vmatpush1.bf16.msra.mxu0 0
      %1433 = vmatprep.subr.bf16.mxu0 0
      %1434 = vmatpush1.bf16.msra.mxu0 0
      %1435 = vmatprep.subr.bf16.mxu0 0
      %1436 = vmatpush1.bf16.msra.mxu0 0
      %1437 = vmatprep.subr.bf16.mxu0 0
      %1438 = vmatpush1.bf16.msra.mxu0 0
      %1439 = vmatprep.subr.bf16.mxu0 0
      %1440 = vmatpush1.bf16.msra.mxu0 0
      %1441 = vmatprep.subr.bf16.mxu0 0
      %1442 = vmatpush1.bf16.msra.mxu0 0
      %1443 = vmatprep.subr.bf16.mxu0 0
      %1444 = vmatpush1.bf16.msra.mxu0 0
      %1445 = vmatprep.subr.bf16.mxu0 0
      %1446 = vmatpush1.bf16.msra.mxu0 0
      %1447 = vmatprep.subr.bf16.mxu0 0
      %1448 = vmatpush1.bf16.msra.mxu0 0
      %1449 = vmatprep.subr.bf16.mxu0 0
      %1450 = vmatpush1.bf16.msra.mxu0 0
      %1451 = vmatprep.mubr.bf16.mxu0 0
      %1452 = vmatmul.mubr.bf16.gmra.mrb[0].mxu0 %v657
      %v1453 = vpop.f32.mrb[0].mxu0
      %v1454 = vadd.f32 %v1417, %v1453
      %v1455 = vpop.f32.mrb[0].mxu0
      %v1456 = vpop.f32.mrb[0].mxu0
      %v1457 = vpop.f32.mrb[0].mxu0
      %1458 = vdwg.mxu0
      %v1459 = vpack.c.bf16 %v1344, %v1344
      %v1460 = vpack.c.bf16 %v1399, %v1399
      %v1462 = vsel %vm811, %v1459, 0
      %v1465 = vsel %vm811, %v1460, 0
      %1467 = vmatprep.subr.bf16.mxu0 0
      %1468 = vmatpush1.bf16.xpose.msra.mxu0 %v1465
      %1469 = vmatprep.subr.bf16.mxu0 0
      %1470 = vmatpush1.bf16.xpose.msra.mxu0 0
      %1471 = vmatprep.subr.bf16.mxu0 0
      %1472 = vmatpush1.bf16.xpose.msra.mxu0 0
      %1473 = vmatprep.subr.bf16.mxu0 0
      %1474 = vmatpush1.bf16.xpose.msra.mxu0 0
      %1475 = vmatprep.subr.bf16.mxu0 0
      %1476 = vmatpush1.bf16.xpose.msra.mxu0 0
      %1477 = vmatprep.subr.bf16.mxu0 0
      %1478 = vmatpush1.bf16.xpose.msra.mxu0 0
      %1479 = vmatprep.subr.bf16.mxu0 0
      %1480 = vmatpush1.bf16.xpose.msra.mxu0 0
      %1481 = vmatprep.subr.bf16.mxu0 0
      %1482 = vmatpush1.bf16.xpose.msra.mxu0 0
      %1483 = vmatprep.subr.bf16.mxu0 0
      %1484 = vmatpush1.bf16.xpose.msra.mxu0 0
      %1485 = vmatprep.subr.bf16.mxu0 0
      %1486 = vmatpush1.bf16.xpose.msra.mxu0 0
      %1487 = vmatprep.subr.bf16.mxu0 0
      %1488 = vmatpush1.bf16.xpose.msra.mxu0 0
      %1489 = vmatprep.subr.bf16.mxu0 0
      %1490 = vmatpush1.bf16.xpose.msra.mxu0 0
      %1491 = vmatprep.subr.bf16.mxu0 0
      %1492 = vmatpush1.bf16.xpose.msra.mxu0 0
      %1493 = vmatprep.subr.bf16.mxu0 0
      %1494 = vmatpush1.bf16.xpose.msra.mxu0 0
      %1495 = vmatprep.subr.bf16.mxu0 0
      %1496 = vmatpush1.bf16.xpose.msra.mxu0 0
      %1497 = vmatprep.subr.bf16.mxu0 0
      %1498 = vmatpush1.bf16.xpose.msra.mxu0 0
      %1499 = vmatprep.mubr.bf16.mxu0 0
      %1500 = vmatmul.mubr.bf16.gmra.mrb[0].mxu0 %v1462
      %v1501 = vpop.f32.mrb[0].mxu0
      %v1502 = vadd.f32 0.0, %v1501
      %v1503 = vpop.f32.mrb[0].mxu0
      %v1504 = vpop.f32.mrb[0].mxu0
      %v1505 = vpop.f32.mrb[0].mxu0
      %1506 = vdwg.mxu0
      %v1507 = vmul.f32 %v1502, 0.35355338
      %v1508 = vsel %vm859, %v1507, -inf
      %1509 = vmax.xlane.f32.xlu0 %v1508
      %v1510 = vpop.xlane.xlu0 %1509
      %v1511 = vsub.f32 %v1507, %v1510
      %v1512 = vmul.f32 %v1511, 1.442695
      %v1513 = vpow.pop %v1512
      %v1514 = vsel %vm859, %v1513, 0.0
      %1515 = vadd.xlane.f32.xlu0 %v1514
      %v1516 = vpop.xlane.xlu0 %1515
      %v1517 = vrcp.pop %v1516
      %v1518 = vmul.f32 %v1513, %v1517
      %v1519 = vpack.c.bf16 %v1518, %v1518
      %v1520 = vpack.c.bf16 %v1454, %v1454
      %v1522 = vsel %vm873, %v1519, 0
      %v1525 = vsel %vm877, %v1520, 0
      %1527 = vmatprep.subr.bf16.mxu0 0
      %1528 = vmatpush1.bf16.msra.mxu0 %v1525
      %1529 = vmatprep.subr.bf16.mxu0 0
      %1530 = vmatpush1.bf16.msra.mxu0 0
      %1531 = vmatprep.subr.bf16.mxu0 0
      %1532 = vmatpush1.bf16.msra.mxu0 0
      %1533 = vmatprep.subr.bf16.mxu0 0
      %1534 = vmatpush1.bf16.msra.mxu0 0
      %1535 = vmatprep.subr.bf16.mxu0 0
      %1536 = vmatpush1.bf16.msra.mxu0 0
      %1537 = vmatprep.subr.bf16.mxu0 0
      %1538 = vmatpush1.bf16.msra.mxu0 0
      %1539 = vmatprep.subr.bf16.mxu0 0
      %1540 = vmatpush1.bf16.msra.mxu0 0
      %1541 = vmatprep.subr.bf16.mxu0 0
      %1542 = vmatpush1.bf16.msra.mxu0 0
      %1543 = vmatprep.subr.bf16.mxu0 0
      %1544 = vmatpush1.bf16.msra.mxu0 0
      %1545 = vmatprep.subr.bf16.mxu0 0
      %1546 = vmatpush1.bf16.msra.mxu0 0
      %1547 = vmatprep.subr.bf16.mxu0 0
      %1548 = vmatpush1.bf16.msra.mxu0 0
      %1549 = vmatprep.subr.bf16.mxu0 0
      %1550 = vmatpush1.bf16.msra.mxu0 0
      %1551 = vmatprep.subr.bf16.mxu0 0
      %1552 = vmatpush1.bf16.msra.mxu0 0
      %1553 = vmatprep.subr.bf16.mxu0 0
      %1554 = vmatpush1.bf16.msra.mxu0 0
      %1555 = vmatprep.subr.bf16.mxu0 0
      %1556 = vmatpush1.bf16.msra.mxu0 0
      %1557 = vmatprep.subr.bf16.mxu0 0
      %1558 = vmatpush1.bf16.msra.mxu0 0
      %1559 = vmatprep.mubr.bf16.mxu0 0
      %1560 = vmatmul.mubr.bf16.gmra.mrb[0].mxu0 %v1522
      %v1561 = vpop.f32.mrb[0].mxu0
      %v1562 = vadd.f32 0.0, %v1561
      %v1563 = vpop.f32.mrb[0].mxu0
      %v1564 = vpop.f32.mrb[0].mxu0
      %v1565 = vpop.f32.mrb[0].mxu0
      %1566 = vdwg.mxu0
      %s1567 = scalar_lea.vmem %s7, 16
      %v1568 = vld [vmem:[%s1567] sm:$0xff]
      %v1569 = vpack.c.bf16 %v1562, %v1562
      %v1570 = vpack.c.bf16 %v1568, %v1568
      %v1572 = vsel %vm811, %v1569, 0
      %v1575 = vsel %vm1204, %v1570, 0
      %1577 = vmatprep.subr.bf16.mxu0 0
      %1578 = vmatpush1.bf16.msra.mxu0 %v1575
      %1579 = vmatprep.subr.bf16.mxu0 0
      %1580 = vmatpush1.bf16.msra.mxu0 0
      %1581 = vmatprep.subr.bf16.mxu0 0
      %1582 = vmatpush1.bf16.msra.mxu0 0
      %1583 = vmatprep.subr.bf16.mxu0 0
      %1584 = vmatpush1.bf16.msra.mxu0 0
      %1585 = vmatprep.subr.bf16.mxu0 0
      %1586 = vmatpush1.bf16.msra.mxu0 0
      %1587 = vmatprep.subr.bf16.mxu0 0
      %1588 = vmatpush1.bf16.msra.mxu0 0
      %1589 = vmatprep.subr.bf16.mxu0 0
      %1590 = vmatpush1.bf16.msra.mxu0 0
      %1591 = vmatprep.subr.bf16.mxu0 0
      %1592 = vmatpush1.bf16.msra.mxu0 0
      %1593 = vmatprep.subr.bf16.mxu0 0
      %1594 = vmatpush1.bf16.msra.mxu0 0
      %1595 = vmatprep.subr.bf16.mxu0 0
      %1596 = vmatpush1.bf16.msra.mxu0 0
      %1597 = vmatprep.subr.bf16.mxu0 0
      %1598 = vmatpush1.bf16.msra.mxu0 0
      %1599 = vmatprep.subr.bf16.mxu0 0
      %1600 = vmatpush1.bf16.msra.mxu0 0
      %1601 = vmatprep.subr.bf16.mxu0 0
      %1602 = vmatpush1.bf16.msra.mxu0 0
      %1603 = vmatprep.subr.bf16.mxu0 0
      %1604 = vmatpush1.bf16.msra.mxu0 0
      %1605 = vmatprep.subr.bf16.mxu0 0
      %1606 = vmatpush1.bf16.msra.mxu0 0
      %1607 = vmatprep.subr.bf16.mxu0 0
      %1608 = vmatpush1.bf16.msra.mxu0 0
      %1609 = vmatprep.mubr.bf16.mxu0 0
      %1610 = vmatmul.mubr.bf16.gmra.mrb[0].mxu0 %v1572
      %v1611 = vpop.f32.mrb[0].mxu0
      %v1612 = vadd.f32 0.0, %v1611
      %v1613 = vpop.f32.mrb[0].mxu0
      %v1614 = vpop.f32.mrb[0].mxu0
      %v1615 = vpop.f32.mrb[0].mxu0
      %1616 = vdwg.mxu0
      %v1617 = vadd.f32 %v1289, %v1612
      %s1618 = scalar_lea.vmem %s5, 96
      %v1619 = vld [vmem:[%s1618] sm:$0xff]
      %v1620 = vld [vmem:[%s1618 + $0x8] sm:$0xff]
      %v1621 = vld [vmem:[%s1618 + $0x10] sm:$0xff]
      %v1622 = vld [vmem:[%s1618 + $0x18] sm:$0xff]
      %v1623 = vpack.c.bf16 %v1620, %v1619
      %v1624 = vpack.c.bf16 %v1622, %v1621
      %s1625 = scalar_lea.vmem %s6, 3
      %v1626 = vld [vmem:[%s1625] sm:$0x1]
      %v1628 = vlaneseq
      %v1629 = vshrl.u32 %v1628, 7
      %v1630 = vsub.s32 0, %v1629
      %v1631 = vrot.slane %v1626, %v1630
      %1633 = vmatprep.subr.bf16.mxu0 0
      %1634 = vmatpush1.bf16.msra.mxu0 %v1623
      %1635 = vmatprep.subr.bf16.mxu0 0
      %1636 = vmatpush1.bf16.msra.mxu0 %v1624
      %1637 = vmatprep.subr.bf16.mxu0 0
      %1638 = vmatpush1.bf16.msra.mxu0 0
      %1639 = vmatprep.subr.bf16.mxu0 0
      %1640 = vmatpush1.bf16.msra.mxu0 0
      %1641 = vmatprep.subr.bf16.mxu0 0
      %1642 = vmatpush1.bf16.msra.mxu0 0
      %1643 = vmatprep.subr.bf16.mxu0 0
      %1644 = vmatpush1.bf16.msra.mxu0 0
      %1645 = vmatprep.subr.bf16.mxu0 0
      %1646 = vmatpush1.bf16.msra.mxu0 0
      %1647 = vmatprep.subr.bf16.mxu0 0
      %1648 = vmatpush1.bf16.msra.mxu0 0
      %1649 = vmatprep.subr.bf16.mxu0 0
      %1650 = vmatpush1.bf16.msra.mxu0 0
      %1651 = vmatprep.subr.bf16.mxu0 0
      %1652 = vmatpush1.bf16.msra.mxu0 0
      %1653 = vmatprep.subr.bf16.mxu0 0
      %1654 = vmatpush1.bf16.msra.mxu0 0
      %1655 = vmatprep.subr.bf16.mxu0 0
      %1656 = vmatpush1.bf16.msra.mxu0 0
      %1657 = vmatprep.subr.bf16.mxu0 0
      %1658 = vmatpush1.bf16.msra.mxu0 0
      %1659 = vmatprep.subr.bf16.mxu0 0
      %1660 = vmatpush1.bf16.msra.mxu0 0
      %1661 = vmatprep.subr.bf16.mxu0 0
      %1662 = vmatpush1.bf16.msra.mxu0 0
      %1663 = vmatprep.subr.bf16.mxu0 0
      %1664 = vmatpush1.bf16.msra.mxu0 0
      %1665 = vmatprep.mubr.bf16.mxu0 0
      %1666 = vmatmul.mubr.bf16.gmra.mrb[0].mxu0 %v657
      %v1667 = vpop.f32.mrb[0].mxu0
      %v1668 = vadd.f32 %v1631, %v1667
      %v1669 = vpop.f32.mrb[0].mxu0
      %v1670 = vpop.f32.mrb[0].mxu0
      %v1671 = vpop.f32.mrb[0].mxu0
      %1672 = vdwg.mxu0
      %s1673 = scalar_lea.vmem %s5, 224
      %v1674 = vld [vmem:[%s1673] sm:$0xff]
      %v1675 = vld [vmem:[%s1673 + $0x8] sm:$0xff]
      %v1676 = vld [vmem:[%s1673 + $0x10] sm:$0xff]
      %v1677 = vld [vmem:[%s1673 + $0x18] sm:$0xff]
      %v1678 = vpack.c.bf16 %v1675, %v1674
      %v1679 = vpack.c.bf16 %v1677, %v1676
      %s1680 = scalar_lea.vmem %s6, 7
      %v1681 = vld [vmem:[%s1680] sm:$0x1]
      %v1683 = vlaneseq
      %v1684 = vshrl.u32 %v1683, 7
      %v1685 = vsub.s32 0, %v1684
      %v1686 = vrot.slane %v1681, %v1685
      %1688 = vmatprep.subr.bf16.mxu0 0
      %1689 = vmatpush1.bf16.msra.mxu0 %v1678
      %1690 = vmatprep.subr.bf16.mxu0 0
      %1691 = vmatpush1.bf16.msra.mxu0 %v1679
      %1692 = vmatprep.subr.bf16.mxu0 0
      %1693 = vmatpush1.bf16.msra.mxu0 0
      %1694 = vmatprep.subr.bf16.mxu0 0
      %1695 = vmatpush1.bf16.msra.mxu0 0
      %1696 = vmatprep.subr.bf16.mxu0 0
      %1697 = vmatpush1.bf16.msra.mxu0 0
      %1698 = vmatprep.subr.bf16.mxu0 0
      %1699 = vmatpush1.bf16.msra.mxu0 0
      %1700 = vmatprep.subr.bf16.mxu0 0
      %1701 = vmatpush1.bf16.msra.mxu0 0
      %1702 = vmatprep.subr.bf16.mxu0 0
      %1703 = vmatpush1.bf16.msra.mxu0 0
      %1704 = vmatprep.subr.bf16.mxu0 0
      %1705 = vmatpush1.bf16.msra.mxu0 0
      %1706 = vmatprep.subr.bf16.mxu0 0
      %1707 = vmatpush1.bf16.msra.mxu0 0
      %1708 = vmatprep.subr.bf16.mxu0 0
      %1709 = vmatpush1.bf16.msra.mxu0 0
      %1710 = vmatprep.subr.bf16.mxu0 0
      %1711 = vmatpush1.bf16.msra.mxu0 0
      %1712 = vmatprep.subr.bf16.mxu0 0
      %1713 = vmatpush1.bf16.msra.mxu0 0
      %1714 = vmatprep.subr.bf16.mxu0 0
      %1715 = vmatpush1.bf16.msra.mxu0 0
      %1716 = vmatprep.subr.bf16.mxu0 0
      %1717 = vmatpush1.bf16.msra.mxu0 0
      %1718 = vmatprep.subr.bf16.mxu0 0
      %1719 = vmatpush1.bf16.msra.mxu0 0
      %1720 = vmatprep.mubr.bf16.mxu0 0
      %1721 = vmatmul.mubr.bf16.gmra.mrb[0].mxu0 %v657
      %v1722 = vpop.f32.mrb[0].mxu0
      %v1723 = vadd.f32 %v1686, %v1722
      %v1724 = vpop.f32.mrb[0].mxu0
      %v1725 = vpop.f32.mrb[0].mxu0
      %v1726 = vpop.f32.mrb[0].mxu0
      %1727 = vdwg.mxu0
      %s1728 = scalar_lea.vmem %s5, 352
      %v1729 = vld [vmem:[%s1728] sm:$0xff]
      %v1730 = vld [vmem:[%s1728 + $0x8] sm:$0xff]
      %v1731 = vld [vmem:[%s1728 + $0x10] sm:$0xff]
      %v1732 = vld [vmem:[%s1728 + $0x18] sm:$0xff]
      %v1733 = vpack.c.bf16 %v1730, %v1729
      %v1734 = vpack.c.bf16 %v1732, %v1731
      %s1735 = scalar_lea.vmem %s6, 11
      %v1736 = vld [vmem:[%s1735] sm:$0x1]
      %v1738 = vlaneseq
      %v1739 = vshrl.u32 %v1738, 7
      %v1740 = vsub.s32 0, %v1739
      %v1741 = vrot.slane %v1736, %v1740
      %1743 = vmatprep.subr.bf16.mxu0 0
      %1744 = vmatpush1.bf16.msra.mxu0 %v1733
      %1745 = vmatprep.subr.bf16.mxu0 0
      %1746 = vmatpush1.bf16.msra.mxu0 %v1734
      %1747 = vmatprep.subr.bf16.mxu0 0
      %1748 = vmatpush1.bf16.msra.mxu0 0
      %1749 = vmatprep.subr.bf16.mxu0 0
      %1750 = vmatpush1.bf16.msra.mxu0 0
      %1751 = vmatprep.subr.bf16.mxu0 0
      %1752 = vmatpush1.bf16.msra.mxu0 0
      %1753 = vmatprep.subr.bf16.mxu0 0
      %1754 = vmatpush1.bf16.msra.mxu0 0
      %1755 = vmatprep.subr.bf16.mxu0 0
      %1756 = vmatpush1.bf16.msra.mxu0 0
      %1757 = vmatprep.subr.bf16.mxu0 0
      %1758 = vmatpush1.bf16.msra.mxu0 0
      %1759 = vmatprep.subr.bf16.mxu0 0
      %1760 = vmatpush1.bf16.msra.mxu0 0
      %1761 = vmatprep.subr.bf16.mxu0 0
      %1762 = vmatpush1.bf16.msra.mxu0 0
      %1763 = vmatprep.subr.bf16.mxu0 0
      %1764 = vmatpush1.bf16.msra.mxu0 0
      %1765 = vmatprep.subr.bf16.mxu0 0
      %1766 = vmatpush1.bf16.msra.mxu0 0
      %1767 = vmatprep.subr.bf16.mxu0 0
      %1768 = vmatpush1.bf16.msra.mxu0 0
      %1769 = vmatprep.subr.bf16.mxu0 0
      %1770 = vmatpush1.bf16.msra.mxu0 0
      %1771 = vmatprep.subr.bf16.mxu0 0
      %1772 = vmatpush1.bf16.msra.mxu0 0
      %1773 = vmatprep.subr.bf16.mxu0 0
      %1774 = vmatpush1.bf16.msra.mxu0 0
      %1775 = vmatprep.mubr.bf16.mxu0 0
      %1776 = vmatmul.mubr.bf16.gmra.mrb[0].mxu0 %v657
      %v1777 = vpop.f32.mrb[0].mxu0
      %v1778 = vadd.f32 %v1741, %v1777
      %v1779 = vpop.f32.mrb[0].mxu0
      %v1780 = vpop.f32.mrb[0].mxu0
      %v1781 = vpop.f32.mrb[0].mxu0
      %1782 = vdwg.mxu0
      %v1783 = vpack.c.bf16 %v1668, %v1668
      %v1784 = vpack.c.bf16 %v1723, %v1723
      %v1786 = vsel %vm811, %v1783, 0
      %v1789 = vsel %vm811, %v1784, 0
      %1791 = vmatprep.subr.bf16.mxu0 0
      %1792 = vmatpush1.bf16.xpose.msra.mxu0 %v1789
      %1793 = vmatprep.subr.bf16.mxu0 0
      %1794 = vmatpush1.bf16.xpose.msra.mxu0 0
      %1795 = vmatprep.subr.bf16.mxu0 0
      %1796 = vmatpush1.bf16.xpose.msra.mxu0 0
      %1797 = vmatprep.subr.bf16.mxu0 0
      %1798 = vmatpush1.bf16.xpose.msra.mxu0 0
      %1799 = vmatprep.subr.bf16.mxu0 0
      %1800 = vmatpush1.bf16.xpose.msra.mxu0 0
      %1801 = vmatprep.subr.bf16.mxu0 0
      %1802 = vmatpush1.bf16.xpose.msra.mxu0 0
      %1803 = vmatprep.subr.bf16.mxu0 0
      %1804 = vmatpush1.bf16.xpose.msra.mxu0 0
      %1805 = vmatprep.subr.bf16.mxu0 0
      %1806 = vmatpush1.bf16.xpose.msra.mxu0 0
      %1807 = vmatprep.subr.bf16.mxu0 0
      %1808 = vmatpush1.bf16.xpose.msra.mxu0 0
      %1809 = vmatprep.subr.bf16.mxu0 0
      %1810 = vmatpush1.bf16.xpose.msra.mxu0 0
      %1811 = vmatprep.subr.bf16.mxu0 0
      %1812 = vmatpush1.bf16.xpose.msra.mxu0 0
      %1813 = vmatprep.subr.bf16.mxu0 0
      %1814 = vmatpush1.bf16.xpose.msra.mxu0 0
      %1815 = vmatprep.subr.bf16.mxu0 0
      %1816 = vmatpush1.bf16.xpose.msra.mxu0 0
      %1817 = vmatprep.subr.bf16.mxu0 0
      %1818 = vmatpush1.bf16.xpose.msra.mxu0 0
      %1819 = vmatprep.subr.bf16.mxu0 0
      %1820 = vmatpush1.bf16.xpose.msra.mxu0 0
      %1821 = vmatprep.subr.bf16.mxu0 0
      %1822 = vmatpush1.bf16.xpose.msra.mxu0 0
      %1823 = vmatprep.mubr.bf16.mxu0 0
      %1824 = vmatmul.mubr.bf16.gmra.mrb[0].mxu0 %v1786
      %v1825 = vpop.f32.mrb[0].mxu0
      %v1826 = vadd.f32 0.0, %v1825
      %v1827 = vpop.f32.mrb[0].mxu0
      %v1828 = vpop.f32.mrb[0].mxu0
      %v1829 = vpop.f32.mrb[0].mxu0
      %1830 = vdwg.mxu0
      %v1831 = vmul.f32 %v1826, 0.35355338
      %v1832 = vsel %vm859, %v1831, -inf
      %1833 = vmax.xlane.f32.xlu0 %v1832
      %v1834 = vpop.xlane.xlu0 %1833
      %v1835 = vsub.f32 %v1831, %v1834
      %v1836 = vmul.f32 %v1835, 1.442695
      %v1837 = vpow.pop %v1836
      %v1838 = vsel %vm859, %v1837, 0.0
      %1839 = vadd.xlane.f32.xlu0 %v1838
      %v1840 = vpop.xlane.xlu0 %1839
      %v1841 = vrcp.pop %v1840
      %v1842 = vmul.f32 %v1837, %v1841
      %v1843 = vpack.c.bf16 %v1842, %v1842
      %v1844 = vpack.c.bf16 %v1778, %v1778
      %v1846 = vsel %vm873, %v1843, 0
      %v1849 = vsel %vm877, %v1844, 0
      %1851 = vmatprep.subr.bf16.mxu0 0
      %1852 = vmatpush1.bf16.msra.mxu0 %v1849
      %1853 = vmatprep.subr.bf16.mxu0 0
      %1854 = vmatpush1.bf16.msra.mxu0 0
      %1855 = vmatprep.subr.bf16.mxu0 0
      %1856 = vmatpush1.bf16.msra.mxu0 0
      %1857 = vmatprep.subr.bf16.mxu0 0
      %1858 = vmatpush1.bf16.msra.mxu0 0
      %1859 = vmatprep.subr.bf16.mxu0 0
      %1860 = vmatpush1.bf16.msra.mxu0 0
      %1861 = vmatprep.subr.bf16.mxu0 0
      %1862 = vmatpush1.bf16.msra.mxu0 0
      %1863 = vmatprep.subr.bf16.mxu0 0
      %1864 = vmatpush1.bf16.msra.mxu0 0
      %1865 = vmatprep.subr.bf16.mxu0 0
      %1866 = vmatpush1.bf16.msra.mxu0 0
      %1867 = vmatprep.subr.bf16.mxu0 0
      %1868 = vmatpush1.bf16.msra.mxu0 0
      %1869 = vmatprep.subr.bf16.mxu0 0
      %1870 = vmatpush1.bf16.msra.mxu0 0
      %1871 = vmatprep.subr.bf16.mxu0 0
      %1872 = vmatpush1.bf16.msra.mxu0 0
      %1873 = vmatprep.subr.bf16.mxu0 0
      %1874 = vmatpush1.bf16.msra.mxu0 0
      %1875 = vmatprep.subr.bf16.mxu0 0
      %1876 = vmatpush1.bf16.msra.mxu0 0
      %1877 = vmatprep.subr.bf16.mxu0 0
      %1878 = vmatpush1.bf16.msra.mxu0 0
      %1879 = vmatprep.subr.bf16.mxu0 0
      %1880 = vmatpush1.bf16.msra.mxu0 0
      %1881 = vmatprep.subr.bf16.mxu0 0
      %1882 = vmatpush1.bf16.msra.mxu0 0
      %1883 = vmatprep.mubr.bf16.mxu0 0
      %1884 = vmatmul.mubr.bf16.gmra.mrb[0].mxu0 %v1846
      %v1885 = vpop.f32.mrb[0].mxu0
      %v1886 = vadd.f32 0.0, %v1885
      %v1887 = vpop.f32.mrb[0].mxu0
      %v1888 = vpop.f32.mrb[0].mxu0
      %v1889 = vpop.f32.mrb[0].mxu0
      %1890 = vdwg.mxu0
      %s1891 = scalar_lea.vmem %s7, 24
      %v1892 = vld [vmem:[%s1891] sm:$0xff]
      %v1893 = vpack.c.bf16 %v1886, %v1886
      %v1894 = vpack.c.bf16 %v1892, %v1892
      %v1896 = vsel %vm811, %v1893, 0
      %v1899 = vsel %vm1204, %v1894, 0
      %1901 = vmatprep.subr.bf16.mxu0 0
      %1902 = vmatpush1.bf16.msra.mxu0 %v1899
      %1903 = vmatprep.subr.bf16.mxu0 0
      %1904 = vmatpush1.bf16.msra.mxu0 0
      %1905 = vmatprep.subr.bf16.mxu0 0
      %1906 = vmatpush1.bf16.msra.mxu0 0
      %1907 = vmatprep.subr.bf16.mxu0 0
      %1908 = vmatpush1.bf16.msra.mxu0 0
      %1909 = vmatprep.subr.bf16.mxu0 0
      %1910 = vmatpush1.bf16.msra.mxu0 0
      %1911 = vmatprep.subr.bf16.mxu0 0
      %1912 = vmatpush1.bf16.msra.mxu0 0
      %1913 = vmatprep.subr.bf16.mxu0 0
      %1914 = vmatpush1.bf16.msra.mxu0 0
      %1915 = vmatprep.subr.bf16.mxu0 0
      %1916 = vmatpush1.bf16.msra.mxu0 0
      %1917 = vmatprep.subr.bf16.mxu0 0
      %1918 = vmatpush1.bf16.msra.mxu0 0
      %1919 = vmatprep.subr.bf16.mxu0 0
      %1920 = vmatpush1.bf16.msra.mxu0 0
      %1921 = vmatprep.subr.bf16.mxu0 0
      %1922 = vmatpush1.bf16.msra.mxu0 0
      %1923 = vmatprep.subr.bf16.mxu0 0
      %1924 = vmatpush1.bf16.msra.mxu0 0
      %1925 = vmatprep.subr.bf16.mxu0 0
      %1926 = vmatpush1.bf16.msra.mxu0 0
      %1927 = vmatprep.subr.bf16.mxu0 0
      %1928 = vmatpush1.bf16.msra.mxu0 0
      %1929 = vmatprep.subr.bf16.mxu0 0
      %1930 = vmatpush1.bf16.msra.mxu0 0
      %1931 = vmatprep.subr.bf16.mxu0 0
      %1932 = vmatpush1.bf16.msra.mxu0 0
      %1933 = vmatprep.mubr.bf16.mxu0 0
      %1934 = vmatmul.mubr.bf16.gmra.mrb[0].mxu0 %v1896
      %v1935 = vpop.f32.mrb[0].mxu0
      %v1936 = vadd.f32 0.0, %v1935
      %v1937 = vpop.f32.mrb[0].mxu0
      %v1938 = vpop.f32.mrb[0].mxu0
      %v1939 = vpop.f32.mrb[0].mxu0
      %1940 = vdwg.mxu0
      %v1941 = vadd.f32 %v1617, %v1936
      %v1942 = vadd.f32 %v605, %v1941
      %v1943 = vld [vmem:[%s8] sm:$0x1]
      %v1945 = vlaneseq
      %v1946 = vshrl.u32 %v1945, 7
      %v1947 = vsub.s32 0, %v1946
      %v1948 = vrot.slane %v1943, %v1947
      %v1950 = vadd.f32 %v1942, %v1948
      %v1951 = vld [vmem:[%s9] sm:$0x1]
      %v1952 = vld [vmem:[%s10] sm:$0x1]
      %v1953 = vsel %vm612, %v1950, 0.0
      %1954 = vadd.xlane.f32.xlu0 %v1953
      %v1955 = vpop.xlane.xlu0 %1954
      %v1956 = vmul.f32 %v1955, %v616
      %v1957 = vsub.f32 %v1950, %v1956
      %v1958 = vmul.f32 %v1957, %v1957
      %v1959 = vsel %vm612, %v1958, 0.0
      %1960 = vadd.xlane.f32.xlu0 %v1959
      %v1961 = vpop.xlane.xlu0 %1960
      %v1962 = vmul.f32 %v1961, %v616
      %v1963 = vadd.f32 %v1962, 1e-05
      %v1964 = vrsqrt.pop %v1963
      %v1965 = vmul.f32 %v1957, %v1964
      %v1967 = vlaneseq
      %v1968 = vshrl.u32 %v1967, 7
      %v1969 = vsub.s32 0, %v1968
      %v1970 = vrot.slane %v1951, %v1969
      %v1972 = vmul.f32 %v1965, %v1970
      %v1974 = vlaneseq
      %v1975 = vshrl.u32 %v1974, 7
      %v1976 = vsub.s32 0, %v1975
      %v1977 = vrot.slane %v1952, %v1976
      %v1979 = vadd.f32 %v1972, %v1977
      %v1980 = vld [vmem:[%s11] sm:$0xff]
      %v1981 = vld [vmem:[%s11 + $0x8] sm:$0xff]
      %v1982 = vld [vmem:[%s11 + $0x10] sm:$0xff]
      %v1983 = vld [vmem:[%s11 + $0x18] sm:$0xff]
      %v1984 = vpack.c.bf16 %v1979, %v1979
      %v1985 = vpack.c.bf16 %v1981, %v1980
      %v1986 = vpack.c.bf16 %v1983, %v1982
      %v1987 = vld [vmem:[%s12] sm:$0x1]
      %v1989 = vlaneseq
      %v1990 = vshrl.u32 %v1989, 7
      %v1991 = vsub.s32 0, %v1990
      %v1992 = vrot.slane %v1987, %v1991
      %v1995 = vsel %vm655, %v1984, 0
      %1997 = vmatprep.subr.bf16.mxu0 0
      %1998 = vmatpush1.bf16.msra.mxu0 %v1985
      %1999 = vmatprep.subr.bf16.mxu0 0
      %2000 = vmatpush1.bf16.msra.mxu0 %v1986
      %2001 = vmatprep.subr.bf16.mxu0 0
      %2002 = vmatpush1.bf16.msra.mxu0 0
      %2003 = vmatprep.subr.bf16.mxu0 0
      %2004 = vmatpush1.bf16.msra.mxu0 0
      %2005 = vmatprep.subr.bf16.mxu0 0
      %2006 = vmatpush1.bf16.msra.mxu0 0
      %2007 = vmatprep.subr.bf16.mxu0 0
      %2008 = vmatpush1.bf16.msra.mxu0 0
      %2009 = vmatprep.subr.bf16.mxu0 0
      %2010 = vmatpush1.bf16.msra.mxu0 0
      %2011 = vmatprep.subr.bf16.mxu0 0
      %2012 = vmatpush1.bf16.msra.mxu0 0
      %2013 = vmatprep.subr.bf16.mxu0 0
      %2014 = vmatpush1.bf16.msra.mxu0 0
      %2015 = vmatprep.subr.bf16.mxu0 0
      %2016 = vmatpush1.bf16.msra.mxu0 0
      %2017 = vmatprep.subr.bf16.mxu0 0
      %2018 = vmatpush1.bf16.msra.mxu0 0
      %2019 = vmatprep.subr.bf16.mxu0 0
      %2020 = vmatpush1.bf16.msra.mxu0 0
      %2021 = vmatprep.subr.bf16.mxu0 0
      %2022 = vmatpush1.bf16.msra.mxu0 0
      %2023 = vmatprep.subr.bf16.mxu0 0
      %2024 = vmatpush1.bf16.msra.mxu0 0
      %2025 = vmatprep.subr.bf16.mxu0 0
      %2026 = vmatpush1.bf16.msra.mxu0 0
      %2027 = vmatprep.subr.bf16.mxu0 0
      %2028 = vmatpush1.bf16.msra.mxu0 0
      %2029 = vmatprep.mubr.bf16.mxu0 0
      %2030 = vmatmul.mubr.bf16.gmra.mrb[0].mxu0 %v1995
      %v2031 = vpop.f32.mrb[0].mxu0
      %v2032 = vadd.f32 %v1992, %v2031
      %v2033 = vpop.f32.mrb[0].mxu0
      %v2034 = vpop.f32.mrb[0].mxu0
      %v2035 = vpop.f32.mrb[0].mxu0
      %2036 = vdwg.mxu0
      %v2037 = vmul.f32 %v2032, %v2032
      %v2038 = vmul.f32 %v2032, %v2037
      %v2039 = vmul.f32 %v2038, 0.044715
      %v2040 = vadd.f32 %v2032, %v2039
      %v2041 = vmul.f32 %v2040, 0.7978846
      %v2042 = vtanh.pop %v2041
      %v2043 = vadd.f32 %v2042, 1.0
      %v2044 = vmul.f32 %v2043, 0.5
      %v2045 = vmul.f32 %v2032, %v2044
      %v2046 = vld [vmem:[%s13] sm:$0xff]
      %v2047 = vld [vmem:[%s13 + $0x8] sm:$0xff]
      %v2048 = vld [vmem:[%s13 + $0x10] sm:$0xff]
      %v2049 = vld [vmem:[%s13 + $0x18] sm:$0xff]
      %v2050 = vld [vmem:[%s13 + $0x20] sm:$0xff]
      %v2051 = vld [vmem:[%s13 + $0x28] sm:$0xff]
      %v2052 = vld [vmem:[%s13 + $0x30] sm:$0xff]
      %v2053 = vld [vmem:[%s13 + $0x38] sm:$0xff]
      %v2054 = vld [vmem:[%s13 + $0x40] sm:$0xff]
      %v2055 = vld [vmem:[%s13 + $0x48] sm:$0xff]
      %v2056 = vld [vmem:[%s13 + $0x50] sm:$0xff]
      %v2057 = vld [vmem:[%s13 + $0x58] sm:$0xff]
      %v2058 = vld [vmem:[%s13 + $0x60] sm:$0xff]
      %v2059 = vld [vmem:[%s13 + $0x68] sm:$0xff]
      %v2060 = vld [vmem:[%s13 + $0x70] sm:$0xff]
      %v2061 = vld [vmem:[%s13 + $0x78] sm:$0xff]
      %v2062 = vpack.c.bf16 %v2045, %v2045
      %v2063 = vpack.c.bf16 %v2047, %v2046
      %v2064 = vpack.c.bf16 %v2049, %v2048
      %v2065 = vpack.c.bf16 %v2051, %v2050
      %v2066 = vpack.c.bf16 %v2053, %v2052
      %v2067 = vpack.c.bf16 %v2055, %v2054
      %v2068 = vpack.c.bf16 %v2057, %v2056
      %v2069 = vpack.c.bf16 %v2059, %v2058
      %v2070 = vpack.c.bf16 %v2061, %v2060
      %2071 = vmatprep.subr.bf16.mxu0 0
      %2072 = vmatpush1.bf16.msra.mxu0 %v2063
      %2073 = vmatprep.subr.bf16.mxu0 0
      %2074 = vmatpush1.bf16.msra.mxu0 %v2064
      %2075 = vmatprep.subr.bf16.mxu0 0
      %2076 = vmatpush1.bf16.msra.mxu0 %v2065
      %2077 = vmatprep.subr.bf16.mxu0 0
      %2078 = vmatpush1.bf16.msra.mxu0 %v2066
      %2079 = vmatprep.subr.bf16.mxu0 0
      %2080 = vmatpush1.bf16.msra.mxu0 %v2067
      %2081 = vmatprep.subr.bf16.mxu0 0
      %2082 = vmatpush1.bf16.msra.mxu0 %v2068
      %2083 = vmatprep.subr.bf16.mxu0 0
      %2084 = vmatpush1.bf16.msra.mxu0 %v2069
      %2085 = vmatprep.subr.bf16.mxu0 0
      %2086 = vmatpush1.bf16.msra.mxu0 %v2070
      %2087 = vmatprep.subr.bf16.mxu0 0
      %2088 = vmatpush1.bf16.msra.mxu0 0
      %2089 = vmatprep.subr.bf16.mxu0 0
      %2090 = vmatpush1.bf16.msra.mxu0 0
      %2091 = vmatprep.subr.bf16.mxu0 0
      %2092 = vmatpush1.bf16.msra.mxu0 0
      %2093 = vmatprep.subr.bf16.mxu0 0
      %2094 = vmatpush1.bf16.msra.mxu0 0
      %2095 = vmatprep.subr.bf16.mxu0 0
      %2096 = vmatpush1.bf16.msra.mxu0 0
      %2097 = vmatprep.subr.bf16.mxu0 0
      %2098 = vmatpush1.bf16.msra.mxu0 0
      %2099 = vmatprep.subr.bf16.mxu0 0
      %2100 = vmatpush1.bf16.msra.mxu0 0
      %2101 = vmatprep.subr.bf16.mxu0 0
      %2102 = vmatpush1.bf16.msra.mxu0 0
      %2103 = vmatprep.mubr.bf16.mxu0 0
      %2104 = vmatmul.mubr.bf16.gmra.mrb[0].mxu0 %v2062
      %v2105 = vpop.f32.mrb[0].mxu0
      %v2106 = vadd.f32 0.0, %v2105
      %v2107 = vpop.f32.mrb[0].mxu0
      %v2108 = vpop.f32.mrb[0].mxu0
      %v2109 = vpop.f32.mrb[0].mxu0
      %2110 = vdwg.mxu0
      %v2111 = vadd.f32 %v1950, %v2106
      %v2112 = vld [vmem:[%s14] sm:$0x1]
      %v2114 = vlaneseq
      %v2115 = vshrl.u32 %v2114, 7
      %v2116 = vsub.s32 0, %v2115
      %v2117 = vrot.slane %v2112, %v2116
      %v2119 = vadd.f32 %v2111, %v2117
      %v2120 = vld [vmem:[%s15] sm:$0xff]
      %v2121 = vld [vmem:[%s15 + $0x8] sm:$0xff]
      %v2122 = vld [vmem:[%s15 + $0x10] sm:$0xff]
      %v2123 = vld [vmem:[%s15 + $0x18] sm:$0xff]
      %v2124 = vpack.c.bf16 %v2119, %v2119
      %v2125 = vpack.c.bf16 %v2121, %v2120
      %v2126 = vpack.c.bf16 %v2123, %v2122
      %v2127 = vld [vmem:[%s16] sm:$0x1]
      %v2129 = vlaneseq
      %v2130 = vshrl.u32 %v2129, 7
      %v2131 = vsub.s32 0, %v2130
      %v2132 = vrot.slane %v2127, %v2131
      %v2135 = vsel %vm655, %v2124, 0
      %2137 = vmatprep.subr.bf16.mxu0 0
      %2138 = vmatpush1.bf16.msra.mxu0 %v2125
      %2139 = vmatprep.subr.bf16.mxu0 0
      %2140 = vmatpush1.bf16.msra.mxu0 %v2126
      %2141 = vmatprep.subr.bf16.mxu0 0
      %2142 = vmatpush1.bf16.msra.mxu0 0
      %2143 = vmatprep.subr.bf16.mxu0 0
      %2144 = vmatpush1.bf16.msra.mxu0 0
      %2145 = vmatprep.subr.bf16.mxu0 0
      %2146 = vmatpush1.bf16.msra.mxu0 0
      %2147 = vmatprep.subr.bf16.mxu0 0
      %2148 = vmatpush1.bf16.msra.mxu0 0
      %2149 = vmatprep.subr.bf16.mxu0 0
      %2150 = vmatpush1.bf16.msra.mxu0 0
      %2151 = vmatprep.subr.bf16.mxu0 0
      %2152 = vmatpush1.bf16.msra.mxu0 0
      %2153 = vmatprep.subr.bf16.mxu0 0
      %2154 = vmatpush1.bf16.msra.mxu0 0
      %2155 = vmatprep.subr.bf16.mxu0 0
      %2156 = vmatpush1.bf16.msra.mxu0 0
      %2157 = vmatprep.subr.bf16.mxu0 0
      %2158 = vmatpush1.bf16.msra.mxu0 0
      %2159 = vmatprep.subr.bf16.mxu0 0
      %2160 = vmatpush1.bf16.msra.mxu0 0
      %2161 = vmatprep.subr.bf16.mxu0 0
      %2162 = vmatpush1.bf16.msra.mxu0 0
      %2163 = vmatprep.subr.bf16.mxu0 0
      %2164 = vmatpush1.bf16.msra.mxu0 0
      %2165 = vmatprep.subr.bf16.mxu0 0
      %2166 = vmatpush1.bf16.msra.mxu0 0
      %2167 = vmatprep.subr.bf16.mxu0 0
      %2168 = vmatpush1.bf16.msra.mxu0 0
      %2169 = vmatprep.mubr.bf16.mxu0 0
      %2170 = vmatmul.mubr.bf16.gmra.mrb[0].mxu0 %v2135
      %v2171 = vpop.f32.mrb[0].mxu0
      %v2172 = vadd.f32 %v2132, %v2171
      %v2173 = vpop.f32.mrb[0].mxu0
      %v2174 = vpop.f32.mrb[0].mxu0
      %v2175 = vpop.f32.mrb[0].mxu0
      %2176 = vdwg.mxu0
      %2177 = vst.msk [vmem:[%s543] sm:$0xf] %vm859, %v2172
      %p2178 = scmp.lt.s32.totalorder %s28, 1
      %s2179 = scalar_select %p2178, %s28, 1
      %s2180 = smul.addr %s2179, 4
      %s2181 = scalar_lea.vmem %s17, %s2180
      // Predicated region
      $region89: #{hvit_vae_forward.5} parent=87 // pred_check
        %p2182 = pneg %p408
      $region90: #{hvit_vae_forward.5} parent=87 // pred_check_branch
        %2184 = sbr.rel (%p2182) target = $region92
      $region91: #{hvit_vae_forward.5} parent=87 // pred_region
        _
      $region92: #{hvit_vae_forward.5} parent=87 // pred_fallthru
        _
    $region88: #{hvit_vae_forward.5} parent=5 // pred_fallthru
      _
    %p2185 = scmp.le.s32.totalorder 2, %s23
    // Predicated region
    $region93: #{hvit_vae_forward.5} parent=5 // pred_check
      %p2186 = pneg %p2185
    $region94: #{hvit_vae_forward.5} parent=5 // pred_check_branch
      %2188 = sbr.rel (%p2186) target = $region96
    $region95: #{hvit_vae_forward.5} parent=5 // pred_region
      %s2189 = ssub.s32 %s23, 2
      // Predicated region
      $region97: #{hvit_vae_forward.5} parent=95 // pred_check
        %p2190 = pneg %p414
      $region98: #{hvit_vae_forward.5} parent=95 // pred_check_branch
        %2192 = sbr.rel (%p2190) target = $region100
      $region99: #{hvit_vae_forward.5} parent=95 // pred_region
        %p2193 = scmp.lt.s32.totalorder %s29, 1
        %s2194 = scalar_select %p2193, %s29, 1
        %s2195 = smul.addr %s2194, 4
        %s2196 = scalar_lea.vmem %s17, %s2195
      $region100: #{hvit_vae_forward.5} parent=95 // pred_fallthru
        _
    $region96: #{hvit_vae_forward.5} parent=5 // pred_fallthru
      _
  $region6: #{hvit_vae_forward.5} parent=0 // loop_footer
    %s27 = sadd.s32 1, %s23
  $region7: #{hvit_vae_forward.5} parent=0 // loop_footer_branch
    %22 = sbr.rel target = $region3
  $region8: #{hvit_vae_forward.5} parent=0 // loop_exit
    _

// kernel: hvit_vae_forward.6
$region0: #{hvit_vae_forward.6}
  #allocation0 [shape = 'u32[]', space=smem, size = 0x4, offset = 0x4, fixed_abs, tag = 'smem constant byte address 0x4 - core index']
  #allocation1 [shape = 'u32[144,128]{1,0:T(1,128)}', space=vmem, size = 0x12000, scoped, tag = 'internal scratch']
  %s0 = inlined_call_operand.vmem [shape: f32[2,4,4], index: 0, kind: input, shape index: {}]
  %s1 = inlined_call_operand.vmem [shape: f32[4,32], index: 1, kind: input, shape index: {}]
  %s2 = inlined_call_operand.vmem [shape: f32[1,32], index: 2, kind: input, shape index: {}]
  %s3 = inlined_call_operand.vmem [shape: f32[1,32], index: 3, kind: input, shape index: {}]
  %s4 = inlined_call_operand.vmem [shape: f32[1,32], index: 4, kind: input, shape index: {}]
  %s5 = inlined_call_operand.vmem [shape: f32[12,32,8], index: 5, kind: input, shape index: {}]
  %s6 = inlined_call_operand.vmem [shape: f32[12,1,8], index: 6, kind: input, shape index: {}]
  %s7 = inlined_call_operand.vmem [shape: f32[4,8,32], index: 7, kind: input, shape index: {}]
  %s8 = inlined_call_operand.vmem [shape: f32[1,32], index: 8, kind: input, shape index: {}]
  %s9 = inlined_call_operand.vmem [shape: f32[1,32], index: 9, kind: input, shape index: {}]
  %s10 = inlined_call_operand.vmem [shape: f32[1,32], index: 10, kind: input, shape index: {}]
  %s11 = inlined_call_operand.vmem [shape: f32[32,128], index: 11, kind: input, shape index: {}]
  %s12 = inlined_call_operand.vmem [shape: f32[1,128], index: 12, kind: input, shape index: {}]
  %s13 = inlined_call_operand.vmem [shape: f32[128,32], index: 13, kind: input, shape index: {}]
  %s14 = inlined_call_operand.vmem [shape: f32[1,32], index: 14, kind: input, shape index: {}]
  %s15 = inlined_call_operand.vmem [shape: f32[32,64], index: 15, kind: input, shape index: {}]
  %s16 = inlined_call_operand.vmem [shape: f32[1,64], index: 16, kind: input, shape index: {}]
  %s17 = inlined_call_operand.vmem [shape: f32[2,4,64], index: 17, kind: output, shape index: {}]
  %s18 = sld [smem:[#allocation0]]
  $region101: #{hvit_vae_forward.6} parent=0
    _
  %s20 = ssub.s32 1, %s18
  %s21 = scalar_select 0, %s20, %s18
  loop: start=0, step=1, limit=4
  $region2: #{hvit_vae_forward.6} parent=0 // loop_pre_header
    _
  $region3: #{hvit_vae_forward.6} parent=0 // loop_header
    %s23 = sphi 0, %s27
    %p24 = scmp.ge.s32.totalorder %s23, 4
    %s33 = sphi 0, %s35
    %s36 = sphi 0, %s33
    %s37 = sphi 0, %s36
    %s53 = sphi 0, %s37
    %s57 = sphi 0, %s57
    %s59 = sphi 0, %s57
    %s60 = sphi 0, %s59
    %s74 = sphi 0, %s60
    %s78 = sphi 0, %s78
    %s80 = sphi 0, %s78
    %s81 = sphi 0, %s80
    %s95 = sphi 0, %s81
    %s99 = sphi 0, %s99
    %s101 = sphi 0, %s99
    %s102 = sphi 0, %s101
    %s116 = sphi 0, %s102
    %s120 = sphi 0, %s120
    %s122 = sphi 0, %s120
    %s123 = sphi 0, %s122
    %s137 = sphi 0, %s123
    %s141 = sphi 0, %s141
    %s143 = sphi 0, %s141
    %s144 = sphi 0, %s143
    %s158 = sphi 0, %s144
    %s162 = sphi 0, %s162
    %s164 = sphi 0, %s162
    %s165 = sphi 0, %s164
    %s179 = sphi 0, %s165
    %s183 = sphi 0, %s183
    %s185 = sphi 0, %s183
    %s186 = sphi 0, %s185
    %s200 = sphi 0, %s186
    %s204 = sphi 0, %s204
    %s206 = sphi 0, %s204
    %s207 = sphi 0, %s206
    %s221 = sphi 0, %s207
    %s225 = sphi 0, %s225
    %s227 = sphi 0, %s225
    %s228 = sphi 0, %s227
    %s242 = sphi 0, %s228
    %s246 = sphi 0, %s246
    %s248 = sphi 0, %s246
    %s249 = sphi 0, %s248
    %s263 = sphi 0, %s249
    %s267 = sphi 0, %s267
    %s269 = sphi 0, %s267
    %s270 = sphi 0, %s269
    %s284 = sphi 0, %s270
    %s288 = sphi 0, %s288
    %s290 = sphi 0, %s288
    %s291 = sphi 0, %s290
    %s305 = sphi 0, %s291
    %s309 = sphi 0, %s309
    %s311 = sphi 0, %s309
    %s312 = sphi 0, %s311
    %s326 = sphi 0, %s312
    %s330 = sphi 0, %s330
    %s332 = sphi 0, %s330
    %s333 = sphi 0, %s332
    %s347 = sphi 0, %s333
    %s351 = sphi 0, %s351
    %s353 = sphi 0, %s351
    %s354 = sphi 0, %s353
    %s368 = sphi 0, %s354
    %s372 = sphi 0, %s372
    %s374 = sphi 0, %s372
    %s375 = sphi 0, %s374
    %s389 = sphi 0, %s375
    %s395 = sphi 0, %s397
    %s398 = sphi 0, %s395
    %s399 = sphi 0, %s398
    %s415 = sphi 0, %s399
  $region4: #{hvit_vae_forward.6} parent=0 // loop_header_branch
    %26 = sbr.rel (%p24) target = $region8
  $region5: #{hvit_vae_forward.6} parent=0 // loop_body
    %s28 = ssub.s32 %s23, 1
    %s29 = ssub.s32 %s23, 2
    %s30 = sadd.s32 %s23, 1
    %s31 = ssub.s32 %s23, %s30
    %p32 = scmp.eq.s32.totalorder %s31, 0
    %s34 = sadd.s32 %s33, 1
    %s35 = scalar_select %p32, %s33, %s34
    %p38 = pneg %p32
    %p39 = scmp.eq.s32.totalorder %s23, 1
    %p40 = por %p38, %p39
    %p41 = scmp.ne.s32.totalorder %s33, %s36
    %p42 = scmp.eq.s32.totalorder %s23, 0
    %p43 = por %p41, %p42
    %p44 = scmp.ne.s32.totalorder %s33, %s36
    %p45 = scmp.eq.s32.totalorder %s28, 1
    %p46 = por %p44, %p45
    %p47 = scmp.ne.s32.totalorder %s36, %s37
    %p48 = scmp.eq.s32.totalorder %s28, 0
    %p49 = por %p47, %p48
    %p50 = scmp.ne.s32.totalorder %s36, %s37
    %p51 = scmp.eq.s32.totalorder %s29, 1
    %p52 = por %p50, %p51
    %p54 = scmp.ne.s32.totalorder %s37, %s53
    %p55 = scmp.eq.s32.totalorder %s29, 0
    %p56 = por %p54, %p55
    %s58 = sadd.s32 %s57, 1
    %p61 = scmp.eq.s32.totalorder %s23, 1
    %p62 = scmp.ne.s32.totalorder %s57, %s59
    %p63 = scmp.eq.s32.totalorder %s23, 0
    %p64 = por %p62, %p63
    %p65 = scmp.ne.s32.totalorder %s57, %s59
    %p66 = scmp.eq.s32.totalorder %s28, 1
    %p67 = por %p65, %p66
    %p68 = scmp.ne.s32.totalorder %s59, %s60
    %p69 = scmp.eq.s32.totalorder %s28, 0
    %p70 = por %p68, %p69
    %p71 = scmp.ne.s32.totalorder %s59, %s60
    %p72 = scmp.eq.s32.totalorder %s29, 1
    %p73 = por %p71, %p72
    %p75 = scmp.ne.s32.totalorder %s60, %s74
    %p76 = scmp.eq.s32.totalorder %s29, 0
    %p77 = por %p75, %p76
    %s79 = sadd.s32 %s78, 1
    %p82 = scmp.eq.s32.totalorder %s23, 1
    %p83 = scmp.ne.s32.totalorder %s78, %s80
    %p84 = scmp.eq.s32.totalorder %s23, 0
    %p85 = por %p83, %p84
    %p86 = scmp.ne.s32.totalorder %s78, %s80
    %p87 = scmp.eq.s32.totalorder %s28, 1
    %p88 = por %p86, %p87
    %p89 = scmp.ne.s32.totalorder %s80, %s81
    %p90 = scmp.eq.s32.totalorder %s28, 0
    %p91 = por %p89, %p90
    %p92 = scmp.ne.s32.totalorder %s80, %s81
    %p93 = scmp.eq.s32.totalorder %s29, 1
    %p94 = por %p92, %p93
    %p96 = scmp.ne.s32.totalorder %s81, %s95
    %p97 = scmp.eq.s32.totalorder %s29, 0
    %p98 = por %p96, %p97
    %s100 = sadd.s32 %s99, 1
    %p103 = scmp.eq.s32.totalorder %s23, 1
    %p104 = scmp.ne.s32.totalorder %s99, %s101
    %p105 = scmp.eq.s32.totalorder %s23, 0
    %p106 = por %p104, %p105
    %p107 = scmp.ne.s32.totalorder %s99, %s101
    %p108 = scmp.eq.s32.totalorder %s28, 1
    %p109 = por %p107, %p108
    %p110 = scmp.ne.s32.totalorder %s101, %s102
    %p111 = scmp.eq.s32.totalorder %s28, 0
    %p112 = por %p110, %p111
    %p113 = scmp.ne.s32.totalorder %s101, %s102
    %p114 = scmp.eq.s32.totalorder %s29, 1
    %p115 = por %p113, %p114
    %p117 = scmp.ne.s32.totalorder %s102, %s116
    %p118 = scmp.eq.s32.totalorder %s29, 0
    %p119 = por %p117, %p118
    %s121 = sadd.s32 %s120, 1
    %p124 = scmp.eq.s32.totalorder %s23, 1
    %p125 = scmp.ne.s32.totalorder %s120, %s122
    %p126 = scmp.eq.s32.totalorder %s23, 0
    %p127 = por %p125, %p126
    %p128 = scmp.ne.s32.totalorder %s120, %s122
    %p129 = scmp.eq.s32.totalorder %s28, 1
    %p130 = por %p128, %p129
    %p131 = scmp.ne.s32.totalorder %s122, %s123
    %p132 = scmp.eq.s32.totalorder %s28, 0
    %p133 = por %p131, %p132
    %p134 = scmp.ne.s32.totalorder %s122, %s123
    %p135 = scmp.eq.s32.totalorder %s29, 1
    %p136 = por %p134, %p135
    %p138 = scmp.ne.s32.totalorder %s123, %s137
    %p139 = scmp.eq.s32.totalorder %s29, 0
    %p140 = por %p138, %p139
    %s142 = sadd.s32 %s141, 1
    %p145 = scmp.eq.s32.totalorder %s23, 1
    %p146 = scmp.ne.s32.totalorder %s141, %s143
    %p147 = scmp.eq.s32.totalorder %s23, 0
    %p148 = por %p146, %p147
    %p149 = scmp.ne.s32.totalorder %s141, %s143
    %p150 = scmp.eq.s32.totalorder %s28, 1
    %p151 = por %p149, %p150
    %p152 = scmp.ne.s32.totalorder %s143, %s144
    %p153 = scmp.eq.s32.totalorder %s28, 0
    %p154 = por %p152, %p153
    %p155 = scmp.ne.s32.totalorder %s143, %s144
    %p156 = scmp.eq.s32.totalorder %s29, 1
    %p157 = por %p155, %p156
    %p159 = scmp.ne.s32.totalorder %s144, %s158
    %p160 = scmp.eq.s32.totalorder %s29, 0
    %p161 = por %p159, %p160
    %s163 = sadd.s32 %s162, 1
    %p166 = scmp.eq.s32.totalorder %s23, 1
    %p167 = scmp.ne.s32.totalorder %s162, %s164
    %p168 = scmp.eq.s32.totalorder %s23, 0
    %p169 = por %p167, %p168
    %p170 = scmp.ne.s32.totalorder %s162, %s164
    %p171 = scmp.eq.s32.totalorder %s28, 1
    %p172 = por %p170, %p171
    %p173 = scmp.ne.s32.totalorder %s164, %s165
    %p174 = scmp.eq.s32.totalorder %s28, 0
    %p175 = por %p173, %p174
    %p176 = scmp.ne.s32.totalorder %s164, %s165
    %p177 = scmp.eq.s32.totalorder %s29, 1
    %p178 = por %p176, %p177
    %p180 = scmp.ne.s32.totalorder %s165, %s179
    %p181 = scmp.eq.s32.totalorder %s29, 0
    %p182 = por %p180, %p181
    %s184 = sadd.s32 %s183, 1
    %p187 = scmp.eq.s32.totalorder %s23, 1
    %p188 = scmp.ne.s32.totalorder %s183, %s185
    %p189 = scmp.eq.s32.totalorder %s23, 0
    %p190 = por %p188, %p189
    %p191 = scmp.ne.s32.totalorder %s183, %s185
    %p192 = scmp.eq.s32.totalorder %s28, 1
    %p193 = por %p191, %p192
    %p194 = scmp.ne.s32.totalorder %s185, %s186
    %p195 = scmp.eq.s32.totalorder %s28, 0
    %p196 = por %p194, %p195
    %p197 = scmp.ne.s32.totalorder %s185, %s186
    %p198 = scmp.eq.s32.totalorder %s29, 1
    %p199 = por %p197, %p198
    %p201 = scmp.ne.s32.totalorder %s186, %s200
    %p202 = scmp.eq.s32.totalorder %s29, 0
    %p203 = por %p201, %p202
    %s205 = sadd.s32 %s204, 1
    %p208 = scmp.eq.s32.totalorder %s23, 1
    %p209 = scmp.ne.s32.totalorder %s204, %s206
    %p210 = scmp.eq.s32.totalorder %s23, 0
    %p211 = por %p209, %p210
    %p212 = scmp.ne.s32.totalorder %s204, %s206
    %p213 = scmp.eq.s32.totalorder %s28, 1
    %p214 = por %p212, %p213
    %p215 = scmp.ne.s32.totalorder %s206, %s207
    %p216 = scmp.eq.s32.totalorder %s28, 0
    %p217 = por %p215, %p216
    %p218 = scmp.ne.s32.totalorder %s206, %s207
    %p219 = scmp.eq.s32.totalorder %s29, 1
    %p220 = por %p218, %p219
    %p222 = scmp.ne.s32.totalorder %s207, %s221
    %p223 = scmp.eq.s32.totalorder %s29, 0
    %p224 = por %p222, %p223
    %s226 = sadd.s32 %s225, 1
    %p229 = scmp.eq.s32.totalorder %s23, 1
    %p230 = scmp.ne.s32.totalorder %s225, %s227
    %p231 = scmp.eq.s32.totalorder %s23, 0
    %p232 = por %p230, %p231
    %p233 = scmp.ne.s32.totalorder %s225, %s227
    %p234 = scmp.eq.s32.totalorder %s28, 1
    %p235 = por %p233, %p234
    %p236 = scmp.ne.s32.totalorder %s227, %s228
    %p237 = scmp.eq.s32.totalorder %s28, 0
    %p238 = por %p236, %p237
    %p239 = scmp.ne.s32.totalorder %s227, %s228
    %p240 = scmp.eq.s32.totalorder %s29, 1
    %p241 = por %p239, %p240
    %p243 = scmp.ne.s32.totalorder %s228, %s242
    %p244 = scmp.eq.s32.totalorder %s29, 0
    %p245 = por %p243, %p244
    %s247 = sadd.s32 %s246, 1
    %p250 = scmp.eq.s32.totalorder %s23, 1
    %p251 = scmp.ne.s32.totalorder %s246, %s248
    %p252 = scmp.eq.s32.totalorder %s23, 0
    %p253 = por %p251, %p252
    %p254 = scmp.ne.s32.totalorder %s246, %s248
    %p255 = scmp.eq.s32.totalorder %s28, 1
    %p256 = por %p254, %p255
    %p257 = scmp.ne.s32.totalorder %s248, %s249
    %p258 = scmp.eq.s32.totalorder %s28, 0
    %p259 = por %p257, %p258
    %p260 = scmp.ne.s32.totalorder %s248, %s249
    %p261 = scmp.eq.s32.totalorder %s29, 1
    %p262 = por %p260, %p261
    %p264 = scmp.ne.s32.totalorder %s249, %s263
    %p265 = scmp.eq.s32.totalorder %s29, 0
    %p266 = por %p264, %p265
    %s268 = sadd.s32 %s267, 1
    %p271 = scmp.eq.s32.totalorder %s23, 1
    %p272 = scmp.ne.s32.totalorder %s267, %s269
    %p273 = scmp.eq.s32.totalorder %s23, 0
    %p274 = por %p272, %p273
    %p275 = scmp.ne.s32.totalorder %s267, %s269
    %p276 = scmp.eq.s32.totalorder %s28, 1
    %p277 = por %p275, %p276
    %p278 = scmp.ne.s32.totalorder %s269, %s270
    %p279 = scmp.eq.s32.totalorder %s28, 0
    %p280 = por %p278, %p279
    %p281 = scmp.ne.s32.totalorder %s269, %s270
    %p282 = scmp.eq.s32.totalorder %s29, 1
    %p283 = por %p281, %p282
    %p285 = scmp.ne.s32.totalorder %s270, %s284
    %p286 = scmp.eq.s32.totalorder %s29, 0
    %p287 = por %p285, %p286
    %s289 = sadd.s32 %s288, 1
    %p292 = scmp.eq.s32.totalorder %s23, 1
    %p293 = scmp.ne.s32.totalorder %s288, %s290
    %p294 = scmp.eq.s32.totalorder %s23, 0
    %p295 = por %p293, %p294
    %p296 = scmp.ne.s32.totalorder %s288, %s290
    %p297 = scmp.eq.s32.totalorder %s28, 1
    %p298 = por %p296, %p297
    %p299 = scmp.ne.s32.totalorder %s290, %s291
    %p300 = scmp.eq.s32.totalorder %s28, 0
    %p301 = por %p299, %p300
    %p302 = scmp.ne.s32.totalorder %s290, %s291
    %p303 = scmp.eq.s32.totalorder %s29, 1
    %p304 = por %p302, %p303
    %p306 = scmp.ne.s32.totalorder %s291, %s305
    %p307 = scmp.eq.s32.totalorder %s29, 0
    %p308 = por %p306, %p307
    %s310 = sadd.s32 %s309, 1
    %p313 = scmp.eq.s32.totalorder %s23, 1
    %p314 = scmp.ne.s32.totalorder %s309, %s311
    %p315 = scmp.eq.s32.totalorder %s23, 0
    %p316 = por %p314, %p315
    %p317 = scmp.ne.s32.totalorder %s309, %s311
    %p318 = scmp.eq.s32.totalorder %s28, 1
    %p319 = por %p317, %p318
    %p320 = scmp.ne.s32.totalorder %s311, %s312
    %p321 = scmp.eq.s32.totalorder %s28, 0
    %p322 = por %p320, %p321
    %p323 = scmp.ne.s32.totalorder %s311, %s312
    %p324 = scmp.eq.s32.totalorder %s29, 1
    %p325 = por %p323, %p324
    %p327 = scmp.ne.s32.totalorder %s312, %s326
    %p328 = scmp.eq.s32.totalorder %s29, 0
    %p329 = por %p327, %p328
    %s331 = sadd.s32 %s330, 1
    %p334 = scmp.eq.s32.totalorder %s23, 1
    %p335 = scmp.ne.s32.totalorder %s330, %s332
    %p336 = scmp.eq.s32.totalorder %s23, 0
    %p337 = por %p335, %p336
    %p338 = scmp.ne.s32.totalorder %s330, %s332
    %p339 = scmp.eq.s32.totalorder %s28, 1
    %p340 = por %p338, %p339
    %p341 = scmp.ne.s32.totalorder %s332, %s333
    %p342 = scmp.eq.s32.totalorder %s28, 0
    %p343 = por %p341, %p342
    %p344 = scmp.ne.s32.totalorder %s332, %s333
    %p345 = scmp.eq.s32.totalorder %s29, 1
    %p346 = por %p344, %p345
    %p348 = scmp.ne.s32.totalorder %s333, %s347
    %p349 = scmp.eq.s32.totalorder %s29, 0
    %p350 = por %p348, %p349
    %s352 = sadd.s32 %s351, 1
    %p355 = scmp.eq.s32.totalorder %s23, 1
    %p356 = scmp.ne.s32.totalorder %s351, %s353
    %p357 = scmp.eq.s32.totalorder %s23, 0
    %p358 = por %p356, %p357
    %p359 = scmp.ne.s32.totalorder %s351, %s353
    %p360 = scmp.eq.s32.totalorder %s28, 1
    %p361 = por %p359, %p360
    %p362 = scmp.ne.s32.totalorder %s353, %s354
    %p363 = scmp.eq.s32.totalorder %s28, 0
    %p364 = por %p362, %p363
    %p365 = scmp.ne.s32.totalorder %s353, %s354
    %p366 = scmp.eq.s32.totalorder %s29, 1
    %p367 = por %p365, %p366
    %p369 = scmp.ne.s32.totalorder %s354, %s368
    %p370 = scmp.eq.s32.totalorder %s29, 0
    %p371 = por %p369, %p370
    %s373 = sadd.s32 %s372, 1
    %p376 = scmp.eq.s32.totalorder %s23, 1
    %p377 = scmp.ne.s32.totalorder %s372, %s374
    %p378 = scmp.eq.s32.totalorder %s23, 0
    %p379 = por %p377, %p378
    %p380 = scmp.ne.s32.totalorder %s372, %s374
    %p381 = scmp.eq.s32.totalorder %s28, 1
    %p382 = por %p380, %p381
    %p383 = scmp.ne.s32.totalorder %s374, %s375
    %p384 = scmp.eq.s32.totalorder %s28, 0
    %p385 = por %p383, %p384
    %p386 = scmp.ne.s32.totalorder %s374, %s375
    %p387 = scmp.eq.s32.totalorder %s29, 1
    %p388 = por %p386, %p387
    %p390 = scmp.ne.s32.totalorder %s375, %s389
    %p391 = scmp.eq.s32.totalorder %s29, 0
    %p392 = por %p390, %p391
    %s393 = ssub.s32 %s23, %s30
    %p394 = scmp.eq.s32.totalorder %s393, 0
    %s396 = sadd.s32 %s395, 1
    %s397 = scalar_select %p394, %s395, %s396
    %p400 = pneg %p394
    %p401 = scmp.eq.s32.totalorder %s23, 1
    %p402 = por %p400, %p401
    %p403 = scmp.ne.s32.totalorder %s395, %s398
    %p404 = scmp.eq.s32.totalorder %s23, 0
    %p405 = por %p403, %p404
    %p406 = scmp.ne.s32.totalorder %s395, %s398
    %p407 = scmp.eq.s32.totalorder %s28, 1
    %p408 = por %p406, %p407
    %p409 = scmp.ne.s32.totalorder %s398, %s399
    %p410 = scmp.eq.s32.totalorder %s28, 0
    %p411 = por %p409, %p410
    %p412 = scmp.ne.s32.totalorder %s398, %s399
    %p413 = scmp.eq.s32.totalorder %s29, 1
    %p414 = por %p412, %p413
    %p416 = scmp.ne.s32.totalorder %s399, %s415
    %p417 = scmp.eq.s32.totalorder %s29, 0
    %p418 = por %p416, %p417
    %p419 = scmp.le.s32.totalorder 1, %s23
    %p420 = scmp.lt.s32.totalorder %s23, 3
    %p421 = pnand %p419, %p420
    %p422 = pneg %p421
    // Predicated region
    $region9: #{hvit_vae_forward.6} parent=5 // pred_check
      _
    $region10: #{hvit_vae_forward.6} parent=5 // pred_check_branch
      %424 = sbr.rel (%p421) target = $region12
    $region11: #{hvit_vae_forward.6} parent=5 // pred_region
      %s425 = ssub.s32 %s23, 1
      // Predicated region
      $region13: #{hvit_vae_forward.6} parent=11 // pred_check
        %p426 = pneg %p70
      $region14: #{hvit_vae_forward.6} parent=11 // pred_check_branch
        %428 = sbr.rel (%p426) target = $region16
      $region15: #{hvit_vae_forward.6} parent=11 // pred_region
        _
      $region16: #{hvit_vae_forward.6} parent=11 // pred_fallthru
        _
      // Predicated region
      $region17: #{hvit_vae_forward.6} parent=11 // pred_check
        %p429 = pneg %p91
      $region18: #{hvit_vae_forward.6} parent=11 // pred_check_branch
        %431 = sbr.rel (%p429) target = $region20
      $region19: #{hvit_vae_forward.6} parent=11 // pred_region
        _
      $region20: #{hvit_vae_forward.6} parent=11 // pred_fallthru
        _
      // Predicated region
      $region21: #{hvit_vae_forward.6} parent=11 // pred_check
        %p432 = pneg %p112
      $region22: #{hvit_vae_forward.6} parent=11 // pred_check_branch
        %434 = sbr.rel (%p432) target = $region24
      $region23: #{hvit_vae_forward.6} parent=11 // pred_region
        _
      $region24: #{hvit_vae_forward.6} parent=11 // pred_fallthru
        _
      // Predicated region
      $region25: #{hvit_vae_forward.6} parent=11 // pred_check
        %p435 = pneg %p133
      $region26: #{hvit_vae_forward.6} parent=11 // pred_check_branch
        %437 = sbr.rel (%p435) target = $region28
      $region27: #{hvit_vae_forward.6} parent=11 // pred_region
        _
      $region28: #{hvit_vae_forward.6} parent=11 // pred_fallthru
        _
      // Predicated region
      $region29: #{hvit_vae_forward.6} parent=11 // pred_check
        %p438 = pneg %p154
      $region30: #{hvit_vae_forward.6} parent=11 // pred_check_branch
        %440 = sbr.rel (%p438) target = $region32
      $region31: #{hvit_vae_forward.6} parent=11 // pred_region
        _
      $region32: #{hvit_vae_forward.6} parent=11 // pred_fallthru
        _
      // Predicated region
      $region33: #{hvit_vae_forward.6} parent=11 // pred_check
        %p441 = pneg %p175
      $region34: #{hvit_vae_forward.6} parent=11 // pred_check_branch
        %443 = sbr.rel (%p441) target = $region36
      $region35: #{hvit_vae_forward.6} parent=11 // pred_region
        _
      $region36: #{hvit_vae_forward.6} parent=11 // pred_fallthru
        _
      // Predicated region
      $region37: #{hvit_vae_forward.6} parent=11 // pred_check
        %p444 = pneg %p196
      $region38: #{hvit_vae_forward.6} parent=11 // pred_check_branch
        %446 = sbr.rel (%p444) target = $region40
      $region39: #{hvit_vae_forward.6} parent=11 // pred_region
        _
      $region40: #{hvit_vae_forward.6} parent=11 // pred_fallthru
        _
      // Predicated region
      $region41: #{hvit_vae_forward.6} parent=11 // pred_check
        %p447 = pneg %p217
      $region42: #{hvit_vae_forward.6} parent=11 // pred_check_branch
        %449 = sbr.rel (%p447) target = $region44
      $region43: #{hvit_vae_forward.6} parent=11 // pred_region
        _
      $region44: #{hvit_vae_forward.6} parent=11 // pred_fallthru
        _
      // Predicated region
      $region45: #{hvit_vae_forward.6} parent=11 // pred_check
        %p450 = pneg %p238
      $region46: #{hvit_vae_forward.6} parent=11 // pred_check_branch
        %452 = sbr.rel (%p450) target = $region48
      $region47: #{hvit_vae_forward.6} parent=11 // pred_region
        _
      $region48: #{hvit_vae_forward.6} parent=11 // pred_fallthru
        _
      // Predicated region
      $region49: #{hvit_vae_forward.6} parent=11 // pred_check
        %p453 = pneg %p259
      $region50: #{hvit_vae_forward.6} parent=11 // pred_check_branch
        %455 = sbr.rel (%p453) target = $region52
      $region51: #{hvit_vae_forward.6} parent=11 // pred_region
        _
      $region52: #{hvit_vae_forward.6} parent=11 // pred_fallthru
        _
      // Predicated region
      $region53: #{hvit_vae_forward.6} parent=11 // pred_check
        %p456 = pneg %p280
      $region54: #{hvit_vae_forward.6} parent=11 // pred_check_branch
        %458 = sbr.rel (%p456) target = $region56
      $region55: #{hvit_vae_forward.6} parent=11 // pred_region
        _
      $region56: #{hvit_vae_forward.6} parent=11 // pred_fallthru
        _
      // Predicated region
      $region57: #{hvit_vae_forward.6} parent=11 // pred_check
        %p459 = pneg %p301
      $region58: #{hvit_vae_forward.6} parent=11 // pred_check_branch
        %461 = sbr.rel (%p459) target = $region60
      $region59: #{hvit_vae_forward.6} parent=11 // pred_region
        _
      $region60: #{hvit_vae_forward.6} parent=11 // pred_fallthru
        _
      // Predicated region
      $region61: #{hvit_vae_forward.6} parent=11 // pred_check
        %p462 = pneg %p322
      $region62: #{hvit_vae_forward.6} parent=11 // pred_check_branch
        %464 = sbr.rel (%p462) target = $region64
      $region63: #{hvit_vae_forward.6} parent=11 // pred_region
        _
      $region64: #{hvit_vae_forward.6} parent=11 // pred_fallthru
        _
      // Predicated region
      $region65: #{hvit_vae_forward.6} parent=11 // pred_check
        %p465 = pneg %p343
      $region66: #{hvit_vae_forward.6} parent=11 // pred_check_branch
        %467 = sbr.rel (%p465) target = $region68
      $region67: #{hvit_vae_forward.6} parent=11 // pred_region
        _
      $region68: #{hvit_vae_forward.6} parent=11 // pred_fallthru
        _
      // Predicated region
      $region69: #{hvit_vae_forward.6} parent=11 // pred_check
        %p468 = pneg %p364
      $region70: #{hvit_vae_forward.6} parent=11 // pred_check_branch
        %470 = sbr.rel (%p468) target = $region72
      $region71: #{hvit_vae_forward.6} parent=11 // pred_region
        _
      $region72: #{hvit_vae_forward.6} parent=11 // pred_fallthru
        _
      // Predicated region
      $region73: #{hvit_vae_forward.6} parent=11 // pred_check
        %p471 = pneg %p385
      $region74: #{hvit_vae_forward.6} parent=11 // pred_check_branch
        %473 = sbr.rel (%p471) target = $region76
      $region75: #{hvit_vae_forward.6} parent=11 // pred_region
        _
      $region76: #{hvit_vae_forward.6} parent=11 // pred_fallthru
        _
    $region12: #{hvit_vae_forward.6} parent=5 // pred_fallthru
      _
    %p474 = scmp.lt.s32.totalorder %s23, 2
    // Predicated region
    $region77: #{hvit_vae_forward.6} parent=5 // pred_check
      %p475 = pneg %p474
    $region78: #{hvit_vae_forward.6} parent=5 // pred_check_branch
      %477 = sbr.rel (%p475) target = $region80
    $region79: #{hvit_vae_forward.6} parent=5 // pred_region
      // Predicated region
      $region81: #{hvit_vae_forward.6} parent=79 // pred_check
        %p478 = pneg %p43
      $region82: #{hvit_vae_forward.6} parent=79 // pred_check_branch
        %480 = sbr.rel (%p478) target = $region84
      $region83: #{hvit_vae_forward.6} parent=79 // pred_region
        %p481 = scmp.lt.s32.totalorder %s23, 1
        %s482 = scalar_select %p481, %s23, 1
        %s483 = smul.addr %s482, 4
        %s484 = scalar_lea.vmem %s0, %s483
      $region84: #{hvit_vae_forward.6} parent=79 // pred_fallthru
        _
    $region80: #{hvit_vae_forward.6} parent=5 // pred_fallthru
      _
    %p485 = scmp.le.s32.totalorder 1, %s23
    %p486 = scmp.lt.s32.totalorder %s23, 3
    %p487 = pnand %p485, %p486
    %p488 = pneg %p487
    // Predicated region
    $region85: #{hvit_vae_forward.6} parent=5 // pred_check
      _
    $region86: #{hvit_vae_forward.6} parent=5 // pred_check_branch
      %490 = sbr.rel (%p487) target = $region88
    $region87: #{hvit_vae_forward.6} parent=5 // pred_region
      %s491 = ssub.s32 %s23, 1
      %p492 = scmp.lt.s32.totalorder %s28, 1
      %s493 = scalar_select %p492, %s28, 1
      %s494 = smul.addr %s493, 4
      %s495 = scalar_lea.vmem %s0, %s494
      %p496 = pneg %p49
      %p497 = pneg %p46
      %p498 = pneg %p70
      %p499 = pneg %p67
      %p500 = pneg %p91
      %p501 = pneg %p88
      %p502 = pneg %p112
      %p503 = pneg %p109
      %p504 = pneg %p133
      %p505 = pneg %p130
      %p506 = pneg %p154
      %p507 = pneg %p151
      %p508 = pneg %p175
      %p509 = pneg %p172
      %p510 = pneg %p196
      %p511 = pneg %p193
      %p512 = pneg %p217
      %p513 = pneg %p214
      %p514 = pneg %p238
      %p515 = pneg %p235
      %p516 = pneg %p259
      %p517 = pneg %p256
      %p518 = pneg %p280
      %p519 = pneg %p277
      %p520 = pneg %p301
      %p521 = pneg %p298
      %p522 = pneg %p322
      %p523 = pneg %p319
      %p524 = pneg %p343
      %p525 = pneg %p340
      %p526 = pneg %p364
      %p527 = pneg %p361
      %p528 = pneg %p385
      %p529 = pneg %p382
      %p530 = pneg %p411
      %p531 = pneg %p408
      %p532 = scmp.lt.s32.totalorder %s28, 1
      %s533 = scalar_select %p532, %s28, 1
      %s534 = smul.addr %s533, 4
      %s535 = scalar_lea.vmem %s17, %s534
      %p536 = scmp.lt.s32.totalorder %s28, 1
      %s537 = scalar_select %p536, %s28, 1
      %s538 = smul.addr %s537, 4
      %s539 = scalar_lea.vmem %s0, %s538
      %p540 = scmp.lt.s32.totalorder %s28, 1
      %s541 = scalar_select %p540, %s28, 1
      %s542 = smul.addr %s541, 4
      %s543 = scalar_lea.vmem %s17, %s542
      %v545 = vld [vmem:[%s539] sm:$0xf]
      %v546 = vld [vmem:[%s1] sm:$0xf]
      %v547 = vpack.c.bf16 %v545, %v545
      %v548 = vpack.c.bf16 %v546, %v546
      %v549 = vld [vmem:[%s2] sm:$0x1]
      %v551 = vlaneseq
      %v552 = vshrl.u32 %v551, 7
      %v553 = vsub.s32 0, %v552
      %v554 = vrot.slane %v549, %v553
      %vm556 = vcmask 31744
      %v558 = vsel %vm556, %v547, 0
      %vm560 = vcmask 1041408
      %v562 = vsel %vm560, %v548, 0
      %564 = vmatprep.subr.bf16.mxu0 0
      %565 = vmatpush1.bf16.msra.mxu0 %v562
      %566 = vmatprep.subr.bf16.mxu0 0
      %567 = vmatpush1.bf16.msra.mxu0 0
      %568 = vmatprep.subr.bf16.mxu0 0
      %569 = vmatpush1.bf16.msra.mxu0 0
      %570 = vmatprep.subr.bf16.mxu0 0
      %571 = vmatpush1.bf16.msra.mxu0 0
      %572 = vmatprep.subr.bf16.mxu0 0
      %573 = vmatpush1.bf16.msra.mxu0 0
      %574 = vmatprep.subr.bf16.mxu0 0
      %575 = vmatpush1.bf16.msra.mxu0 0
      %576 = vmatprep.subr.bf16.mxu0 0
      %577 = vmatpush1.bf16.msra.mxu0 0
      %578 = vmatprep.subr.bf16.mxu0 0
      %579 = vmatpush1.bf16.msra.mxu0 0
      %580 = vmatprep.subr.bf16.mxu0 0
      %581 = vmatpush1.bf16.msra.mxu0 0
      %582 = vmatprep.subr.bf16.mxu0 0
      %583 = vmatpush1.bf16.msra.mxu0 0
      %584 = vmatprep.subr.bf16.mxu0 0
      %585 = vmatpush1.bf16.msra.mxu0 0
      %586 = vmatprep.subr.bf16.mxu0 0
      %587 = vmatpush1.bf16.msra.mxu0 0
      %588 = vmatprep.subr.bf16.mxu0 0
      %589 = vmatpush1.bf16.msra.mxu0 0
      %590 = vmatprep.subr.bf16.mxu0 0
      %591 = vmatpush1.bf16.msra.mxu0 0
      %592 = vmatprep.subr.bf16.mxu0 0
      %593 = vmatpush1.bf16.msra.mxu0 0
      %594 = vmatprep.subr.bf16.mxu0 0
      %595 = vmatpush1.bf16.msra.mxu0 0
      %596 = vmatprep.mubr.bf16.mxu0 0
      %597 = vmatmul.mubr.bf16.gmra.mrb[0].mxu0 %v558
      %v598 = vpop.f32.mrb[0].mxu0
      %v599 = vadd.f32 %v554, %v598
      %v600 = vpop.f32.mrb[0].mxu0
      %v601 = vpop.f32.mrb[0].mxu0
      %v602 = vpop.f32.mrb[0].mxu0
      %603 = vdwg.mxu0
      %v604 = vld [vmem:[%s3] sm:$0x1]
      %v605 = vld [vmem:[%s4] sm:$0x1]
      %vm606 = vcmask 257024
      %v607 = vsel %vm606, %v599, 0.0
      %608 = vadd.xlane.f32.xlu0 %v607
      %v609 = vpop.xlane.xlu0 %608
      %v610 = vrcp.pop 32.0
      %v611 = vmul.f32 %v609, %v610
      %v612 = vsub.f32 %v599, %v611
      %v613 = vmul.f32 %v612, %v612
      %v614 = vsel %vm606, %v613, 0.0
      %615 = vadd.xlane.f32.xlu0 %v614
      %v616 = vpop.xlane.xlu0 %615
      %v617 = vmul.f32 %v616, %v610
      %v618 = vadd.f32 %v617, 1e-05
      %v619 = vrsqrt.pop %v618
      %v620 = vmul.f32 %v612, %v619
      %v622 = vlaneseq
      %v623 = vshrl.u32 %v622, 7
      %v624 = vsub.s32 0, %v623
      %v625 = vrot.slane %v604, %v624
      %v627 = vmul.f32 %v620, %v625
      %v629 = vlaneseq
      %v630 = vshrl.u32 %v629, 7
      %v631 = vsub.s32 0, %v630
      %v632 = vrot.slane %v605, %v631
      %v634 = vadd.f32 %v627, %v632
      %v635 = vld [vmem:[%s5] sm:$0xff]
      %v636 = vld [vmem:[%s5 + $0x8] sm:$0xff]
      %v637 = vld [vmem:[%s5 + $0x10] sm:$0xff]
      %v638 = vld [vmem:[%s5 + $0x18] sm:$0xff]
      %v639 = vpack.c.bf16 %v634, %v634
      %v640 = vpack.c.bf16 %v636, %v635
      %v641 = vpack.c.bf16 %v638, %v637
      %v642 = vld [vmem:[%s6] sm:$0x1]
      %v644 = vlaneseq
      %v645 = vshrl.u32 %v644, 7
      %v646 = vsub.s32 0, %v645
      %v647 = vrot.slane %v642, %v646
      %vm649 = vcmask 261120
      %v651 = vsel %vm649, %v639, 0
      %653 = vmatprep.subr.bf16.mxu0 0
      %654 = vmatpush1.bf16.msra.mxu0 %v640
      %655 = vmatprep.subr.bf16.mxu0 0
      %656 = vmatpush1.bf16.msra.mxu0 %v641
      %657 = vmatprep.subr.bf16.mxu0 0
      %658 = vmatpush1.bf16.msra.mxu0 0
      %659 = vmatprep.subr.bf16.mxu0 0
      %660 = vmatpush1.bf16.msra.mxu0 0
      %661 = vmatprep.subr.bf16.mxu0 0
      %662 = vmatpush1.bf16.msra.mxu0 0
      %663 = vmatprep.subr.bf16.mxu0 0
      %664 = vmatpush1.bf16.msra.mxu0 0
      %665 = vmatprep.subr.bf16.mxu0 0
      %666 = vmatpush1.bf16.msra.mxu0 0
      %667 = vmatprep.subr.bf16.mxu0 0
      %668 = vmatpush1.bf16.msra.mxu0 0
      %669 = vmatprep.subr.bf16.mxu0 0
      %670 = vmatpush1.bf16.msra.mxu0 0
      %671 = vmatprep.subr.bf16.mxu0 0
      %672 = vmatpush1.bf16.msra.mxu0 0
      %673 = vmatprep.subr.bf16.mxu0 0
      %674 = vmatpush1.bf16.msra.mxu0 0
      %675 = vmatprep.subr.bf16.mxu0 0
      %676 = vmatpush1.bf16.msra.mxu0 0
      %677 = vmatprep.subr.bf16.mxu0 0
      %678 = vmatpush1.bf16.msra.mxu0 0
      %679 = vmatprep.subr.bf16.mxu0 0
      %680 = vmatpush1.bf16.msra.mxu0 0
      %681 = vmatprep.subr.bf16.mxu0 0
      %682 = vmatpush1.bf16.msra.mxu0 0
      %683 = vmatprep.subr.bf16.mxu0 0
      %684 = vmatpush1.bf16.msra.mxu0 0
      %685 = vmatprep.mubr.bf16.mxu0 0
      %686 = vmatmul.mubr.bf16.gmra.mrb[0].mxu0 %v651
      %v687 = vpop.f32.mrb[0].mxu0
      %v688 = vadd.f32 %v647, %v687
      %v689 = vpop.f32.mrb[0].mxu0
      %v690 = vpop.f32.mrb[0].mxu0
      %v691 = vpop.f32.mrb[0].mxu0
      %692 = vdwg.mxu0
      %s693 = scalar_lea.vmem %s5, 128
      %v694 = vld [vmem:[%s693] sm:$0xff]
      %v695 = vld [vmem:[%s693 + $0x8] sm:$0xff]
      %v696 = vld [vmem:[%s693 + $0x10] sm:$0xff]
      %v697 = vld [vmem:[%s693 + $0x18] sm:$0xff]
      %v698 = vpack.c.bf16 %v695, %v694
      %v699 = vpack.c.bf16 %v697, %v696
      %s700 = scalar_lea.vmem %s6, 4
      %v701 = vld [vmem:[%s700] sm:$0x1]
      %v703 = vlaneseq
      %v704 = vshrl.u32 %v703, 7
      %v705 = vsub.s32 0, %v704
      %v706 = vrot.slane %v701, %v705
      %708 = vmatprep.subr.bf16.mxu0 0
      %709 = vmatpush1.bf16.msra.mxu0 %v698
      %710 = vmatprep.subr.bf16.mxu0 0
      %711 = vmatpush1.bf16.msra.mxu0 %v699
      %712 = vmatprep.subr.bf16.mxu0 0
      %713 = vmatpush1.bf16.msra.mxu0 0
      %714 = vmatprep.subr.bf16.mxu0 0
      %715 = vmatpush1.bf16.msra.mxu0 0
      %716 = vmatprep.subr.bf16.mxu0 0
      %717 = vmatpush1.bf16.msra.mxu0 0
      %718 = vmatprep.subr.bf16.mxu0 0
      %719 = vmatpush1.bf16.msra.mxu0 0
      %720 = vmatprep.subr.bf16.mxu0 0
      %721 = vmatpush1.bf16.msra.mxu0 0
      %722 = vmatprep.subr.bf16.mxu0 0
      %723 = vmatpush1.bf16.msra.mxu0 0
      %724 = vmatprep.subr.bf16.mxu0 0
      %725 = vmatpush1.bf16.msra.mxu0 0
      %726 = vmatprep.subr.bf16.mxu0 0
      %727 = vmatpush1.bf16.msra.mxu0 0
      %728 = vmatprep.subr.bf16.mxu0 0
      %729 = vmatpush1.bf16.msra.mxu0 0
      %730 = vmatprep.subr.bf16.mxu0 0
      %731 = vmatpush1.bf16.msra.mxu0 0
      %732 = vmatprep.subr.bf16.mxu0 0
      %733 = vmatpush1.bf16.msra.mxu0 0
      %734 = vmatprep.subr.bf16.mxu0 0
      %735 = vmatpush1.bf16.msra.mxu0 0
      %736 = vmatprep.subr.bf16.mxu0 0
      %737 = vmatpush1.bf16.msra.mxu0 0
      %738 = vmatprep.subr.bf16.mxu0 0
      %739 = vmatpush1.bf16.msra.mxu0 0
      %740 = vmatprep.mubr.bf16.mxu0 0
      %741 = vmatmul.mubr.bf16.gmra.mrb[0].mxu0 %v651
      %v742 = vpop.f32.mrb[0].mxu0
      %v743 = vadd.f32 %v706, %v742
      %v744 = vpop.f32.mrb[0].mxu0
      %v745 = vpop.f32.mrb[0].mxu0
      %v746 = vpop.f32.mrb[0].mxu0
      %747 = vdwg.mxu0
      %s748 = scalar_lea.vmem %s5, 256
      %v749 = vld [vmem:[%s748] sm:$0xff]
      %v750 = vld [vmem:[%s748 + $0x8] sm:$0xff]
      %v751 = vld [vmem:[%s748 + $0x10] sm:$0xff]
      %v752 = vld [vmem:[%s748 + $0x18] sm:$0xff]
      %v753 = vpack.c.bf16 %v750, %v749
      %v754 = vpack.c.bf16 %v752, %v751
      %s755 = scalar_lea.vmem %s6, 8
      %v756 = vld [vmem:[%s755] sm:$0x1]
      %v758 = vlaneseq
      %v759 = vshrl.u32 %v758, 7
      %v760 = vsub.s32 0, %v759
      %v761 = vrot.slane %v756, %v760
      %763 = vmatprep.subr.bf16.mxu0 0
      %764 = vmatpush1.bf16.msra.mxu0 %v753
      %765 = vmatprep.subr.bf16.mxu0 0
      %766 = vmatpush1.bf16.msra.mxu0 %v754
      %767 = vmatprep.subr.bf16.mxu0 0
      %768 = vmatpush1.bf16.msra.mxu0 0
      %769 = vmatprep.subr.bf16.mxu0 0
      %770 = vmatpush1.bf16.msra.mxu0 0
      %771 = vmatprep.subr.bf16.mxu0 0
      %772 = vmatpush1.bf16.msra.mxu0 0
      %773 = vmatprep.subr.bf16.mxu0 0
      %774 = vmatpush1.bf16.msra.mxu0 0
      %775 = vmatprep.subr.bf16.mxu0 0
      %776 = vmatpush1.bf16.msra.mxu0 0
      %777 = vmatprep.subr.bf16.mxu0 0
      %778 = vmatpush1.bf16.msra.mxu0 0
      %779 = vmatprep.subr.bf16.mxu0 0
      %780 = vmatpush1.bf16.msra.mxu0 0
      %781 = vmatprep.subr.bf16.mxu0 0
      %782 = vmatpush1.bf16.msra.mxu0 0
      %783 = vmatprep.subr.bf16.mxu0 0
      %784 = vmatpush1.bf16.msra.mxu0 0
      %785 = vmatprep.subr.bf16.mxu0 0
      %786 = vmatpush1.bf16.msra.mxu0 0
      %787 = vmatprep.subr.bf16.mxu0 0
      %788 = vmatpush1.bf16.msra.mxu0 0
      %789 = vmatprep.subr.bf16.mxu0 0
      %790 = vmatpush1.bf16.msra.mxu0 0
      %791 = vmatprep.subr.bf16.mxu0 0
      %792 = vmatpush1.bf16.msra.mxu0 0
      %793 = vmatprep.subr.bf16.mxu0 0
      %794 = vmatpush1.bf16.msra.mxu0 0
      %795 = vmatprep.mubr.bf16.mxu0 0
      %796 = vmatmul.mubr.bf16.gmra.mrb[0].mxu0 %v651
      %v797 = vpop.f32.mrb[0].mxu0
      %v798 = vadd.f32 %v761, %v797
      %v799 = vpop.f32.mrb[0].mxu0
      %v800 = vpop.f32.mrb[0].mxu0
      %v801 = vpop.f32.mrb[0].mxu0
      %802 = vdwg.mxu0
      %v803 = vpack.c.bf16 %v688, %v688
      %v804 = vpack.c.bf16 %v743, %v743
      %vm805 = vcmask 64512
      %v807 = vsel %vm805, %v803, 0
      %v810 = vsel %vm805, %v804, 0
      %812 = vmatprep.subr.bf16.mxu0 0
      %813 = vmatpush1.bf16.xpose.msra.mxu0 %v810
      %814 = vmatprep.subr.bf16.mxu0 0
      %815 = vmatpush1.bf16.xpose.msra.mxu0 0
      %816 = vmatprep.subr.bf16.mxu0 0
      %817 = vmatpush1.bf16.xpose.msra.mxu0 0
      %818 = vmatprep.subr.bf16.mxu0 0
      %819 = vmatpush1.bf16.xpose.msra.mxu0 0
      %820 = vmatprep.subr.bf16.mxu0 0
      %821 = vmatpush1.bf16.xpose.msra.mxu0 0
      %822 = vmatprep.subr.bf16.mxu0 0
      %823 = vmatpush1.bf16.xpose.msra.mxu0 0
      %824 = vmatprep.subr.bf16.mxu0 0
      %825 = vmatpush1.bf16.xpose.msra.mxu0 0
      %826 = vmatprep.subr.bf16.mxu0 0
      %827 = vmatpush1.bf16.xpose.msra.mxu0 0
      %828 = vmatprep.subr.bf16.mxu0 0
      %829 = vmatpush1.bf16.xpose.msra.mxu0 0
      %830 = vmatprep.subr.bf16.mxu0 0
      %831 = vmatpush1.bf16.xpose.msra.mxu0 0
      %832 = vmatprep.subr.bf16.mxu0 0
      %833 = vmatpush1.bf16.xpose.msra.mxu0 0
      %834 = vmatprep.subr.bf16.mxu0 0
      %835 = vmatpush1.bf16.xpose.msra.mxu0 0
      %836 = vmatprep.subr.bf16.mxu0 0
      %837 = vmatpush1.bf16.xpose.msra.mxu0 0
      %838 = vmatprep.subr.bf16.mxu0 0
      %839 = vmatpush1.bf16.xpose.msra.mxu0 0
      %840 = vmatprep.subr.bf16.mxu0 0
      %841 = vmatpush1.bf16.xpose.msra.mxu0 0
      %842 = vmatprep.subr.bf16.mxu0 0
      %843 = vmatpush1.bf16.xpose.msra.mxu0 0
      %844 = vmatprep.mubr.bf16.mxu0 0
      %845 = vmatmul.mubr.bf16.gmra.mrb[0].mxu0 %v807
      %v846 = vpop.f32.mrb[0].mxu0
      %v847 = vadd.f32 0.0, %v846
      %v848 = vpop.f32.mrb[0].mxu0
      %v849 = vpop.f32.mrb[0].mxu0
      %v850 = vpop.f32.mrb[0].mxu0
      %851 = vdwg.mxu0
      %v852 = vmul.f32 %v847, 0.35355338
      %vm853 = vcmask 27648
      %v854 = vsel %vm853, %v852, -inf
      %855 = vmax.xlane.f32.xlu0 %v854
      %v856 = vpop.xlane.xlu0 %855
      %v857 = vsub.f32 %v852, %v856
      %v858 = vmul.f32 %v857, 1.442695
      %v859 = vpow.pop %v858
      %v860 = vsel %vm853, %v859, 0.0
      %861 = vadd.xlane.f32.xlu0 %v860
      %v862 = vpop.xlane.xlu0 %861
      %v863 = vrcp.pop %v862
      %v864 = vmul.f32 %v859, %v863
      %v865 = vpack.c.bf16 %v864, %v864
      %v866 = vpack.c.bf16 %v798, %v798
      %v868 = vsel %vm556, %v865, 0
      %v871 = vsel %vm560, %v866, 0
      %873 = vmatprep.subr.bf16.mxu0 0
      %874 = vmatpush1.bf16.msra.mxu0 %v871
      %875 = vmatprep.subr.bf16.mxu0 0
      %876 = vmatpush1.bf16.msra.mxu0 0
      %877 = vmatprep.subr.bf16.mxu0 0
      %878 = vmatpush1.bf16.msra.mxu0 0
      %879 = vmatprep.subr.bf16.mxu0 0
      %880 = vmatpush1.bf16.msra.mxu0 0
      %881 = vmatprep.subr.bf16.mxu0 0
      %882 = vmatpush1.bf16.msra.mxu0 0
      %883 = vmatprep.subr.bf16.mxu0 0
      %884 = vmatpush1.bf16.msra.mxu0 0
      %885 = vmatprep.subr.bf16.mxu0 0
      %886 = vmatpush1.bf16.msra.mxu0 0
      %887 = vmatprep.subr.bf16.mxu0 0
      %888 = vmatpush1.bf16.msra.mxu0 0
      %889 = vmatprep.subr.bf16.mxu0 0
      %890 = vmatpush1.bf16.msra.mxu0 0
      %891 = vmatprep.subr.bf16.mxu0 0
      %892 = vmatpush1.bf16.msra.mxu0 0
      %893 = vmatprep.subr.bf16.mxu0 0
      %894 = vmatpush1.bf16.msra.mxu0 0
      %895 = vmatprep.subr.bf16.mxu0 0
      %896 = vmatpush1.bf16.msra.mxu0 0
      %897 = vmatprep.subr.bf16.mxu0 0
      %898 = vmatpush1.bf16.msra.mxu0 0
      %899 = vmatprep.subr.bf16.mxu0 0
      %900 = vmatpush1.bf16.msra.mxu0 0
      %901 = vmatprep.subr.bf16.mxu0 0
      %902 = vmatpush1.bf16.msra.mxu0 0
      %903 = vmatprep.subr.bf16.mxu0 0
      %904 = vmatpush1.bf16.msra.mxu0 0
      %905 = vmatprep.mubr.bf16.mxu0 0
      %906 = vmatmul.mubr.bf16.gmra.mrb[0].mxu0 %v868
      %v907 = vpop.f32.mrb[0].mxu0
      %v908 = vadd.f32 0.0, %v907
      %v909 = vpop.f32.mrb[0].mxu0
      %v910 = vpop.f32.mrb[0].mxu0
      %v911 = vpop.f32.mrb[0].mxu0
      %912 = vdwg.mxu0
      %v913 = vld [vmem:[%s7] sm:$0xff]
      %v914 = vpack.c.bf16 %v908, %v908
      %v915 = vpack.c.bf16 %v913, %v913
      %s916 = scalar_lea.vmem %s5, 32
      %v917 = vld [vmem:[%s916] sm:$0xff]
      %v918 = vld [vmem:[%s916 + $0x8] sm:$0xff]
      %v919 = vld [vmem:[%s916 + $0x10] sm:$0xff]
      %v920 = vld [vmem:[%s916 + $0x18] sm:$0xff]
      %v921 = vpack.c.bf16 %v918, %v917
      %v922 = vpack.c.bf16 %v920, %v919
      %s923 = scalar_lea.vmem %s6, 1
      %v924 = vld [vmem:[%s923] sm:$0x1]
      %v926 = vlaneseq
      %v927 = vshrl.u32 %v926, 7
      %v928 = vsub.s32 0, %v927
      %v929 = vrot.slane %v924, %v928
      %931 = vmatprep.subr.bf16.mxu0 0
      %932 = vmatpush1.bf16.msra.mxu0 %v921
      %933 = vmatprep.subr.bf16.mxu0 0
      %934 = vmatpush1.bf16.msra.mxu0 %v922
      %935 = vmatprep.subr.bf16.mxu0 0
      %936 = vmatpush1.bf16.msra.mxu0 0
      %937 = vmatprep.subr.bf16.mxu0 0
      %938 = vmatpush1.bf16.msra.mxu0 0
      %939 = vmatprep.subr.bf16.mxu0 0
      %940 = vmatpush1.bf16.msra.mxu0 0
      %941 = vmatprep.subr.bf16.mxu0 0
      %942 = vmatpush1.bf16.msra.mxu0 0
      %943 = vmatprep.subr.bf16.mxu0 0
      %944 = vmatpush1.bf16.msra.mxu0 0
      %945 = vmatprep.subr.bf16.mxu0 0
      %946 = vmatpush1.bf16.msra.mxu0 0
      %947 = vmatprep.subr.bf16.mxu0 0
      %948 = vmatpush1.bf16.msra.mxu0 0
      %949 = vmatprep.subr.bf16.mxu0 0
      %950 = vmatpush1.bf16.msra.mxu0 0
      %951 = vmatprep.subr.bf16.mxu0 0
      %952 = vmatpush1.bf16.msra.mxu0 0
      %953 = vmatprep.subr.bf16.mxu0 0
      %954 = vmatpush1.bf16.msra.mxu0 0
      %955 = vmatprep.subr.bf16.mxu0 0
      %956 = vmatpush1.bf16.msra.mxu0 0
      %957 = vmatprep.subr.bf16.mxu0 0
      %958 = vmatpush1.bf16.msra.mxu0 0
      %959 = vmatprep.subr.bf16.mxu0 0
      %960 = vmatpush1.bf16.msra.mxu0 0
      %961 = vmatprep.subr.bf16.mxu0 0
      %962 = vmatpush1.bf16.msra.mxu0 0
      %963 = vmatprep.mubr.bf16.mxu0 0
      %964 = vmatmul.mubr.bf16.gmra.mrb[0].mxu0 %v651
      %v965 = vpop.f32.mrb[0].mxu0
      %v966 = vadd.f32 %v929, %v965
      %v967 = vpop.f32.mrb[0].mxu0
      %v968 = vpop.f32.mrb[0].mxu0
      %v969 = vpop.f32.mrb[0].mxu0
      %970 = vdwg.mxu0
      %s971 = scalar_lea.vmem %s5, 160
      %v972 = vld [vmem:[%s971] sm:$0xff]
      %v973 = vld [vmem:[%s971 + $0x8] sm:$0xff]
      %v974 = vld [vmem:[%s971 + $0x10] sm:$0xff]
      %v975 = vld [vmem:[%s971 + $0x18] sm:$0xff]
      %v976 = vpack.c.bf16 %v973, %v972
      %v977 = vpack.c.bf16 %v975, %v974
      %s978 = scalar_lea.vmem %s6, 5
      %v979 = vld [vmem:[%s978] sm:$0x1]
      %v981 = vlaneseq
      %v982 = vshrl.u32 %v981, 7
      %v983 = vsub.s32 0, %v982
      %v984 = vrot.slane %v979, %v983
      %986 = vmatprep.subr.bf16.mxu0 0
      %987 = vmatpush1.bf16.msra.mxu0 %v976
      %988 = vmatprep.subr.bf16.mxu0 0
      %989 = vmatpush1.bf16.msra.mxu0 %v977
      %990 = vmatprep.subr.bf16.mxu0 0
      %991 = vmatpush1.bf16.msra.mxu0 0
      %992 = vmatprep.subr.bf16.mxu0 0
      %993 = vmatpush1.bf16.msra.mxu0 0
      %994 = vmatprep.subr.bf16.mxu0 0
      %995 = vmatpush1.bf16.msra.mxu0 0
      %996 = vmatprep.subr.bf16.mxu0 0
      %997 = vmatpush1.bf16.msra.mxu0 0
      %998 = vmatprep.subr.bf16.mxu0 0
      %999 = vmatpush1.bf16.msra.mxu0 0
      %1000 = vmatprep.subr.bf16.mxu0 0
      %1001 = vmatpush1.bf16.msra.mxu0 0
      %1002 = vmatprep.subr.bf16.mxu0 0
      %1003 = vmatpush1.bf16.msra.mxu0 0
      %1004 = vmatprep.subr.bf16.mxu0 0
      %1005 = vmatpush1.bf16.msra.mxu0 0
      %1006 = vmatprep.subr.bf16.mxu0 0
      %1007 = vmatpush1.bf16.msra.mxu0 0
      %1008 = vmatprep.subr.bf16.mxu0 0
      %1009 = vmatpush1.bf16.msra.mxu0 0
      %1010 = vmatprep.subr.bf16.mxu0 0
      %1011 = vmatpush1.bf16.msra.mxu0 0
      %1012 = vmatprep.subr.bf16.mxu0 0
      %1013 = vmatpush1.bf16.msra.mxu0 0
      %1014 = vmatprep.subr.bf16.mxu0 0
      %1015 = vmatpush1.bf16.msra.mxu0 0
      %1016 = vmatprep.subr.bf16.mxu0 0
      %1017 = vmatpush1.bf16.msra.mxu0 0
      %1018 = vmatprep.mubr.bf16.mxu0 0
      %1019 = vmatmul.mubr.bf16.gmra.mrb[0].mxu0 %v651
      %v1020 = vpop.f32.mrb[0].mxu0
      %v1021 = vadd.f32 %v984, %v1020
      %v1022 = vpop.f32.mrb[0].mxu0
      %v1023 = vpop.f32.mrb[0].mxu0
      %v1024 = vpop.f32.mrb[0].mxu0
      %1025 = vdwg.mxu0
      %s1026 = scalar_lea.vmem %s5, 288
      %v1027 = vld [vmem:[%s1026] sm:$0xff]
      %v1028 = vld [vmem:[%s1026 + $0x8] sm:$0xff]
      %v1029 = vld [vmem:[%s1026 + $0x10] sm:$0xff]
      %v1030 = vld [vmem:[%s1026 + $0x18] sm:$0xff]
      %v1031 = vpack.c.bf16 %v1028, %v1027
      %v1032 = vpack.c.bf16 %v1030, %v1029
      %s1033 = scalar_lea.vmem %s6, 9
      %v1034 = vld [vmem:[%s1033] sm:$0x1]
      %v1036 = vlaneseq
      %v1037 = vshrl.u32 %v1036, 7
      %v1038 = vsub.s32 0, %v1037
      %v1039 = vrot.slane %v1034, %v1038
      %1041 = vmatprep.subr.bf16.mxu0 0
      %1042 = vmatpush1.bf16.msra.mxu0 %v1031
      %1043 = vmatprep.subr.bf16.mxu0 0
      %1044 = vmatpush1.bf16.msra.mxu0 %v1032
      %1045 = vmatprep.subr.bf16.mxu0 0
      %1046 = vmatpush1.bf16.msra.mxu0 0
      %1047 = vmatprep.subr.bf16.mxu0 0
      %1048 = vmatpush1.bf16.msra.mxu0 0
      %1049 = vmatprep.subr.bf16.mxu0 0
      %1050 = vmatpush1.bf16.msra.mxu0 0
      %1051 = vmatprep.subr.bf16.mxu0 0
      %1052 = vmatpush1.bf16.msra.mxu0 0
      %1053 = vmatprep.subr.bf16.mxu0 0
      %1054 = vmatpush1.bf16.msra.mxu0 0
      %1055 = vmatprep.subr.bf16.mxu0 0
      %1056 = vmatpush1.bf16.msra.mxu0 0
      %1057 = vmatprep.subr.bf16.mxu0 0
      %1058 = vmatpush1.bf16.msra.mxu0 0
      %1059 = vmatprep.subr.bf16.mxu0 0
      %1060 = vmatpush1.bf16.msra.mxu0 0
      %1061 = vmatprep.subr.bf16.mxu0 0
      %1062 = vmatpush1.bf16.msra.mxu0 0
      %1063 = vmatprep.subr.bf16.mxu0 0
      %1064 = vmatpush1.bf16.msra.mxu0 0
      %1065 = vmatprep.subr.bf16.mxu0 0
      %1066 = vmatpush1.bf16.msra.mxu0 0
      %1067 = vmatprep.subr.bf16.mxu0 0
      %1068 = vmatpush1.bf16.msra.mxu0 0
      %1069 = vmatprep.subr.bf16.mxu0 0
      %1070 = vmatpush1.bf16.msra.mxu0 0
      %1071 = vmatprep.subr.bf16.mxu0 0
      %1072 = vmatpush1.bf16.msra.mxu0 0
      %1073 = vmatprep.mubr.bf16.mxu0 0
      %1074 = vmatmul.mubr.bf16.gmra.mrb[0].mxu0 %v651
      %v1075 = vpop.f32.mrb[0].mxu0
      %v1076 = vadd.f32 %v1039, %v1075
      %v1077 = vpop.f32.mrb[0].mxu0
      %v1078 = vpop.f32.mrb[0].mxu0
      %v1079 = vpop.f32.mrb[0].mxu0
      %1080 = vdwg.mxu0
      %v1081 = vpack.c.bf16 %v966, %v966
      %v1082 = vpack.c.bf16 %v1021, %v1021
      %v1084 = vsel %vm805, %v1081, 0
      %v1087 = vsel %vm805, %v1082, 0
      %1089 = vmatprep.subr.bf16.mxu0 0
      %1090 = vmatpush1.bf16.xpose.msra.mxu0 %v1087
      %1091 = vmatprep.subr.bf16.mxu0 0
      %1092 = vmatpush1.bf16.xpose.msra.mxu0 0
      %1093 = vmatprep.subr.bf16.mxu0 0
      %1094 = vmatpush1.bf16.xpose.msra.mxu0 0
      %1095 = vmatprep.subr.bf16.mxu0 0
      %1096 = vmatpush1.bf16.xpose.msra.mxu0 0
      %1097 = vmatprep.subr.bf16.mxu0 0
      %1098 = vmatpush1.bf16.xpose.msra.mxu0 0
      %1099 = vmatprep.subr.bf16.mxu0 0
      %1100 = vmatpush1.bf16.xpose.msra.mxu0 0
      %1101 = vmatprep.subr.bf16.mxu0 0
      %1102 = vmatpush1.bf16.xpose.msra.mxu0 0
      %1103 = vmatprep.subr.bf16.mxu0 0
      %1104 = vmatpush1.bf16.xpose.msra.mxu0 0
      %1105 = vmatprep.subr.bf16.mxu0 0
      %1106 = vmatpush1.bf16.xpose.msra.mxu0 0
      %1107 = vmatprep.subr.bf16.mxu0 0
      %1108 = vmatpush1.bf16.xpose.msra.mxu0 0
      %1109 = vmatprep.subr.bf16.mxu0 0
      %1110 = vmatpush1.bf16.xpose.msra.mxu0 0
      %1111 = vmatprep.subr.bf16.mxu0 0
      %1112 = vmatpush1.bf16.xpose.msra.mxu0 0
      %1113 = vmatprep.subr.bf16.mxu0 0
      %1114 = vmatpush1.bf16.xpose.msra.mxu0 0
      %1115 = vmatprep.subr.bf16.mxu0 0
      %1116 = vmatpush1.bf16.xpose.msra.mxu0 0
      %1117 = vmatprep.subr.bf16.mxu0 0
      %1118 = vmatpush1.bf16.xpose.msra.mxu0 0
      %1119 = vmatprep.subr.bf16.mxu0 0
      %1120 = vmatpush1.bf16.xpose.msra.mxu0 0
      %1121 = vmatprep.mubr.bf16.mxu0 0
      %1122 = vmatmul.mubr.bf16.gmra.mrb[0].mxu0 %v1084
      %v1123 = vpop.f32.mrb[0].mxu0
      %v1124 = vadd.f32 0.0, %v1123
      %v1125 = vpop.f32.mrb[0].mxu0
      %v1126 = vpop.f32.mrb[0].mxu0
      %v1127 = vpop.f32.mrb[0].mxu0
      %1128 = vdwg.mxu0
      %v1129 = vmul.f32 %v1124, 0.35355338
      %v1130 = vsel %vm853, %v1129, -inf
      %1131 = vmax.xlane.f32.xlu0 %v1130
      %v1132 = vpop.xlane.xlu0 %1131
      %v1133 = vsub.f32 %v1129, %v1132
      %v1134 = vmul.f32 %v1133, 1.442695
      %v1135 = vpow.pop %v1134
      %v1136 = vsel %vm853, %v1135, 0.0
      %1137 = vadd.xlane.f32.xlu0 %v1136
      %v1138 = vpop.xlane.xlu0 %1137
      %v1139 = vrcp.pop %v1138
      %v1140 = vmul.f32 %v1135, %v1139
      %v1141 = vpack.c.bf16 %v1140, %v1140
      %v1142 = vpack.c.bf16 %v1076, %v1076
      %v1144 = vsel %vm556, %v1141, 0
      %v1147 = vsel %vm560, %v1142, 0
      %1149 = vmatprep.subr.bf16.mxu0 0
      %1150 = vmatpush1.bf16.msra.mxu0 %v1147
      %1151 = vmatprep.subr.bf16.mxu0 0
      %1152 = vmatpush1.bf16.msra.mxu0 0
      %1153 = vmatprep.subr.bf16.mxu0 0
      %1154 = vmatpush1.bf16.msra.mxu0 0
      %1155 = vmatprep.subr.bf16.mxu0 0
      %1156 = vmatpush1.bf16.msra.mxu0 0
      %1157 = vmatprep.subr.bf16.mxu0 0
      %1158 = vmatpush1.bf16.msra.mxu0 0
      %1159 = vmatprep.subr.bf16.mxu0 0
      %1160 = vmatpush1.bf16.msra.mxu0 0
      %1161 = vmatprep.subr.bf16.mxu0 0
      %1162 = vmatpush1.bf16.msra.mxu0 0
      %1163 = vmatprep.subr.bf16.mxu0 0
      %1164 = vmatpush1.bf16.msra.mxu0 0
      %1165 = vmatprep.subr.bf16.mxu0 0
      %1166 = vmatpush1.bf16.msra.mxu0 0
      %1167 = vmatprep.subr.bf16.mxu0 0
      %1168 = vmatpush1.bf16.msra.mxu0 0
      %1169 = vmatprep.subr.bf16.mxu0 0
      %1170 = vmatpush1.bf16.msra.mxu0 0
      %1171 = vmatprep.subr.bf16.mxu0 0
      %1172 = vmatpush1.bf16.msra.mxu0 0
      %1173 = vmatprep.subr.bf16.mxu0 0
      %1174 = vmatpush1.bf16.msra.mxu0 0
      %1175 = vmatprep.subr.bf16.mxu0 0
      %1176 = vmatpush1.bf16.msra.mxu0 0
      %1177 = vmatprep.subr.bf16.mxu0 0
      %1178 = vmatpush1.bf16.msra.mxu0 0
      %1179 = vmatprep.subr.bf16.mxu0 0
      %1180 = vmatpush1.bf16.msra.mxu0 0
      %1181 = vmatprep.mubr.bf16.mxu0 0
      %1182 = vmatmul.mubr.bf16.gmra.mrb[0].mxu0 %v1144
      %v1183 = vpop.f32.mrb[0].mxu0
      %v1184 = vadd.f32 0.0, %v1183
      %v1185 = vpop.f32.mrb[0].mxu0
      %v1186 = vpop.f32.mrb[0].mxu0
      %v1187 = vpop.f32.mrb[0].mxu0
      %1188 = vdwg.mxu0
      %s1189 = scalar_lea.vmem %s7, 8
      %v1190 = vld [vmem:[%s1189] sm:$0xff]
      %v1191 = vpack.c.bf16 %v1184, %v1184
      %v1192 = vpack.c.bf16 %v1190, %v1190
      %v1194 = vsel %vm805, %v1191, 0
      %vm1196 = vcmask 1043456
      %v1198 = vsel %vm1196, %v1192, 0
      %1200 = vmatprep.subr.bf16.mxu0 0
      %1201 = vmatpush1.bf16.msra.mxu0 %v1198
      %1202 = vmatprep.subr.bf16.mxu0 0
      %1203 = vmatpush1.bf16.msra.mxu0 0
      %1204 = vmatprep.subr.bf16.mxu0 0
      %1205 = vmatpush1.bf16.msra.mxu0 0
      %1206 = vmatprep.subr.bf16.mxu0 0
      %1207 = vmatpush1.bf16.msra.mxu0 0
      %1208 = vmatprep.subr.bf16.mxu0 0
      %1209 = vmatpush1.bf16.msra.mxu0 0
      %1210 = vmatprep.subr.bf16.mxu0 0
      %1211 = vmatpush1.bf16.msra.mxu0 0
      %1212 = vmatprep.subr.bf16.mxu0 0
      %1213 = vmatpush1.bf16.msra.mxu0 0
      %1214 = vmatprep.subr.bf16.mxu0 0
      %1215 = vmatpush1.bf16.msra.mxu0 0
      %1216 = vmatprep.subr.bf16.mxu0 0
      %1217 = vmatpush1.bf16.msra.mxu0 0
      %1218 = vmatprep.subr.bf16.mxu0 0
      %1219 = vmatpush1.bf16.msra.mxu0 0
      %1220 = vmatprep.subr.bf16.mxu0 0
      %1221 = vmatpush1.bf16.msra.mxu0 0
      %1222 = vmatprep.subr.bf16.mxu0 0
      %1223 = vmatpush1.bf16.msra.mxu0 0
      %1224 = vmatprep.subr.bf16.mxu0 0
      %1225 = vmatpush1.bf16.msra.mxu0 0
      %1226 = vmatprep.subr.bf16.mxu0 0
      %1227 = vmatpush1.bf16.msra.mxu0 0
      %1228 = vmatprep.subr.bf16.mxu0 0
      %1229 = vmatpush1.bf16.msra.mxu0 0
      %1230 = vmatprep.subr.bf16.mxu0 0
      %1231 = vmatpush1.bf16.msra.mxu0 0
      %1232 = vmatprep.mubr.bf16.mxu0 0
      %1233 = vmatmul.mubr.bf16.gmra.mrb[0].mxu0 %v1194
      %v1234 = vpop.f32.mrb[0].mxu0
      %v1235 = vadd.f32 0.0, %v1234
      %v1236 = vpop.f32.mrb[0].mxu0
      %v1237 = vpop.f32.mrb[0].mxu0
      %v1238 = vpop.f32.mrb[0].mxu0
      %1239 = vdwg.mxu0
      %v1241 = vsel %vm805, %v914, 0
      %v1244 = vsel %vm1196, %v915, 0
      %1246 = vmatprep.subr.bf16.mxu0 0
      %1247 = vmatpush1.bf16.msra.mxu0 %v1244
      %1248 = vmatprep.subr.bf16.mxu0 0
      %1249 = vmatpush1.bf16.msra.mxu0 0
      %1250 = vmatprep.subr.bf16.mxu0 0
      %1251 = vmatpush1.bf16.msra.mxu0 0
      %1252 = vmatprep.subr.bf16.mxu0 0
      %1253 = vmatpush1.bf16.msra.mxu0 0
      %1254 = vmatprep.subr.bf16.mxu0 0
      %1255 = vmatpush1.bf16.msra.mxu0 0
      %1256 = vmatprep.subr.bf16.mxu0 0
      %1257 = vmatpush1.bf16.msra.mxu0 0
      %1258 = vmatprep.subr.bf16.mxu0 0
      %1259 = vmatpush1.bf16.msra.mxu0 0
      %1260 = vmatprep.subr.bf16.mxu0 0
      %1261 = vmatpush1.bf16.msra.mxu0 0
      %1262 = vmatprep.subr.bf16.mxu0 0
      %1263 = vmatpush1.bf16.msra.mxu0 0
      %1264 = vmatprep.subr.bf16.mxu0 0
      %1265 = vmatpush1.bf16.msra.mxu0 0
      %1266 = vmatprep.subr.bf16.mxu0 0
      %1267 = vmatpush1.bf16.msra.mxu0 0
      %1268 = vmatprep.subr.bf16.mxu0 0
      %1269 = vmatpush1.bf16.msra.mxu0 0
      %1270 = vmatprep.subr.bf16.mxu0 0
      %1271 = vmatpush1.bf16.msra.mxu0 0
      %1272 = vmatprep.subr.bf16.mxu0 0
      %1273 = vmatpush1.bf16.msra.mxu0 0
      %1274 = vmatprep.subr.bf16.mxu0 0
      %1275 = vmatpush1.bf16.msra.mxu0 0
      %1276 = vmatprep.subr.bf16.mxu0 0
      %1277 = vmatpush1.bf16.msra.mxu0 0
      %1278 = vmatprep.mubr.bf16.mxu0 0
      %1279 = vmatmul.mubr.bf16.gmra.mrb[0].mxu0 %v1241
      %v1280 = vpop.f32.mrb[0].mxu0
      %v1281 = vadd.f32 %v1235, %v1280
      %v1282 = vpop.f32.mrb[0].mxu0
      %v1283 = vpop.f32.mrb[0].mxu0
      %v1284 = vpop.f32.mrb[0].mxu0
      %1285 = vdwg.mxu0
      %s1286 = scalar_lea.vmem %s5, 64
      %v1287 = vld [vmem:[%s1286] sm:$0xff]
      %v1288 = vld [vmem:[%s1286 + $0x8] sm:$0xff]
      %v1289 = vld [vmem:[%s1286 + $0x10] sm:$0xff]
      %v1290 = vld [vmem:[%s1286 + $0x18] sm:$0xff]
      %v1291 = vpack.c.bf16 %v1288, %v1287
      %v1292 = vpack.c.bf16 %v1290, %v1289
      %s1293 = scalar_lea.vmem %s6, 2
      %v1294 = vld [vmem:[%s1293] sm:$0x1]
      %v1296 = vlaneseq
      %v1297 = vshrl.u32 %v1296, 7
      %v1298 = vsub.s32 0, %v1297
      %v1299 = vrot.slane %v1294, %v1298
      %1301 = vmatprep.subr.bf16.mxu0 0
      %1302 = vmatpush1.bf16.msra.mxu0 %v1291
      %1303 = vmatprep.subr.bf16.mxu0 0
      %1304 = vmatpush1.bf16.msra.mxu0 %v1292
      %1305 = vmatprep.subr.bf16.mxu0 0
      %1306 = vmatpush1.bf16.msra.mxu0 0
      %1307 = vmatprep.subr.bf16.mxu0 0
      %1308 = vmatpush1.bf16.msra.mxu0 0
      %1309 = vmatprep.subr.bf16.mxu0 0
      %1310 = vmatpush1.bf16.msra.mxu0 0
      %1311 = vmatprep.subr.bf16.mxu0 0
      %1312 = vmatpush1.bf16.msra.mxu0 0
      %1313 = vmatprep.subr.bf16.mxu0 0
      %1314 = vmatpush1.bf16.msra.mxu0 0
      %1315 = vmatprep.subr.bf16.mxu0 0
      %1316 = vmatpush1.bf16.msra.mxu0 0
      %1317 = vmatprep.subr.bf16.mxu0 0
      %1318 = vmatpush1.bf16.msra.mxu0 0
      %1319 = vmatprep.subr.bf16.mxu0 0
      %1320 = vmatpush1.bf16.msra.mxu0 0
      %1321 = vmatprep.subr.bf16.mxu0 0
      %1322 = vmatpush1.bf16.msra.mxu0 0
      %1323 = vmatprep.subr.bf16.mxu0 0
      %1324 = vmatpush1.bf16.msra.mxu0 0
      %1325 = vmatprep.subr.bf16.mxu0 0
      %1326 = vmatpush1.bf16.msra.mxu0 0
      %1327 = vmatprep.subr.bf16.mxu0 0
      %1328 = vmatpush1.bf16.msra.mxu0 0
      %1329 = vmatprep.subr.bf16.mxu0 0
      %1330 = vmatpush1.bf16.msra.mxu0 0
      %1331 = vmatprep.subr.bf16.mxu0 0
      %1332 = vmatpush1.bf16.msra.mxu0 0
      %1333 = vmatprep.mubr.bf16.mxu0 0
      %1334 = vmatmul.mubr.bf16.gmra.mrb[0].mxu0 %v651
      %v1335 = vpop.f32.mrb[0].mxu0
      %v1336 = vadd.f32 %v1299, %v1335
      %v1337 = vpop.f32.mrb[0].mxu0
      %v1338 = vpop.f32.mrb[0].mxu0
      %v1339 = vpop.f32.mrb[0].mxu0
      %1340 = vdwg.mxu0
      %s1341 = scalar_lea.vmem %s5, 192
      %v1342 = vld [vmem:[%s1341] sm:$0xff]
      %v1343 = vld [vmem:[%s1341 + $0x8] sm:$0xff]
      %v1344 = vld [vmem:[%s1341 + $0x10] sm:$0xff]
      %v1345 = vld [vmem:[%s1341 + $0x18] sm:$0xff]
      %v1346 = vpack.c.bf16 %v1343, %v1342
      %v1347 = vpack.c.bf16 %v1345, %v1344
      %s1348 = scalar_lea.vmem %s6, 6
      %v1349 = vld [vmem:[%s1348] sm:$0x1]
      %v1351 = vlaneseq
      %v1352 = vshrl.u32 %v1351, 7
      %v1353 = vsub.s32 0, %v1352
      %v1354 = vrot.slane %v1349, %v1353
      %1356 = vmatprep.subr.bf16.mxu0 0
      %1357 = vmatpush1.bf16.msra.mxu0 %v1346
      %1358 = vmatprep.subr.bf16.mxu0 0
      %1359 = vmatpush1.bf16.msra.mxu0 %v1347
      %1360 = vmatprep.subr.bf16.mxu0 0
      %1361 = vmatpush1.bf16.msra.mxu0 0
      %1362 = vmatprep.subr.bf16.mxu0 0
      %1363 = vmatpush1.bf16.msra.mxu0 0
      %1364 = vmatprep.subr.bf16.mxu0 0
      %1365 = vmatpush1.bf16.msra.mxu0 0
      %1366 = vmatprep.subr.bf16.mxu0 0
      %1367 = vmatpush1.bf16.msra.mxu0 0
      %1368 = vmatprep.subr.bf16.mxu0 0
      %1369 = vmatpush1.bf16.msra.mxu0 0
      %1370 = vmatprep.subr.bf16.mxu0 0
      %1371 = vmatpush1.bf16.msra.mxu0 0
      %1372 = vmatprep.subr.bf16.mxu0 0
      %1373 = vmatpush1.bf16.msra.mxu0 0
      %1374 = vmatprep.subr.bf16.mxu0 0
      %1375 = vmatpush1.bf16.msra.mxu0 0
      %1376 = vmatprep.subr.bf16.mxu0 0
      %1377 = vmatpush1.bf16.msra.mxu0 0
      %1378 = vmatprep.subr.bf16.mxu0 0
      %1379 = vmatpush1.bf16.msra.mxu0 0
      %1380 = vmatprep.subr.bf16.mxu0 0
      %1381 = vmatpush1.bf16.msra.mxu0 0
      %1382 = vmatprep.subr.bf16.mxu0 0
      %1383 = vmatpush1.bf16.msra.mxu0 0
      %1384 = vmatprep.subr.bf16.mxu0 0
      %1385 = vmatpush1.bf16.msra.mxu0 0
      %1386 = vmatprep.subr.bf16.mxu0 0
      %1387 = vmatpush1.bf16.msra.mxu0 0
      %1388 = vmatprep.mubr.bf16.mxu0 0
      %1389 = vmatmul.mubr.bf16.gmra.mrb[0].mxu0 %v651
      %v1390 = vpop.f32.mrb[0].mxu0
      %v1391 = vadd.f32 %v1354, %v1390
      %v1392 = vpop.f32.mrb[0].mxu0
      %v1393 = vpop.f32.mrb[0].mxu0
      %v1394 = vpop.f32.mrb[0].mxu0
      %1395 = vdwg.mxu0
      %s1396 = scalar_lea.vmem %s5, 320
      %v1397 = vld [vmem:[%s1396] sm:$0xff]
      %v1398 = vld [vmem:[%s1396 + $0x8] sm:$0xff]
      %v1399 = vld [vmem:[%s1396 + $0x10] sm:$0xff]
      %v1400 = vld [vmem:[%s1396 + $0x18] sm:$0xff]
      %v1401 = vpack.c.bf16 %v1398, %v1397
      %v1402 = vpack.c.bf16 %v1400, %v1399
      %s1403 = scalar_lea.vmem %s6, 10
      %v1404 = vld [vmem:[%s1403] sm:$0x1]
      %v1406 = vlaneseq
      %v1407 = vshrl.u32 %v1406, 7
      %v1408 = vsub.s32 0, %v1407
      %v1409 = vrot.slane %v1404, %v1408
      %1411 = vmatprep.subr.bf16.mxu0 0
      %1412 = vmatpush1.bf16.msra.mxu0 %v1401
      %1413 = vmatprep.subr.bf16.mxu0 0
      %1414 = vmatpush1.bf16.msra.mxu0 %v1402
      %1415 = vmatprep.subr.bf16.mxu0 0
      %1416 = vmatpush1.bf16.msra.mxu0 0
      %1417 = vmatprep.subr.bf16.mxu0 0
      %1418 = vmatpush1.bf16.msra.mxu0 0
      %1419 = vmatprep.subr.bf16.mxu0 0
      %1420 = vmatpush1.bf16.msra.mxu0 0
      %1421 = vmatprep.subr.bf16.mxu0 0
      %1422 = vmatpush1.bf16.msra.mxu0 0
      %1423 = vmatprep.subr.bf16.mxu0 0
      %1424 = vmatpush1.bf16.msra.mxu0 0
      %1425 = vmatprep.subr.bf16.mxu0 0
      %1426 = vmatpush1.bf16.msra.mxu0 0
      %1427 = vmatprep.subr.bf16.mxu0 0
      %1428 = vmatpush1.bf16.msra.mxu0 0
      %1429 = vmatprep.subr.bf16.mxu0 0
      %1430 = vmatpush1.bf16.msra.mxu0 0
      %1431 = vmatprep.subr.bf16.mxu0 0
      %1432 = vmatpush1.bf16.msra.mxu0 0
      %1433 = vmatprep.subr.bf16.mxu0 0
      %1434 = vmatpush1.bf16.msra.mxu0 0
      %1435 = vmatprep.subr.bf16.mxu0 0
      %1436 = vmatpush1.bf16.msra.mxu0 0
      %1437 = vmatprep.subr.bf16.mxu0 0
      %1438 = vmatpush1.bf16.msra.mxu0 0
      %1439 = vmatprep.subr.bf16.mxu0 0
      %1440 = vmatpush1.bf16.msra.mxu0 0
      %1441 = vmatprep.subr.bf16.mxu0 0
      %1442 = vmatpush1.bf16.msra.mxu0 0
      %1443 = vmatprep.mubr.bf16.mxu0 0
      %1444 = vmatmul.mubr.bf16.gmra.mrb[0].mxu0 %v651
      %v1445 = vpop.f32.mrb[0].mxu0
      %v1446 = vadd.f32 %v1409, %v1445
      %v1447 = vpop.f32.mrb[0].mxu0
      %v1448 = vpop.f32.mrb[0].mxu0
      %v1449 = vpop.f32.mrb[0].mxu0
      %1450 = vdwg.mxu0
      %v1451 = vpack.c.bf16 %v1336, %v1336
      %v1452 = vpack.c.bf16 %v1391, %v1391
      %v1454 = vsel %vm805, %v1451, 0
      %v1457 = vsel %vm805, %v1452, 0
      %1459 = vmatprep.subr.bf16.mxu0 0
      %1460 = vmatpush1.bf16.xpose.msra.mxu0 %v1457
      %1461 = vmatprep.subr.bf16.mxu0 0
      %1462 = vmatpush1.bf16.xpose.msra.mxu0 0
      %1463 = vmatprep.subr.bf16.mxu0 0
      %1464 = vmatpush1.bf16.xpose.msra.mxu0 0
      %1465 = vmatprep.subr.bf16.mxu0 0
      %1466 = vmatpush1.bf16.xpose.msra.mxu0 0
      %1467 = vmatprep.subr.bf16.mxu0 0
      %1468 = vmatpush1.bf16.xpose.msra.mxu0 0
      %1469 = vmatprep.subr.bf16.mxu0 0
      %1470 = vmatpush1.bf16.xpose.msra.mxu0 0
      %1471 = vmatprep.subr.bf16.mxu0 0
      %1472 = vmatpush1.bf16.xpose.msra.mxu0 0
      %1473 = vmatprep.subr.bf16.mxu0 0
      %1474 = vmatpush1.bf16.xpose.msra.mxu0 0
      %1475 = vmatprep.subr.bf16.mxu0 0
      %1476 = vmatpush1.bf16.xpose.msra.mxu0 0
      %1477 = vmatprep.subr.bf16.mxu0 0
      %1478 = vmatpush1.bf16.xpose.msra.mxu0 0
      %1479 = vmatprep.subr.bf16.mxu0 0
      %1480 = vmatpush1.bf16.xpose.msra.mxu0 0
      %1481 = vmatprep.subr.bf16.mxu0 0
      %1482 = vmatpush1.bf16.xpose.msra.mxu0 0
      %1483 = vmatprep.subr.bf16.mxu0 0
      %1484 = vmatpush1.bf16.xpose.msra.mxu0 0
      %1485 = vmatprep.subr.bf16.mxu0 0
      %1486 = vmatpush1.bf16.xpose.msra.mxu0 0
      %1487 = vmatprep.subr.bf16.mxu0 0
      %1488 = vmatpush1.bf16.xpose.msra.mxu0 0
      %1489 = vmatprep.subr.bf16.mxu0 0
      %1490 = vmatpush1.bf16.xpose.msra.mxu0 0
      %1491 = vmatprep.mubr.bf16.mxu0 0
      %1492 = vmatmul.mubr.bf16.gmra.mrb[0].mxu0 %v1454
      %v1493 = vpop.f32.mrb[0].mxu0
      %v1494 = vadd.f32 0.0, %v1493
      %v1495 = vpop.f32.mrb[0].mxu0
      %v1496 = vpop.f32.mrb[0].mxu0
      %v1497 = vpop.f32.mrb[0].mxu0
      %1498 = vdwg.mxu0
      %v1499 = vmul.f32 %v1494, 0.35355338
      %v1500 = vsel %vm853, %v1499, -inf
      %1501 = vmax.xlane.f32.xlu0 %v1500
      %v1502 = vpop.xlane.xlu0 %1501
      %v1503 = vsub.f32 %v1499, %v1502
      %v1504 = vmul.f32 %v1503, 1.442695
      %v1505 = vpow.pop %v1504
      %v1506 = vsel %vm853, %v1505, 0.0
      %1507 = vadd.xlane.f32.xlu0 %v1506
      %v1508 = vpop.xlane.xlu0 %1507
      %v1509 = vrcp.pop %v1508
      %v1510 = vmul.f32 %v1505, %v1509
      %v1511 = vpack.c.bf16 %v1510, %v1510
      %v1512 = vpack.c.bf16 %v1446, %v1446
      %v1514 = vsel %vm556, %v1511, 0
      %v1517 = vsel %vm560, %v1512, 0
      %1519 = vmatprep.subr.bf16.mxu0 0
      %1520 = vmatpush1.bf16.msra.mxu0 %v1517
      %1521 = vmatprep.subr.bf16.mxu0 0
      %1522 = vmatpush1.bf16.msra.mxu0 0
      %1523 = vmatprep.subr.bf16.mxu0 0
      %1524 = vmatpush1.bf16.msra.mxu0 0
      %1525 = vmatprep.subr.bf16.mxu0 0
      %1526 = vmatpush1.bf16.msra.mxu0 0
      %1527 = vmatprep.subr.bf16.mxu0 0
      %1528 = vmatpush1.bf16.msra.mxu0 0
      %1529 = vmatprep.subr.bf16.mxu0 0
      %1530 = vmatpush1.bf16.msra.mxu0 0
      %1531 = vmatprep.subr.bf16.mxu0 0
      %1532 = vmatpush1.bf16.msra.mxu0 0
      %1533 = vmatprep.subr.bf16.mxu0 0
      %1534 = vmatpush1.bf16.msra.mxu0 0
      %1535 = vmatprep.subr.bf16.mxu0 0
      %1536 = vmatpush1.bf16.msra.mxu0 0
      %1537 = vmatprep.subr.bf16.mxu0 0
      %1538 = vmatpush1.bf16.msra.mxu0 0
      %1539 = vmatprep.subr.bf16.mxu0 0
      %1540 = vmatpush1.bf16.msra.mxu0 0
      %1541 = vmatprep.subr.bf16.mxu0 0
      %1542 = vmatpush1.bf16.msra.mxu0 0
      %1543 = vmatprep.subr.bf16.mxu0 0
      %1544 = vmatpush1.bf16.msra.mxu0 0
      %1545 = vmatprep.subr.bf16.mxu0 0
      %1546 = vmatpush1.bf16.msra.mxu0 0
      %1547 = vmatprep.subr.bf16.mxu0 0
      %1548 = vmatpush1.bf16.msra.mxu0 0
      %1549 = vmatprep.subr.bf16.mxu0 0
      %1550 = vmatpush1.bf16.msra.mxu0 0
      %1551 = vmatprep.mubr.bf16.mxu0 0
      %1552 = vmatmul.mubr.bf16.gmra.mrb[0].mxu0 %v1514
      %v1553 = vpop.f32.mrb[0].mxu0
      %v1554 = vadd.f32 0.0, %v1553
      %v1555 = vpop.f32.mrb[0].mxu0
      %v1556 = vpop.f32.mrb[0].mxu0
      %v1557 = vpop.f32.mrb[0].mxu0
      %1558 = vdwg.mxu0
      %s1559 = scalar_lea.vmem %s7, 16
      %v1560 = vld [vmem:[%s1559] sm:$0xff]
      %v1561 = vpack.c.bf16 %v1554, %v1554
      %v1562 = vpack.c.bf16 %v1560, %v1560
      %v1564 = vsel %vm805, %v1561, 0
      %v1567 = vsel %vm1196, %v1562, 0
      %1569 = vmatprep.subr.bf16.mxu0 0
      %1570 = vmatpush1.bf16.msra.mxu0 %v1567
      %1571 = vmatprep.subr.bf16.mxu0 0
      %1572 = vmatpush1.bf16.msra.mxu0 0
      %1573 = vmatprep.subr.bf16.mxu0 0
      %1574 = vmatpush1.bf16.msra.mxu0 0
      %1575 = vmatprep.subr.bf16.mxu0 0
      %1576 = vmatpush1.bf16.msra.mxu0 0
      %1577 = vmatprep.subr.bf16.mxu0 0
      %1578 = vmatpush1.bf16.msra.mxu0 0
      %1579 = vmatprep.subr.bf16.mxu0 0
      %1580 = vmatpush1.bf16.msra.mxu0 0
      %1581 = vmatprep.subr.bf16.mxu0 0
      %1582 = vmatpush1.bf16.msra.mxu0 0
      %1583 = vmatprep.subr.bf16.mxu0 0
      %1584 = vmatpush1.bf16.msra.mxu0 0
      %1585 = vmatprep.subr.bf16.mxu0 0
      %1586 = vmatpush1.bf16.msra.mxu0 0
      %1587 = vmatprep.subr.bf16.mxu0 0
      %1588 = vmatpush1.bf16.msra.mxu0 0
      %1589 = vmatprep.subr.bf16.mxu0 0
      %1590 = vmatpush1.bf16.msra.mxu0 0
      %1591 = vmatprep.subr.bf16.mxu0 0
      %1592 = vmatpush1.bf16.msra.mxu0 0
      %1593 = vmatprep.subr.bf16.mxu0 0
      %1594 = vmatpush1.bf16.msra.mxu0 0
      %1595 = vmatprep.subr.bf16.mxu0 0
      %1596 = vmatpush1.bf16.msra.mxu0 0
      %1597 = vmatprep.subr.bf16.mxu0 0
      %1598 = vmatpush1.bf16.msra.mxu0 0
      %1599 = vmatprep.subr.bf16.mxu0 0
      %1600 = vmatpush1.bf16.msra.mxu0 0
      %1601 = vmatprep.mubr.bf16.mxu0 0
      %1602 = vmatmul.mubr.bf16.gmra.mrb[0].mxu0 %v1564
      %v1603 = vpop.f32.mrb[0].mxu0
      %v1604 = vadd.f32 0.0, %v1603
      %v1605 = vpop.f32.mrb[0].mxu0
      %v1606 = vpop.f32.mrb[0].mxu0
      %v1607 = vpop.f32.mrb[0].mxu0
      %1608 = vdwg.mxu0
      %v1609 = vadd.f32 %v1281, %v1604
      %s1610 = scalar_lea.vmem %s5, 96
      %v1611 = vld [vmem:[%s1610] sm:$0xff]
      %v1612 = vld [vmem:[%s1610 + $0x8] sm:$0xff]
      %v1613 = vld [vmem:[%s1610 + $0x10] sm:$0xff]
      %v1614 = vld [vmem:[%s1610 + $0x18] sm:$0xff]
      %v1615 = vpack.c.bf16 %v1612, %v1611
      %v1616 = vpack.c.bf16 %v1614, %v1613
      %s1617 = scalar_lea.vmem %s6, 3
      %v1618 = vld [vmem:[%s1617] sm:$0x1]
      %v1620 = vlaneseq
      %v1621 = vshrl.u32 %v1620, 7
      %v1622 = vsub.s32 0, %v1621
      %v1623 = vrot.slane %v1618, %v1622
      %1625 = vmatprep.subr.bf16.mxu0 0
      %1626 = vmatpush1.bf16.msra.mxu0 %v1615
      %1627 = vmatprep.subr.bf16.mxu0 0
      %1628 = vmatpush1.bf16.msra.mxu0 %v1616
      %1629 = vmatprep.subr.bf16.mxu0 0
      %1630 = vmatpush1.bf16.msra.mxu0 0
      %1631 = vmatprep.subr.bf16.mxu0 0
      %1632 = vmatpush1.bf16.msra.mxu0 0
      %1633 = vmatprep.subr.bf16.mxu0 0
      %1634 = vmatpush1.bf16.msra.mxu0 0
      %1635 = vmatprep.subr.bf16.mxu0 0
      %1636 = vmatpush1.bf16.msra.mxu0 0
      %1637 = vmatprep.subr.bf16.mxu0 0
      %1638 = vmatpush1.bf16.msra.mxu0 0
      %1639 = vmatprep.subr.bf16.mxu0 0
      %1640 = vmatpush1.bf16.msra.mxu0 0
      %1641 = vmatprep.subr.bf16.mxu0 0
      %1642 = vmatpush1.bf16.msra.mxu0 0
      %1643 = vmatprep.subr.bf16.mxu0 0
      %1644 = vmatpush1.bf16.msra.mxu0 0
      %1645 = vmatprep.subr.bf16.mxu0 0
      %1646 = vmatpush1.bf16.msra.mxu0 0
      %1647 = vmatprep.subr.bf16.mxu0 0
      %1648 = vmatpush1.bf16.msra.mxu0 0
      %1649 = vmatprep.subr.bf16.mxu0 0
      %1650 = vmatpush1.bf16.msra.mxu0 0
      %1651 = vmatprep.subr.bf16.mxu0 0
      %1652 = vmatpush1.bf16.msra.mxu0 0
      %1653 = vmatprep.subr.bf16.mxu0 0
      %1654 = vmatpush1.bf16.msra.mxu0 0
      %1655 = vmatprep.subr.bf16.mxu0 0
      %1656 = vmatpush1.bf16.msra.mxu0 0
      %1657 = vmatprep.mubr.bf16.mxu0 0
      %1658 = vmatmul.mubr.bf16.gmra.mrb[0].mxu0 %v651
      %v1659 = vpop.f32.mrb[0].mxu0
      %v1660 = vadd.f32 %v1623, %v1659
      %v1661 = vpop.f32.mrb[0].mxu0
      %v1662 = vpop.f32.mrb[0].mxu0
      %v1663 = vpop.f32.mrb[0].mxu0
      %1664 = vdwg.mxu0
      %s1665 = scalar_lea.vmem %s5, 224
      %v1666 = vld [vmem:[%s1665] sm:$0xff]
      %v1667 = vld [vmem:[%s1665 + $0x8] sm:$0xff]
      %v1668 = vld [vmem:[%s1665 + $0x10] sm:$0xff]
      %v1669 = vld [vmem:[%s1665 + $0x18] sm:$0xff]
      %v1670 = vpack.c.bf16 %v1667, %v1666
      %v1671 = vpack.c.bf16 %v1669, %v1668
      %s1672 = scalar_lea.vmem %s6, 7
      %v1673 = vld [vmem:[%s1672] sm:$0x1]
      %v1675 = vlaneseq
      %v1676 = vshrl.u32 %v1675, 7
      %v1677 = vsub.s32 0, %v1676
      %v1678 = vrot.slane %v1673, %v1677
      %1680 = vmatprep.subr.bf16.mxu0 0
      %1681 = vmatpush1.bf16.msra.mxu0 %v1670
      %1682 = vmatprep.subr.bf16.mxu0 0
      %1683 = vmatpush1.bf16.msra.mxu0 %v1671
      %1684 = vmatprep.subr.bf16.mxu0 0
      %1685 = vmatpush1.bf16.msra.mxu0 0
      %1686 = vmatprep.subr.bf16.mxu0 0
      %1687 = vmatpush1.bf16.msra.mxu0 0
      %1688 = vmatprep.subr.bf16.mxu0 0
      %1689 = vmatpush1.bf16.msra.mxu0 0
      %1690 = vmatprep.subr.bf16.mxu0 0
      %1691 = vmatpush1.bf16.msra.mxu0 0
      %1692 = vmatprep.subr.bf16.mxu0 0
      %1693 = vmatpush1.bf16.msra.mxu0 0
      %1694 = vmatprep.subr.bf16.mxu0 0
      %1695 = vmatpush1.bf16.msra.mxu0 0
      %1696 = vmatprep.subr.bf16.mxu0 0
      %1697 = vmatpush1.bf16.msra.mxu0 0
      %1698 = vmatprep.subr.bf16.mxu0 0
      %1699 = vmatpush1.bf16.msra.mxu0 0
      %1700 = vmatprep.subr.bf16.mxu0 0
      %1701 = vmatpush1.bf16.msra.mxu0 0
      %1702 = vmatprep.subr.bf16.mxu0 0
      %1703 = vmatpush1.bf16.msra.mxu0 0
      %1704 = vmatprep.subr.bf16.mxu0 0
      %1705 = vmatpush1.bf16.msra.mxu0 0
      %1706 = vmatprep.subr.bf16.mxu0 0
      %1707 = vmatpush1.bf16.msra.mxu0 0
      %1708 = vmatprep.subr.bf16.mxu0 0
      %1709 = vmatpush1.bf16.msra.mxu0 0
      %1710 = vmatprep.subr.bf16.mxu0 0
      %1711 = vmatpush1.bf16.msra.mxu0 0
      %1712 = vmatprep.mubr.bf16.mxu0 0
      %1713 = vmatmul.mubr.bf16.gmra.mrb[0].mxu0 %v651
      %v1714 = vpop.f32.mrb[0].mxu0
      %v1715 = vadd.f32 %v1678, %v1714
      %v1716 = vpop.f32.mrb[0].mxu0
      %v1717 = vpop.f32.mrb[0].mxu0
      %v1718 = vpop.f32.mrb[0].mxu0
      %1719 = vdwg.mxu0
      %s1720 = scalar_lea.vmem %s5, 352
      %v1721 = vld [vmem:[%s1720] sm:$0xff]
      %v1722 = vld [vmem:[%s1720 + $0x8] sm:$0xff]
      %v1723 = vld [vmem:[%s1720 + $0x10] sm:$0xff]
      %v1724 = vld [vmem:[%s1720 + $0x18] sm:$0xff]
      %v1725 = vpack.c.bf16 %v1722, %v1721
      %v1726 = vpack.c.bf16 %v1724, %v1723
      %s1727 = scalar_lea.vmem %s6, 11
      %v1728 = vld [vmem:[%s1727] sm:$0x1]
      %v1730 = vlaneseq
      %v1731 = vshrl.u32 %v1730, 7
      %v1732 = vsub.s32 0, %v1731
      %v1733 = vrot.slane %v1728, %v1732
      %1735 = vmatprep.subr.bf16.mxu0 0
      %1736 = vmatpush1.bf16.msra.mxu0 %v1725
      %1737 = vmatprep.subr.bf16.mxu0 0
      %1738 = vmatpush1.bf16.msra.mxu0 %v1726
      %1739 = vmatprep.subr.bf16.mxu0 0
      %1740 = vmatpush1.bf16.msra.mxu0 0
      %1741 = vmatprep.subr.bf16.mxu0 0
      %1742 = vmatpush1.bf16.msra.mxu0 0
      %1743 = vmatprep.subr.bf16.mxu0 0
      %1744 = vmatpush1.bf16.msra.mxu0 0
      %1745 = vmatprep.subr.bf16.mxu0 0
      %1746 = vmatpush1.bf16.msra.mxu0 0
      %1747 = vmatprep.subr.bf16.mxu0 0
      %1748 = vmatpush1.bf16.msra.mxu0 0
      %1749 = vmatprep.subr.bf16.mxu0 0
      %1750 = vmatpush1.bf16.msra.mxu0 0
      %1751 = vmatprep.subr.bf16.mxu0 0
      %1752 = vmatpush1.bf16.msra.mxu0 0
      %1753 = vmatprep.subr.bf16.mxu0 0
      %1754 = vmatpush1.bf16.msra.mxu0 0
      %1755 = vmatprep.subr.bf16.mxu0 0
      %1756 = vmatpush1.bf16.msra.mxu0 0
      %1757 = vmatprep.subr.bf16.mxu0 0
      %1758 = vmatpush1.bf16.msra.mxu0 0
      %1759 = vmatprep.subr.bf16.mxu0 0
      %1760 = vmatpush1.bf16.msra.mxu0 0
      %1761 = vmatprep.subr.bf16.mxu0 0
      %1762 = vmatpush1.bf16.msra.mxu0 0
      %1763 = vmatprep.subr.bf16.mxu0 0
      %1764 = vmatpush1.bf16.msra.mxu0 0
      %1765 = vmatprep.subr.bf16.mxu0 0
      %1766 = vmatpush1.bf16.msra.mxu0 0
      %1767 = vmatprep.mubr.bf16.mxu0 0
      %1768 = vmatmul.mubr.bf16.gmra.mrb[0].mxu0 %v651
      %v1769 = vpop.f32.mrb[0].mxu0
      %v1770 = vadd.f32 %v1733, %v1769
      %v1771 = vpop.f32.mrb[0].mxu0
      %v1772 = vpop.f32.mrb[0].mxu0
      %v1773 = vpop.f32.mrb[0].mxu0
      %1774 = vdwg.mxu0
      %v1775 = vpack.c.bf16 %v1660, %v1660
      %v1776 = vpack.c.bf16 %v1715, %v1715
      %v1778 = vsel %vm805, %v1775, 0
      %v1781 = vsel %vm805, %v1776, 0
      %1783 = vmatprep.subr.bf16.mxu0 0
      %1784 = vmatpush1.bf16.xpose.msra.mxu0 %v1781
      %1785 = vmatprep.subr.bf16.mxu0 0
      %1786 = vmatpush1.bf16.xpose.msra.mxu0 0
      %1787 = vmatprep.subr.bf16.mxu0 0
      %1788 = vmatpush1.bf16.xpose.msra.mxu0 0
      %1789 = vmatprep.subr.bf16.mxu0 0
      %1790 = vmatpush1.bf16.xpose.msra.mxu0 0
      %1791 = vmatprep.subr.bf16.mxu0 0
      %1792 = vmatpush1.bf16.xpose.msra.mxu0 0
      %1793 = vmatprep.subr.bf16.mxu0 0
      %1794 = vmatpush1.bf16.xpose.msra.mxu0 0
      %1795 = vmatprep.subr.bf16.mxu0 0
      %1796 = vmatpush1.bf16.xpose.msra.mxu0 0
      %1797 = vmatprep.subr.bf16.mxu0 0
      %1798 = vmatpush1.bf16.xpose.msra.mxu0 0
      %1799 = vmatprep.subr.bf16.mxu0 0
      %1800 = vmatpush1.bf16.xpose.msra.mxu0 0
      %1801 = vmatprep.subr.bf16.mxu0 0
      %1802 = vmatpush1.bf16.xpose.msra.mxu0 0
      %1803 = vmatprep.subr.bf16.mxu0 0
      %1804 = vmatpush1.bf16.xpose.msra.mxu0 0
      %1805 = vmatprep.subr.bf16.mxu0 0
      %1806 = vmatpush1.bf16.xpose.msra.mxu0 0
      %1807 = vmatprep.subr.bf16.mxu0 0
      %1808 = vmatpush1.bf16.xpose.msra.mxu0 0
      %1809 = vmatprep.subr.bf16.mxu0 0
      %1810 = vmatpush1.bf16.xpose.msra.mxu0 0
      %1811 = vmatprep.subr.bf16.mxu0 0
      %1812 = vmatpush1.bf16.xpose.msra.mxu0 0
      %1813 = vmatprep.subr.bf16.mxu0 0
      %1814 = vmatpush1.bf16.xpose.msra.mxu0 0
      %1815 = vmatprep.mubr.bf16.mxu0 0
      %1816 = vmatmul.mubr.bf16.gmra.mrb[0].mxu0 %v1778
      %v1817 = vpop.f32.mrb[0].mxu0
      %v1818 = vadd.f32 0.0, %v1817
      %v1819 = vpop.f32.mrb[0].mxu0
      %v1820 = vpop.f32.mrb[0].mxu0
      %v1821 = vpop.f32.mrb[0].mxu0
      %1822 = vdwg.mxu0
      %v1823 = vmul.f32 %v1818, 0.35355338
      %v1824 = vsel %vm853, %v1823, -inf
      %1825 = vmax.xlane.f32.xlu0 %v1824
      %v1826 = vpop.xlane.xlu0 %1825
      %v1827 = vsub.f32 %v1823, %v1826
      %v1828 = vmul.f32 %v1827, 1.442695
      %v1829 = vpow.pop %v1828
      %v1830 = vsel %vm853, %v1829, 0.0
      %1831 = vadd.xlane.f32.xlu0 %v1830
      %v1832 = vpop.xlane.xlu0 %1831
      %v1833 = vrcp.pop %v1832
      %v1834 = vmul.f32 %v1829, %v1833
      %v1835 = vpack.c.bf16 %v1834, %v1834
      %v1836 = vpack.c.bf16 %v1770, %v1770
      %v1838 = vsel %vm556, %v1835, 0
      %v1841 = vsel %vm560, %v1836, 0
      %1843 = vmatprep.subr.bf16.mxu0 0
      %1844 = vmatpush1.bf16.msra.mxu0 %v1841
      %1845 = vmatprep.subr.bf16.mxu0 0
      %1846 = vmatpush1.bf16.msra.mxu0 0
      %1847 = vmatprep.subr.bf16.mxu0 0
      %1848 = vmatpush1.bf16.msra.mxu0 0
      %1849 = vmatprep.subr.bf16.mxu0 0
      %1850 = vmatpush1.bf16.msra.mxu0 0
      %1851 = vmatprep.subr.bf16.mxu0 0
      %1852 = vmatpush1.bf16.msra.mxu0 0
      %1853 = vmatprep.subr.bf16.mxu0 0
      %1854 = vmatpush1.bf16.msra.mxu0 0
      %1855 = vmatprep.subr.bf16.mxu0 0
      %1856 = vmatpush1.bf16.msra.mxu0 0
      %1857 = vmatprep.subr.bf16.mxu0 0
      %1858 = vmatpush1.bf16.msra.mxu0 0
      %1859 = vmatprep.subr.bf16.mxu0 0
      %1860 = vmatpush1.bf16.msra.mxu0 0
      %1861 = vmatprep.subr.bf16.mxu0 0
      %1862 = vmatpush1.bf16.msra.mxu0 0
      %1863 = vmatprep.subr.bf16.mxu0 0
      %1864 = vmatpush1.bf16.msra.mxu0 0
      %1865 = vmatprep.subr.bf16.mxu0 0
      %1866 = vmatpush1.bf16.msra.mxu0 0
      %1867 = vmatprep.subr.bf16.mxu0 0
      %1868 = vmatpush1.bf16.msra.mxu0 0
      %1869 = vmatprep.subr.bf16.mxu0 0
      %1870 = vmatpush1.bf16.msra.mxu0 0
      %1871 = vmatprep.subr.bf16.mxu0 0
      %1872 = vmatpush1.bf16.msra.mxu0 0
      %1873 = vmatprep.subr.bf16.mxu0 0
      %1874 = vmatpush1.bf16.msra.mxu0 0
      %1875 = vmatprep.mubr.bf16.mxu0 0
      %1876 = vmatmul.mubr.bf16.gmra.mrb[0].mxu0 %v1838
      %v1877 = vpop.f32.mrb[0].mxu0
      %v1878 = vadd.f32 0.0, %v1877
      %v1879 = vpop.f32.mrb[0].mxu0
      %v1880 = vpop.f32.mrb[0].mxu0
      %v1881 = vpop.f32.mrb[0].mxu0
      %1882 = vdwg.mxu0
      %s1883 = scalar_lea.vmem %s7, 24
      %v1884 = vld [vmem:[%s1883] sm:$0xff]
      %v1885 = vpack.c.bf16 %v1878, %v1878
      %v1886 = vpack.c.bf16 %v1884, %v1884
      %v1888 = vsel %vm805, %v1885, 0
      %v1891 = vsel %vm1196, %v1886, 0
      %1893 = vmatprep.subr.bf16.mxu0 0
      %1894 = vmatpush1.bf16.msra.mxu0 %v1891
      %1895 = vmatprep.subr.bf16.mxu0 0
      %1896 = vmatpush1.bf16.msra.mxu0 0
      %1897 = vmatprep.subr.bf16.mxu0 0
      %1898 = vmatpush1.bf16.msra.mxu0 0
      %1899 = vmatprep.subr.bf16.mxu0 0
      %1900 = vmatpush1.bf16.msra.mxu0 0
      %1901 = vmatprep.subr.bf16.mxu0 0
      %1902 = vmatpush1.bf16.msra.mxu0 0
      %1903 = vmatprep.subr.bf16.mxu0 0
      %1904 = vmatpush1.bf16.msra.mxu0 0
      %1905 = vmatprep.subr.bf16.mxu0 0
      %1906 = vmatpush1.bf16.msra.mxu0 0
      %1907 = vmatprep.subr.bf16.mxu0 0
      %1908 = vmatpush1.bf16.msra.mxu0 0
      %1909 = vmatprep.subr.bf16.mxu0 0
      %1910 = vmatpush1.bf16.msra.mxu0 0
      %1911 = vmatprep.subr.bf16.mxu0 0
      %1912 = vmatpush1.bf16.msra.mxu0 0
      %1913 = vmatprep.subr.bf16.mxu0 0
      %1914 = vmatpush1.bf16.msra.mxu0 0
      %1915 = vmatprep.subr.bf16.mxu0 0
      %1916 = vmatpush1.bf16.msra.mxu0 0
      %1917 = vmatprep.subr.bf16.mxu0 0
      %1918 = vmatpush1.bf16.msra.mxu0 0
      %1919 = vmatprep.subr.bf16.mxu0 0
      %1920 = vmatpush1.bf16.msra.mxu0 0
      %1921 = vmatprep.subr.bf16.mxu0 0
      %1922 = vmatpush1.bf16.msra.mxu0 0
      %1923 = vmatprep.subr.bf16.mxu0 0
      %1924 = vmatpush1.bf16.msra.mxu0 0
      %1925 = vmatprep.mubr.bf16.mxu0 0
      %1926 = vmatmul.mubr.bf16.gmra.mrb[0].mxu0 %v1888
      %v1927 = vpop.f32.mrb[0].mxu0
      %v1928 = vadd.f32 0.0, %v1927
      %v1929 = vpop.f32.mrb[0].mxu0
      %v1930 = vpop.f32.mrb[0].mxu0
      %v1931 = vpop.f32.mrb[0].mxu0
      %1932 = vdwg.mxu0
      %v1933 = vadd.f32 %v1609, %v1928
      %v1934 = vadd.f32 %v599, %v1933
      %v1935 = vld [vmem:[%s8] sm:$0x1]
      %v1937 = vlaneseq
      %v1938 = vshrl.u32 %v1937, 7
      %v1939 = vsub.s32 0, %v1938
      %v1940 = vrot.slane %v1935, %v1939
      %v1942 = vadd.f32 %v1934, %v1940
      %v1943 = vld [vmem:[%s9] sm:$0x1]
      %v1944 = vld [vmem:[%s10] sm:$0x1]
      %v1945 = vsel %vm606, %v1942, 0.0
      %1946 = vadd.xlane.f32.xlu0 %v1945
      %v1947 = vpop.xlane.xlu0 %1946
      %v1948 = vmul.f32 %v1947, %v610
      %v1949 = vsub.f32 %v1942, %v1948
      %v1950 = vmul.f32 %v1949, %v1949
      %v1951 = vsel %vm606, %v1950, 0.0
      %1952 = vadd.xlane.f32.xlu0 %v1951
      %v1953 = vpop.xlane.xlu0 %1952
      %v1954 = vmul.f32 %v1953, %v610
      %v1955 = vadd.f32 %v1954, 1e-05
      %v1956 = vrsqrt.pop %v1955
      %v1957 = vmul.f32 %v1949, %v1956
      %v1959 = vlaneseq
      %v1960 = vshrl.u32 %v1959, 7
      %v1961 = vsub.s32 0, %v1960
      %v1962 = vrot.slane %v1943, %v1961
      %v1964 = vmul.f32 %v1957, %v1962
      %v1966 = vlaneseq
      %v1967 = vshrl.u32 %v1966, 7
      %v1968 = vsub.s32 0, %v1967
      %v1969 = vrot.slane %v1944, %v1968
      %v1971 = vadd.f32 %v1964, %v1969
      %v1972 = vld [vmem:[%s11] sm:$0xff]
      %v1973 = vld [vmem:[%s11 + $0x8] sm:$0xff]
      %v1974 = vld [vmem:[%s11 + $0x10] sm:$0xff]
      %v1975 = vld [vmem:[%s11 + $0x18] sm:$0xff]
      %v1976 = vpack.c.bf16 %v1971, %v1971
      %v1977 = vpack.c.bf16 %v1973, %v1972
      %v1978 = vpack.c.bf16 %v1975, %v1974
      %v1979 = vld [vmem:[%s12] sm:$0x1]
      %v1981 = vlaneseq
      %v1982 = vshrl.u32 %v1981, 7
      %v1983 = vsub.s32 0, %v1982
      %v1984 = vrot.slane %v1979, %v1983
      %v1987 = vsel %vm649, %v1976, 0
      %1989 = vmatprep.subr.bf16.mxu0 0
      %1990 = vmatpush1.bf16.msra.mxu0 %v1977
      %1991 = vmatprep.subr.bf16.mxu0 0
      %1992 = vmatpush1.bf16.msra.mxu0 %v1978
      %1993 = vmatprep.subr.bf16.mxu0 0
      %1994 = vmatpush1.bf16.msra.mxu0 0
      %1995 = vmatprep.subr.bf16.mxu0 0
      %1996 = vmatpush1.bf16.msra.mxu0 0
      %1997 = vmatprep.subr.bf16.mxu0 0
      %1998 = vmatpush1.bf16.msra.mxu0 0
      %1999 = vmatprep.subr.bf16.mxu0 0
      %2000 = vmatpush1.bf16.msra.mxu0 0
      %2001 = vmatprep.subr.bf16.mxu0 0
      %2002 = vmatpush1.bf16.msra.mxu0 0
      %2003 = vmatprep.subr.bf16.mxu0 0
      %2004 = vmatpush1.bf16.msra.mxu0 0
      %2005 = vmatprep.subr.bf16.mxu0 0
      %2006 = vmatpush1.bf16.msra.mxu0 0
      %2007 = vmatprep.subr.bf16.mxu0 0
      %2008 = vmatpush1.bf16.msra.mxu0 0
      %2009 = vmatprep.subr.bf16.mxu0 0
      %2010 = vmatpush1.bf16.msra.mxu0 0
      %2011 = vmatprep.subr.bf16.mxu0 0
      %2012 = vmatpush1.bf16.msra.mxu0 0
      %2013 = vmatprep.subr.bf16.mxu0 0
      %2014 = vmatpush1.bf16.msra.mxu0 0
      %2015 = vmatprep.subr.bf16.mxu0 0
      %2016 = vmatpush1.bf16.msra.mxu0 0
      %2017 = vmatprep.subr.bf16.mxu0 0
      %2018 = vmatpush1.bf16.msra.mxu0 0
      %2019 = vmatprep.subr.bf16.mxu0 0
      %2020 = vmatpush1.bf16.msra.mxu0 0
      %2021 = vmatprep.mubr.bf16.mxu0 0
      %2022 = vmatmul.mubr.bf16.gmra.mrb[0].mxu0 %v1987
      %v2023 = vpop.f32.mrb[0].mxu0
      %v2024 = vadd.f32 %v1984, %v2023
      %v2025 = vpop.f32.mrb[0].mxu0
      %v2026 = vpop.f32.mrb[0].mxu0
      %v2027 = vpop.f32.mrb[0].mxu0
      %2028 = vdwg.mxu0
      %v2029 = vmul.f32 %v2024, %v2024
      %v2030 = vmul.f32 %v2024, %v2029
      %v2031 = vmul.f32 %v2030, 0.044715
      %v2032 = vadd.f32 %v2024, %v2031
      %v2033 = vmul.f32 %v2032, 0.7978846
      %v2034 = vtanh.pop %v2033
      %v2035 = vadd.f32 %v2034, 1.0
      %v2036 = vmul.f32 %v2035, 0.5
      %v2037 = vmul.f32 %v2024, %v2036
      %v2038 = vld [vmem:[%s13] sm:$0xff]
      %v2039 = vld [vmem:[%s13 + $0x8] sm:$0xff]
      %v2040 = vld [vmem:[%s13 + $0x10] sm:$0xff]
      %v2041 = vld [vmem:[%s13 + $0x18] sm:$0xff]
      %v2042 = vld [vmem:[%s13 + $0x20] sm:$0xff]
      %v2043 = vld [vmem:[%s13 + $0x28] sm:$0xff]
      %v2044 = vld [vmem:[%s13 + $0x30] sm:$0xff]
      %v2045 = vld [vmem:[%s13 + $0x38] sm:$0xff]
      %v2046 = vld [vmem:[%s13 + $0x40] sm:$0xff]
      %v2047 = vld [vmem:[%s13 + $0x48] sm:$0xff]
      %v2048 = vld [vmem:[%s13 + $0x50] sm:$0xff]
      %v2049 = vld [vmem:[%s13 + $0x58] sm:$0xff]
      %v2050 = vld [vmem:[%s13 + $0x60] sm:$0xff]
      %v2051 = vld [vmem:[%s13 + $0x68] sm:$0xff]
      %v2052 = vld [vmem:[%s13 + $0x70] sm:$0xff]
      %v2053 = vld [vmem:[%s13 + $0x78] sm:$0xff]
      %v2054 = vpack.c.bf16 %v2037, %v2037
      %v2055 = vpack.c.bf16 %v2039, %v2038
      %v2056 = vpack.c.bf16 %v2041, %v2040
      %v2057 = vpack.c.bf16 %v2043, %v2042
      %v2058 = vpack.c.bf16 %v2045, %v2044
      %v2059 = vpack.c.bf16 %v2047, %v2046
      %v2060 = vpack.c.bf16 %v2049, %v2048
      %v2061 = vpack.c.bf16 %v2051, %v2050
      %v2062 = vpack.c.bf16 %v2053, %v2052
      %2063 = vmatprep.subr.bf16.mxu0 0
      %2064 = vmatpush1.bf16.msra.mxu0 %v2055
      %2065 = vmatprep.subr.bf16.mxu0 0
      %2066 = vmatpush1.bf16.msra.mxu0 %v2056
      %2067 = vmatprep.subr.bf16.mxu0 0
      %2068 = vmatpush1.bf16.msra.mxu0 %v2057
      %2069 = vmatprep.subr.bf16.mxu0 0
      %2070 = vmatpush1.bf16.msra.mxu0 %v2058
      %2071 = vmatprep.subr.bf16.mxu0 0
      %2072 = vmatpush1.bf16.msra.mxu0 %v2059
      %2073 = vmatprep.subr.bf16.mxu0 0
      %2074 = vmatpush1.bf16.msra.mxu0 %v2060
      %2075 = vmatprep.subr.bf16.mxu0 0
      %2076 = vmatpush1.bf16.msra.mxu0 %v2061
      %2077 = vmatprep.subr.bf16.mxu0 0
      %2078 = vmatpush1.bf16.msra.mxu0 %v2062
      %2079 = vmatprep.subr.bf16.mxu0 0
      %2080 = vmatpush1.bf16.msra.mxu0 0
      %2081 = vmatprep.subr.bf16.mxu0 0
      %2082 = vmatpush1.bf16.msra.mxu0 0
      %2083 = vmatprep.subr.bf16.mxu0 0
      %2084 = vmatpush1.bf16.msra.mxu0 0
      %2085 = vmatprep.subr.bf16.mxu0 0
      %2086 = vmatpush1.bf16.msra.mxu0 0
      %2087 = vmatprep.subr.bf16.mxu0 0
      %2088 = vmatpush1.bf16.msra.mxu0 0
      %2089 = vmatprep.subr.bf16.mxu0 0
      %2090 = vmatpush1.bf16.msra.mxu0 0
      %2091 = vmatprep.subr.bf16.mxu0 0
      %2092 = vmatpush1.bf16.msra.mxu0 0
      %2093 = vmatprep.subr.bf16.mxu0 0
      %2094 = vmatpush1.bf16.msra.mxu0 0
      %2095 = vmatprep.mubr.bf16.mxu0 0
      %2096 = vmatmul.mubr.bf16.gmra.mrb[0].mxu0 %v2054
      %v2097 = vpop.f32.mrb[0].mxu0
      %v2098 = vadd.f32 0.0, %v2097
      %v2099 = vpop.f32.mrb[0].mxu0
      %v2100 = vpop.f32.mrb[0].mxu0
      %v2101 = vpop.f32.mrb[0].mxu0
      %2102 = vdwg.mxu0
      %v2103 = vadd.f32 %v1942, %v2098
      %v2104 = vld [vmem:[%s14] sm:$0x1]
      %v2106 = vlaneseq
      %v2107 = vshrl.u32 %v2106, 7
      %v2108 = vsub.s32 0, %v2107
      %v2109 = vrot.slane %v2104, %v2108
      %v2111 = vadd.f32 %v2103, %v2109
      %v2112 = vld [vmem:[%s15] sm:$0xff]
      %v2113 = vld [vmem:[%s15 + $0x8] sm:$0xff]
      %v2114 = vld [vmem:[%s15 + $0x10] sm:$0xff]
      %v2115 = vld [vmem:[%s15 + $0x18] sm:$0xff]
      %v2116 = vpack.c.bf16 %v2111, %v2111
      %v2117 = vpack.c.bf16 %v2113, %v2112
      %v2118 = vpack.c.bf16 %v2115, %v2114
      %v2119 = vld [vmem:[%s16] sm:$0x1]
      %v2121 = vlaneseq
      %v2122 = vshrl.u32 %v2121, 7
      %v2123 = vsub.s32 0, %v2122
      %v2124 = vrot.slane %v2119, %v2123
      %v2127 = vsel %vm649, %v2116, 0
      %2129 = vmatprep.subr.bf16.mxu0 0
      %2130 = vmatpush1.bf16.msra.mxu0 %v2117
      %2131 = vmatprep.subr.bf16.mxu0 0
      %2132 = vmatpush1.bf16.msra.mxu0 %v2118
      %2133 = vmatprep.subr.bf16.mxu0 0
      %2134 = vmatpush1.bf16.msra.mxu0 0
      %2135 = vmatprep.subr.bf16.mxu0 0
      %2136 = vmatpush1.bf16.msra.mxu0 0
      %2137 = vmatprep.subr.bf16.mxu0 0
      %2138 = vmatpush1.bf16.msra.mxu0 0
      %2139 = vmatprep.subr.bf16.mxu0 0
      %2140 = vmatpush1.bf16.msra.mxu0 0
      %2141 = vmatprep.subr.bf16.mxu0 0
      %2142 = vmatpush1.bf16.msra.mxu0 0
      %2143 = vmatprep.subr.bf16.mxu0 0
      %2144 = vmatpush1.bf16.msra.mxu0 0
      %2145 = vmatprep.subr.bf16.mxu0 0
      %2146 = vmatpush1.bf16.msra.mxu0 0
      %2147 = vmatprep.subr.bf16.mxu0 0
      %2148 = vmatpush1.bf16.msra.mxu0 0
      %2149 = vmatprep.subr.bf16.mxu0 0
      %2150 = vmatpush1.bf16.msra.mxu0 0
      %2151 = vmatprep.subr.bf16.mxu0 0
      %2152 = vmatpush1.bf16.msra.mxu0 0
      %2153 = vmatprep.subr.bf16.mxu0 0
      %2154 = vmatpush1.bf16.msra.mxu0 0
      %2155 = vmatprep.subr.bf16.mxu0 0
      %2156 = vmatpush1.bf16.msra.mxu0 0
      %2157 = vmatprep.subr.bf16.mxu0 0
      %2158 = vmatpush1.bf16.msra.mxu0 0
      %2159 = vmatprep.subr.bf16.mxu0 0
      %2160 = vmatpush1.bf16.msra.mxu0 0
      %2161 = vmatprep.mubr.bf16.mxu0 0
      %2162 = vmatmul.mubr.bf16.gmra.mrb[0].mxu0 %v2127
      %v2163 = vpop.f32.mrb[0].mxu0
      %v2164 = vadd.f32 %v2124, %v2163
      %v2165 = vpop.f32.mrb[0].mxu0
      %v2166 = vpop.f32.mrb[0].mxu0
      %v2167 = vpop.f32.mrb[0].mxu0
      %2168 = vdwg.mxu0
      %vm2169 = vcmask 519168
      %2170 = vst.msk [vmem:[%s543] sm:$0xf] %vm2169, %v2164
      %p2171 = scmp.lt.s32.totalorder %s28, 1
      %s2172 = scalar_select %p2171, %s28, 1
      %s2173 = smul.addr %s2172, 4
      %s2174 = scalar_lea.vmem %s17, %s2173
      // Predicated region
      $region89: #{hvit_vae_forward.6} parent=87 // pred_check
        %p2175 = pneg %p408
      $region90: #{hvit_vae_forward.6} parent=87 // pred_check_branch
        %2177 = sbr.rel (%p2175) target = $region92
      $region91: #{hvit_vae_forward.6} parent=87 // pred_region
        _
      $region92: #{hvit_vae_forward.6} parent=87 // pred_fallthru
        _
    $region88: #{hvit_vae_forward.6} parent=5 // pred_fallthru
      _
    %p2178 = scmp.le.s32.totalorder 2, %s23
    // Predicated region
    $region93: #{hvit_vae_forward.6} parent=5 // pred_check
      %p2179 = pneg %p2178
    $region94: #{hvit_vae_forward.6} parent=5 // pred_check_branch
      %2181 = sbr.rel (%p2179) target = $region96
    $region95: #{hvit_vae_forward.6} parent=5 // pred_region
      %s2182 = ssub.s32 %s23, 2
      // Predicated region
      $region97: #{hvit_vae_forward.6} parent=95 // pred_check
        %p2183 = pneg %p414
      $region98: #{hvit_vae_forward.6} parent=95 // pred_check_branch
        %2185 = sbr.rel (%p2183) target = $region100
      $region99: #{hvit_vae_forward.6} parent=95 // pred_region
        %p2186 = scmp.lt.s32.totalorder %s29, 1
        %s2187 = scalar_select %p2186, %s29, 1
        %s2188 = smul.addr %s2187, 4
        %s2189 = scalar_lea.vmem %s17, %s2188
      $region100: #{hvit_vae_forward.6} parent=95 // pred_fallthru
        _
    $region96: #{hvit_vae_forward.6} parent=5 // pred_fallthru
      _
  $region6: #{hvit_vae_forward.6} parent=0 // loop_footer
    %s27 = sadd.s32 1, %s23
  $region7: #{hvit_vae_forward.6} parent=0 // loop_footer_branch
    %22 = sbr.rel target = $region3
  $region8: #{hvit_vae_forward.6} parent=0 // loop_exit
    _

</llo_original>
